<compile_context>
chip_gen: v6e
topology: v6e:2x2x1
jax: 0.10.0
libtpu: 0.0.40
codegen_flags: <defaults>
</compile_context>

<pallas_src>
import functools

import numpy as np
import jax
import jax.numpy as jnp
from jax import lax
from jax.experimental import pallas as pl
from jax.experimental.pallas import tpu as pltpu

PAD = 0          # Constants.PAD
NEG_INF = -1e9   # large finite negative: avoids NaN on fully-masked rows


# ----------------------------------------------------------------------------
# In-kernel helpers
# ----------------------------------------------------------------------------
def _layer_norm(z, g, beta, eps):
    # torch-style LayerNormalization from the reference repo:
    # unbiased std, (z - mu) / (std + eps) * g + b
    d = z.shape[-1]
    mu = jnp.mean(z, axis=-1, keepdims=True)
    var = jnp.sum((z - mu) ** 2, axis=-1, keepdims=True) / (d - 1)
    sigma = jnp.sqrt(var)
    return (z - mu) / (sigma + eps) * g + beta


def _mha_block(q, kv, mask_bias, wq, wk, wv, pw, pb, g, b,
               n_head, d_k, d_v, scale, eps):
    """Multi-head attention + output proj + residual + LayerNorm.

    q: (Lq, Dm)  kv: (Lk, Dm)  mask_bias: (Lq, Lk) additive (-1e9 where masked)
    Returns (Lq, Dm).
    """
    # Wide, lane-dense QKV projections (one MXU call each). 1/temper folded in.
    qh_all = jnp.dot(q, wq, preferred_element_type=jnp.float32) * scale
    kh_all = jnp.dot(kv, wk, preferred_element_type=jnp.float32)
    vh_all = jnp.dot(kv, wv, preferred_element_type=jnp.float32)

    heads = []
    for h in range(n_head):                      # static unrolled head loop
        qh = qh_all[:, h * d_k:(h + 1) * d_k]    # (Lq, Dk)
        kh = kh_all[:, h * d_k:(h + 1) * d_k]    # (Lk, Dk)
        vh = vh_all[:, h * d_v:(h + 1) * d_v]    # (Lk, Dv)

        # scores = qh @ kh^T without materializing a transpose
        s = lax.dot_general(qh, kh, (((1,), (1,)), ((), ())),
                            preferred_element_type=jnp.float32)  # (Lq, Lk)
        s = s + mask_bias

        m = jnp.max(s, axis=-1, keepdims=True)
        e = jnp.exp(s - m)
        denom = jnp.sum(e, axis=-1, keepdims=True)
        p = e * pl.reciprocal(denom, approx=True)
        heads.append(jnp.dot(p, vh, preferred_element_type=jnp.float32))

    head_cat = jnp.concatenate(heads, axis=-1)   # (Lq, H*Dv), lane-dense

    y = jnp.dot(head_cat, pw, preferred_element_type=jnp.float32) + pb
    return _layer_norm(y + q, g, b, eps)


# ----------------------------------------------------------------------------
# Fused decoder-layer Pallas kernel (one batch element per grid step)
# ----------------------------------------------------------------------------
def _decoder_layer_kernel(dec_ref, enc_ref, smask_ref, emask_ref,
                          swq_ref, swk_ref, swv_ref, spw_ref, spb_ref,
                          sg_ref, sb_ref,
                          ewq_ref, ewk_ref, ewv_ref, epw_ref, epb_ref,
                          eg_ref, eb_ref,
                          w1_ref, b1_ref, w2_ref, b2_ref, fg_ref, fb_ref,
                          o_ref, *, n_head, d_k, d_v, scale, eps):
    x = dec_ref[0]                                     # (Lt, Dm)
    enc = enc_ref[0]                                   # (Ls, Dm)
    # additive mask bias, computed once, reused across all heads
    slf_bias = smask_ref[0] * jnp.float32(NEG_INF)     # (Lt, Lt)
    enc_bias = emask_ref[0] * jnp.float32(NEG_INF)     # (Lt, Ls)

    # --- masked self-attention sub-layer ---
    x1 = _mha_block(x, x, slf_bias,
                    swq_ref[...], swk_ref[...], swv_ref[...],
                    spw_ref[...], spb_ref[...], sg_ref[...], sb_ref[...],
                    n_head, d_k, d_v, scale, eps)

    # --- encoder-decoder attention sub-layer ---
    x2 = _mha_block(x1, enc, enc_bias,
                    ewq_ref[...], ewk_ref[...], ewv_ref[...],
                    epw_ref[...], epb_ref[...], eg_ref[...], eb_ref[...],
                    n_head, d_k, d_v, scale, eps)

    # --- position-wise feed-forward sub-layer ---
    h = jnp.dot(x2, w1_ref[...], preferred_element_type=jnp.float32) + b1_ref[...]
    h = jnp.maximum(h, 0.0)
    y = jnp.dot(h, w2_ref[...], preferred_element_type=jnp.float32) + b2_ref[...]
    out = _layer_norm(y + x2, fg_ref[...], fb_ref[...], eps)

    o_ref[...] = out[None, :, :]


def decoder_layer(p, dec_inp, enc_out, slf_mask_f, enc_mask_f,
                  n_head, d_k, d_v, eps=1e-3):
    """One fused decoder layer.  dec_inp: (B, Lt, Dm), enc_out: (B, Ls, Dm)."""
    B, Lt, Dm = dec_inp.shape
    Ls = enc_out.shape[1]
    scale = 1.0 / float(np.sqrt(Dm))  # 1 / temper, temper = d_model ** 0.5

    kernel = functools.partial(_decoder_layer_kernel, n_head=n_head,
                               d_k=d_k, d_v=d_v, scale=scale, eps=eps)

    def full(shape):
        # whole array resident in VMEM across the batch grid
        return pl.BlockSpec(shape, lambda bi, _s=shape: (0,) * len(_s))

    weight_keys = ('slf_wq', 'slf_wk', 'slf_wv', 'slf_proj_w', 'slf_proj_b',
                   'slf_ln_g', 'slf_ln_b',
                   'enc_wq', 'enc_wk', 'enc_wv', 'enc_proj_w', 'enc_proj_b',
                   'enc_ln_g', 'enc_ln_b',
                   'ffn_w1', 'ffn_b1', 'ffn_w2', 'ffn_b2',
                   'ffn_ln_g', 'ffn_ln_b')

    in_specs = [
        pl.BlockSpec((1, Lt, Dm), lambda bi: (bi, 0, 0)),
        pl.BlockSpec((1, Ls, Dm), lambda bi: (bi, 0, 0)),
        pl.BlockSpec((1, Lt, Lt), lambda bi: (bi, 0, 0)),
        pl.BlockSpec((1, Lt, Ls), lambda bi: (bi, 0, 0)),
    ] + [full(p[k].shape) for k in weight_keys]

    return pl.pallas_call(
        kernel,
        out_shape=jax.ShapeDtypeStruct((B, Lt, Dm), jnp.float32),
        grid=(B,),
        in_specs=in_specs,
        out_specs=pl.BlockSpec((1, Lt, Dm), lambda bi: (bi, 0, 0)),
        compiler_params=pltpu.CompilerParams(
            dimension_semantics=("parallel",)),
    )(dec_inp, enc_out, slf_mask_f, enc_mask_f,
      *[p[k] for k in weight_keys])


# ----------------------------------------------------------------------------
# Model glue (plain JAX)
# ----------------------------------------------------------------------------
def position_encoding_init(n_position, d_pos_vec):
    pe = np.array([
        [pos / np.power(10000, 2 * (j // 2) / d_pos_vec)
         for j in range(d_pos_vec)]
        if pos != 0 else np.zeros(d_pos_vec)
        for pos in range(n_position)])
    pe[1:, 0::2] = np.sin(pe[1:, 0::2])
    pe[1:, 1::2] = np.cos(pe[1:, 1::2])
    return pe.astype(np.float32)


def init_params(key, n_tgt_vocab, n_max_seq, n_layers, n_head, d_k, d_v,
                d_word_vec, d_model, d_inner):
    n_position = n_max_seq + 1
    keys = jax.random.split(key, 1 + n_layers)

    emb = jax.random.normal(keys[0], (n_tgt_vocab, d_word_vec), jnp.float32) * 0.1
    emb = emb.at[PAD].set(0.0)  # padding_idx=PAD

    def nrm(k, shape, scale=0.1):
        return jax.random.normal(k, shape, jnp.float32) * scale

    layers = []
    for li in range(n_layers):
        lk = jax.random.split(keys[1 + li], 10)
        layers.append(dict(
            # head-fused QKV weights: (Dm, H*Dk) / (Dm, H*Dv)
            slf_wq=nrm(lk[0], (d_model, n_head * d_k)),
            slf_wk=nrm(lk[1], (d_model, n_head * d_k)),
            slf_wv=nrm(lk[2], (d_model, n_head * d_v)),
            slf_proj_w=nrm(lk[3], (n_head * d_v, d_model)),
            slf_proj_b=jnp.zeros((1, d_model), jnp.float32),
            slf_ln_g=jnp.ones((1, d_model), jnp.float32),
            slf_ln_b=jnp.zeros((1, d_model), jnp.float32),
            enc_wq=nrm(lk[4], (d_model, n_head * d_k)),
            enc_wk=nrm(lk[5], (d_model, n_head * d_k)),
            enc_wv=nrm(lk[6], (d_model, n_head * d_v)),
            enc_proj_w=nrm(lk[7], (n_head * d_v, d_model)),
            enc_proj_b=jnp.zeros((1, d_model), jnp.float32),
            enc_ln_g=jnp.ones((1, d_model), jnp.float32),
            enc_ln_b=jnp.zeros((1, d_model), jnp.float32),
            ffn_w1=nrm(lk[8], (d_model, d_inner)),
            ffn_b1=jnp.zeros((1, d_inner), jnp.float32),
            ffn_w2=nrm(lk[9], (d_inner, d_model)),
            ffn_b2=jnp.zeros((1, d_model), jnp.float32),
            ffn_ln_g=jnp.ones((1, d_model), jnp.float32),
            ffn_ln_b=jnp.zeros((1, d_model), jnp.float32),
        ))

    return dict(
        tgt_word_emb=emb,
        position_enc=jnp.asarray(position_encoding_init(n_position, d_word_vec)),
        layers=layers,
    )


def transformer_decoder(params, tgt_seq, tgt_pos, src_seq, enc_output,
                        *, n_head, d_k, d_v):
    B, Lt = tgt_seq.shape
    Ls = src_seq.shape[1]

    dec_input = params['tgt_word_emb'][tgt_seq] + params['position_enc'][tgt_pos]

    # self-attn mask = padding mask OR subsequent (causal) mask
    pad_mask = (tgt_seq == PAD)[:, None, :].astype(jnp.int32)      # (B,1,Lt)
    sub_mask = jnp.triu(jnp.ones((Lt, Lt), jnp.int32), k=1)[None]  # (1,Lt,Lt)
    slf_mask = ((pad_mask + sub_mask) > 0).astype(jnp.float32)     # (B,Lt,Lt)

    # enc-dec attn mask = src padding mask
    enc_mask = jnp.broadcast_to((src_seq == PAD)[:, None, :],
                                (B, Lt, Ls)).astype(jnp.float32)

    dec_output = dec_input.astype(jnp.float32)
    for layer in params['layers']:
        dec_output = decoder_layer(layer, dec_output, enc_output,
                                   slf_mask, enc_mask, n_head, d_k, d_v)
    return (dec_output,)


# ----------------------------------------------------------------------------
# Main
# ----------------------------------------------------------------------------
if __name__ == "__main__":
    n_tgt_vocab = 16
    n_max_seq = 8
    n_layers = 2
    n_head = 4
    d_k = d_v = 8
    d_word_vec = d_model = 32
    d_inner = 64
    B, Lt, Ls = 2, 8, 8

    key = jax.random.PRNGKey(0)
    kp, k1, k2, k3 = jax.random.split(key, 4)

    params = init_params(kp, n_tgt_vocab, n_max_seq, n_layers, n_head,
                         d_k, d_v, d_word_vec, d_model, d_inner)

    tgt_seq = jax.random.randint(k1, (B, Lt), 1, n_tgt_vocab, dtype=jnp.int32)
    tgt_pos = jnp.tile(jnp.arange(1, Lt + 1, dtype=jnp.int32)[None, :], (B, 1))
    src_seq = jax.random.randint(k2, (B, Ls), 1, n_tgt_vocab, dtype=jnp.int32)
    src_seq = src_seq.at[1, Ls - 1].set(PAD)  # exercise enc-dec padding mask
    enc_output = jax.random.normal(k3, (B, Ls, d_model), jnp.float32)

    fwd = jax.jit(functools.partial(transformer_decoder,
                                    n_head=n_head, d_k=d_k, d_v=d_v))
    (dec_out,) = fwd(params, tgt_seq, tgt_pos, src_seq, enc_output)
    dec_out = jax.block_until_ready(dec_out)

    assert dec_out.shape == (B, Lt, d_model)
    assert bool(jnp.all(jnp.isfinite(dec_out)))
    print("KERNEL_OK")
</pallas_src>

<mosaic_0001>
module attributes {stable_mosaic.version = 11 : i64} {
  func.func @_decoder_layer_kernel(%arg0: i32, %arg1: memref<1x8x32xf32, #tpu.memory_space<vmem>>, %arg2: memref<1x8x32xf32, #tpu.memory_space<vmem>>, %arg3: memref<1x8x8xf32, #tpu.memory_space<vmem>>, %arg4: memref<1x8x8xf32, #tpu.memory_space<vmem>>, %arg5: memref<32x32xf32, #tpu.memory_space<vmem>>, %arg6: memref<32x32xf32, #tpu.memory_space<vmem>>, %arg7: memref<32x32xf32, #tpu.memory_space<vmem>>, %arg8: memref<32x32xf32, #tpu.memory_space<vmem>>, %arg9: memref<1x32xf32, #tpu.memory_space<vmem>>, %arg10: memref<1x32xf32, #tpu.memory_space<vmem>>, %arg11: memref<1x32xf32, #tpu.memory_space<vmem>>, %arg12: memref<32x32xf32, #tpu.memory_space<vmem>>, %arg13: memref<32x32xf32, #tpu.memory_space<vmem>>, %arg14: memref<32x32xf32, #tpu.memory_space<vmem>>, %arg15: memref<32x32xf32, #tpu.memory_space<vmem>>, %arg16: memref<1x32xf32, #tpu.memory_space<vmem>>, %arg17: memref<1x32xf32, #tpu.memory_space<vmem>>, %arg18: memref<1x32xf32, #tpu.memory_space<vmem>>, %arg19: memref<32x64xf32, #tpu.memory_space<vmem>>, %arg20: memref<1x64xf32, #tpu.memory_space<vmem>>, %arg21: memref<64x32xf32, #tpu.memory_space<vmem>>, %arg22: memref<1x32xf32, #tpu.memory_space<vmem>>, %arg23: memref<1x32xf32, #tpu.memory_space<vmem>>, %arg24: memref<1x32xf32, #tpu.memory_space<vmem>>, %arg25: memref<1x8x32xf32, #tpu.memory_space<vmem>>) attributes {dimension_semantics = [#tpu.dimension_semantics<parallel>], iteration_bounds = array<i64: 2>, scalar_prefetch = 0 : i64, scratch_operands = 0 : i64, tpu.core_type = #tpu.core_type<tc>, window_params = [{transform_indices = @transform_0, window_bounds = array<i64: 1, 8, 32>}, {transform_indices = @transform_1, window_bounds = array<i64: 1, 8, 32>}, {transform_indices = @transform_2, window_bounds = array<i64: 1, 8, 8>}, {transform_indices = @transform_3, window_bounds = array<i64: 1, 8, 8>}, {pipeline_mode = #tpu.pipeline_mode<synchronous>, transform_indices = @transform_4, window_bounds = array<i64: 32, 32>}, {pipeline_mode = #tpu.pipeline_mode<synchronous>, transform_indices = @transform_5, window_bounds = array<i64: 32, 32>}, {pipeline_mode = #tpu.pipeline_mode<synchronous>, transform_indices = @transform_6, window_bounds = array<i64: 32, 32>}, {pipeline_mode = #tpu.pipeline_mode<synchronous>, transform_indices = @transform_7, window_bounds = array<i64: 32, 32>}, {pipeline_mode = #tpu.pipeline_mode<synchronous>, transform_indices = @transform_8, window_bounds = array<i64: 1, 32>}, {pipeline_mode = #tpu.pipeline_mode<synchronous>, transform_indices = @transform_9, window_bounds = array<i64: 1, 32>}, {pipeline_mode = #tpu.pipeline_mode<synchronous>, transform_indices = @transform_10, window_bounds = array<i64: 1, 32>}, {pipeline_mode = #tpu.pipeline_mode<synchronous>, transform_indices = @transform_11, window_bounds = array<i64: 32, 32>}, {pipeline_mode = #tpu.pipeline_mode<synchronous>, transform_indices = @transform_12, window_bounds = array<i64: 32, 32>}, {pipeline_mode = #tpu.pipeline_mode<synchronous>, transform_indices = @transform_13, window_bounds = array<i64: 32, 32>}, {pipeline_mode = #tpu.pipeline_mode<synchronous>, transform_indices = @transform_14, window_bounds = array<i64: 32, 32>}, {pipeline_mode = #tpu.pipeline_mode<synchronous>, transform_indices = @transform_15, window_bounds = array<i64: 1, 32>}, {pipeline_mode = #tpu.pipeline_mode<synchronous>, transform_indices = @transform_16, window_bounds = array<i64: 1, 32>}, {pipeline_mode = #tpu.pipeline_mode<synchronous>, transform_indices = @transform_17, window_bounds = array<i64: 1, 32>}, {pipeline_mode = #tpu.pipeline_mode<synchronous>, transform_indices = @transform_18, window_bounds = array<i64: 32, 64>}, {pipeline_mode = #tpu.pipeline_mode<synchronous>, transform_indices = @transform_19, window_bounds = array<i64: 1, 64>}, {pipeline_mode = #tpu.pipeline_mode<synchronous>, transform_indices = @transform_20, window_bounds = array<i64: 64, 32>}, {pipeline_mode = #tpu.pipeline_mode<synchronous>, transform_indices = @transform_21, window_bounds = array<i64: 1, 32>}, {pipeline_mode = #tpu.pipeline_mode<synchronous>, transform_indices = @transform_22, window_bounds = array<i64: 1, 32>}, {pipeline_mode = #tpu.pipeline_mode<synchronous>, transform_indices = @transform_23, window_bounds = array<i64: 1, 32>}, {transform_indices = @transform_24, window_bounds = array<i64: 1, 8, 32>}]} {
    %c0 = arith.constant 0 : index
    %c0_0 = arith.constant 0 : index
    %c0_1 = arith.constant 0 : index
    %0 = vector.load %arg1[%c0, %c0_0, %c0_1] : memref<1x8x32xf32, #tpu.memory_space<vmem>>, vector<1x8x32xf32>
    %1 = vector.shape_cast %0 : vector<1x8x32xf32> to vector<8x32xf32>
    %c0_2 = arith.constant 0 : index
    %c0_3 = arith.constant 0 : index
    %c0_4 = arith.constant 0 : index
    %2 = vector.load %arg2[%c0_2, %c0_3, %c0_4] : memref<1x8x32xf32, #tpu.memory_space<vmem>>, vector<1x8x32xf32>
    %3 = vector.shape_cast %2 : vector<1x8x32xf32> to vector<8x32xf32>
    %c0_5 = arith.constant 0 : index
    %c0_6 = arith.constant 0 : index
    %c0_7 = arith.constant 0 : index
    %4 = vector.load %arg3[%c0_5, %c0_6, %c0_7] : memref<1x8x8xf32, #tpu.memory_space<vmem>>, vector<1x8x8xf32>
    %5 = vector.shape_cast %4 : vector<1x8x8xf32> to vector<8x8xf32>
    %cst = arith.constant -1.000000e+09 : f32
    %6 = vector.broadcast %cst : f32 to vector<8x8xf32>
    %7 = arith.mulf %5, %6 : vector<8x8xf32>
    %c0_8 = arith.constant 0 : index
    %c0_9 = arith.constant 0 : index
    %c0_10 = arith.constant 0 : index
    %8 = vector.load %arg4[%c0_8, %c0_9, %c0_10] : memref<1x8x8xf32, #tpu.memory_space<vmem>>, vector<1x8x8xf32>
    %9 = vector.shape_cast %8 : vector<1x8x8xf32> to vector<8x8xf32>
    %cst_11 = arith.constant -1.000000e+09 : f32
    %10 = vector.broadcast %cst_11 : f32 to vector<8x8xf32>
    %11 = arith.mulf %9, %10 : vector<8x8xf32>
    %c0_12 = arith.constant 0 : index
    %c0_13 = arith.constant 0 : index
    %12 = vector.load %arg5[%c0_12, %c0_13] : memref<32x32xf32, #tpu.memory_space<vmem>>, vector<32x32xf32>
    %c0_14 = arith.constant 0 : index
    %c0_15 = arith.constant 0 : index
    %13 = vector.load %arg6[%c0_14, %c0_15] : memref<32x32xf32, #tpu.memory_space<vmem>>, vector<32x32xf32>
    %c0_16 = arith.constant 0 : index
    %c0_17 = arith.constant 0 : index
    %14 = vector.load %arg7[%c0_16, %c0_17] : memref<32x32xf32, #tpu.memory_space<vmem>>, vector<32x32xf32>
    %c0_18 = arith.constant 0 : index
    %c0_19 = arith.constant 0 : index
    %15 = vector.load %arg8[%c0_18, %c0_19] : memref<32x32xf32, #tpu.memory_space<vmem>>, vector<32x32xf32>
    %c0_20 = arith.constant 0 : index
    %c0_21 = arith.constant 0 : index
    %16 = vector.load %arg9[%c0_20, %c0_21] : memref<1x32xf32, #tpu.memory_space<vmem>>, vector<1x32xf32>
    %c0_22 = arith.constant 0 : index
    %c0_23 = arith.constant 0 : index
    %17 = vector.load %arg10[%c0_22, %c0_23] : memref<1x32xf32, #tpu.memory_space<vmem>>, vector<1x32xf32>
    %c0_24 = arith.constant 0 : index
    %c0_25 = arith.constant 0 : index
    %18 = vector.load %arg11[%c0_24, %c0_25] : memref<1x32xf32, #tpu.memory_space<vmem>>, vector<1x32xf32>
    %cst_26 = arith.constant dense<0.000000e+00> : vector<8x32xf32>
    %19 = tpu.matmul %1, %12, %cst_26 {dimension_numbers = #tpu.dot_dimension_numbers<[1], [0], [0], [1], [0, 0, 1, 1], [], []>} : vector<8x32xf32>, vector<32x32xf32>, vector<8x32xf32> -> vector<8x32xf32>
    %cst_27 = arith.constant 0.176776692 : f32
    %20 = vector.broadcast %cst_27 : f32 to vector<8x32xf32>
    %21 = arith.mulf %19, %20 : vector<8x32xf32>
    %cst_28 = arith.constant dense<0.000000e+00> : vector<8x32xf32>
    %22 = tpu.matmul %1, %13, %cst_28 {dimension_numbers = #tpu.dot_dimension_numbers<[1], [0], [0], [1], [0, 0, 1, 1], [], []>} : vector<8x32xf32>, vector<32x32xf32>, vector<8x32xf32> -> vector<8x32xf32>
    %cst_29 = arith.constant dense<0.000000e+00> : vector<8x32xf32>
    %23 = tpu.matmul %1, %14, %cst_29 {dimension_numbers = #tpu.dot_dimension_numbers<[1], [0], [0], [1], [0, 0, 1, 1], [], []>} : vector<8x32xf32>, vector<32x32xf32>, vector<8x32xf32> -> vector<8x32xf32>
    %24 = vector.extract_strided_slice %21 {offsets = [0, 0], sizes = [8, 8], strides = [1, 1]} : vector<8x32xf32> to vector<8x8xf32>
    %25 = vector.extract_strided_slice %22 {offsets = [0, 0], sizes = [8, 8], strides = [1, 1]} : vector<8x32xf32> to vector<8x8xf32>
    %26 = vector.extract_strided_slice %23 {offsets = [0, 0], sizes = [8, 8], strides = [1, 1]} : vector<8x32xf32> to vector<8x8xf32>
    %cst_30 = arith.constant dense<0.000000e+00> : vector<8x8xf32>
    %27 = tpu.matmul %24, %25, %cst_30 {dimension_numbers = #tpu.dot_dimension_numbers<[1], [1], [0], [0], [0, 0, 1, 0], [], []>} : vector<8x8xf32>, vector<8x8xf32>, vector<8x8xf32> -> vector<8x8xf32>
    %28 = arith.addf %27, %7 : vector<8x8xf32>
    %cst_31 = arith.constant dense<0xFF800000> : vector<8xf32>
    %29 = vector.multi_reduction <maximumf>, %28, %cst_31 [1] : vector<8x8xf32> to vector<8xf32>
    %30 = vector.shape_cast %29 : vector<8xf32> to vector<8x1xf32>
    %31 = vector.broadcast %30 : vector<8x1xf32> to vector<8x8xf32>
    %32 = arith.subf %28, %31 : vector<8x8xf32>
    %33 = math.exp %32 : vector<8x8xf32>
    %cst_32 = arith.constant dense<0.000000e+00> : vector<8xf32>
    %34 = vector.multi_reduction <add>, %33, %cst_32 [1] : vector<8x8xf32> to vector<8xf32>
    %35 = vector.shape_cast %34 : vector<8xf32> to vector<8x1xf32>
    %36 = tpu.reciprocal %35 {approx = true} : vector<8x1xf32> -> vector<8x1xf32>
    %37 = vector.broadcast %36 : vector<8x1xf32> to vector<8x8xf32>
    %38 = arith.mulf %33, %37 : vector<8x8xf32>
    %cst_33 = arith.constant dense<0.000000e+00> : vector<8x8xf32>
    %39 = tpu.matmul %38, %26, %cst_33 {dimension_numbers = #tpu.dot_dimension_numbers<[1], [0], [0], [1], [0, 0, 1, 1], [], []>} : vector<8x8xf32>, vector<8x8xf32>, vector<8x8xf32> -> vector<8x8xf32>
    %40 = vector.extract_strided_slice %21 {offsets = [0, 8], sizes = [8, 8], strides = [1, 1]} : vector<8x32xf32> to vector<8x8xf32>
    %41 = vector.extract_strided_slice %22 {offsets = [0, 8], sizes = [8, 8], strides = [1, 1]} : vector<8x32xf32> to vector<8x8xf32>
    %42 = vector.extract_strided_slice %23 {offsets = [0, 8], sizes = [8, 8], strides = [1, 1]} : vector<8x32xf32> to vector<8x8xf32>
    %cst_34 = arith.constant dense<0.000000e+00> : vector<8x8xf32>
    %43 = tpu.matmul %40, %41, %cst_34 {dimension_numbers = #tpu.dot_dimension_numbers<[1], [1], [0], [0], [0, 0, 1, 0], [], []>} : vector<8x8xf32>, vector<8x8xf32>, vector<8x8xf32> -> vector<8x8xf32>
    %44 = arith.addf %43, %7 : vector<8x8xf32>
    %cst_35 = arith.constant dense<0xFF800000> : vector<8xf32>
    %45 = vector.multi_reduction <maximumf>, %44, %cst_35 [1] : vector<8x8xf32> to vector<8xf32>
    %46 = vector.shape_cast %45 : vector<8xf32> to vector<8x1xf32>
    %47 = vector.broadcast %46 : vector<8x1xf32> to vector<8x8xf32>
    %48 = arith.subf %44, %47 : vector<8x8xf32>
    %49 = math.exp %48 : vector<8x8xf32>
    %cst_36 = arith.constant dense<0.000000e+00> : vector<8xf32>
    %50 = vector.multi_reduction <add>, %49, %cst_36 [1] : vector<8x8xf32> to vector<8xf32>
    %51 = vector.shape_cast %50 : vector<8xf32> to vector<8x1xf32>
    %52 = tpu.reciprocal %51 {approx = true} : vector<8x1xf32> -> vector<8x1xf32>
    %53 = vector.broadcast %52 : vector<8x1xf32> to vector<8x8xf32>
    %54 = arith.mulf %49, %53 : vector<8x8xf32>
    %cst_37 = arith.constant dense<0.000000e+00> : vector<8x8xf32>
    %55 = tpu.matmul %54, %42, %cst_37 {dimension_numbers = #tpu.dot_dimension_numbers<[1], [0], [0], [1], [0, 0, 1, 1], [], []>} : vector<8x8xf32>, vector<8x8xf32>, vector<8x8xf32> -> vector<8x8xf32>
    %56 = vector.extract_strided_slice %21 {offsets = [0, 16], sizes = [8, 8], strides = [1, 1]} : vector<8x32xf32> to vector<8x8xf32>
    %57 = vector.extract_strided_slice %22 {offsets = [0, 16], sizes = [8, 8], strides = [1, 1]} : vector<8x32xf32> to vector<8x8xf32>
    %58 = vector.extract_strided_slice %23 {offsets = [0, 16], sizes = [8, 8], strides = [1, 1]} : vector<8x32xf32> to vector<8x8xf32>
    %cst_38 = arith.constant dense<0.000000e+00> : vector<8x8xf32>
    %59 = tpu.matmul %56, %57, %cst_38 {dimension_numbers = #tpu.dot_dimension_numbers<[1], [1], [0], [0], [0, 0, 1, 0], [], []>} : vector<8x8xf32>, vector<8x8xf32>, vector<8x8xf32> -> vector<8x8xf32>
    %60 = arith.addf %59, %7 : vector<8x8xf32>
    %cst_39 = arith.constant dense<0xFF800000> : vector<8xf32>
    %61 = vector.multi_reduction <maximumf>, %60, %cst_39 [1] : vector<8x8xf32> to vector<8xf32>
    %62 = vector.shape_cast %61 : vector<8xf32> to vector<8x1xf32>
    %63 = vector.broadcast %62 : vector<8x1xf32> to vector<8x8xf32>
    %64 = arith.subf %60, %63 : vector<8x8xf32>
    %65 = math.exp %64 : vector<8x8xf32>
    %cst_40 = arith.constant dense<0.000000e+00> : vector<8xf32>
    %66 = vector.multi_reduction <add>, %65, %cst_40 [1] : vector<8x8xf32> to vector<8xf32>
    %67 = vector.shape_cast %66 : vector<8xf32> to vector<8x1xf32>
    %68 = tpu.reciprocal %67 {approx = true} : vector<8x1xf32> -> vector<8x1xf32>
    %69 = vector.broadcast %68 : vector<8x1xf32> to vector<8x8xf32>
    %70 = arith.mulf %65, %69 : vector<8x8xf32>
    %cst_41 = arith.constant dense<0.000000e+00> : vector<8x8xf32>
    %71 = tpu.matmul %70, %58, %cst_41 {dimension_numbers = #tpu.dot_dimension_numbers<[1], [0], [0], [1], [0, 0, 1, 1], [], []>} : vector<8x8xf32>, vector<8x8xf32>, vector<8x8xf32> -> vector<8x8xf32>
    %72 = vector.extract_strided_slice %21 {offsets = [0, 24], sizes = [8, 8], strides = [1, 1]} : vector<8x32xf32> to vector<8x8xf32>
    %73 = vector.extract_strided_slice %22 {offsets = [0, 24], sizes = [8, 8], strides = [1, 1]} : vector<8x32xf32> to vector<8x8xf32>
    %74 = vector.extract_strided_slice %23 {offsets = [0, 24], sizes = [8, 8], strides = [1, 1]} : vector<8x32xf32> to vector<8x8xf32>
    %cst_42 = arith.constant dense<0.000000e+00> : vector<8x8xf32>
    %75 = tpu.matmul %72, %73, %cst_42 {dimension_numbers = #tpu.dot_dimension_numbers<[1], [1], [0], [0], [0, 0, 1, 0], [], []>} : vector<8x8xf32>, vector<8x8xf32>, vector<8x8xf32> -> vector<8x8xf32>
    %76 = arith.addf %75, %7 : vector<8x8xf32>
    %cst_43 = arith.constant dense<0xFF800000> : vector<8xf32>
    %77 = vector.multi_reduction <maximumf>, %76, %cst_43 [1] : vector<8x8xf32> to vector<8xf32>
    %78 = vector.shape_cast %77 : vector<8xf32> to vector<8x1xf32>
    %79 = vector.broadcast %78 : vector<8x1xf32> to vector<8x8xf32>
    %80 = arith.subf %76, %79 : vector<8x8xf32>
    %81 = math.exp %80 : vector<8x8xf32>
    %cst_44 = arith.constant dense<0.000000e+00> : vector<8xf32>
    %82 = vector.multi_reduction <add>, %81, %cst_44 [1] : vector<8x8xf32> to vector<8xf32>
    %83 = vector.shape_cast %82 : vector<8xf32> to vector<8x1xf32>
    %84 = tpu.reciprocal %83 {approx = true} : vector<8x1xf32> -> vector<8x1xf32>
    %85 = vector.broadcast %84 : vector<8x1xf32> to vector<8x8xf32>
    %86 = arith.mulf %81, %85 : vector<8x8xf32>
    %cst_45 = arith.constant dense<0.000000e+00> : vector<8x8xf32>
    %87 = tpu.matmul %86, %74, %cst_45 {dimension_numbers = #tpu.dot_dimension_numbers<[1], [0], [0], [1], [0, 0, 1, 1], [], []>} : vector<8x8xf32>, vector<8x8xf32>, vector<8x8xf32> -> vector<8x8xf32>
    %88 = tpu.concatenate %39, %55, %71, %87 in 1 : vector<8x8xf32>, vector<8x8xf32>, vector<8x8xf32>, vector<8x8xf32> -> vector<8x32xf32>
    %cst_46 = arith.constant dense<0.000000e+00> : vector<8x32xf32>
    %89 = tpu.matmul %88, %15, %cst_46 {dimension_numbers = #tpu.dot_dimension_numbers<[1], [0], [0], [1], [0, 0, 1, 1], [], []>} : vector<8x32xf32>, vector<32x32xf32>, vector<8x32xf32> -> vector<8x32xf32>
    %90 = vector.broadcast %16 : vector<1x32xf32> to vector<8x32xf32>
    %91 = arith.addf %89, %90 : vector<8x32xf32>
    %92 = arith.addf %91, %1 : vector<8x32xf32>
    %cst_47 = arith.constant dense<0.000000e+00> : vector<8xf32>
    %93 = vector.multi_reduction <add>, %92, %cst_47 [1] : vector<8x32xf32> to vector<8xf32>
    %94 = vector.shape_cast %93 : vector<8xf32> to vector<8x1xf32>
    %cst_48 = arith.constant 3.200000e+01 : f32
    %95 = vector.broadcast %cst_48 : f32 to vector<8x1xf32>
    %96 = arith.divf %94, %95 : vector<8x1xf32>
    %97 = vector.broadcast %96 : vector<8x1xf32> to vector<8x32xf32>
    %98 = arith.subf %92, %97 : vector<8x32xf32>
    %99 = arith.mulf %98, %98 : vector<8x32xf32>
    %cst_49 = arith.constant dense<0.000000e+00> : vector<8xf32>
    %100 = vector.multi_reduction <add>, %99, %cst_49 [1] : vector<8x32xf32> to vector<8xf32>
    %101 = vector.shape_cast %100 : vector<8xf32> to vector<8x1xf32>
    %cst_50 = arith.constant 3.100000e+01 : f32
    %102 = vector.broadcast %cst_50 : f32 to vector<8x1xf32>
    %103 = arith.divf %101, %102 : vector<8x1xf32>
    %104 = math.sqrt %103 : vector<8x1xf32>
    %105 = vector.broadcast %96 : vector<8x1xf32> to vector<8x32xf32>
    %106 = arith.subf %92, %105 : vector<8x32xf32>
    %cst_51 = arith.constant 1.000000e-03 : f32
    %107 = vector.broadcast %cst_51 : f32 to vector<8x1xf32>
    %108 = arith.addf %104, %107 : vector<8x1xf32>
    %109 = vector.broadcast %108 : vector<8x1xf32> to vector<8x32xf32>
    %110 = arith.divf %106, %109 : vector<8x32xf32>
    %111 = vector.broadcast %17 : vector<1x32xf32> to vector<8x32xf32>
    %112 = arith.mulf %110, %111 : vector<8x32xf32>
    %113 = vector.broadcast %18 : vector<1x32xf32> to vector<8x32xf32>
    %114 = arith.addf %112, %113 : vector<8x32xf32>
    %c0_52 = arith.constant 0 : index
    %c0_53 = arith.constant 0 : index
    %115 = vector.load %arg12[%c0_52, %c0_53] : memref<32x32xf32, #tpu.memory_space<vmem>>, vector<32x32xf32>
    %c0_54 = arith.constant 0 : index
    %c0_55 = arith.constant 0 : index
    %116 = vector.load %arg13[%c0_54, %c0_55] : memref<32x32xf32, #tpu.memory_space<vmem>>, vector<32x32xf32>
    %c0_56 = arith.constant 0 : index
    %c0_57 = arith.constant 0 : index
    %117 = vector.load %arg14[%c0_56, %c0_57] : memref<32x32xf32, #tpu.memory_space<vmem>>, vector<32x32xf32>
    %c0_58 = arith.constant 0 : index
    %c0_59 = arith.constant 0 : index
    %118 = vector.load %arg15[%c0_58, %c0_59] : memref<32x32xf32, #tpu.memory_space<vmem>>, vector<32x32xf32>
    %c0_60 = arith.constant 0 : index
    %c0_61 = arith.constant 0 : index
    %119 = vector.load %arg16[%c0_60, %c0_61] : memref<1x32xf32, #tpu.memory_space<vmem>>, vector<1x32xf32>
    %c0_62 = arith.constant 0 : index
    %c0_63 = arith.constant 0 : index
    %120 = vector.load %arg17[%c0_62, %c0_63] : memref<1x32xf32, #tpu.memory_space<vmem>>, vector<1x32xf32>
    %c0_64 = arith.constant 0 : index
    %c0_65 = arith.constant 0 : index
    %121 = vector.load %arg18[%c0_64, %c0_65] : memref<1x32xf32, #tpu.memory_space<vmem>>, vector<1x32xf32>
    %cst_66 = arith.constant dense<0.000000e+00> : vector<8x32xf32>
    %122 = tpu.matmul %114, %115, %cst_66 {dimension_numbers = #tpu.dot_dimension_numbers<[1], [0], [0], [1], [0, 0, 1, 1], [], []>} : vector<8x32xf32>, vector<32x32xf32>, vector<8x32xf32> -> vector<8x32xf32>
    %cst_67 = arith.constant 0.176776692 : f32
    %123 = vector.broadcast %cst_67 : f32 to vector<8x32xf32>
    %124 = arith.mulf %122, %123 : vector<8x32xf32>
    %cst_68 = arith.constant dense<0.000000e+00> : vector<8x32xf32>
    %125 = tpu.matmul %3, %116, %cst_68 {dimension_numbers = #tpu.dot_dimension_numbers<[1], [0], [0], [1], [0, 0, 1, 1], [], []>} : vector<8x32xf32>, vector<32x32xf32>, vector<8x32xf32> -> vector<8x32xf32>
    %cst_69 = arith.constant dense<0.000000e+00> : vector<8x32xf32>
    %126 = tpu.matmul %3, %117, %cst_69 {dimension_numbers = #tpu.dot_dimension_numbers<[1], [0], [0], [1], [0, 0, 1, 1], [], []>} : vector<8x32xf32>, vector<32x32xf32>, vector<8x32xf32> -> vector<8x32xf32>
    %127 = vector.extract_strided_slice %124 {offsets = [0, 0], sizes = [8, 8], strides = [1, 1]} : vector<8x32xf32> to vector<8x8xf32>
    %128 = vector.extract_strided_slice %125 {offsets = [0, 0], sizes = [8, 8], strides = [1, 1]} : vector<8x32xf32> to vector<8x8xf32>
    %129 = vector.extract_strided_slice %126 {offsets = [0, 0], sizes = [8, 8], strides = [1, 1]} : vector<8x32xf32> to vector<8x8xf32>
    %cst_70 = arith.constant dense<0.000000e+00> : vector<8x8xf32>
    %130 = tpu.matmul %127, %128, %cst_70 {dimension_numbers = #tpu.dot_dimension_numbers<[1], [1], [0], [0], [0, 0, 1, 0], [], []>} : vector<8x8xf32>, vector<8x8xf32>, vector<8x8xf32> -> vector<8x8xf32>
    %131 = arith.addf %130, %11 : vector<8x8xf32>
    %cst_71 = arith.constant dense<0xFF800000> : vector<8xf32>
    %132 = vector.multi_reduction <maximumf>, %131, %cst_71 [1] : vector<8x8xf32> to vector<8xf32>
    %133 = vector.shape_cast %132 : vector<8xf32> to vector<8x1xf32>
    %134 = vector.broadcast %133 : vector<8x1xf32> to vector<8x8xf32>
    %135 = arith.subf %131, %134 : vector<8x8xf32>
    %136 = math.exp %135 : vector<8x8xf32>
    %cst_72 = arith.constant dense<0.000000e+00> : vector<8xf32>
    %137 = vector.multi_reduction <add>, %136, %cst_72 [1] : vector<8x8xf32> to vector<8xf32>
    %138 = vector.shape_cast %137 : vector<8xf32> to vector<8x1xf32>
    %139 = tpu.reciprocal %138 {approx = true} : vector<8x1xf32> -> vector<8x1xf32>
    %140 = vector.broadcast %139 : vector<8x1xf32> to vector<8x8xf32>
    %141 = arith.mulf %136, %140 : vector<8x8xf32>
    %cst_73 = arith.constant dense<0.000000e+00> : vector<8x8xf32>
    %142 = tpu.matmul %141, %129, %cst_73 {dimension_numbers = #tpu.dot_dimension_numbers<[1], [0], [0], [1], [0, 0, 1, 1], [], []>} : vector<8x8xf32>, vector<8x8xf32>, vector<8x8xf32> -> vector<8x8xf32>
    %143 = vector.extract_strided_slice %124 {offsets = [0, 8], sizes = [8, 8], strides = [1, 1]} : vector<8x32xf32> to vector<8x8xf32>
    %144 = vector.extract_strided_slice %125 {offsets = [0, 8], sizes = [8, 8], strides = [1, 1]} : vector<8x32xf32> to vector<8x8xf32>
    %145 = vector.extract_strided_slice %126 {offsets = [0, 8], sizes = [8, 8], strides = [1, 1]} : vector<8x32xf32> to vector<8x8xf32>
    %cst_74 = arith.constant dense<0.000000e+00> : vector<8x8xf32>
    %146 = tpu.matmul %143, %144, %cst_74 {dimension_numbers = #tpu.dot_dimension_numbers<[1], [1], [0], [0], [0, 0, 1, 0], [], []>} : vector<8x8xf32>, vector<8x8xf32>, vector<8x8xf32> -> vector<8x8xf32>
    %147 = arith.addf %146, %11 : vector<8x8xf32>
    %cst_75 = arith.constant dense<0xFF800000> : vector<8xf32>
    %148 = vector.multi_reduction <maximumf>, %147, %cst_75 [1] : vector<8x8xf32> to vector<8xf32>
    %149 = vector.shape_cast %148 : vector<8xf32> to vector<8x1xf32>
    %150 = vector.broadcast %149 : vector<8x1xf32> to vector<8x8xf32>
    %151 = arith.subf %147, %150 : vector<8x8xf32>
    %152 = math.exp %151 : vector<8x8xf32>
    %cst_76 = arith.constant dense<0.000000e+00> : vector<8xf32>
    %153 = vector.multi_reduction <add>, %152, %cst_76 [1] : vector<8x8xf32> to vector<8xf32>
    %154 = vector.shape_cast %153 : vector<8xf32> to vector<8x1xf32>
    %155 = tpu.reciprocal %154 {approx = true} : vector<8x1xf32> -> vector<8x1xf32>
    %156 = vector.broadcast %155 : vector<8x1xf32> to vector<8x8xf32>
    %157 = arith.mulf %152, %156 : vector<8x8xf32>
    %cst_77 = arith.constant dense<0.000000e+00> : vector<8x8xf32>
    %158 = tpu.matmul %157, %145, %cst_77 {dimension_numbers = #tpu.dot_dimension_numbers<[1], [0], [0], [1], [0, 0, 1, 1], [], []>} : vector<8x8xf32>, vector<8x8xf32>, vector<8x8xf32> -> vector<8x8xf32>
    %159 = vector.extract_strided_slice %124 {offsets = [0, 16], sizes = [8, 8], strides = [1, 1]} : vector<8x32xf32> to vector<8x8xf32>
    %160 = vector.extract_strided_slice %125 {offsets = [0, 16], sizes = [8, 8], strides = [1, 1]} : vector<8x32xf32> to vector<8x8xf32>
    %161 = vector.extract_strided_slice %126 {offsets = [0, 16], sizes = [8, 8], strides = [1, 1]} : vector<8x32xf32> to vector<8x8xf32>
    %cst_78 = arith.constant dense<0.000000e+00> : vector<8x8xf32>
    %162 = tpu.matmul %159, %160, %cst_78 {dimension_numbers = #tpu.dot_dimension_numbers<[1], [1], [0], [0], [0, 0, 1, 0], [], []>} : vector<8x8xf32>, vector<8x8xf32>, vector<8x8xf32> -> vector<8x8xf32>
    %163 = arith.addf %162, %11 : vector<8x8xf32>
    %cst_79 = arith.constant dense<0xFF800000> : vector<8xf32>
    %164 = vector.multi_reduction <maximumf>, %163, %cst_79 [1] : vector<8x8xf32> to vector<8xf32>
    %165 = vector.shape_cast %164 : vector<8xf32> to vector<8x1xf32>
    %166 = vector.broadcast %165 : vector<8x1xf32> to vector<8x8xf32>
    %167 = arith.subf %163, %166 : vector<8x8xf32>
    %168 = math.exp %167 : vector<8x8xf32>
    %cst_80 = arith.constant dense<0.000000e+00> : vector<8xf32>
    %169 = vector.multi_reduction <add>, %168, %cst_80 [1] : vector<8x8xf32> to vector<8xf32>
    %170 = vector.shape_cast %169 : vector<8xf32> to vector<8x1xf32>
    %171 = tpu.reciprocal %170 {approx = true} : vector<8x1xf32> -> vector<8x1xf32>
    %172 = vector.broadcast %171 : vector<8x1xf32> to vector<8x8xf32>
    %173 = arith.mulf %168, %172 : vector<8x8xf32>
    %cst_81 = arith.constant dense<0.000000e+00> : vector<8x8xf32>
    %174 = tpu.matmul %173, %161, %cst_81 {dimension_numbers = #tpu.dot_dimension_numbers<[1], [0], [0], [1], [0, 0, 1, 1], [], []>} : vector<8x8xf32>, vector<8x8xf32>, vector<8x8xf32> -> vector<8x8xf32>
    %175 = vector.extract_strided_slice %124 {offsets = [0, 24], sizes = [8, 8], strides = [1, 1]} : vector<8x32xf32> to vector<8x8xf32>
    %176 = vector.extract_strided_slice %125 {offsets = [0, 24], sizes = [8, 8], strides = [1, 1]} : vector<8x32xf32> to vector<8x8xf32>
    %177 = vector.extract_strided_slice %126 {offsets = [0, 24], sizes = [8, 8], strides = [1, 1]} : vector<8x32xf32> to vector<8x8xf32>
    %cst_82 = arith.constant dense<0.000000e+00> : vector<8x8xf32>
    %178 = tpu.matmul %175, %176, %cst_82 {dimension_numbers = #tpu.dot_dimension_numbers<[1], [1], [0], [0], [0, 0, 1, 0], [], []>} : vector<8x8xf32>, vector<8x8xf32>, vector<8x8xf32> -> vector<8x8xf32>
    %179 = arith.addf %178, %11 : vector<8x8xf32>
    %cst_83 = arith.constant dense<0xFF800000> : vector<8xf32>
    %180 = vector.multi_reduction <maximumf>, %179, %cst_83 [1] : vector<8x8xf32> to vector<8xf32>
    %181 = vector.shape_cast %180 : vector<8xf32> to vector<8x1xf32>
    %182 = vector.broadcast %181 : vector<8x1xf32> to vector<8x8xf32>
    %183 = arith.subf %179, %182 : vector<8x8xf32>
    %184 = math.exp %183 : vector<8x8xf32>
    %cst_84 = arith.constant dense<0.000000e+00> : vector<8xf32>
    %185 = vector.multi_reduction <add>, %184, %cst_84 [1] : vector<8x8xf32> to vector<8xf32>
    %186 = vector.shape_cast %185 : vector<8xf32> to vector<8x1xf32>
    %187 = tpu.reciprocal %186 {approx = true} : vector<8x1xf32> -> vector<8x1xf32>
    %188 = vector.broadcast %187 : vector<8x1xf32> to vector<8x8xf32>
    %189 = arith.mulf %184, %188 : vector<8x8xf32>
    %cst_85 = arith.constant dense<0.000000e+00> : vector<8x8xf32>
    %190 = tpu.matmul %189, %177, %cst_85 {dimension_numbers = #tpu.dot_dimension_numbers<[1], [0], [0], [1], [0, 0, 1, 1], [], []>} : vector<8x8xf32>, vector<8x8xf32>, vector<8x8xf32> -> vector<8x8xf32>
    %191 = tpu.concatenate %142, %158, %174, %190 in 1 : vector<8x8xf32>, vector<8x8xf32>, vector<8x8xf32>, vector<8x8xf32> -> vector<8x32xf32>
    %cst_86 = arith.constant dense<0.000000e+00> : vector<8x32xf32>
    %192 = tpu.matmul %191, %118, %cst_86 {dimension_numbers = #tpu.dot_dimension_numbers<[1], [0], [0], [1], [0, 0, 1, 1], [], []>} : vector<8x32xf32>, vector<32x32xf32>, vector<8x32xf32> -> vector<8x32xf32>
    %193 = vector.broadcast %119 : vector<1x32xf32> to vector<8x32xf32>
    %194 = arith.addf %192, %193 : vector<8x32xf32>
    %195 = arith.addf %194, %114 : vector<8x32xf32>
    %cst_87 = arith.constant dense<0.000000e+00> : vector<8xf32>
    %196 = vector.multi_reduction <add>, %195, %cst_87 [1] : vector<8x32xf32> to vector<8xf32>
    %197 = vector.shape_cast %196 : vector<8xf32> to vector<8x1xf32>
    %cst_88 = arith.constant 3.200000e+01 : f32
    %198 = vector.broadcast %cst_88 : f32 to vector<8x1xf32>
    %199 = arith.divf %197, %198 : vector<8x1xf32>
    %200 = vector.broadcast %199 : vector<8x1xf32> to vector<8x32xf32>
    %201 = arith.subf %195, %200 : vector<8x32xf32>
    %202 = arith.mulf %201, %201 : vector<8x32xf32>
    %cst_89 = arith.constant dense<0.000000e+00> : vector<8xf32>
    %203 = vector.multi_reduction <add>, %202, %cst_89 [1] : vector<8x32xf32> to vector<8xf32>
    %204 = vector.shape_cast %203 : vector<8xf32> to vector<8x1xf32>
    %cst_90 = arith.constant 3.100000e+01 : f32
    %205 = vector.broadcast %cst_90 : f32 to vector<8x1xf32>
    %206 = arith.divf %204, %205 : vector<8x1xf32>
    %207 = math.sqrt %206 : vector<8x1xf32>
    %208 = vector.broadcast %199 : vector<8x1xf32> to vector<8x32xf32>
    %209 = arith.subf %195, %208 : vector<8x32xf32>
    %cst_91 = arith.constant 1.000000e-03 : f32
    %210 = vector.broadcast %cst_91 : f32 to vector<8x1xf32>
    %211 = arith.addf %207, %210 : vector<8x1xf32>
    %212 = vector.broadcast %211 : vector<8x1xf32> to vector<8x32xf32>
    %213 = arith.divf %209, %212 : vector<8x32xf32>
    %214 = vector.broadcast %120 : vector<1x32xf32> to vector<8x32xf32>
    %215 = arith.mulf %213, %214 : vector<8x32xf32>
    %216 = vector.broadcast %121 : vector<1x32xf32> to vector<8x32xf32>
    %217 = arith.addf %215, %216 : vector<8x32xf32>
    %c0_92 = arith.constant 0 : index
    %c0_93 = arith.constant 0 : index
    %218 = vector.load %arg19[%c0_92, %c0_93] : memref<32x64xf32, #tpu.memory_space<vmem>>, vector<32x64xf32>
    %cst_94 = arith.constant dense<0.000000e+00> : vector<8x64xf32>
    %219 = tpu.matmul %217, %218, %cst_94 {dimension_numbers = #tpu.dot_dimension_numbers<[1], [0], [0], [1], [0, 0, 1, 1], [], []>} : vector<8x32xf32>, vector<32x64xf32>, vector<8x64xf32> -> vector<8x64xf32>
    %c0_95 = arith.constant 0 : index
    %c0_96 = arith.constant 0 : index
    %220 = vector.load %arg20[%c0_95, %c0_96] : memref<1x64xf32, #tpu.memory_space<vmem>>, vector<1x64xf32>
    %221 = vector.broadcast %220 : vector<1x64xf32> to vector<8x64xf32>
    %222 = arith.addf %219, %221 : vector<8x64xf32>
    %cst_97 = arith.constant 0.000000e+00 : f32
    %223 = vector.broadcast %cst_97 : f32 to vector<8x64xf32>
    %224 = arith.maximumf %222, %223 : vector<8x64xf32>
    %c0_98 = arith.constant 0 : index
    %c0_99 = arith.constant 0 : index
    %225 = vector.load %arg21[%c0_98, %c0_99] : memref<64x32xf32, #tpu.memory_space<vmem>>, vector<64x32xf32>
    %cst_100 = arith.constant dense<0.000000e+00> : vector<8x32xf32>
    %226 = tpu.matmul %224, %225, %cst_100 {dimension_numbers = #tpu.dot_dimension_numbers<[1], [0], [0], [1], [0, 0, 1, 1], [], []>} : vector<8x64xf32>, vector<64x32xf32>, vector<8x32xf32> -> vector<8x32xf32>
    %c0_101 = arith.constant 0 : index
    %c0_102 = arith.constant 0 : index
    %227 = vector.load %arg22[%c0_101, %c0_102] : memref<1x32xf32, #tpu.memory_space<vmem>>, vector<1x32xf32>
    %228 = vector.broadcast %227 : vector<1x32xf32> to vector<8x32xf32>
    %229 = arith.addf %226, %228 : vector<8x32xf32>
    %230 = arith.addf %229, %217 : vector<8x32xf32>
    %c0_103 = arith.constant 0 : index
    %c0_104 = arith.constant 0 : index
    %231 = vector.load %arg23[%c0_103, %c0_104] : memref<1x32xf32, #tpu.memory_space<vmem>>, vector<1x32xf32>
    %c0_105 = arith.constant 0 : index
    %c0_106 = arith.constant 0 : index
    %232 = vector.load %arg24[%c0_105, %c0_106] : memref<1x32xf32, #tpu.memory_space<vmem>>, vector<1x32xf32>
    %cst_107 = arith.constant dense<0.000000e+00> : vector<8xf32>
    %233 = vector.multi_reduction <add>, %230, %cst_107 [1] : vector<8x32xf32> to vector<8xf32>
    %234 = vector.shape_cast %233 : vector<8xf32> to vector<8x1xf32>
    %cst_108 = arith.constant 3.200000e+01 : f32
    %235 = vector.broadcast %cst_108 : f32 to vector<8x1xf32>
    %236 = arith.divf %234, %235 : vector<8x1xf32>
    %237 = vector.broadcast %236 : vector<8x1xf32> to vector<8x32xf32>
    %238 = arith.subf %230, %237 : vector<8x32xf32>
    %239 = arith.mulf %238, %238 : vector<8x32xf32>
    %cst_109 = arith.constant dense<0.000000e+00> : vector<8xf32>
    %240 = vector.multi_reduction <add>, %239, %cst_109 [1] : vector<8x32xf32> to vector<8xf32>
    %241 = vector.shape_cast %240 : vector<8xf32> to vector<8x1xf32>
    %cst_110 = arith.constant 3.100000e+01 : f32
    %242 = vector.broadcast %cst_110 : f32 to vector<8x1xf32>
    %243 = arith.divf %241, %242 : vector<8x1xf32>
    %244 = math.sqrt %243 : vector<8x1xf32>
    %245 = vector.broadcast %236 : vector<8x1xf32> to vector<8x32xf32>
    %246 = arith.subf %230, %245 : vector<8x32xf32>
    %cst_111 = arith.constant 1.000000e-03 : f32
    %247 = vector.broadcast %cst_111 : f32 to vector<8x1xf32>
    %248 = arith.addf %244, %247 : vector<8x1xf32>
    %249 = vector.broadcast %248 : vector<8x1xf32> to vector<8x32xf32>
    %250 = arith.divf %246, %249 : vector<8x32xf32>
    %251 = vector.broadcast %231 : vector<1x32xf32> to vector<8x32xf32>
    %252 = arith.mulf %250, %251 : vector<8x32xf32>
    %253 = vector.broadcast %232 : vector<1x32xf32> to vector<8x32xf32>
    %254 = arith.addf %252, %253 : vector<8x32xf32>
    %255 = vector.shape_cast %254 : vector<8x32xf32> to vector<1x8x32xf32>
    %c0_112 = arith.constant 0 : index
    %c0_113 = arith.constant 0 : index
    %c0_114 = arith.constant 0 : index
    %256 = vector.load %arg25[%c0_112, %c0_113, %c0_114] : memref<1x8x32xf32, #tpu.memory_space<vmem>>, vector<1x8x32xf32>
    tpu.vector_store %arg25[%c0_112, %c0_113, %c0_114], %255 {strides = array<i32>} : memref<1x8x32xf32, #tpu.memory_space<vmem>>, vector<1x8x32xf32>,
    return
  }
  func.func @transform_0(%arg0: i32) -> (i32, i32, i32) {
    %c0_i32 = arith.constant 0 : i32
    %c0_i32_0 = arith.constant 0 : i32
    %c0_i32_1 = arith.constant 0 : i32
    return %arg0, %c0_i32, %c0_i32_0 : i32, i32, i32
  }
  func.func @transform_1(%arg0: i32) -> (i32, i32, i32) {
    %c0_i32 = arith.constant 0 : i32
    %c0_i32_0 = arith.constant 0 : i32
    %c0_i32_1 = arith.constant 0 : i32
    return %arg0, %c0_i32, %c0_i32_0 : i32, i32, i32
  }
  func.func @transform_2(%arg0: i32) -> (i32, i32, i32) {
    %c0_i32 = arith.constant 0 : i32
    %c0_i32_0 = arith.constant 0 : i32
    %c0_i32_1 = arith.constant 0 : i32
    return %arg0, %c0_i32, %c0_i32_0 : i32, i32, i32
  }
  func.func @transform_3(%arg0: i32) -> (i32, i32, i32) {
    %c0_i32 = arith.constant 0 : i32
    %c0_i32_0 = arith.constant 0 : i32
    %c0_i32_1 = arith.constant 0 : i32
    return %arg0, %c0_i32, %c0_i32_0 : i32, i32, i32
  }
  func.func @transform_4(%arg0: i32) -> (i32, i32) {
    %c0_i32 = arith.constant 0 : i32
    %c0_i32_0 = arith.constant 0 : i32
    %c0_i32_1 = arith.constant 0 : i32
    return %c0_i32, %c0_i32_0 : i32, i32
  }
  func.func @transform_5(%arg0: i32) -> (i32, i32) {
    %c0_i32 = arith.constant 0 : i32
    %c0_i32_0 = arith.constant 0 : i32
    %c0_i32_1 = arith.constant 0 : i32
    return %c0_i32, %c0_i32_0 : i32, i32
  }
  func.func @transform_6(%arg0: i32) -> (i32, i32) {
    %c0_i32 = arith.constant 0 : i32
    %c0_i32_0 = arith.constant 0 : i32
    %c0_i32_1 = arith.constant 0 : i32
    return %c0_i32, %c0_i32_0 : i32, i32
  }
  func.func @transform_7(%arg0: i32) -> (i32, i32) {
    %c0_i32 = arith.constant 0 : i32
    %c0_i32_0 = arith.constant 0 : i32
    %c0_i32_1 = arith.constant 0 : i32
    return %c0_i32, %c0_i32_0 : i32, i32
  }
  func.func @transform_8(%arg0: i32) -> (i32, i32) {
    %c0_i32 = arith.constant 0 : i32
    %c0_i32_0 = arith.constant 0 : i32
    %c0_i32_1 = arith.constant 0 : i32
    return %c0_i32, %c0_i32_0 : i32, i32
  }
  func.func @transform_9(%arg0: i32) -> (i32, i32) {
    %c0_i32 = arith.constant 0 : i32
    %c0_i32_0 = arith.constant 0 : i32
    %c0_i32_1 = arith.constant 0 : i32
    return %c0_i32, %c0_i32_0 : i32, i32
  }
  func.func @transform_10(%arg0: i32) -> (i32, i32) {
    %c0_i32 = arith.constant 0 : i32
    %c0_i32_0 = arith.constant 0 : i32
    %c0_i32_1 = arith.constant 0 : i32
    return %c0_i32, %c0_i32_0 : i32, i32
  }
  func.func @transform_11(%arg0: i32) -> (i32, i32) {
    %c0_i32 = arith.constant 0 : i32
    %c0_i32_0 = arith.constant 0 : i32
    %c0_i32_1 = arith.constant 0 : i32
    return %c0_i32, %c0_i32_0 : i32, i32
  }
  func.func @transform_12(%arg0: i32) -> (i32, i32) {
    %c0_i32 = arith.constant 0 : i32
    %c0_i32_0 = arith.constant 0 : i32
    %c0_i32_1 = arith.constant 0 : i32
    return %c0_i32, %c0_i32_0 : i32, i32
  }
  func.func @transform_13(%arg0: i32) -> (i32, i32) {
    %c0_i32 = arith.constant 0 : i32
    %c0_i32_0 = arith.constant 0 : i32
    %c0_i32_1 = arith.constant 0 : i32
    return %c0_i32, %c0_i32_0 : i32, i32
  }
  func.func @transform_14(%arg0: i32) -> (i32, i32) {
    %c0_i32 = arith.constant 0 : i32
    %c0_i32_0 = arith.constant 0 : i32
    %c0_i32_1 = arith.constant 0 : i32
    return %c0_i32, %c0_i32_0 : i32, i32
  }
  func.func @transform_15(%arg0: i32) -> (i32, i32) {
    %c0_i32 = arith.constant 0 : i32
    %c0_i32_0 = arith.constant 0 : i32
    %c0_i32_1 = arith.constant 0 : i32
    return %c0_i32, %c0_i32_0 : i32, i32
  }
  func.func @transform_16(%arg0: i32) -> (i32, i32) {
    %c0_i32 = arith.constant 0 : i32
    %c0_i32_0 = arith.constant 0 : i32
    %c0_i32_1 = arith.constant 0 : i32
    return %c0_i32, %c0_i32_0 : i32, i32
  }
  func.func @transform_17(%arg0: i32) -> (i32, i32) {
    %c0_i32 = arith.constant 0 : i32
    %c0_i32_0 = arith.constant 0 : i32
    %c0_i32_1 = arith.constant 0 : i32
    return %c0_i32, %c0_i32_0 : i32, i32
  }
  func.func @transform_18(%arg0: i32) -> (i32, i32) {
    %c0_i32 = arith.constant 0 : i32
    %c0_i32_0 = arith.constant 0 : i32
    %c0_i32_1 = arith.constant 0 : i32
    return %c0_i32, %c0_i32_0 : i32, i32
  }
  func.func @transform_19(%arg0: i32) -> (i32, i32) {
    %c0_i32 = arith.constant 0 : i32
    %c0_i32_0 = arith.constant 0 : i32
    %c0_i32_1 = arith.constant 0 : i32
    return %c0_i32, %c0_i32_0 : i32, i32
  }
  func.func @transform_20(%arg0: i32) -> (i32, i32) {
    %c0_i32 = arith.constant 0 : i32
    %c0_i32_0 = arith.constant 0 : i32
    %c0_i32_1 = arith.constant 0 : i32
    return %c0_i32, %c0_i32_0 : i32, i32
  }
  func.func @transform_21(%arg0: i32) -> (i32, i32) {
    %c0_i32 = arith.constant 0 : i32
    %c0_i32_0 = arith.constant 0 : i32
    %c0_i32_1 = arith.constant 0 : i32
    return %c0_i32, %c0_i32_0 : i32, i32
  }
  func.func @transform_22(%arg0: i32) -> (i32, i32) {
    %c0_i32 = arith.constant 0 : i32
    %c0_i32_0 = arith.constant 0 : i32
    %c0_i32_1 = arith.constant 0 : i32
    return %c0_i32, %c0_i32_0 : i32, i32
  }
  func.func @transform_23(%arg0: i32) -> (i32, i32) {
    %c0_i32 = arith.constant 0 : i32
    %c0_i32_0 = arith.constant 0 : i32
    %c0_i32_1 = arith.constant 0 : i32
    return %c0_i32, %c0_i32_0 : i32, i32
  }
  func.func @transform_24(%arg0: i32) -> (i32, i32, i32) {
    %c0_i32 = arith.constant 0 : i32
    %c0_i32_0 = arith.constant 0 : i32
    %c0_i32_1 = arith.constant 0 : i32
    return %arg0, %c0_i32, %c0_i32_0 : i32, i32, i32
  }
}

module attributes {stable_mosaic.version = 11 : i64} {
  func.func @_decoder_layer_kernel(%arg0: i32, %arg1: memref<1x8x32xf32, #tpu.memory_space<vmem>>, %arg2: memref<1x8x32xf32, #tpu.memory_space<vmem>>, %arg3: memref<1x8x8xf32, #tpu.memory_space<vmem>>, %arg4: memref<1x8x8xf32, #tpu.memory_space<vmem>>, %arg5: memref<32x32xf32, #tpu.memory_space<vmem>>, %arg6: memref<32x32xf32, #tpu.memory_space<vmem>>, %arg7: memref<32x32xf32, #tpu.memory_space<vmem>>, %arg8: memref<32x32xf32, #tpu.memory_space<vmem>>, %arg9: memref<1x32xf32, #tpu.memory_space<vmem>>, %arg10: memref<1x32xf32, #tpu.memory_space<vmem>>, %arg11: memref<1x32xf32, #tpu.memory_space<vmem>>, %arg12: memref<32x32xf32, #tpu.memory_space<vmem>>, %arg13: memref<32x32xf32, #tpu.memory_space<vmem>>, %arg14: memref<32x32xf32, #tpu.memory_space<vmem>>, %arg15: memref<32x32xf32, #tpu.memory_space<vmem>>, %arg16: memref<1x32xf32, #tpu.memory_space<vmem>>, %arg17: memref<1x32xf32, #tpu.memory_space<vmem>>, %arg18: memref<1x32xf32, #tpu.memory_space<vmem>>, %arg19: memref<32x64xf32, #tpu.memory_space<vmem>>, %arg20: memref<1x64xf32, #tpu.memory_space<vmem>>, %arg21: memref<64x32xf32, #tpu.memory_space<vmem>>, %arg22: memref<1x32xf32, #tpu.memory_space<vmem>>, %arg23: memref<1x32xf32, #tpu.memory_space<vmem>>, %arg24: memref<1x32xf32, #tpu.memory_space<vmem>>, %arg25: memref<1x8x32xf32, #tpu.memory_space<vmem>>) attributes {dimension_semantics = [#tpu.dimension_semantics<parallel>], iteration_bounds = array<i64: 2>, scalar_prefetch = 0 : i64, scratch_operands = 0 : i64, tpu.core_type = #tpu.core_type<tc>, window_params = [{transform_indices = @transform_0, window_bounds = array<i64: 1, 8, 32>}, {transform_indices = @transform_1, window_bounds = array<i64: 1, 8, 32>}, {transform_indices = @transform_2, window_bounds = array<i64: 1, 8, 8>}, {transform_indices = @transform_3, window_bounds = array<i64: 1, 8, 8>}, {pipeline_mode = #tpu.pipeline_mode<synchronous>, transform_indices = @transform_4, window_bounds = array<i64: 32, 32>}, {pipeline_mode = #tpu.pipeline_mode<synchronous>, transform_indices = @transform_5, window_bounds = array<i64: 32, 32>}, {pipeline_mode = #tpu.pipeline_mode<synchronous>, transform_indices = @transform_6, window_bounds = array<i64: 32, 32>}, {pipeline_mode = #tpu.pipeline_mode<synchronous>, transform_indices = @transform_7, window_bounds = array<i64: 32, 32>}, {pipeline_mode = #tpu.pipeline_mode<synchronous>, transform_indices = @transform_8, window_bounds = array<i64: 1, 32>}, {pipeline_mode = #tpu.pipeline_mode<synchronous>, transform_indices = @transform_9, window_bounds = array<i64: 1, 32>}, {pipeline_mode = #tpu.pipeline_mode<synchronous>, transform_indices = @transform_10, window_bounds = array<i64: 1, 32>}, {pipeline_mode = #tpu.pipeline_mode<synchronous>, transform_indices = @transform_11, window_bounds = array<i64: 32, 32>}, {pipeline_mode = #tpu.pipeline_mode<synchronous>, transform_indices = @transform_12, window_bounds = array<i64: 32, 32>}, {pipeline_mode = #tpu.pipeline_mode<synchronous>, transform_indices = @transform_13, window_bounds = array<i64: 32, 32>}, {pipeline_mode = #tpu.pipeline_mode<synchronous>, transform_indices = @transform_14, window_bounds = array<i64: 32, 32>}, {pipeline_mode = #tpu.pipeline_mode<synchronous>, transform_indices = @transform_15, window_bounds = array<i64: 1, 32>}, {pipeline_mode = #tpu.pipeline_mode<synchronous>, transform_indices = @transform_16, window_bounds = array<i64: 1, 32>}, {pipeline_mode = #tpu.pipeline_mode<synchronous>, transform_indices = @transform_17, window_bounds = array<i64: 1, 32>}, {pipeline_mode = #tpu.pipeline_mode<synchronous>, transform_indices = @transform_18, window_bounds = array<i64: 32, 64>}, {pipeline_mode = #tpu.pipeline_mode<synchronous>, transform_indices = @transform_19, window_bounds = array<i64: 1, 64>}, {pipeline_mode = #tpu.pipeline_mode<synchronous>, transform_indices = @transform_20, window_bounds = array<i64: 64, 32>}, {pipeline_mode = #tpu.pipeline_mode<synchronous>, transform_indices = @transform_21, window_bounds = array<i64: 1, 32>}, {pipeline_mode = #tpu.pipeline_mode<synchronous>, transform_indices = @transform_22, window_bounds = array<i64: 1, 32>}, {pipeline_mode = #tpu.pipeline_mode<synchronous>, transform_indices = @transform_23, window_bounds = array<i64: 1, 32>}, {transform_indices = @transform_24, window_bounds = array<i64: 1, 8, 32>}]} {
    %c0 = arith.constant 0 : index
    %c0_0 = arith.constant 0 : index
    %c0_1 = arith.constant 0 : index
    %0 = vector.load %arg1[%c0, %c0_0, %c0_1] : memref<1x8x32xf32, #tpu.memory_space<vmem>>, vector<1x8x32xf32>
    %1 = vector.shape_cast %0 : vector<1x8x32xf32> to vector<8x32xf32>
    %c0_2 = arith.constant 0 : index
    %c0_3 = arith.constant 0 : index
    %c0_4 = arith.constant 0 : index
    %2 = vector.load %arg2[%c0_2, %c0_3, %c0_4] : memref<1x8x32xf32, #tpu.memory_space<vmem>>, vector<1x8x32xf32>
    %3 = vector.shape_cast %2 : vector<1x8x32xf32> to vector<8x32xf32>
    %c0_5 = arith.constant 0 : index
    %c0_6 = arith.constant 0 : index
    %c0_7 = arith.constant 0 : index
    %4 = vector.load %arg3[%c0_5, %c0_6, %c0_7] : memref<1x8x8xf32, #tpu.memory_space<vmem>>, vector<1x8x8xf32>
    %5 = vector.shape_cast %4 : vector<1x8x8xf32> to vector<8x8xf32>
    %cst = arith.constant -1.000000e+09 : f32
    %6 = vector.broadcast %cst : f32 to vector<8x8xf32>
    %7 = arith.mulf %5, %6 : vector<8x8xf32>
    %c0_8 = arith.constant 0 : index
    %c0_9 = arith.constant 0 : index
    %c0_10 = arith.constant 0 : index
    %8 = vector.load %arg4[%c0_8, %c0_9, %c0_10] : memref<1x8x8xf32, #tpu.memory_space<vmem>>, vector<1x8x8xf32>
    %9 = vector.shape_cast %8 : vector<1x8x8xf32> to vector<8x8xf32>
    %cst_11 = arith.constant -1.000000e+09 : f32
    %10 = vector.broadcast %cst_11 : f32 to vector<8x8xf32>
    %11 = arith.mulf %9, %10 : vector<8x8xf32>
    %c0_12 = arith.constant 0 : index
    %c0_13 = arith.constant 0 : index
    %12 = vector.load %arg5[%c0_12, %c0_13] : memref<32x32xf32, #tpu.memory_space<vmem>>, vector<32x32xf32>
    %c0_14 = arith.constant 0 : index
    %c0_15 = arith.constant 0 : index
    %13 = vector.load %arg6[%c0_14, %c0_15] : memref<32x32xf32, #tpu.memory_space<vmem>>, vector<32x32xf32>
    %c0_16 = arith.constant 0 : index
    %c0_17 = arith.constant 0 : index
    %14 = vector.load %arg7[%c0_16, %c0_17] : memref<32x32xf32, #tpu.memory_space<vmem>>, vector<32x32xf32>
    %c0_18 = arith.constant 0 : index
    %c0_19 = arith.constant 0 : index
    %15 = vector.load %arg8[%c0_18, %c0_19] : memref<32x32xf32, #tpu.memory_space<vmem>>, vector<32x32xf32>
    %c0_20 = arith.constant 0 : index
    %c0_21 = arith.constant 0 : index
    %16 = vector.load %arg9[%c0_20, %c0_21] : memref<1x32xf32, #tpu.memory_space<vmem>>, vector<1x32xf32>
    %c0_22 = arith.constant 0 : index
    %c0_23 = arith.constant 0 : index
    %17 = vector.load %arg10[%c0_22, %c0_23] : memref<1x32xf32, #tpu.memory_space<vmem>>, vector<1x32xf32>
    %c0_24 = arith.constant 0 : index
    %c0_25 = arith.constant 0 : index
    %18 = vector.load %arg11[%c0_24, %c0_25] : memref<1x32xf32, #tpu.memory_space<vmem>>, vector<1x32xf32>
    %cst_26 = arith.constant dense<0.000000e+00> : vector<8x32xf32>
    %19 = tpu.matmul %1, %12, %cst_26 {dimension_numbers = #tpu.dot_dimension_numbers<[1], [0], [0], [1], [0, 0, 1, 1], [], []>} : vector<8x32xf32>, vector<32x32xf32>, vector<8x32xf32> -> vector<8x32xf32>
    %cst_27 = arith.constant 0.176776692 : f32
    %20 = vector.broadcast %cst_27 : f32 to vector<8x32xf32>
    %21 = arith.mulf %19, %20 : vector<8x32xf32>
    %cst_28 = arith.constant dense<0.000000e+00> : vector<8x32xf32>
    %22 = tpu.matmul %1, %13, %cst_28 {dimension_numbers = #tpu.dot_dimension_numbers<[1], [0], [0], [1], [0, 0, 1, 1], [], []>} : vector<8x32xf32>, vector<32x32xf32>, vector<8x32xf32> -> vector<8x32xf32>
    %cst_29 = arith.constant dense<0.000000e+00> : vector<8x32xf32>
    %23 = tpu.matmul %1, %14, %cst_29 {dimension_numbers = #tpu.dot_dimension_numbers<[1], [0], [0], [1], [0, 0, 1, 1], [], []>} : vector<8x32xf32>, vector<32x32xf32>, vector<8x32xf32> -> vector<8x32xf32>
    %24 = vector.extract_strided_slice %21 {offsets = [0, 0], sizes = [8, 8], strides = [1, 1]} : vector<8x32xf32> to vector<8x8xf32>
    %25 = vector.extract_strided_slice %22 {offsets = [0, 0], sizes = [8, 8], strides = [1, 1]} : vector<8x32xf32> to vector<8x8xf32>
    %26 = vector.extract_strided_slice %23 {offsets = [0, 0], sizes = [8, 8], strides = [1, 1]} : vector<8x32xf32> to vector<8x8xf32>
    %cst_30 = arith.constant dense<0.000000e+00> : vector<8x8xf32>
    %27 = tpu.matmul %24, %25, %cst_30 {dimension_numbers = #tpu.dot_dimension_numbers<[1], [1], [0], [0], [0, 0, 1, 0], [], []>} : vector<8x8xf32>, vector<8x8xf32>, vector<8x8xf32> -> vector<8x8xf32>
    %28 = arith.addf %27, %7 : vector<8x8xf32>
    %cst_31 = arith.constant dense<0xFF800000> : vector<8xf32>
    %29 = vector.multi_reduction <maximumf>, %28, %cst_31 [1] : vector<8x8xf32> to vector<8xf32>
    %30 = vector.shape_cast %29 : vector<8xf32> to vector<8x1xf32>
    %31 = vector.broadcast %30 : vector<8x1xf32> to vector<8x8xf32>
    %32 = arith.subf %28, %31 : vector<8x8xf32>
    %33 = math.exp %32 : vector<8x8xf32>
    %cst_32 = arith.constant dense<0.000000e+00> : vector<8xf32>
    %34 = vector.multi_reduction <add>, %33, %cst_32 [1] : vector<8x8xf32> to vector<8xf32>
    %35 = vector.shape_cast %34 : vector<8xf32> to vector<8x1xf32>
    %36 = tpu.reciprocal %35 {approx = true} : vector<8x1xf32> -> vector<8x1xf32>
    %37 = vector.broadcast %36 : vector<8x1xf32> to vector<8x8xf32>
    %38 = arith.mulf %33, %37 : vector<8x8xf32>
    %cst_33 = arith.constant dense<0.000000e+00> : vector<8x8xf32>
    %39 = tpu.matmul %38, %26, %cst_33 {dimension_numbers = #tpu.dot_dimension_numbers<[1], [0], [0], [1], [0, 0, 1, 1], [], []>} : vector<8x8xf32>, vector<8x8xf32>, vector<8x8xf32> -> vector<8x8xf32>
    %40 = vector.extract_strided_slice %21 {offsets = [0, 8], sizes = [8, 8], strides = [1, 1]} : vector<8x32xf32> to vector<8x8xf32>
    %41 = vector.extract_strided_slice %22 {offsets = [0, 8], sizes = [8, 8], strides = [1, 1]} : vector<8x32xf32> to vector<8x8xf32>
    %42 = vector.extract_strided_slice %23 {offsets = [0, 8], sizes = [8, 8], strides = [1, 1]} : vector<8x32xf32> to vector<8x8xf32>
    %cst_34 = arith.constant dense<0.000000e+00> : vector<8x8xf32>
    %43 = tpu.matmul %40, %41, %cst_34 {dimension_numbers = #tpu.dot_dimension_numbers<[1], [1], [0], [0], [0, 0, 1, 0], [], []>} : vector<8x8xf32>, vector<8x8xf32>, vector<8x8xf32> -> vector<8x8xf32>
    %44 = arith.addf %43, %7 : vector<8x8xf32>
    %cst_35 = arith.constant dense<0xFF800000> : vector<8xf32>
    %45 = vector.multi_reduction <maximumf>, %44, %cst_35 [1] : vector<8x8xf32> to vector<8xf32>
    %46 = vector.shape_cast %45 : vector<8xf32> to vector<8x1xf32>
    %47 = vector.broadcast %46 : vector<8x1xf32> to vector<8x8xf32>
    %48 = arith.subf %44, %47 : vector<8x8xf32>
    %49 = math.exp %48 : vector<8x8xf32>
    %cst_36 = arith.constant dense<0.000000e+00> : vector<8xf32>
    %50 = vector.multi_reduction <add>, %49, %cst_36 [1] : vector<8x8xf32> to vector<8xf32>
    %51 = vector.shape_cast %50 : vector<8xf32> to vector<8x1xf32>
    %52 = tpu.reciprocal %51 {approx = true} : vector<8x1xf32> -> vector<8x1xf32>
    %53 = vector.broadcast %52 : vector<8x1xf32> to vector<8x8xf32>
    %54 = arith.mulf %49, %53 : vector<8x8xf32>
    %cst_37 = arith.constant dense<0.000000e+00> : vector<8x8xf32>
    %55 = tpu.matmul %54, %42, %cst_37 {dimension_numbers = #tpu.dot_dimension_numbers<[1], [0], [0], [1], [0, 0, 1, 1], [], []>} : vector<8x8xf32>, vector<8x8xf32>, vector<8x8xf32> -> vector<8x8xf32>
    %56 = vector.extract_strided_slice %21 {offsets = [0, 16], sizes = [8, 8], strides = [1, 1]} : vector<8x32xf32> to vector<8x8xf32>
    %57 = vector.extract_strided_slice %22 {offsets = [0, 16], sizes = [8, 8], strides = [1, 1]} : vector<8x32xf32> to vector<8x8xf32>
    %58 = vector.extract_strided_slice %23 {offsets = [0, 16], sizes = [8, 8], strides = [1, 1]} : vector<8x32xf32> to vector<8x8xf32>
    %cst_38 = arith.constant dense<0.000000e+00> : vector<8x8xf32>
    %59 = tpu.matmul %56, %57, %cst_38 {dimension_numbers = #tpu.dot_dimension_numbers<[1], [1], [0], [0], [0, 0, 1, 0], [], []>} : vector<8x8xf32>, vector<8x8xf32>, vector<8x8xf32> -> vector<8x8xf32>
    %60 = arith.addf %59, %7 : vector<8x8xf32>
    %cst_39 = arith.constant dense<0xFF800000> : vector<8xf32>
    %61 = vector.multi_reduction <maximumf>, %60, %cst_39 [1] : vector<8x8xf32> to vector<8xf32>
    %62 = vector.shape_cast %61 : vector<8xf32> to vector<8x1xf32>
    %63 = vector.broadcast %62 : vector<8x1xf32> to vector<8x8xf32>
    %64 = arith.subf %60, %63 : vector<8x8xf32>
    %65 = math.exp %64 : vector<8x8xf32>
    %cst_40 = arith.constant dense<0.000000e+00> : vector<8xf32>
    %66 = vector.multi_reduction <add>, %65, %cst_40 [1] : vector<8x8xf32> to vector<8xf32>
    %67 = vector.shape_cast %66 : vector<8xf32> to vector<8x1xf32>
    %68 = tpu.reciprocal %67 {approx = true} : vector<8x1xf32> -> vector<8x1xf32>
    %69 = vector.broadcast %68 : vector<8x1xf32> to vector<8x8xf32>
    %70 = arith.mulf %65, %69 : vector<8x8xf32>
    %cst_41 = arith.constant dense<0.000000e+00> : vector<8x8xf32>
    %71 = tpu.matmul %70, %58, %cst_41 {dimension_numbers = #tpu.dot_dimension_numbers<[1], [0], [0], [1], [0, 0, 1, 1], [], []>} : vector<8x8xf32>, vector<8x8xf32>, vector<8x8xf32> -> vector<8x8xf32>
    %72 = vector.extract_strided_slice %21 {offsets = [0, 24], sizes = [8, 8], strides = [1, 1]} : vector<8x32xf32> to vector<8x8xf32>
    %73 = vector.extract_strided_slice %22 {offsets = [0, 24], sizes = [8, 8], strides = [1, 1]} : vector<8x32xf32> to vector<8x8xf32>
    %74 = vector.extract_strided_slice %23 {offsets = [0, 24], sizes = [8, 8], strides = [1, 1]} : vector<8x32xf32> to vector<8x8xf32>
    %cst_42 = arith.constant dense<0.000000e+00> : vector<8x8xf32>
    %75 = tpu.matmul %72, %73, %cst_42 {dimension_numbers = #tpu.dot_dimension_numbers<[1], [1], [0], [0], [0, 0, 1, 0], [], []>} : vector<8x8xf32>, vector<8x8xf32>, vector<8x8xf32> -> vector<8x8xf32>
    %76 = arith.addf %75, %7 : vector<8x8xf32>
    %cst_43 = arith.constant dense<0xFF800000> : vector<8xf32>
    %77 = vector.multi_reduction <maximumf>, %76, %cst_43 [1] : vector<8x8xf32> to vector<8xf32>
    %78 = vector.shape_cast %77 : vector<8xf32> to vector<8x1xf32>
    %79 = vector.broadcast %78 : vector<8x1xf32> to vector<8x8xf32>
    %80 = arith.subf %76, %79 : vector<8x8xf32>
    %81 = math.exp %80 : vector<8x8xf32>
    %cst_44 = arith.constant dense<0.000000e+00> : vector<8xf32>
    %82 = vector.multi_reduction <add>, %81, %cst_44 [1] : vector<8x8xf32> to vector<8xf32>
    %83 = vector.shape_cast %82 : vector<8xf32> to vector<8x1xf32>
    %84 = tpu.reciprocal %83 {approx = true} : vector<8x1xf32> -> vector<8x1xf32>
    %85 = vector.broadcast %84 : vector<8x1xf32> to vector<8x8xf32>
    %86 = arith.mulf %81, %85 : vector<8x8xf32>
    %cst_45 = arith.constant dense<0.000000e+00> : vector<8x8xf32>
    %87 = tpu.matmul %86, %74, %cst_45 {dimension_numbers = #tpu.dot_dimension_numbers<[1], [0], [0], [1], [0, 0, 1, 1], [], []>} : vector<8x8xf32>, vector<8x8xf32>, vector<8x8xf32> -> vector<8x8xf32>
    %88 = tpu.concatenate %39, %55, %71, %87 in 1 : vector<8x8xf32>, vector<8x8xf32>, vector<8x8xf32>, vector<8x8xf32> -> vector<8x32xf32>
    %cst_46 = arith.constant dense<0.000000e+00> : vector<8x32xf32>
    %89 = tpu.matmul %88, %15, %cst_46 {dimension_numbers = #tpu.dot_dimension_numbers<[1], [0], [0], [1], [0, 0, 1, 1], [], []>} : vector<8x32xf32>, vector<32x32xf32>, vector<8x32xf32> -> vector<8x32xf32>
    %90 = vector.broadcast %16 : vector<1x32xf32> to vector<8x32xf32>
    %91 = arith.addf %89, %90 : vector<8x32xf32>
    %92 = arith.addf %91, %1 : vector<8x32xf32>
    %cst_47 = arith.constant dense<0.000000e+00> : vector<8xf32>
    %93 = vector.multi_reduction <add>, %92, %cst_47 [1] : vector<8x32xf32> to vector<8xf32>
    %94 = vector.shape_cast %93 : vector<8xf32> to vector<8x1xf32>
    %cst_48 = arith.constant 3.200000e+01 : f32
    %95 = vector.broadcast %cst_48 : f32 to vector<8x1xf32>
    %96 = arith.divf %94, %95 : vector<8x1xf32>
    %97 = vector.broadcast %96 : vector<8x1xf32> to vector<8x32xf32>
    %98 = arith.subf %92, %97 : vector<8x32xf32>
    %99 = arith.mulf %98, %98 : vector<8x32xf32>
    %cst_49 = arith.constant dense<0.000000e+00> : vector<8xf32>
    %100 = vector.multi_reduction <add>, %99, %cst_49 [1] : vector<8x32xf32> to vector<8xf32>
    %101 = vector.shape_cast %100 : vector<8xf32> to vector<8x1xf32>
    %cst_50 = arith.constant 3.100000e+01 : f32
    %102 = vector.broadcast %cst_50 : f32 to vector<8x1xf32>
    %103 = arith.divf %101, %102 : vector<8x1xf32>
    %104 = math.sqrt %103 : vector<8x1xf32>
    %105 = vector.broadcast %96 : vector<8x1xf32> to vector<8x32xf32>
    %106 = arith.subf %92, %105 : vector<8x32xf32>
    %cst_51 = arith.constant 1.000000e-03 : f32
    %107 = vector.broadcast %cst_51 : f32 to vector<8x1xf32>
    %108 = arith.addf %104, %107 : vector<8x1xf32>
    %109 = vector.broadcast %108 : vector<8x1xf32> to vector<8x32xf32>
    %110 = arith.divf %106, %109 : vector<8x32xf32>
    %111 = vector.broadcast %17 : vector<1x32xf32> to vector<8x32xf32>
    %112 = arith.mulf %110, %111 : vector<8x32xf32>
    %113 = vector.broadcast %18 : vector<1x32xf32> to vector<8x32xf32>
    %114 = arith.addf %112, %113 : vector<8x32xf32>
    %c0_52 = arith.constant 0 : index
    %c0_53 = arith.constant 0 : index
    %115 = vector.load %arg12[%c0_52, %c0_53] : memref<32x32xf32, #tpu.memory_space<vmem>>, vector<32x32xf32>
    %c0_54 = arith.constant 0 : index
    %c0_55 = arith.constant 0 : index
    %116 = vector.load %arg13[%c0_54, %c0_55] : memref<32x32xf32, #tpu.memory_space<vmem>>, vector<32x32xf32>
    %c0_56 = arith.constant 0 : index
    %c0_57 = arith.constant 0 : index
    %117 = vector.load %arg14[%c0_56, %c0_57] : memref<32x32xf32, #tpu.memory_space<vmem>>, vector<32x32xf32>
    %c0_58 = arith.constant 0 : index
    %c0_59 = arith.constant 0 : index
    %118 = vector.load %arg15[%c0_58, %c0_59] : memref<32x32xf32, #tpu.memory_space<vmem>>, vector<32x32xf32>
    %c0_60 = arith.constant 0 : index
    %c0_61 = arith.constant 0 : index
    %119 = vector.load %arg16[%c0_60, %c0_61] : memref<1x32xf32, #tpu.memory_space<vmem>>, vector<1x32xf32>
    %c0_62 = arith.constant 0 : index
    %c0_63 = arith.constant 0 : index
    %120 = vector.load %arg17[%c0_62, %c0_63] : memref<1x32xf32, #tpu.memory_space<vmem>>, vector<1x32xf32>
    %c0_64 = arith.constant 0 : index
    %c0_65 = arith.constant 0 : index
    %121 = vector.load %arg18[%c0_64, %c0_65] : memref<1x32xf32, #tpu.memory_space<vmem>>, vector<1x32xf32>
    %cst_66 = arith.constant dense<0.000000e+00> : vector<8x32xf32>
    %122 = tpu.matmul %114, %115, %cst_66 {dimension_numbers = #tpu.dot_dimension_numbers<[1], [0], [0], [1], [0, 0, 1, 1], [], []>} : vector<8x32xf32>, vector<32x32xf32>, vector<8x32xf32> -> vector<8x32xf32>
    %cst_67 = arith.constant 0.176776692 : f32
    %123 = vector.broadcast %cst_67 : f32 to vector<8x32xf32>
    %124 = arith.mulf %122, %123 : vector<8x32xf32>
    %cst_68 = arith.constant dense<0.000000e+00> : vector<8x32xf32>
    %125 = tpu.matmul %3, %116, %cst_68 {dimension_numbers = #tpu.dot_dimension_numbers<[1], [0], [0], [1], [0, 0, 1, 1], [], []>} : vector<8x32xf32>, vector<32x32xf32>, vector<8x32xf32> -> vector<8x32xf32>
    %cst_69 = arith.constant dense<0.000000e+00> : vector<8x32xf32>
    %126 = tpu.matmul %3, %117, %cst_69 {dimension_numbers = #tpu.dot_dimension_numbers<[1], [0], [0], [1], [0, 0, 1, 1], [], []>} : vector<8x32xf32>, vector<32x32xf32>, vector<8x32xf32> -> vector<8x32xf32>
    %127 = vector.extract_strided_slice %124 {offsets = [0, 0], sizes = [8, 8], strides = [1, 1]} : vector<8x32xf32> to vector<8x8xf32>
    %128 = vector.extract_strided_slice %125 {offsets = [0, 0], sizes = [8, 8], strides = [1, 1]} : vector<8x32xf32> to vector<8x8xf32>
    %129 = vector.extract_strided_slice %126 {offsets = [0, 0], sizes = [8, 8], strides = [1, 1]} : vector<8x32xf32> to vector<8x8xf32>
    %cst_70 = arith.constant dense<0.000000e+00> : vector<8x8xf32>
    %130 = tpu.matmul %127, %128, %cst_70 {dimension_numbers = #tpu.dot_dimension_numbers<[1], [1], [0], [0], [0, 0, 1, 0], [], []>} : vector<8x8xf32>, vector<8x8xf32>, vector<8x8xf32> -> vector<8x8xf32>
    %131 = arith.addf %130, %11 : vector<8x8xf32>
    %cst_71 = arith.constant dense<0xFF800000> : vector<8xf32>
    %132 = vector.multi_reduction <maximumf>, %131, %cst_71 [1] : vector<8x8xf32> to vector<8xf32>
    %133 = vector.shape_cast %132 : vector<8xf32> to vector<8x1xf32>
    %134 = vector.broadcast %133 : vector<8x1xf32> to vector<8x8xf32>
    %135 = arith.subf %131, %134 : vector<8x8xf32>
    %136 = math.exp %135 : vector<8x8xf32>
    %cst_72 = arith.constant dense<0.000000e+00> : vector<8xf32>
    %137 = vector.multi_reduction <add>, %136, %cst_72 [1] : vector<8x8xf32> to vector<8xf32>
    %138 = vector.shape_cast %137 : vector<8xf32> to vector<8x1xf32>
    %139 = tpu.reciprocal %138 {approx = true} : vector<8x1xf32> -> vector<8x1xf32>
    %140 = vector.broadcast %139 : vector<8x1xf32> to vector<8x8xf32>
    %141 = arith.mulf %136, %140 : vector<8x8xf32>
    %cst_73 = arith.constant dense<0.000000e+00> : vector<8x8xf32>
    %142 = tpu.matmul %141, %129, %cst_73 {dimension_numbers = #tpu.dot_dimension_numbers<[1], [0], [0], [1], [0, 0, 1, 1], [], []>} : vector<8x8xf32>, vector<8x8xf32>, vector<8x8xf32> -> vector<8x8xf32>
    %143 = vector.extract_strided_slice %124 {offsets = [0, 8], sizes = [8, 8], strides = [1, 1]} : vector<8x32xf32> to vector<8x8xf32>
    %144 = vector.extract_strided_slice %125 {offsets = [0, 8], sizes = [8, 8], strides = [1, 1]} : vector<8x32xf32> to vector<8x8xf32>
    %145 = vector.extract_strided_slice %126 {offsets = [0, 8], sizes = [8, 8], strides = [1, 1]} : vector<8x32xf32> to vector<8x8xf32>
    %cst_74 = arith.constant dense<0.000000e+00> : vector<8x8xf32>
    %146 = tpu.matmul %143, %144, %cst_74 {dimension_numbers = #tpu.dot_dimension_numbers<[1], [1], [0], [0], [0, 0, 1, 0], [], []>} : vector<8x8xf32>, vector<8x8xf32>, vector<8x8xf32> -> vector<8x8xf32>
    %147 = arith.addf %146, %11 : vector<8x8xf32>
    %cst_75 = arith.constant dense<0xFF800000> : vector<8xf32>
    %148 = vector.multi_reduction <maximumf>, %147, %cst_75 [1] : vector<8x8xf32> to vector<8xf32>
    %149 = vector.shape_cast %148 : vector<8xf32> to vector<8x1xf32>
    %150 = vector.broadcast %149 : vector<8x1xf32> to vector<8x8xf32>
    %151 = arith.subf %147, %150 : vector<8x8xf32>
    %152 = math.exp %151 : vector<8x8xf32>
    %cst_76 = arith.constant dense<0.000000e+00> : vector<8xf32>
    %153 = vector.multi_reduction <add>, %152, %cst_76 [1] : vector<8x8xf32> to vector<8xf32>
    %154 = vector.shape_cast %153 : vector<8xf32> to vector<8x1xf32>
    %155 = tpu.reciprocal %154 {approx = true} : vector<8x1xf32> -> vector<8x1xf32>
    %156 = vector.broadcast %155 : vector<8x1xf32> to vector<8x8xf32>
    %157 = arith.mulf %152, %156 : vector<8x8xf32>
    %cst_77 = arith.constant dense<0.000000e+00> : vector<8x8xf32>
    %158 = tpu.matmul %157, %145, %cst_77 {dimension_numbers = #tpu.dot_dimension_numbers<[1], [0], [0], [1], [0, 0, 1, 1], [], []>} : vector<8x8xf32>, vector<8x8xf32>, vector<8x8xf32> -> vector<8x8xf32>
    %159 = vector.extract_strided_slice %124 {offsets = [0, 16], sizes = [8, 8], strides = [1, 1]} : vector<8x32xf32> to vector<8x8xf32>
    %160 = vector.extract_strided_slice %125 {offsets = [0, 16], sizes = [8, 8], strides = [1, 1]} : vector<8x32xf32> to vector<8x8xf32>
    %161 = vector.extract_strided_slice %126 {offsets = [0, 16], sizes = [8, 8], strides = [1, 1]} : vector<8x32xf32> to vector<8x8xf32>
    %cst_78 = arith.constant dense<0.000000e+00> : vector<8x8xf32>
    %162 = tpu.matmul %159, %160, %cst_78 {dimension_numbers = #tpu.dot_dimension_numbers<[1], [1], [0], [0], [0, 0, 1, 0], [], []>} : vector<8x8xf32>, vector<8x8xf32>, vector<8x8xf32> -> vector<8x8xf32>
    %163 = arith.addf %162, %11 : vector<8x8xf32>
    %cst_79 = arith.constant dense<0xFF800000> : vector<8xf32>
    %164 = vector.multi_reduction <maximumf>, %163, %cst_79 [1] : vector<8x8xf32> to vector<8xf32>
    %165 = vector.shape_cast %164 : vector<8xf32> to vector<8x1xf32>
    %166 = vector.broadcast %165 : vector<8x1xf32> to vector<8x8xf32>
    %167 = arith.subf %163, %166 : vector<8x8xf32>
    %168 = math.exp %167 : vector<8x8xf32>
    %cst_80 = arith.constant dense<0.000000e+00> : vector<8xf32>
    %169 = vector.multi_reduction <add>, %168, %cst_80 [1] : vector<8x8xf32> to vector<8xf32>
    %170 = vector.shape_cast %169 : vector<8xf32> to vector<8x1xf32>
    %171 = tpu.reciprocal %170 {approx = true} : vector<8x1xf32> -> vector<8x1xf32>
    %172 = vector.broadcast %171 : vector<8x1xf32> to vector<8x8xf32>
    %173 = arith.mulf %168, %172 : vector<8x8xf32>
    %cst_81 = arith.constant dense<0.000000e+00> : vector<8x8xf32>
    %174 = tpu.matmul %173, %161, %cst_81 {dimension_numbers = #tpu.dot_dimension_numbers<[1], [0], [0], [1], [0, 0, 1, 1], [], []>} : vector<8x8xf32>, vector<8x8xf32>, vector<8x8xf32> -> vector<8x8xf32>
    %175 = vector.extract_strided_slice %124 {offsets = [0, 24], sizes = [8, 8], strides = [1, 1]} : vector<8x32xf32> to vector<8x8xf32>
    %176 = vector.extract_strided_slice %125 {offsets = [0, 24], sizes = [8, 8], strides = [1, 1]} : vector<8x32xf32> to vector<8x8xf32>
    %177 = vector.extract_strided_slice %126 {offsets = [0, 24], sizes = [8, 8], strides = [1, 1]} : vector<8x32xf32> to vector<8x8xf32>
    %cst_82 = arith.constant dense<0.000000e+00> : vector<8x8xf32>
    %178 = tpu.matmul %175, %176, %cst_82 {dimension_numbers = #tpu.dot_dimension_numbers<[1], [1], [0], [0], [0, 0, 1, 0], [], []>} : vector<8x8xf32>, vector<8x8xf32>, vector<8x8xf32> -> vector<8x8xf32>
    %179 = arith.addf %178, %11 : vector<8x8xf32>
    %cst_83 = arith.constant dense<0xFF800000> : vector<8xf32>
    %180 = vector.multi_reduction <maximumf>, %179, %cst_83 [1] : vector<8x8xf32> to vector<8xf32>
    %181 = vector.shape_cast %180 : vector<8xf32> to vector<8x1xf32>
    %182 = vector.broadcast %181 : vector<8x1xf32> to vector<8x8xf32>
    %183 = arith.subf %179, %182 : vector<8x8xf32>
    %184 = math.exp %183 : vector<8x8xf32>
    %cst_84 = arith.constant dense<0.000000e+00> : vector<8xf32>
    %185 = vector.multi_reduction <add>, %184, %cst_84 [1] : vector<8x8xf32> to vector<8xf32>
    %186 = vector.shape_cast %185 : vector<8xf32> to vector<8x1xf32>
    %187 = tpu.reciprocal %186 {approx = true} : vector<8x1xf32> -> vector<8x1xf32>
    %188 = vector.broadcast %187 : vector<8x1xf32> to vector<8x8xf32>
    %189 = arith.mulf %184, %188 : vector<8x8xf32>
    %cst_85 = arith.constant dense<0.000000e+00> : vector<8x8xf32>
    %190 = tpu.matmul %189, %177, %cst_85 {dimension_numbers = #tpu.dot_dimension_numbers<[1], [0], [0], [1], [0, 0, 1, 1], [], []>} : vector<8x8xf32>, vector<8x8xf32>, vector<8x8xf32> -> vector<8x8xf32>
    %191 = tpu.concatenate %142, %158, %174, %190 in 1 : vector<8x8xf32>, vector<8x8xf32>, vector<8x8xf32>, vector<8x8xf32> -> vector<8x32xf32>
    %cst_86 = arith.constant dense<0.000000e+00> : vector<8x32xf32>
    %192 = tpu.matmul %191, %118, %cst_86 {dimension_numbers = #tpu.dot_dimension_numbers<[1], [0], [0], [1], [0, 0, 1, 1], [], []>} : vector<8x32xf32>, vector<32x32xf32>, vector<8x32xf32> -> vector<8x32xf32>
    %193 = vector.broadcast %119 : vector<1x32xf32> to vector<8x32xf32>
    %194 = arith.addf %192, %193 : vector<8x32xf32>
    %195 = arith.addf %194, %114 : vector<8x32xf32>
    %cst_87 = arith.constant dense<0.000000e+00> : vector<8xf32>
    %196 = vector.multi_reduction <add>, %195, %cst_87 [1] : vector<8x32xf32> to vector<8xf32>
    %197 = vector.shape_cast %196 : vector<8xf32> to vector<8x1xf32>
    %cst_88 = arith.constant 3.200000e+01 : f32
    %198 = vector.broadcast %cst_88 : f32 to vector<8x1xf32>
    %199 = arith.divf %197, %198 : vector<8x1xf32>
    %200 = vector.broadcast %199 : vector<8x1xf32> to vector<8x32xf32>
    %201 = arith.subf %195, %200 : vector<8x32xf32>
    %202 = arith.mulf %201, %201 : vector<8x32xf32>
    %cst_89 = arith.constant dense<0.000000e+00> : vector<8xf32>
    %203 = vector.multi_reduction <add>, %202, %cst_89 [1] : vector<8x32xf32> to vector<8xf32>
    %204 = vector.shape_cast %203 : vector<8xf32> to vector<8x1xf32>
    %cst_90 = arith.constant 3.100000e+01 : f32
    %205 = vector.broadcast %cst_90 : f32 to vector<8x1xf32>
    %206 = arith.divf %204, %205 : vector<8x1xf32>
    %207 = math.sqrt %206 : vector<8x1xf32>
    %208 = vector.broadcast %199 : vector<8x1xf32> to vector<8x32xf32>
    %209 = arith.subf %195, %208 : vector<8x32xf32>
    %cst_91 = arith.constant 1.000000e-03 : f32
    %210 = vector.broadcast %cst_91 : f32 to vector<8x1xf32>
    %211 = arith.addf %207, %210 : vector<8x1xf32>
    %212 = vector.broadcast %211 : vector<8x1xf32> to vector<8x32xf32>
    %213 = arith.divf %209, %212 : vector<8x32xf32>
    %214 = vector.broadcast %120 : vector<1x32xf32> to vector<8x32xf32>
    %215 = arith.mulf %213, %214 : vector<8x32xf32>
    %216 = vector.broadcast %121 : vector<1x32xf32> to vector<8x32xf32>
    %217 = arith.addf %215, %216 : vector<8x32xf32>
    %c0_92 = arith.constant 0 : index
    %c0_93 = arith.constant 0 : index
    %218 = vector.load %arg19[%c0_92, %c0_93] : memref<32x64xf32, #tpu.memory_space<vmem>>, vector<32x64xf32>
    %cst_94 = arith.constant dense<0.000000e+00> : vector<8x64xf32>
    %219 = tpu.matmul %217, %218, %cst_94 {dimension_numbers = #tpu.dot_dimension_numbers<[1], [0], [0], [1], [0, 0, 1, 1], [], []>} : vector<8x32xf32>, vector<32x64xf32>, vector<8x64xf32> -> vector<8x64xf32>
    %c0_95 = arith.constant 0 : index
    %c0_96 = arith.constant 0 : index
    %220 = vector.load %arg20[%c0_95, %c0_96] : memref<1x64xf32, #tpu.memory_space<vmem>>, vector<1x64xf32>
    %221 = vector.broadcast %220 : vector<1x64xf32> to vector<8x64xf32>
    %222 = arith.addf %219, %221 : vector<8x64xf32>
    %cst_97 = arith.constant 0.000000e+00 : f32
    %223 = vector.broadcast %cst_97 : f32 to vector<8x64xf32>
    %224 = arith.maximumf %222, %223 : vector<8x64xf32>
    %c0_98 = arith.constant 0 : index
    %c0_99 = arith.constant 0 : index
    %225 = vector.load %arg21[%c0_98, %c0_99] : memref<64x32xf32, #tpu.memory_space<vmem>>, vector<64x32xf32>
    %cst_100 = arith.constant dense<0.000000e+00> : vector<8x32xf32>
    %226 = tpu.matmul %224, %225, %cst_100 {dimension_numbers = #tpu.dot_dimension_numbers<[1], [0], [0], [1], [0, 0, 1, 1], [], []>} : vector<8x64xf32>, vector<64x32xf32>, vector<8x32xf32> -> vector<8x32xf32>
    %c0_101 = arith.constant 0 : index
    %c0_102 = arith.constant 0 : index
    %227 = vector.load %arg22[%c0_101, %c0_102] : memref<1x32xf32, #tpu.memory_space<vmem>>, vector<1x32xf32>
    %228 = vector.broadcast %227 : vector<1x32xf32> to vector<8x32xf32>
    %229 = arith.addf %226, %228 : vector<8x32xf32>
    %230 = arith.addf %229, %217 : vector<8x32xf32>
    %c0_103 = arith.constant 0 : index
    %c0_104 = arith.constant 0 : index
    %231 = vector.load %arg23[%c0_103, %c0_104] : memref<1x32xf32, #tpu.memory_space<vmem>>, vector<1x32xf32>
    %c0_105 = arith.constant 0 : index
    %c0_106 = arith.constant 0 : index
    %232 = vector.load %arg24[%c0_105, %c0_106] : memref<1x32xf32, #tpu.memory_space<vmem>>, vector<1x32xf32>
    %cst_107 = arith.constant dense<0.000000e+00> : vector<8xf32>
    %233 = vector.multi_reduction <add>, %230, %cst_107 [1] : vector<8x32xf32> to vector<8xf32>
    %234 = vector.shape_cast %233 : vector<8xf32> to vector<8x1xf32>
    %cst_108 = arith.constant 3.200000e+01 : f32
    %235 = vector.broadcast %cst_108 : f32 to vector<8x1xf32>
    %236 = arith.divf %234, %235 : vector<8x1xf32>
    %237 = vector.broadcast %236 : vector<8x1xf32> to vector<8x32xf32>
    %238 = arith.subf %230, %237 : vector<8x32xf32>
    %239 = arith.mulf %238, %238 : vector<8x32xf32>
    %cst_109 = arith.constant dense<0.000000e+00> : vector<8xf32>
    %240 = vector.multi_reduction <add>, %239, %cst_109 [1] : vector<8x32xf32> to vector<8xf32>
    %241 = vector.shape_cast %240 : vector<8xf32> to vector<8x1xf32>
    %cst_110 = arith.constant 3.100000e+01 : f32
    %242 = vector.broadcast %cst_110 : f32 to vector<8x1xf32>
    %243 = arith.divf %241, %242 : vector<8x1xf32>
    %244 = math.sqrt %243 : vector<8x1xf32>
    %245 = vector.broadcast %236 : vector<8x1xf32> to vector<8x32xf32>
    %246 = arith.subf %230, %245 : vector<8x32xf32>
    %cst_111 = arith.constant 1.000000e-03 : f32
    %247 = vector.broadcast %cst_111 : f32 to vector<8x1xf32>
    %248 = arith.addf %244, %247 : vector<8x1xf32>
    %249 = vector.broadcast %248 : vector<8x1xf32> to vector<8x32xf32>
    %250 = arith.divf %246, %249 : vector<8x32xf32>
    %251 = vector.broadcast %231 : vector<1x32xf32> to vector<8x32xf32>
    %252 = arith.mulf %250, %251 : vector<8x32xf32>
    %253 = vector.broadcast %232 : vector<1x32xf32> to vector<8x32xf32>
    %254 = arith.addf %252, %253 : vector<8x32xf32>
    %255 = vector.shape_cast %254 : vector<8x32xf32> to vector<1x8x32xf32>
    %c0_112 = arith.constant 0 : index
    %c0_113 = arith.constant 0 : index
    %c0_114 = arith.constant 0 : index
    %256 = vector.load %arg25[%c0_112, %c0_113, %c0_114] : memref<1x8x32xf32, #tpu.memory_space<vmem>>, vector<1x8x32xf32>
    tpu.vector_store %arg25[%c0_112, %c0_113, %c0_114], %255 {strides = array<i32>} : memref<1x8x32xf32, #tpu.memory_space<vmem>>, vector<1x8x32xf32>,
    return
  }
  func.func @transform_0(%arg0: i32) -> (i32, i32, i32) {
    %c0_i32 = arith.constant 0 : i32
    %c0_i32_0 = arith.constant 0 : i32
    %c0_i32_1 = arith.constant 0 : i32
    return %arg0, %c0_i32, %c0_i32_0 : i32, i32, i32
  }
  func.func @transform_1(%arg0: i32) -> (i32, i32, i32) {
    %c0_i32 = arith.constant 0 : i32
    %c0_i32_0 = arith.constant 0 : i32
    %c0_i32_1 = arith.constant 0 : i32
    return %arg0, %c0_i32, %c0_i32_0 : i32, i32, i32
  }
  func.func @transform_2(%arg0: i32) -> (i32, i32, i32) {
    %c0_i32 = arith.constant 0 : i32
    %c0_i32_0 = arith.constant 0 : i32
    %c0_i32_1 = arith.constant 0 : i32
    return %arg0, %c0_i32, %c0_i32_0 : i32, i32, i32
  }
  func.func @transform_3(%arg0: i32) -> (i32, i32, i32) {
    %c0_i32 = arith.constant 0 : i32
    %c0_i32_0 = arith.constant 0 : i32
    %c0_i32_1 = arith.constant 0 : i32
    return %arg0, %c0_i32, %c0_i32_0 : i32, i32, i32
  }
  func.func @transform_4(%arg0: i32) -> (i32, i32) {
    %c0_i32 = arith.constant 0 : i32
    %c0_i32_0 = arith.constant 0 : i32
    %c0_i32_1 = arith.constant 0 : i32
    return %c0_i32, %c0_i32_0 : i32, i32
  }
  func.func @transform_5(%arg0: i32) -> (i32, i32) {
    %c0_i32 = arith.constant 0 : i32
    %c0_i32_0 = arith.constant 0 : i32
    %c0_i32_1 = arith.constant 0 : i32
    return %c0_i32, %c0_i32_0 : i32, i32
  }
  func.func @transform_6(%arg0: i32) -> (i32, i32) {
    %c0_i32 = arith.constant 0 : i32
    %c0_i32_0 = arith.constant 0 : i32
    %c0_i32_1 = arith.constant 0 : i32
    return %c0_i32, %c0_i32_0 : i32, i32
  }
  func.func @transform_7(%arg0: i32) -> (i32, i32) {
    %c0_i32 = arith.constant 0 : i32
    %c0_i32_0 = arith.constant 0 : i32
    %c0_i32_1 = arith.constant 0 : i32
    return %c0_i32, %c0_i32_0 : i32, i32
  }
  func.func @transform_8(%arg0: i32) -> (i32, i32) {
    %c0_i32 = arith.constant 0 : i32
    %c0_i32_0 = arith.constant 0 : i32
    %c0_i32_1 = arith.constant 0 : i32
    return %c0_i32, %c0_i32_0 : i32, i32
  }
  func.func @transform_9(%arg0: i32) -> (i32, i32) {
    %c0_i32 = arith.constant 0 : i32
    %c0_i32_0 = arith.constant 0 : i32
    %c0_i32_1 = arith.constant 0 : i32
    return %c0_i32, %c0_i32_0 : i32, i32
  }
  func.func @transform_10(%arg0: i32) -> (i32, i32) {
    %c0_i32 = arith.constant 0 : i32
    %c0_i32_0 = arith.constant 0 : i32
    %c0_i32_1 = arith.constant 0 : i32
    return %c0_i32, %c0_i32_0 : i32, i32
  }
  func.func @transform_11(%arg0: i32) -> (i32, i32) {
    %c0_i32 = arith.constant 0 : i32
    %c0_i32_0 = arith.constant 0 : i32
    %c0_i32_1 = arith.constant 0 : i32
    return %c0_i32, %c0_i32_0 : i32, i32
  }
  func.func @transform_12(%arg0: i32) -> (i32, i32) {
    %c0_i32 = arith.constant 0 : i32
    %c0_i32_0 = arith.constant 0 : i32
    %c0_i32_1 = arith.constant 0 : i32
    return %c0_i32, %c0_i32_0 : i32, i32
  }
  func.func @transform_13(%arg0: i32) -> (i32, i32) {
    %c0_i32 = arith.constant 0 : i32
    %c0_i32_0 = arith.constant 0 : i32
    %c0_i32_1 = arith.constant 0 : i32
    return %c0_i32, %c0_i32_0 : i32, i32
  }
  func.func @transform_14(%arg0: i32) -> (i32, i32) {
    %c0_i32 = arith.constant 0 : i32
    %c0_i32_0 = arith.constant 0 : i32
    %c0_i32_1 = arith.constant 0 : i32
    return %c0_i32, %c0_i32_0 : i32, i32
  }
  func.func @transform_15(%arg0: i32) -> (i32, i32) {
    %c0_i32 = arith.constant 0 : i32
    %c0_i32_0 = arith.constant 0 : i32
    %c0_i32_1 = arith.constant 0 : i32
    return %c0_i32, %c0_i32_0 : i32, i32
  }
  func.func @transform_16(%arg0: i32) -> (i32, i32) {
    %c0_i32 = arith.constant 0 : i32
    %c0_i32_0 = arith.constant 0 : i32
    %c0_i32_1 = arith.constant 0 : i32
    return %c0_i32, %c0_i32_0 : i32, i32
  }
  func.func @transform_17(%arg0: i32) -> (i32, i32) {
    %c0_i32 = arith.constant 0 : i32
    %c0_i32_0 = arith.constant 0 : i32
    %c0_i32_1 = arith.constant 0 : i32
    return %c0_i32, %c0_i32_0 : i32, i32
  }
  func.func @transform_18(%arg0: i32) -> (i32, i32) {
    %c0_i32 = arith.constant 0 : i32
    %c0_i32_0 = arith.constant 0 : i32
    %c0_i32_1 = arith.constant 0 : i32
    return %c0_i32, %c0_i32_0 : i32, i32
  }
  func.func @transform_19(%arg0: i32) -> (i32, i32) {
    %c0_i32 = arith.constant 0 : i32
    %c0_i32_0 = arith.constant 0 : i32
    %c0_i32_1 = arith.constant 0 : i32
    return %c0_i32, %c0_i32_0 : i32, i32
  }
  func.func @transform_20(%arg0: i32) -> (i32, i32) {
    %c0_i32 = arith.constant 0 : i32
    %c0_i32_0 = arith.constant 0 : i32
    %c0_i32_1 = arith.constant 0 : i32
    return %c0_i32, %c0_i32_0 : i32, i32
  }
  func.func @transform_21(%arg0: i32) -> (i32, i32) {
    %c0_i32 = arith.constant 0 : i32
    %c0_i32_0 = arith.constant 0 : i32
    %c0_i32_1 = arith.constant 0 : i32
    return %c0_i32, %c0_i32_0 : i32, i32
  }
  func.func @transform_22(%arg0: i32) -> (i32, i32) {
    %c0_i32 = arith.constant 0 : i32
    %c0_i32_0 = arith.constant 0 : i32
    %c0_i32_1 = arith.constant 0 : i32
    return %c0_i32, %c0_i32_0 : i32, i32
  }
  func.func @transform_23(%arg0: i32) -> (i32, i32) {
    %c0_i32 = arith.constant 0 : i32
    %c0_i32_0 = arith.constant 0 : i32
    %c0_i32_1 = arith.constant 0 : i32
    return %c0_i32, %c0_i32_0 : i32, i32
  }
  func.func @transform_24(%arg0: i32) -> (i32, i32, i32) {
    %c0_i32 = arith.constant 0 : i32
    %c0_i32_0 = arith.constant 0 : i32
    %c0_i32_1 = arith.constant 0 : i32
    return %arg0, %c0_i32, %c0_i32_0 : i32, i32, i32
  }
}

</mosaic_0001>

<llo_original>
// kernel: transformer_decoder.2
$region0: #{transformer_decoder.2}
  #allocation0 [shape = 'u32[]', space=smem, size = 0x4, offset = 0x4, fixed_abs, tag = 'smem constant byte address 0x4 - core index']
  #allocation1 [shape = 'u32[144,128]{1,0:T(1,128)}', space=vmem, size = 0x12000, scoped, tag = 'internal scratch']
  %s0 = inlined_call_operand.vmem [shape: f32[2,8,32], index: 0, kind: input, shape index: {}]
  %s1 = inlined_call_operand.vmem [shape: f32[2,8,32], index: 1, kind: input, shape index: {}]
  %s2 = inlined_call_operand.vmem [shape: f32[2,8,8], index: 2, kind: input, shape index: {}]
  %s3 = inlined_call_operand.vmem [shape: f32[2,8,8], index: 3, kind: input, shape index: {}]
  %s4 = inlined_call_operand.vmem [shape: f32[32,32], index: 4, kind: input, shape index: {}]
  %s5 = inlined_call_operand.vmem [shape: f32[32,32], index: 5, kind: input, shape index: {}]
  %s6 = inlined_call_operand.vmem [shape: f32[32,32], index: 6, kind: input, shape index: {}]
  %s7 = inlined_call_operand.vmem [shape: f32[32,32], index: 7, kind: input, shape index: {}]
  %s8 = inlined_call_operand.vmem [shape: f32[1,32], index: 8, kind: input, shape index: {}]
  %s9 = inlined_call_operand.vmem [shape: f32[1,32], index: 9, kind: input, shape index: {}]
  %s10 = inlined_call_operand.vmem [shape: f32[1,32], index: 10, kind: input, shape index: {}]
  %s11 = inlined_call_operand.vmem [shape: f32[32,32], index: 11, kind: input, shape index: {}]
  %s12 = inlined_call_operand.vmem [shape: f32[32,32], index: 12, kind: input, shape index: {}]
  %s13 = inlined_call_operand.vmem [shape: f32[32,32], index: 13, kind: input, shape index: {}]
  %s14 = inlined_call_operand.vmem [shape: f32[32,32], index: 14, kind: input, shape index: {}]
  %s15 = inlined_call_operand.vmem [shape: f32[1,32], index: 15, kind: input, shape index: {}]
  %s16 = inlined_call_operand.vmem [shape: f32[1,32], index: 16, kind: input, shape index: {}]
  %s17 = inlined_call_operand.vmem [shape: f32[1,32], index: 17, kind: input, shape index: {}]
  %s18 = inlined_call_operand.vmem [shape: f32[32,64], index: 18, kind: input, shape index: {}]
  %s19 = inlined_call_operand.vmem [shape: f32[1,64], index: 19, kind: input, shape index: {}]
  %s20 = inlined_call_operand.vmem [shape: f32[64,32], index: 20, kind: input, shape index: {}]
  %s21 = inlined_call_operand.vmem [shape: f32[1,32], index: 21, kind: input, shape index: {}]
  %s22 = inlined_call_operand.vmem [shape: f32[1,32], index: 22, kind: input, shape index: {}]
  %s23 = inlined_call_operand.vmem [shape: f32[1,32], index: 23, kind: input, shape index: {}]
  %s24 = inlined_call_operand.vmem [shape: f32[2,8,32], index: 24, kind: output, shape index: {}]
  %s25 = sld [smem:[#allocation0]]
  $region129: #{transformer_decoder.2} parent=0
    _
  %s27 = ssub.s32 1, %s25
  %s28 = scalar_select 0, %s27, %s25
  loop: start=0, step=1, limit=4
  $region2: #{transformer_decoder.2} parent=0 // loop_pre_header
    _
  $region3: #{transformer_decoder.2} parent=0 // loop_header
    %s30 = sphi 0, %s34
    %p31 = scmp.ge.s32.totalorder %s30, 4
    %s40 = sphi 0, %s42
    %s43 = sphi 0, %s40
    %s44 = sphi 0, %s43
    %s60 = sphi 0, %s44
    %s66 = sphi 0, %s68
    %s69 = sphi 0, %s66
    %s70 = sphi 0, %s69
    %s86 = sphi 0, %s70
    %s92 = sphi 0, %s94
    %s95 = sphi 0, %s92
    %s96 = sphi 0, %s95
    %s112 = sphi 0, %s96
    %s118 = sphi 0, %s120
    %s121 = sphi 0, %s118
    %s122 = sphi 0, %s121
    %s138 = sphi 0, %s122
    %s142 = sphi 0, %s142
    %s144 = sphi 0, %s142
    %s145 = sphi 0, %s144
    %s159 = sphi 0, %s145
    %s163 = sphi 0, %s163
    %s165 = sphi 0, %s163
    %s166 = sphi 0, %s165
    %s180 = sphi 0, %s166
    %s184 = sphi 0, %s184
    %s186 = sphi 0, %s184
    %s187 = sphi 0, %s186
    %s201 = sphi 0, %s187
    %s205 = sphi 0, %s205
    %s207 = sphi 0, %s205
    %s208 = sphi 0, %s207
    %s222 = sphi 0, %s208
    %s226 = sphi 0, %s226
    %s228 = sphi 0, %s226
    %s229 = sphi 0, %s228
    %s243 = sphi 0, %s229
    %s247 = sphi 0, %s247
    %s249 = sphi 0, %s247
    %s250 = sphi 0, %s249
    %s264 = sphi 0, %s250
    %s268 = sphi 0, %s268
    %s270 = sphi 0, %s268
    %s271 = sphi 0, %s270
    %s285 = sphi 0, %s271
    %s289 = sphi 0, %s289
    %s291 = sphi 0, %s289
    %s292 = sphi 0, %s291
    %s306 = sphi 0, %s292
    %s310 = sphi 0, %s310
    %s312 = sphi 0, %s310
    %s313 = sphi 0, %s312
    %s327 = sphi 0, %s313
    %s331 = sphi 0, %s331
    %s333 = sphi 0, %s331
    %s334 = sphi 0, %s333
    %s348 = sphi 0, %s334
    %s352 = sphi 0, %s352
    %s354 = sphi 0, %s352
    %s355 = sphi 0, %s354
    %s369 = sphi 0, %s355
    %s373 = sphi 0, %s373
    %s375 = sphi 0, %s373
    %s376 = sphi 0, %s375
    %s390 = sphi 0, %s376
    %s394 = sphi 0, %s394
    %s396 = sphi 0, %s394
    %s397 = sphi 0, %s396
    %s411 = sphi 0, %s397
    %s415 = sphi 0, %s415
    %s417 = sphi 0, %s415
    %s418 = sphi 0, %s417
    %s432 = sphi 0, %s418
    %s436 = sphi 0, %s436
    %s438 = sphi 0, %s436
    %s439 = sphi 0, %s438
    %s453 = sphi 0, %s439
    %s457 = sphi 0, %s457
    %s459 = sphi 0, %s457
    %s460 = sphi 0, %s459
    %s474 = sphi 0, %s460
    %s478 = sphi 0, %s478
    %s480 = sphi 0, %s478
    %s481 = sphi 0, %s480
    %s495 = sphi 0, %s481
    %s499 = sphi 0, %s499
    %s501 = sphi 0, %s499
    %s502 = sphi 0, %s501
    %s516 = sphi 0, %s502
    %s520 = sphi 0, %s520
    %s522 = sphi 0, %s520
    %s523 = sphi 0, %s522
    %s537 = sphi 0, %s523
    %s541 = sphi 0, %s541
    %s543 = sphi 0, %s541
    %s544 = sphi 0, %s543
    %s558 = sphi 0, %s544
    %s564 = sphi 0, %s566
    %s567 = sphi 0, %s564
    %s568 = sphi 0, %s567
    %s584 = sphi 0, %s568
  $region4: #{transformer_decoder.2} parent=0 // loop_header_branch
    %33 = sbr.rel (%p31) target = $region8
  $region5: #{transformer_decoder.2} parent=0 // loop_body
    %s35 = ssub.s32 %s30, 1
    %s36 = ssub.s32 %s30, 2
    %s37 = sadd.s32 %s30, 1
    %s38 = ssub.s32 %s30, %s37
    %p39 = scmp.eq.s32.totalorder %s38, 0
    %s41 = sadd.s32 %s40, 1
    %s42 = scalar_select %p39, %s40, %s41
    %p45 = pneg %p39
    %p46 = scmp.eq.s32.totalorder %s30, 1
    %p47 = por %p45, %p46
    %p48 = scmp.ne.s32.totalorder %s40, %s43
    %p49 = scmp.eq.s32.totalorder %s30, 0
    %p50 = por %p48, %p49
    %p51 = scmp.ne.s32.totalorder %s40, %s43
    %p52 = scmp.eq.s32.totalorder %s35, 1
    %p53 = por %p51, %p52
    %p54 = scmp.ne.s32.totalorder %s43, %s44
    %p55 = scmp.eq.s32.totalorder %s35, 0
    %p56 = por %p54, %p55
    %p57 = scmp.ne.s32.totalorder %s43, %s44
    %p58 = scmp.eq.s32.totalorder %s36, 1
    %p59 = por %p57, %p58
    %p61 = scmp.ne.s32.totalorder %s44, %s60
    %p62 = scmp.eq.s32.totalorder %s36, 0
    %p63 = por %p61, %p62
    %s64 = ssub.s32 %s30, %s37
    %p65 = scmp.eq.s32.totalorder %s64, 0
    %s67 = sadd.s32 %s66, 1
    %s68 = scalar_select %p65, %s66, %s67
    %p71 = pneg %p65
    %p72 = scmp.eq.s32.totalorder %s30, 1
    %p73 = por %p71, %p72
    %p74 = scmp.ne.s32.totalorder %s66, %s69
    %p75 = scmp.eq.s32.totalorder %s30, 0
    %p76 = por %p74, %p75
    %p77 = scmp.ne.s32.totalorder %s66, %s69
    %p78 = scmp.eq.s32.totalorder %s35, 1
    %p79 = por %p77, %p78
    %p80 = scmp.ne.s32.totalorder %s69, %s70
    %p81 = scmp.eq.s32.totalorder %s35, 0
    %p82 = por %p80, %p81
    %p83 = scmp.ne.s32.totalorder %s69, %s70
    %p84 = scmp.eq.s32.totalorder %s36, 1
    %p85 = por %p83, %p84
    %p87 = scmp.ne.s32.totalorder %s70, %s86
    %p88 = scmp.eq.s32.totalorder %s36, 0
    %p89 = por %p87, %p88
    %s90 = ssub.s32 %s30, %s37
    %p91 = scmp.eq.s32.totalorder %s90, 0
    %s93 = sadd.s32 %s92, 1
    %s94 = scalar_select %p91, %s92, %s93
    %p97 = pneg %p91
    %p98 = scmp.eq.s32.totalorder %s30, 1
    %p99 = por %p97, %p98
    %p100 = scmp.ne.s32.totalorder %s92, %s95
    %p101 = scmp.eq.s32.totalorder %s30, 0
    %p102 = por %p100, %p101
    %p103 = scmp.ne.s32.totalorder %s92, %s95
    %p104 = scmp.eq.s32.totalorder %s35, 1
    %p105 = por %p103, %p104
    %p106 = scmp.ne.s32.totalorder %s95, %s96
    %p107 = scmp.eq.s32.totalorder %s35, 0
    %p108 = por %p106, %p107
    %p109 = scmp.ne.s32.totalorder %s95, %s96
    %p110 = scmp.eq.s32.totalorder %s36, 1
    %p111 = por %p109, %p110
    %p113 = scmp.ne.s32.totalorder %s96, %s112
    %p114 = scmp.eq.s32.totalorder %s36, 0
    %p115 = por %p113, %p114
    %s116 = ssub.s32 %s30, %s37
    %p117 = scmp.eq.s32.totalorder %s116, 0
    %s119 = sadd.s32 %s118, 1
    %s120 = scalar_select %p117, %s118, %s119
    %p123 = pneg %p117
    %p124 = scmp.eq.s32.totalorder %s30, 1
    %p125 = por %p123, %p124
    %p126 = scmp.ne.s32.totalorder %s118, %s121
    %p127 = scmp.eq.s32.totalorder %s30, 0
    %p128 = por %p126, %p127
    %p129 = scmp.ne.s32.totalorder %s118, %s121
    %p130 = scmp.eq.s32.totalorder %s35, 1
    %p131 = por %p129, %p130
    %p132 = scmp.ne.s32.totalorder %s121, %s122
    %p133 = scmp.eq.s32.totalorder %s35, 0
    %p134 = por %p132, %p133
    %p135 = scmp.ne.s32.totalorder %s121, %s122
    %p136 = scmp.eq.s32.totalorder %s36, 1
    %p137 = por %p135, %p136
    %p139 = scmp.ne.s32.totalorder %s122, %s138
    %p140 = scmp.eq.s32.totalorder %s36, 0
    %p141 = por %p139, %p140
    %s143 = sadd.s32 %s142, 1
    %p146 = scmp.eq.s32.totalorder %s30, 1
    %p147 = scmp.ne.s32.totalorder %s142, %s144
    %p148 = scmp.eq.s32.totalorder %s30, 0
    %p149 = por %p147, %p148
    %p150 = scmp.ne.s32.totalorder %s142, %s144
    %p151 = scmp.eq.s32.totalorder %s35, 1
    %p152 = por %p150, %p151
    %p153 = scmp.ne.s32.totalorder %s144, %s145
    %p154 = scmp.eq.s32.totalorder %s35, 0
    %p155 = por %p153, %p154
    %p156 = scmp.ne.s32.totalorder %s144, %s145
    %p157 = scmp.eq.s32.totalorder %s36, 1
    %p158 = por %p156, %p157
    %p160 = scmp.ne.s32.totalorder %s145, %s159
    %p161 = scmp.eq.s32.totalorder %s36, 0
    %p162 = por %p160, %p161
    %s164 = sadd.s32 %s163, 1
    %p167 = scmp.eq.s32.totalorder %s30, 1
    %p168 = scmp.ne.s32.totalorder %s163, %s165
    %p169 = scmp.eq.s32.totalorder %s30, 0
    %p170 = por %p168, %p169
    %p171 = scmp.ne.s32.totalorder %s163, %s165
    %p172 = scmp.eq.s32.totalorder %s35, 1
    %p173 = por %p171, %p172
    %p174 = scmp.ne.s32.totalorder %s165, %s166
    %p175 = scmp.eq.s32.totalorder %s35, 0
    %p176 = por %p174, %p175
    %p177 = scmp.ne.s32.totalorder %s165, %s166
    %p178 = scmp.eq.s32.totalorder %s36, 1
    %p179 = por %p177, %p178
    %p181 = scmp.ne.s32.totalorder %s166, %s180
    %p182 = scmp.eq.s32.totalorder %s36, 0
    %p183 = por %p181, %p182
    %s185 = sadd.s32 %s184, 1
    %p188 = scmp.eq.s32.totalorder %s30, 1
    %p189 = scmp.ne.s32.totalorder %s184, %s186
    %p190 = scmp.eq.s32.totalorder %s30, 0
    %p191 = por %p189, %p190
    %p192 = scmp.ne.s32.totalorder %s184, %s186
    %p193 = scmp.eq.s32.totalorder %s35, 1
    %p194 = por %p192, %p193
    %p195 = scmp.ne.s32.totalorder %s186, %s187
    %p196 = scmp.eq.s32.totalorder %s35, 0
    %p197 = por %p195, %p196
    %p198 = scmp.ne.s32.totalorder %s186, %s187
    %p199 = scmp.eq.s32.totalorder %s36, 1
    %p200 = por %p198, %p199
    %p202 = scmp.ne.s32.totalorder %s187, %s201
    %p203 = scmp.eq.s32.totalorder %s36, 0
    %p204 = por %p202, %p203
    %s206 = sadd.s32 %s205, 1
    %p209 = scmp.eq.s32.totalorder %s30, 1
    %p210 = scmp.ne.s32.totalorder %s205, %s207
    %p211 = scmp.eq.s32.totalorder %s30, 0
    %p212 = por %p210, %p211
    %p213 = scmp.ne.s32.totalorder %s205, %s207
    %p214 = scmp.eq.s32.totalorder %s35, 1
    %p215 = por %p213, %p214
    %p216 = scmp.ne.s32.totalorder %s207, %s208
    %p217 = scmp.eq.s32.totalorder %s35, 0
    %p218 = por %p216, %p217
    %p219 = scmp.ne.s32.totalorder %s207, %s208
    %p220 = scmp.eq.s32.totalorder %s36, 1
    %p221 = por %p219, %p220
    %p223 = scmp.ne.s32.totalorder %s208, %s222
    %p224 = scmp.eq.s32.totalorder %s36, 0
    %p225 = por %p223, %p224
    %s227 = sadd.s32 %s226, 1
    %p230 = scmp.eq.s32.totalorder %s30, 1
    %p231 = scmp.ne.s32.totalorder %s226, %s228
    %p232 = scmp.eq.s32.totalorder %s30, 0
    %p233 = por %p231, %p232
    %p234 = scmp.ne.s32.totalorder %s226, %s228
    %p235 = scmp.eq.s32.totalorder %s35, 1
    %p236 = por %p234, %p235
    %p237 = scmp.ne.s32.totalorder %s228, %s229
    %p238 = scmp.eq.s32.totalorder %s35, 0
    %p239 = por %p237, %p238
    %p240 = scmp.ne.s32.totalorder %s228, %s229
    %p241 = scmp.eq.s32.totalorder %s36, 1
    %p242 = por %p240, %p241
    %p244 = scmp.ne.s32.totalorder %s229, %s243
    %p245 = scmp.eq.s32.totalorder %s36, 0
    %p246 = por %p244, %p245
    %s248 = sadd.s32 %s247, 1
    %p251 = scmp.eq.s32.totalorder %s30, 1
    %p252 = scmp.ne.s32.totalorder %s247, %s249
    %p253 = scmp.eq.s32.totalorder %s30, 0
    %p254 = por %p252, %p253
    %p255 = scmp.ne.s32.totalorder %s247, %s249
    %p256 = scmp.eq.s32.totalorder %s35, 1
    %p257 = por %p255, %p256
    %p258 = scmp.ne.s32.totalorder %s249, %s250
    %p259 = scmp.eq.s32.totalorder %s35, 0
    %p260 = por %p258, %p259
    %p261 = scmp.ne.s32.totalorder %s249, %s250
    %p262 = scmp.eq.s32.totalorder %s36, 1
    %p263 = por %p261, %p262
    %p265 = scmp.ne.s32.totalorder %s250, %s264
    %p266 = scmp.eq.s32.totalorder %s36, 0
    %p267 = por %p265, %p266
    %s269 = sadd.s32 %s268, 1
    %p272 = scmp.eq.s32.totalorder %s30, 1
    %p273 = scmp.ne.s32.totalorder %s268, %s270
    %p274 = scmp.eq.s32.totalorder %s30, 0
    %p275 = por %p273, %p274
    %p276 = scmp.ne.s32.totalorder %s268, %s270
    %p277 = scmp.eq.s32.totalorder %s35, 1
    %p278 = por %p276, %p277
    %p279 = scmp.ne.s32.totalorder %s270, %s271
    %p280 = scmp.eq.s32.totalorder %s35, 0
    %p281 = por %p279, %p280
    %p282 = scmp.ne.s32.totalorder %s270, %s271
    %p283 = scmp.eq.s32.totalorder %s36, 1
    %p284 = por %p282, %p283
    %p286 = scmp.ne.s32.totalorder %s271, %s285
    %p287 = scmp.eq.s32.totalorder %s36, 0
    %p288 = por %p286, %p287
    %s290 = sadd.s32 %s289, 1
    %p293 = scmp.eq.s32.totalorder %s30, 1
    %p294 = scmp.ne.s32.totalorder %s289, %s291
    %p295 = scmp.eq.s32.totalorder %s30, 0
    %p296 = por %p294, %p295
    %p297 = scmp.ne.s32.totalorder %s289, %s291
    %p298 = scmp.eq.s32.totalorder %s35, 1
    %p299 = por %p297, %p298
    %p300 = scmp.ne.s32.totalorder %s291, %s292
    %p301 = scmp.eq.s32.totalorder %s35, 0
    %p302 = por %p300, %p301
    %p303 = scmp.ne.s32.totalorder %s291, %s292
    %p304 = scmp.eq.s32.totalorder %s36, 1
    %p305 = por %p303, %p304
    %p307 = scmp.ne.s32.totalorder %s292, %s306
    %p308 = scmp.eq.s32.totalorder %s36, 0
    %p309 = por %p307, %p308
    %s311 = sadd.s32 %s310, 1
    %p314 = scmp.eq.s32.totalorder %s30, 1
    %p315 = scmp.ne.s32.totalorder %s310, %s312
    %p316 = scmp.eq.s32.totalorder %s30, 0
    %p317 = por %p315, %p316
    %p318 = scmp.ne.s32.totalorder %s310, %s312
    %p319 = scmp.eq.s32.totalorder %s35, 1
    %p320 = por %p318, %p319
    %p321 = scmp.ne.s32.totalorder %s312, %s313
    %p322 = scmp.eq.s32.totalorder %s35, 0
    %p323 = por %p321, %p322
    %p324 = scmp.ne.s32.totalorder %s312, %s313
    %p325 = scmp.eq.s32.totalorder %s36, 1
    %p326 = por %p324, %p325
    %p328 = scmp.ne.s32.totalorder %s313, %s327
    %p329 = scmp.eq.s32.totalorder %s36, 0
    %p330 = por %p328, %p329
    %s332 = sadd.s32 %s331, 1
    %p335 = scmp.eq.s32.totalorder %s30, 1
    %p336 = scmp.ne.s32.totalorder %s331, %s333
    %p337 = scmp.eq.s32.totalorder %s30, 0
    %p338 = por %p336, %p337
    %p339 = scmp.ne.s32.totalorder %s331, %s333
    %p340 = scmp.eq.s32.totalorder %s35, 1
    %p341 = por %p339, %p340
    %p342 = scmp.ne.s32.totalorder %s333, %s334
    %p343 = scmp.eq.s32.totalorder %s35, 0
    %p344 = por %p342, %p343
    %p345 = scmp.ne.s32.totalorder %s333, %s334
    %p346 = scmp.eq.s32.totalorder %s36, 1
    %p347 = por %p345, %p346
    %p349 = scmp.ne.s32.totalorder %s334, %s348
    %p350 = scmp.eq.s32.totalorder %s36, 0
    %p351 = por %p349, %p350
    %s353 = sadd.s32 %s352, 1
    %p356 = scmp.eq.s32.totalorder %s30, 1
    %p357 = scmp.ne.s32.totalorder %s352, %s354
    %p358 = scmp.eq.s32.totalorder %s30, 0
    %p359 = por %p357, %p358
    %p360 = scmp.ne.s32.totalorder %s352, %s354
    %p361 = scmp.eq.s32.totalorder %s35, 1
    %p362 = por %p360, %p361
    %p363 = scmp.ne.s32.totalorder %s354, %s355
    %p364 = scmp.eq.s32.totalorder %s35, 0
    %p365 = por %p363, %p364
    %p366 = scmp.ne.s32.totalorder %s354, %s355
    %p367 = scmp.eq.s32.totalorder %s36, 1
    %p368 = por %p366, %p367
    %p370 = scmp.ne.s32.totalorder %s355, %s369
    %p371 = scmp.eq.s32.totalorder %s36, 0
    %p372 = por %p370, %p371
    %s374 = sadd.s32 %s373, 1
    %p377 = scmp.eq.s32.totalorder %s30, 1
    %p378 = scmp.ne.s32.totalorder %s373, %s375
    %p379 = scmp.eq.s32.totalorder %s30, 0
    %p380 = por %p378, %p379
    %p381 = scmp.ne.s32.totalorder %s373, %s375
    %p382 = scmp.eq.s32.totalorder %s35, 1
    %p383 = por %p381, %p382
    %p384 = scmp.ne.s32.totalorder %s375, %s376
    %p385 = scmp.eq.s32.totalorder %s35, 0
    %p386 = por %p384, %p385
    %p387 = scmp.ne.s32.totalorder %s375, %s376
    %p388 = scmp.eq.s32.totalorder %s36, 1
    %p389 = por %p387, %p388
    %p391 = scmp.ne.s32.totalorder %s376, %s390
    %p392 = scmp.eq.s32.totalorder %s36, 0
    %p393 = por %p391, %p392
    %s395 = sadd.s32 %s394, 1
    %p398 = scmp.eq.s32.totalorder %s30, 1
    %p399 = scmp.ne.s32.totalorder %s394, %s396
    %p400 = scmp.eq.s32.totalorder %s30, 0
    %p401 = por %p399, %p400
    %p402 = scmp.ne.s32.totalorder %s394, %s396
    %p403 = scmp.eq.s32.totalorder %s35, 1
    %p404 = por %p402, %p403
    %p405 = scmp.ne.s32.totalorder %s396, %s397
    %p406 = scmp.eq.s32.totalorder %s35, 0
    %p407 = por %p405, %p406
    %p408 = scmp.ne.s32.totalorder %s396, %s397
    %p409 = scmp.eq.s32.totalorder %s36, 1
    %p410 = por %p408, %p409
    %p412 = scmp.ne.s32.totalorder %s397, %s411
    %p413 = scmp.eq.s32.totalorder %s36, 0
    %p414 = por %p412, %p413
    %s416 = sadd.s32 %s415, 1
    %p419 = scmp.eq.s32.totalorder %s30, 1
    %p420 = scmp.ne.s32.totalorder %s415, %s417
    %p421 = scmp.eq.s32.totalorder %s30, 0
    %p422 = por %p420, %p421
    %p423 = scmp.ne.s32.totalorder %s415, %s417
    %p424 = scmp.eq.s32.totalorder %s35, 1
    %p425 = por %p423, %p424
    %p426 = scmp.ne.s32.totalorder %s417, %s418
    %p427 = scmp.eq.s32.totalorder %s35, 0
    %p428 = por %p426, %p427
    %p429 = scmp.ne.s32.totalorder %s417, %s418
    %p430 = scmp.eq.s32.totalorder %s36, 1
    %p431 = por %p429, %p430
    %p433 = scmp.ne.s32.totalorder %s418, %s432
    %p434 = scmp.eq.s32.totalorder %s36, 0
    %p435 = por %p433, %p434
    %s437 = sadd.s32 %s436, 1
    %p440 = scmp.eq.s32.totalorder %s30, 1
    %p441 = scmp.ne.s32.totalorder %s436, %s438
    %p442 = scmp.eq.s32.totalorder %s30, 0
    %p443 = por %p441, %p442
    %p444 = scmp.ne.s32.totalorder %s436, %s438
    %p445 = scmp.eq.s32.totalorder %s35, 1
    %p446 = por %p444, %p445
    %p447 = scmp.ne.s32.totalorder %s438, %s439
    %p448 = scmp.eq.s32.totalorder %s35, 0
    %p449 = por %p447, %p448
    %p450 = scmp.ne.s32.totalorder %s438, %s439
    %p451 = scmp.eq.s32.totalorder %s36, 1
    %p452 = por %p450, %p451
    %p454 = scmp.ne.s32.totalorder %s439, %s453
    %p455 = scmp.eq.s32.totalorder %s36, 0
    %p456 = por %p454, %p455
    %s458 = sadd.s32 %s457, 1
    %p461 = scmp.eq.s32.totalorder %s30, 1
    %p462 = scmp.ne.s32.totalorder %s457, %s459
    %p463 = scmp.eq.s32.totalorder %s30, 0
    %p464 = por %p462, %p463
    %p465 = scmp.ne.s32.totalorder %s457, %s459
    %p466 = scmp.eq.s32.totalorder %s35, 1
    %p467 = por %p465, %p466
    %p468 = scmp.ne.s32.totalorder %s459, %s460
    %p469 = scmp.eq.s32.totalorder %s35, 0
    %p470 = por %p468, %p469
    %p471 = scmp.ne.s32.totalorder %s459, %s460
    %p472 = scmp.eq.s32.totalorder %s36, 1
    %p473 = por %p471, %p472
    %p475 = scmp.ne.s32.totalorder %s460, %s474
    %p476 = scmp.eq.s32.totalorder %s36, 0
    %p477 = por %p475, %p476
    %s479 = sadd.s32 %s478, 1
    %p482 = scmp.eq.s32.totalorder %s30, 1
    %p483 = scmp.ne.s32.totalorder %s478, %s480
    %p484 = scmp.eq.s32.totalorder %s30, 0
    %p485 = por %p483, %p484
    %p486 = scmp.ne.s32.totalorder %s478, %s480
    %p487 = scmp.eq.s32.totalorder %s35, 1
    %p488 = por %p486, %p487
    %p489 = scmp.ne.s32.totalorder %s480, %s481
    %p490 = scmp.eq.s32.totalorder %s35, 0
    %p491 = por %p489, %p490
    %p492 = scmp.ne.s32.totalorder %s480, %s481
    %p493 = scmp.eq.s32.totalorder %s36, 1
    %p494 = por %p492, %p493
    %p496 = scmp.ne.s32.totalorder %s481, %s495
    %p497 = scmp.eq.s32.totalorder %s36, 0
    %p498 = por %p496, %p497
    %s500 = sadd.s32 %s499, 1
    %p503 = scmp.eq.s32.totalorder %s30, 1
    %p504 = scmp.ne.s32.totalorder %s499, %s501
    %p505 = scmp.eq.s32.totalorder %s30, 0
    %p506 = por %p504, %p505
    %p507 = scmp.ne.s32.totalorder %s499, %s501
    %p508 = scmp.eq.s32.totalorder %s35, 1
    %p509 = por %p507, %p508
    %p510 = scmp.ne.s32.totalorder %s501, %s502
    %p511 = scmp.eq.s32.totalorder %s35, 0
    %p512 = por %p510, %p511
    %p513 = scmp.ne.s32.totalorder %s501, %s502
    %p514 = scmp.eq.s32.totalorder %s36, 1
    %p515 = por %p513, %p514
    %p517 = scmp.ne.s32.totalorder %s502, %s516
    %p518 = scmp.eq.s32.totalorder %s36, 0
    %p519 = por %p517, %p518
    %s521 = sadd.s32 %s520, 1
    %p524 = scmp.eq.s32.totalorder %s30, 1
    %p525 = scmp.ne.s32.totalorder %s520, %s522
    %p526 = scmp.eq.s32.totalorder %s30, 0
    %p527 = por %p525, %p526
    %p528 = scmp.ne.s32.totalorder %s520, %s522
    %p529 = scmp.eq.s32.totalorder %s35, 1
    %p530 = por %p528, %p529
    %p531 = scmp.ne.s32.totalorder %s522, %s523
    %p532 = scmp.eq.s32.totalorder %s35, 0
    %p533 = por %p531, %p532
    %p534 = scmp.ne.s32.totalorder %s522, %s523
    %p535 = scmp.eq.s32.totalorder %s36, 1
    %p536 = por %p534, %p535
    %p538 = scmp.ne.s32.totalorder %s523, %s537
    %p539 = scmp.eq.s32.totalorder %s36, 0
    %p540 = por %p538, %p539
    %s542 = sadd.s32 %s541, 1
    %p545 = scmp.eq.s32.totalorder %s30, 1
    %p546 = scmp.ne.s32.totalorder %s541, %s543
    %p547 = scmp.eq.s32.totalorder %s30, 0
    %p548 = por %p546, %p547
    %p549 = scmp.ne.s32.totalorder %s541, %s543
    %p550 = scmp.eq.s32.totalorder %s35, 1
    %p551 = por %p549, %p550
    %p552 = scmp.ne.s32.totalorder %s543, %s544
    %p553 = scmp.eq.s32.totalorder %s35, 0
    %p554 = por %p552, %p553
    %p555 = scmp.ne.s32.totalorder %s543, %s544
    %p556 = scmp.eq.s32.totalorder %s36, 1
    %p557 = por %p555, %p556
    %p559 = scmp.ne.s32.totalorder %s544, %s558
    %p560 = scmp.eq.s32.totalorder %s36, 0
    %p561 = por %p559, %p560
    %s562 = ssub.s32 %s30, %s37
    %p563 = scmp.eq.s32.totalorder %s562, 0
    %s565 = sadd.s32 %s564, 1
    %s566 = scalar_select %p563, %s564, %s565
    %p569 = pneg %p563
    %p570 = scmp.eq.s32.totalorder %s30, 1
    %p571 = por %p569, %p570
    %p572 = scmp.ne.s32.totalorder %s564, %s567
    %p573 = scmp.eq.s32.totalorder %s30, 0
    %p574 = por %p572, %p573
    %p575 = scmp.ne.s32.totalorder %s564, %s567
    %p576 = scmp.eq.s32.totalorder %s35, 1
    %p577 = por %p575, %p576
    %p578 = scmp.ne.s32.totalorder %s567, %s568
    %p579 = scmp.eq.s32.totalorder %s35, 0
    %p580 = por %p578, %p579
    %p581 = scmp.ne.s32.totalorder %s567, %s568
    %p582 = scmp.eq.s32.totalorder %s36, 1
    %p583 = por %p581, %p582
    %p585 = scmp.ne.s32.totalorder %s568, %s584
    %p586 = scmp.eq.s32.totalorder %s36, 0
    %p587 = por %p585, %p586
    %p588 = scmp.le.s32.totalorder 1, %s30
    %p589 = scmp.lt.s32.totalorder %s30, 3
    %p590 = pnand %p588, %p589
    %p591 = pneg %p590
    // Predicated region
    $region9: #{transformer_decoder.2} parent=5 // pred_check
      _
    $region10: #{transformer_decoder.2} parent=5 // pred_check_branch
      %593 = sbr.rel (%p590) target = $region12
    $region11: #{transformer_decoder.2} parent=5 // pred_region
      %s594 = ssub.s32 %s30, 1
      // Predicated region
      $region13: #{transformer_decoder.2} parent=11 // pred_check
        %p595 = pneg %p155
      $region14: #{transformer_decoder.2} parent=11 // pred_check_branch
        %597 = sbr.rel (%p595) target = $region16
      $region15: #{transformer_decoder.2} parent=11 // pred_region
        _
      $region16: #{transformer_decoder.2} parent=11 // pred_fallthru
        _
      // Predicated region
      $region17: #{transformer_decoder.2} parent=11 // pred_check
        %p598 = pneg %p176
      $region18: #{transformer_decoder.2} parent=11 // pred_check_branch
        %600 = sbr.rel (%p598) target = $region20
      $region19: #{transformer_decoder.2} parent=11 // pred_region
        _
      $region20: #{transformer_decoder.2} parent=11 // pred_fallthru
        _
      // Predicated region
      $region21: #{transformer_decoder.2} parent=11 // pred_check
        %p601 = pneg %p197
      $region22: #{transformer_decoder.2} parent=11 // pred_check_branch
        %603 = sbr.rel (%p601) target = $region24
      $region23: #{transformer_decoder.2} parent=11 // pred_region
        _
      $region24: #{transformer_decoder.2} parent=11 // pred_fallthru
        _
      // Predicated region
      $region25: #{transformer_decoder.2} parent=11 // pred_check
        %p604 = pneg %p218
      $region26: #{transformer_decoder.2} parent=11 // pred_check_branch
        %606 = sbr.rel (%p604) target = $region28
      $region27: #{transformer_decoder.2} parent=11 // pred_region
        _
      $region28: #{transformer_decoder.2} parent=11 // pred_fallthru
        _
      // Predicated region
      $region29: #{transformer_decoder.2} parent=11 // pred_check
        %p607 = pneg %p239
      $region30: #{transformer_decoder.2} parent=11 // pred_check_branch
        %609 = sbr.rel (%p607) target = $region32
      $region31: #{transformer_decoder.2} parent=11 // pred_region
        _
      $region32: #{transformer_decoder.2} parent=11 // pred_fallthru
        _
      // Predicated region
      $region33: #{transformer_decoder.2} parent=11 // pred_check
        %p610 = pneg %p260
      $region34: #{transformer_decoder.2} parent=11 // pred_check_branch
        %612 = sbr.rel (%p610) target = $region36
      $region35: #{transformer_decoder.2} parent=11 // pred_region
        _
      $region36: #{transformer_decoder.2} parent=11 // pred_fallthru
        _
      // Predicated region
      $region37: #{transformer_decoder.2} parent=11 // pred_check
        %p613 = pneg %p281
      $region38: #{transformer_decoder.2} parent=11 // pred_check_branch
        %615 = sbr.rel (%p613) target = $region40
      $region39: #{transformer_decoder.2} parent=11 // pred_region
        _
      $region40: #{transformer_decoder.2} parent=11 // pred_fallthru
        _
      // Predicated region
      $region41: #{transformer_decoder.2} parent=11 // pred_check
        %p616 = pneg %p302
      $region42: #{transformer_decoder.2} parent=11 // pred_check_branch
        %618 = sbr.rel (%p616) target = $region44
      $region43: #{transformer_decoder.2} parent=11 // pred_region
        _
      $region44: #{transformer_decoder.2} parent=11 // pred_fallthru
        _
      // Predicated region
      $region45: #{transformer_decoder.2} parent=11 // pred_check
        %p619 = pneg %p323
      $region46: #{transformer_decoder.2} parent=11 // pred_check_branch
        %621 = sbr.rel (%p619) target = $region48
      $region47: #{transformer_decoder.2} parent=11 // pred_region
        _
      $region48: #{transformer_decoder.2} parent=11 // pred_fallthru
        _
      // Predicated region
      $region49: #{transformer_decoder.2} parent=11 // pred_check
        %p622 = pneg %p344
      $region50: #{transformer_decoder.2} parent=11 // pred_check_branch
        %624 = sbr.rel (%p622) target = $region52
      $region51: #{transformer_decoder.2} parent=11 // pred_region
        _
      $region52: #{transformer_decoder.2} parent=11 // pred_fallthru
        _
      // Predicated region
      $region53: #{transformer_decoder.2} parent=11 // pred_check
        %p625 = pneg %p365
      $region54: #{transformer_decoder.2} parent=11 // pred_check_branch
        %627 = sbr.rel (%p625) target = $region56
      $region55: #{transformer_decoder.2} parent=11 // pred_region
        _
      $region56: #{transformer_decoder.2} parent=11 // pred_fallthru
        _
      // Predicated region
      $region57: #{transformer_decoder.2} parent=11 // pred_check
        %p628 = pneg %p386
      $region58: #{transformer_decoder.2} parent=11 // pred_check_branch
        %630 = sbr.rel (%p628) target = $region60
      $region59: #{transformer_decoder.2} parent=11 // pred_region
        _
      $region60: #{transformer_decoder.2} parent=11 // pred_fallthru
        _
      // Predicated region
      $region61: #{transformer_decoder.2} parent=11 // pred_check
        %p631 = pneg %p407
      $region62: #{transformer_decoder.2} parent=11 // pred_check_branch
        %633 = sbr.rel (%p631) target = $region64
      $region63: #{transformer_decoder.2} parent=11 // pred_region
        _
      $region64: #{transformer_decoder.2} parent=11 // pred_fallthru
        _
      // Predicated region
      $region65: #{transformer_decoder.2} parent=11 // pred_check
        %p634 = pneg %p428
      $region66: #{transformer_decoder.2} parent=11 // pred_check_branch
        %636 = sbr.rel (%p634) target = $region68
      $region67: #{transformer_decoder.2} parent=11 // pred_region
        _
      $region68: #{transformer_decoder.2} parent=11 // pred_fallthru
        _
      // Predicated region
      $region69: #{transformer_decoder.2} parent=11 // pred_check
        %p637 = pneg %p449
      $region70: #{transformer_decoder.2} parent=11 // pred_check_branch
        %639 = sbr.rel (%p637) target = $region72
      $region71: #{transformer_decoder.2} parent=11 // pred_region
        _
      $region72: #{transformer_decoder.2} parent=11 // pred_fallthru
        _
      // Predicated region
      $region73: #{transformer_decoder.2} parent=11 // pred_check
        %p640 = pneg %p470
      $region74: #{transformer_decoder.2} parent=11 // pred_check_branch
        %642 = sbr.rel (%p640) target = $region76
      $region75: #{transformer_decoder.2} parent=11 // pred_region
        _
      $region76: #{transformer_decoder.2} parent=11 // pred_fallthru
        _
      // Predicated region
      $region77: #{transformer_decoder.2} parent=11 // pred_check
        %p643 = pneg %p491
      $region78: #{transformer_decoder.2} parent=11 // pred_check_branch
        %645 = sbr.rel (%p643) target = $region80
      $region79: #{transformer_decoder.2} parent=11 // pred_region
        _
      $region80: #{transformer_decoder.2} parent=11 // pred_fallthru
        _
      // Predicated region
      $region81: #{transformer_decoder.2} parent=11 // pred_check
        %p646 = pneg %p512
      $region82: #{transformer_decoder.2} parent=11 // pred_check_branch
        %648 = sbr.rel (%p646) target = $region84
      $region83: #{transformer_decoder.2} parent=11 // pred_region
        _
      $region84: #{transformer_decoder.2} parent=11 // pred_fallthru
        _
      // Predicated region
      $region85: #{transformer_decoder.2} parent=11 // pred_check
        %p649 = pneg %p533
      $region86: #{transformer_decoder.2} parent=11 // pred_check_branch
        %651 = sbr.rel (%p649) target = $region88
      $region87: #{transformer_decoder.2} parent=11 // pred_region
        _
      $region88: #{transformer_decoder.2} parent=11 // pred_fallthru
        _
      // Predicated region
      $region89: #{transformer_decoder.2} parent=11 // pred_check
        %p652 = pneg %p554
      $region90: #{transformer_decoder.2} parent=11 // pred_check_branch
        %654 = sbr.rel (%p652) target = $region92
      $region91: #{transformer_decoder.2} parent=11 // pred_region
        _
      $region92: #{transformer_decoder.2} parent=11 // pred_fallthru
        _
    $region12: #{transformer_decoder.2} parent=5 // pred_fallthru
      _
    %p655 = scmp.lt.s32.totalorder %s30, 2
    // Predicated region
    $region93: #{transformer_decoder.2} parent=5 // pred_check
      %p656 = pneg %p655
    $region94: #{transformer_decoder.2} parent=5 // pred_check_branch
      %658 = sbr.rel (%p656) target = $region96
    $region95: #{transformer_decoder.2} parent=5 // pred_region
      // Predicated region
      $region97: #{transformer_decoder.2} parent=95 // pred_check
        %p659 = pneg %p50
      $region98: #{transformer_decoder.2} parent=95 // pred_check_branch
        %661 = sbr.rel (%p659) target = $region100
      $region99: #{transformer_decoder.2} parent=95 // pred_region
        %p662 = scmp.lt.s32.totalorder %s30, 1
        %s663 = scalar_select %p662, %s30, 1
        %s664 = smul.addr %s663, 8
        %s665 = scalar_lea.vmem %s0, %s664
      $region100: #{transformer_decoder.2} parent=95 // pred_fallthru
        _
      // Predicated region
      $region101: #{transformer_decoder.2} parent=95 // pred_check
        %p666 = pneg %p76
      $region102: #{transformer_decoder.2} parent=95 // pred_check_branch
        %668 = sbr.rel (%p666) target = $region104
      $region103: #{transformer_decoder.2} parent=95 // pred_region
        %p669 = scmp.lt.s32.totalorder %s30, 1
        %s670 = scalar_select %p669, %s30, 1
        %s671 = smul.addr %s670, 8
        %s672 = scalar_lea.vmem %s1, %s671
      $region104: #{transformer_decoder.2} parent=95 // pred_fallthru
        _
      // Predicated region
      $region105: #{transformer_decoder.2} parent=95 // pred_check
        %p673 = pneg %p102
      $region106: #{transformer_decoder.2} parent=95 // pred_check_branch
        %675 = sbr.rel (%p673) target = $region108
      $region107: #{transformer_decoder.2} parent=95 // pred_region
        %p676 = scmp.lt.s32.totalorder %s30, 1
        %s677 = scalar_select %p676, %s30, 1
        %s678 = smul.addr %s677, 8
        %s679 = scalar_lea.vmem %s2, %s678
      $region108: #{transformer_decoder.2} parent=95 // pred_fallthru
        _
      // Predicated region
      $region109: #{transformer_decoder.2} parent=95 // pred_check
        %p680 = pneg %p128
      $region110: #{transformer_decoder.2} parent=95 // pred_check_branch
        %682 = sbr.rel (%p680) target = $region112
      $region111: #{transformer_decoder.2} parent=95 // pred_region
        %p683 = scmp.lt.s32.totalorder %s30, 1
        %s684 = scalar_select %p683, %s30, 1
        %s685 = smul.addr %s684, 8
        %s686 = scalar_lea.vmem %s3, %s685
      $region112: #{transformer_decoder.2} parent=95 // pred_fallthru
        _
    $region96: #{transformer_decoder.2} parent=5 // pred_fallthru
      _
    %p687 = scmp.le.s32.totalorder 1, %s30
    %p688 = scmp.lt.s32.totalorder %s30, 3
    %p689 = pnand %p687, %p688
    %p690 = pneg %p689
    // Predicated region
    $region113: #{transformer_decoder.2} parent=5 // pred_check
      _
    $region114: #{transformer_decoder.2} parent=5 // pred_check_branch
      %692 = sbr.rel (%p689) target = $region116
    $region115: #{transformer_decoder.2} parent=5 // pred_region
      %s693 = ssub.s32 %s30, 1
      %p694 = scmp.lt.s32.totalorder %s35, 1
      %s695 = scalar_select %p694, %s35, 1
      %s696 = smul.addr %s695, 8
      %s697 = scalar_lea.vmem %s0, %s696
      %p698 = pneg %p56
      %p699 = pneg %p53
      %p700 = scmp.lt.s32.totalorder %s35, 1
      %s701 = scalar_select %p700, %s35, 1
      %s702 = smul.addr %s701, 8
      %s703 = scalar_lea.vmem %s1, %s702
      %p704 = pneg %p82
      %p705 = pneg %p79
      %p706 = scmp.lt.s32.totalorder %s35, 1
      %s707 = scalar_select %p706, %s35, 1
      %s708 = smul.addr %s707, 8
      %s709 = scalar_lea.vmem %s2, %s708
      %p710 = pneg %p108
      %p711 = pneg %p105
      %p712 = scmp.lt.s32.totalorder %s35, 1
      %s713 = scalar_select %p712, %s35, 1
      %s714 = smul.addr %s713, 8
      %s715 = scalar_lea.vmem %s3, %s714
      %p716 = pneg %p134
      %p717 = pneg %p131
      %p718 = pneg %p155
      %p719 = pneg %p152
      %p720 = pneg %p176
      %p721 = pneg %p173
      %p722 = pneg %p197
      %p723 = pneg %p194
      %p724 = pneg %p218
      %p725 = pneg %p215
      %p726 = pneg %p239
      %p727 = pneg %p236
      %p728 = pneg %p260
      %p729 = pneg %p257
      %p730 = pneg %p281
      %p731 = pneg %p278
      %p732 = pneg %p302
      %p733 = pneg %p299
      %p734 = pneg %p323
      %p735 = pneg %p320
      %p736 = pneg %p344
      %p737 = pneg %p341
      %p738 = pneg %p365
      %p739 = pneg %p362
      %p740 = pneg %p386
      %p741 = pneg %p383
      %p742 = pneg %p407
      %p743 = pneg %p404
      %p744 = pneg %p428
      %p745 = pneg %p425
      %p746 = pneg %p449
      %p747 = pneg %p446
      %p748 = pneg %p470
      %p749 = pneg %p467
      %p750 = pneg %p491
      %p751 = pneg %p488
      %p752 = pneg %p512
      %p753 = pneg %p509
      %p754 = pneg %p533
      %p755 = pneg %p530
      %p756 = pneg %p554
      %p757 = pneg %p551
      %p758 = pneg %p580
      %p759 = pneg %p577
      %p760 = scmp.lt.s32.totalorder %s35, 1
      %s761 = scalar_select %p760, %s35, 1
      %s762 = smul.addr %s761, 8
      %s763 = scalar_lea.vmem %s24, %s762
      %p764 = scmp.lt.s32.totalorder %s35, 1
      %s765 = scalar_select %p764, %s35, 1
      %s766 = smul.addr %s765, 8
      %s767 = scalar_lea.vmem %s0, %s766
      %p768 = scmp.lt.s32.totalorder %s35, 1
      %s769 = scalar_select %p768, %s35, 1
      %s770 = smul.addr %s769, 8
      %s771 = scalar_lea.vmem %s1, %s770
      %p772 = scmp.lt.s32.totalorder %s35, 1
      %s773 = scalar_select %p772, %s35, 1
      %s774 = smul.addr %s773, 8
      %s775 = scalar_lea.vmem %s2, %s774
      %p776 = scmp.lt.s32.totalorder %s35, 1
      %s777 = scalar_select %p776, %s35, 1
      %s778 = smul.addr %s777, 8
      %s779 = scalar_lea.vmem %s3, %s778
      %p780 = scmp.lt.s32.totalorder %s35, 1
      %s781 = scalar_select %p780, %s35, 1
      %s782 = smul.addr %s781, 8
      %s783 = scalar_lea.vmem %s24, %s782
      %v784 = vld [vmem:[%s767] sm:$0xff]
      %v785 = vld [vmem:[%s771] sm:$0xff]
      %v786 = vld [vmem:[%s775] sm:$0xff]
      %v787 = vmul.f32 %v786, -1e+09
      %v788 = vld [vmem:[%s779] sm:$0xff]
      %v789 = vmul.f32 %v788, -1e+09
      %v790 = vld [vmem:[%s4] sm:$0xff]
      %v791 = vld [vmem:[%s4 + $0x8] sm:$0xff]
      %v792 = vld [vmem:[%s4 + $0x10] sm:$0xff]
      %v793 = vld [vmem:[%s4 + $0x18] sm:$0xff]
      %v794 = vld [vmem:[%s5] sm:$0xff]
      %v795 = vld [vmem:[%s5 + $0x8] sm:$0xff]
      %v796 = vld [vmem:[%s5 + $0x10] sm:$0xff]
      %v797 = vld [vmem:[%s5 + $0x18] sm:$0xff]
      %v798 = vld [vmem:[%s6] sm:$0xff]
      %v799 = vld [vmem:[%s6 + $0x8] sm:$0xff]
      %v800 = vld [vmem:[%s6 + $0x10] sm:$0xff]
      %v801 = vld [vmem:[%s6 + $0x18] sm:$0xff]
      %v802 = vld [vmem:[%s7] sm:$0xff]
      %v803 = vld [vmem:[%s7 + $0x8] sm:$0xff]
      %v804 = vld [vmem:[%s7 + $0x10] sm:$0xff]
      %v805 = vld [vmem:[%s7 + $0x18] sm:$0xff]
      %v806 = vld [vmem:[%s8] sm:$0x1]
      %v807 = vld [vmem:[%s9] sm:$0x1]
      %v808 = vld [vmem:[%s10] sm:$0x1]
      %vm809 = vcmask 261120
      %v811 = vsel %vm809, %v784, 0
      %813 = vmatprep.subr.mxu0 0.0
      %814 = vmatpush1.msra.mxu0 0.0
      %815 = vmatprep.subr.mxu0 0.0
      %816 = vmatpush1.msra.mxu0 0.0
      %817 = vmatprep.subr.mxu0 0.0
      %818 = vmatpush1.msra.mxu0 0.0
      %819 = vmatprep.subr.mxu0 0.0
      %820 = vmatpush1.msra.mxu0 0.0
      %821 = vmatprep.subr.mxu0 0.0
      %822 = vmatpush1.msra.mxu0 0.0
      %823 = vmatprep.subr.mxu0 0.0
      %824 = vmatpush1.msra.mxu0 0.0
      %825 = vmatprep.subr.mxu0 0.0
      %826 = vmatpush1.msra.mxu0 0.0
      %827 = vmatprep.subr.mxu0 0.0
      %828 = vmatpush1.msra.mxu0 0.0
      %829 = vmatprep.subr.mxu0 0.0
      %830 = vmatpush1.msra.mxu0 0.0
      %831 = vmatprep.subr.mxu0 0.0
      %832 = vmatpush1.msra.mxu0 0.0
      %833 = vmatprep.subr.mxu0 0.0
      %834 = vmatpush1.msra.mxu0 0.0
      %835 = vmatprep.subr.mxu0 0.0
      %836 = vmatpush1.msra.mxu0 0.0
      %837 = vmatprep.subr.mxu0 0.0
      %838 = vmatpush1.msra.mxu0 %v793
      %839 = vmatprep.subr.mxu0 0.0
      %840 = vmatpush1.msra.mxu0 %v792
      %841 = vmatprep.subr.mxu0 0.0
      %842 = vmatpush1.msra.mxu0 %v791
      %843 = vmatprep.subr.mxu0 0.0
      %844 = vmatpush1.msra.mxu0 %v790
      %845 = vmatprep.subr.mxu0 0.0
      %846 = vmatpush2.msra.mxu0 0.0
      %847 = vmatprep.subr.mxu0 0.0
      %848 = vmatpush2.msra.mxu0 0.0
      %849 = vmatprep.subr.mxu0 0.0
      %850 = vmatpush2.msra.mxu0 0.0
      %851 = vmatprep.subr.mxu0 0.0
      %852 = vmatpush2.msra.mxu0 0.0
      %853 = vmatprep.subr.mxu0 0.0
      %854 = vmatpush2.msra.mxu0 0.0
      %855 = vmatprep.subr.mxu0 0.0
      %856 = vmatpush2.msra.mxu0 0.0
      %857 = vmatprep.subr.mxu0 0.0
      %858 = vmatpush2.msra.mxu0 0.0
      %859 = vmatprep.subr.mxu0 0.0
      %860 = vmatpush2.msra.mxu0 0.0
      %861 = vmatprep.subr.mxu0 0.0
      %862 = vmatpush2.msra.mxu0 0.0
      %863 = vmatprep.subr.mxu0 0.0
      %864 = vmatpush2.msra.mxu0 0.0
      %865 = vmatprep.subr.mxu0 0.0
      %866 = vmatpush2.msra.mxu0 0.0
      %867 = vmatprep.subr.mxu0 0.0
      %868 = vmatpush2.msra.mxu0 0.0
      %869 = vmatprep.subr.mxu0 0.0
      %870 = vmatpush2.msra.mxu0 0.0
      %871 = vmatprep.subr.mxu0 0.0
      %872 = vmatpush2.msra.mxu0 0.0
      %873 = vmatprep.subr.mxu0 0.0
      %874 = vmatpush2.msra.mxu0 0.0
      %875 = vmatprep.subr.mxu0 0.0
      %876 = vmatpush2.msra.mxu0 0.0
      %877 = vmatprep.mubr.f32.mxu0 0.0
      %878 = vmatmul.mubr.f32.gmra.mxu0 %v811
      %v879 = vpop.f32.mrf.mxu0
      %v880 = vadd.f32 0.0, %v879
      %v881 = vpop.f32.mrf.mxu0
      %882 = vdwg.mxu0
      %v883 = vmul.f32 %v880, 0.17677669
      %884 = vmatprep.subr.mxu0 0.0
      %885 = vmatpush1.msra.mxu0 0.0
      %886 = vmatprep.subr.mxu0 0.0
      %887 = vmatpush1.msra.mxu0 0.0
      %888 = vmatprep.subr.mxu0 0.0
      %889 = vmatpush1.msra.mxu0 0.0
      %890 = vmatprep.subr.mxu0 0.0
      %891 = vmatpush1.msra.mxu0 0.0
      %892 = vmatprep.subr.mxu0 0.0
      %893 = vmatpush1.msra.mxu0 0.0
      %894 = vmatprep.subr.mxu0 0.0
      %895 = vmatpush1.msra.mxu0 0.0
      %896 = vmatprep.subr.mxu0 0.0
      %897 = vmatpush1.msra.mxu0 0.0
      %898 = vmatprep.subr.mxu0 0.0
      %899 = vmatpush1.msra.mxu0 0.0
      %900 = vmatprep.subr.mxu0 0.0
      %901 = vmatpush1.msra.mxu0 0.0
      %902 = vmatprep.subr.mxu0 0.0
      %903 = vmatpush1.msra.mxu0 0.0
      %904 = vmatprep.subr.mxu0 0.0
      %905 = vmatpush1.msra.mxu0 0.0
      %906 = vmatprep.subr.mxu0 0.0
      %907 = vmatpush1.msra.mxu0 0.0
      %908 = vmatprep.subr.mxu0 0.0
      %909 = vmatpush1.msra.mxu0 %v797
      %910 = vmatprep.subr.mxu0 0.0
      %911 = vmatpush1.msra.mxu0 %v796
      %912 = vmatprep.subr.mxu0 0.0
      %913 = vmatpush1.msra.mxu0 %v795
      %914 = vmatprep.subr.mxu0 0.0
      %915 = vmatpush1.msra.mxu0 %v794
      %916 = vmatprep.subr.mxu0 0.0
      %917 = vmatpush2.msra.mxu0 0.0
      %918 = vmatprep.subr.mxu0 0.0
      %919 = vmatpush2.msra.mxu0 0.0
      %920 = vmatprep.subr.mxu0 0.0
      %921 = vmatpush2.msra.mxu0 0.0
      %922 = vmatprep.subr.mxu0 0.0
      %923 = vmatpush2.msra.mxu0 0.0
      %924 = vmatprep.subr.mxu0 0.0
      %925 = vmatpush2.msra.mxu0 0.0
      %926 = vmatprep.subr.mxu0 0.0
      %927 = vmatpush2.msra.mxu0 0.0
      %928 = vmatprep.subr.mxu0 0.0
      %929 = vmatpush2.msra.mxu0 0.0
      %930 = vmatprep.subr.mxu0 0.0
      %931 = vmatpush2.msra.mxu0 0.0
      %932 = vmatprep.subr.mxu0 0.0
      %933 = vmatpush2.msra.mxu0 0.0
      %934 = vmatprep.subr.mxu0 0.0
      %935 = vmatpush2.msra.mxu0 0.0
      %936 = vmatprep.subr.mxu0 0.0
      %937 = vmatpush2.msra.mxu0 0.0
      %938 = vmatprep.subr.mxu0 0.0
      %939 = vmatpush2.msra.mxu0 0.0
      %940 = vmatprep.subr.mxu0 0.0
      %941 = vmatpush2.msra.mxu0 0.0
      %942 = vmatprep.subr.mxu0 0.0
      %943 = vmatpush2.msra.mxu0 0.0
      %944 = vmatprep.subr.mxu0 0.0
      %945 = vmatpush2.msra.mxu0 0.0
      %946 = vmatprep.subr.mxu0 0.0
      %947 = vmatpush2.msra.mxu0 0.0
      %948 = vmatprep.mubr.f32.mxu0 0.0
      %949 = vmatmul.mubr.f32.gmra.mxu0 %v811
      %v950 = vpop.f32.mrf.mxu0
      %v951 = vadd.f32 0.0, %v950
      %v952 = vpop.f32.mrf.mxu0
      %953 = vdwg.mxu0
      %954 = vmatprep.subr.mxu0 0.0
      %955 = vmatpush1.msra.mxu0 0.0
      %956 = vmatprep.subr.mxu0 0.0
      %957 = vmatpush1.msra.mxu0 0.0
      %958 = vmatprep.subr.mxu0 0.0
      %959 = vmatpush1.msra.mxu0 0.0
      %960 = vmatprep.subr.mxu0 0.0
      %961 = vmatpush1.msra.mxu0 0.0
      %962 = vmatprep.subr.mxu0 0.0
      %963 = vmatpush1.msra.mxu0 0.0
      %964 = vmatprep.subr.mxu0 0.0
      %965 = vmatpush1.msra.mxu0 0.0
      %966 = vmatprep.subr.mxu0 0.0
      %967 = vmatpush1.msra.mxu0 0.0
      %968 = vmatprep.subr.mxu0 0.0
      %969 = vmatpush1.msra.mxu0 0.0
      %970 = vmatprep.subr.mxu0 0.0
      %971 = vmatpush1.msra.mxu0 0.0
      %972 = vmatprep.subr.mxu0 0.0
      %973 = vmatpush1.msra.mxu0 0.0
      %974 = vmatprep.subr.mxu0 0.0
      %975 = vmatpush1.msra.mxu0 0.0
      %976 = vmatprep.subr.mxu0 0.0
      %977 = vmatpush1.msra.mxu0 0.0
      %978 = vmatprep.subr.mxu0 0.0
      %979 = vmatpush1.msra.mxu0 %v801
      %980 = vmatprep.subr.mxu0 0.0
      %981 = vmatpush1.msra.mxu0 %v800
      %982 = vmatprep.subr.mxu0 0.0
      %983 = vmatpush1.msra.mxu0 %v799
      %984 = vmatprep.subr.mxu0 0.0
      %985 = vmatpush1.msra.mxu0 %v798
      %986 = vmatprep.subr.mxu0 0.0
      %987 = vmatpush2.msra.mxu0 0.0
      %988 = vmatprep.subr.mxu0 0.0
      %989 = vmatpush2.msra.mxu0 0.0
      %990 = vmatprep.subr.mxu0 0.0
      %991 = vmatpush2.msra.mxu0 0.0
      %992 = vmatprep.subr.mxu0 0.0
      %993 = vmatpush2.msra.mxu0 0.0
      %994 = vmatprep.subr.mxu0 0.0
      %995 = vmatpush2.msra.mxu0 0.0
      %996 = vmatprep.subr.mxu0 0.0
      %997 = vmatpush2.msra.mxu0 0.0
      %998 = vmatprep.subr.mxu0 0.0
      %999 = vmatpush2.msra.mxu0 0.0
      %1000 = vmatprep.subr.mxu0 0.0
      %1001 = vmatpush2.msra.mxu0 0.0
      %1002 = vmatprep.subr.mxu0 0.0
      %1003 = vmatpush2.msra.mxu0 0.0
      %1004 = vmatprep.subr.mxu0 0.0
      %1005 = vmatpush2.msra.mxu0 0.0
      %1006 = vmatprep.subr.mxu0 0.0
      %1007 = vmatpush2.msra.mxu0 0.0
      %1008 = vmatprep.subr.mxu0 0.0
      %1009 = vmatpush2.msra.mxu0 0.0
      %1010 = vmatprep.subr.mxu0 0.0
      %1011 = vmatpush2.msra.mxu0 0.0
      %1012 = vmatprep.subr.mxu0 0.0
      %1013 = vmatpush2.msra.mxu0 0.0
      %1014 = vmatprep.subr.mxu0 0.0
      %1015 = vmatpush2.msra.mxu0 0.0
      %1016 = vmatprep.subr.mxu0 0.0
      %1017 = vmatpush2.msra.mxu0 0.0
      %1018 = vmatprep.mubr.f32.mxu0 0.0
      %1019 = vmatmul.mubr.f32.gmra.mxu0 %v811
      %v1020 = vpop.f32.mrf.mxu0
      %v1021 = vadd.f32 0.0, %v1020
      %v1022 = vpop.f32.mrf.mxu0
      %1023 = vdwg.mxu0
      %vm1024 = vcmask 64512
      %v1026 = vsel %vm1024, %v883, 0
      %v1029 = vsel %vm1024, %v951, 0
      %1031 = vmatprep.subr.mxu0 0.0
      %1032 = vmatpush1.xpose.msra.mxu0 0.0
      %1033 = vmatprep.subr.mxu0 0.0
      %1034 = vmatpush1.xpose.msra.mxu0 0.0
      %1035 = vmatprep.subr.mxu0 0.0
      %1036 = vmatpush1.xpose.msra.mxu0 0.0
      %1037 = vmatprep.subr.mxu0 0.0
      %1038 = vmatpush1.xpose.msra.mxu0 0.0
      %1039 = vmatprep.subr.mxu0 0.0
      %1040 = vmatpush1.xpose.msra.mxu0 0.0
      %1041 = vmatprep.subr.mxu0 0.0
      %1042 = vmatpush1.xpose.msra.mxu0 0.0
      %1043 = vmatprep.subr.mxu0 0.0
      %1044 = vmatpush1.xpose.msra.mxu0 0.0
      %1045 = vmatprep.subr.mxu0 0.0
      %1046 = vmatpush1.xpose.msra.mxu0 0.0
      %1047 = vmatprep.subr.mxu0 0.0
      %1048 = vmatpush1.xpose.msra.mxu0 0.0
      %1049 = vmatprep.subr.mxu0 0.0
      %1050 = vmatpush1.xpose.msra.mxu0 0.0
      %1051 = vmatprep.subr.mxu0 0.0
      %1052 = vmatpush1.xpose.msra.mxu0 0.0
      %1053 = vmatprep.subr.mxu0 0.0
      %1054 = vmatpush1.xpose.msra.mxu0 0.0
      %1055 = vmatprep.subr.mxu0 0.0
      %1056 = vmatpush1.xpose.msra.mxu0 0.0
      %1057 = vmatprep.subr.mxu0 0.0
      %1058 = vmatpush1.xpose.msra.mxu0 0.0
      %1059 = vmatprep.subr.mxu0 0.0
      %1060 = vmatpush1.xpose.msra.mxu0 0.0
      %1061 = vmatprep.subr.mxu0 0.0
      %1062 = vmatpush1.xpose.msra.mxu0 %v1029
      %1063 = vmatprep.subr.mxu0 0.0
      %1064 = vmatpush2.xpose.msra.mxu0 0.0
      %1065 = vmatprep.subr.mxu0 0.0
      %1066 = vmatpush2.xpose.msra.mxu0 0.0
      %1067 = vmatprep.subr.mxu0 0.0
      %1068 = vmatpush2.xpose.msra.mxu0 0.0
      %1069 = vmatprep.subr.mxu0 0.0
      %1070 = vmatpush2.xpose.msra.mxu0 0.0
      %1071 = vmatprep.subr.mxu0 0.0
      %1072 = vmatpush2.xpose.msra.mxu0 0.0
      %1073 = vmatprep.subr.mxu0 0.0
      %1074 = vmatpush2.xpose.msra.mxu0 0.0
      %1075 = vmatprep.subr.mxu0 0.0
      %1076 = vmatpush2.xpose.msra.mxu0 0.0
      %1077 = vmatprep.subr.mxu0 0.0
      %1078 = vmatpush2.xpose.msra.mxu0 0.0
      %1079 = vmatprep.subr.mxu0 0.0
      %1080 = vmatpush2.xpose.msra.mxu0 0.0
      %1081 = vmatprep.subr.mxu0 0.0
      %1082 = vmatpush2.xpose.msra.mxu0 0.0
      %1083 = vmatprep.subr.mxu0 0.0
      %1084 = vmatpush2.xpose.msra.mxu0 0.0
      %1085 = vmatprep.subr.mxu0 0.0
      %1086 = vmatpush2.xpose.msra.mxu0 0.0
      %1087 = vmatprep.subr.mxu0 0.0
      %1088 = vmatpush2.xpose.msra.mxu0 0.0
      %1089 = vmatprep.subr.mxu0 0.0
      %1090 = vmatpush2.xpose.msra.mxu0 0.0
      %1091 = vmatprep.subr.mxu0 0.0
      %1092 = vmatpush2.xpose.msra.mxu0 0.0
      %1093 = vmatprep.subr.mxu0 0.0
      %1094 = vmatpush2.xpose.msra.mxu0 0.0
      %1095 = vmatprep.mubr.f32.mxu0 0.0
      %1096 = vmatmul.mubr.f32.gmra.mxu0 %v1026
      %v1097 = vpop.f32.mrf.mxu0
      %v1098 = vadd.f32 %v787, %v1097
      %v1099 = vpop.f32.mrf.mxu0
      %1100 = vdwg.mxu0
      %v1101 = vsel %vm1024, %v1098, -inf
      %1102 = vmax.xlane.f32.xlu0 %v1101
      %v1103 = vpop.xlane.xlu0 %1102
      %v1104 = vsub.f32 %v1098, %v1103
      %v1105 = vmul.f32 %v1104, 1.442695
      %v1106 = vpow.pop %v1105
      %v1107 = vsel %vm1024, %v1106, 0.0
      %1108 = vadd.xlane.f32.xlu0 %v1107
      %v1109 = vpop.xlane.xlu0 %1108
      %v1110 = vrcp.pop %v1109
      %v1111 = vmul.f32 %v1106, %v1110
      %v1113 = vsel %vm1024, %v1111, 0
      %1115 = vmatprep.subr.mxu0 0.0
      %1116 = vmatpush1.msra.mxu0 0.0
      %1117 = vmatprep.subr.mxu0 0.0
      %1118 = vmatpush1.msra.mxu0 0.0
      %1119 = vmatprep.subr.mxu0 0.0
      %1120 = vmatpush1.msra.mxu0 0.0
      %1121 = vmatprep.subr.mxu0 0.0
      %1122 = vmatpush1.msra.mxu0 0.0
      %1123 = vmatprep.subr.mxu0 0.0
      %1124 = vmatpush1.msra.mxu0 0.0
      %1125 = vmatprep.subr.mxu0 0.0
      %1126 = vmatpush1.msra.mxu0 0.0
      %1127 = vmatprep.subr.mxu0 0.0
      %1128 = vmatpush1.msra.mxu0 0.0
      %1129 = vmatprep.subr.mxu0 0.0
      %1130 = vmatpush1.msra.mxu0 0.0
      %1131 = vmatprep.subr.mxu0 0.0
      %1132 = vmatpush1.msra.mxu0 0.0
      %1133 = vmatprep.subr.mxu0 0.0
      %1134 = vmatpush1.msra.mxu0 0.0
      %1135 = vmatprep.subr.mxu0 0.0
      %1136 = vmatpush1.msra.mxu0 0.0
      %1137 = vmatprep.subr.mxu0 0.0
      %1138 = vmatpush1.msra.mxu0 0.0
      %1139 = vmatprep.subr.mxu0 0.0
      %1140 = vmatpush1.msra.mxu0 0.0
      %1141 = vmatprep.subr.mxu0 0.0
      %1142 = vmatpush1.msra.mxu0 0.0
      %1143 = vmatprep.subr.mxu0 0.0
      %1144 = vmatpush1.msra.mxu0 0.0
      %1145 = vmatprep.subr.mxu0 0.0
      %1146 = vmatpush1.msra.mxu0 %v1021
      %1147 = vmatprep.subr.mxu0 0.0
      %1148 = vmatpush2.msra.mxu0 0.0
      %1149 = vmatprep.subr.mxu0 0.0
      %1150 = vmatpush2.msra.mxu0 0.0
      %1151 = vmatprep.subr.mxu0 0.0
      %1152 = vmatpush2.msra.mxu0 0.0
      %1153 = vmatprep.subr.mxu0 0.0
      %1154 = vmatpush2.msra.mxu0 0.0
      %1155 = vmatprep.subr.mxu0 0.0
      %1156 = vmatpush2.msra.mxu0 0.0
      %1157 = vmatprep.subr.mxu0 0.0
      %1158 = vmatpush2.msra.mxu0 0.0
      %1159 = vmatprep.subr.mxu0 0.0
      %1160 = vmatpush2.msra.mxu0 0.0
      %1161 = vmatprep.subr.mxu0 0.0
      %1162 = vmatpush2.msra.mxu0 0.0
      %1163 = vmatprep.subr.mxu0 0.0
      %1164 = vmatpush2.msra.mxu0 0.0
      %1165 = vmatprep.subr.mxu0 0.0
      %1166 = vmatpush2.msra.mxu0 0.0
      %1167 = vmatprep.subr.mxu0 0.0
      %1168 = vmatpush2.msra.mxu0 0.0
      %1169 = vmatprep.subr.mxu0 0.0
      %1170 = vmatpush2.msra.mxu0 0.0
      %1171 = vmatprep.subr.mxu0 0.0
      %1172 = vmatpush2.msra.mxu0 0.0
      %1173 = vmatprep.subr.mxu0 0.0
      %1174 = vmatpush2.msra.mxu0 0.0
      %1175 = vmatprep.subr.mxu0 0.0
      %1176 = vmatpush2.msra.mxu0 0.0
      %1177 = vmatprep.subr.mxu0 0.0
      %1178 = vmatpush2.msra.mxu0 0.0
      %1179 = vmatprep.mubr.f32.mxu0 0.0
      %1180 = vmatmul.mubr.f32.gmra.mxu0 %v1113
      %v1181 = vpop.f32.mrf.mxu0
      %v1182 = vadd.f32 0.0, %v1181
      %v1183 = vpop.f32.mrf.mxu0
      %1184 = vdwg.mxu0
      %1185 = vrot.lane.b32.xlu0 %v883, 120
      %v1186 = vpop.permute.xlu0 %1185
      %1187 = vrot.lane.b32.xlu0 %v951, 120
      %v1188 = vpop.permute.xlu0 %1187
      %v1189 = vsel %vm1024, %v1186, 0
      %v1191 = vsel %vm1024, %v1188, 0
      %1193 = vmatprep.subr.mxu0 0.0
      %1194 = vmatpush1.xpose.msra.mxu0 0.0
      %1195 = vmatprep.subr.mxu0 0.0
      %1196 = vmatpush1.xpose.msra.mxu0 0.0
      %1197 = vmatprep.subr.mxu0 0.0
      %1198 = vmatpush1.xpose.msra.mxu0 0.0
      %1199 = vmatprep.subr.mxu0 0.0
      %1200 = vmatpush1.xpose.msra.mxu0 0.0
      %1201 = vmatprep.subr.mxu0 0.0
      %1202 = vmatpush1.xpose.msra.mxu0 0.0
      %1203 = vmatprep.subr.mxu0 0.0
      %1204 = vmatpush1.xpose.msra.mxu0 0.0
      %1205 = vmatprep.subr.mxu0 0.0
      %1206 = vmatpush1.xpose.msra.mxu0 0.0
      %1207 = vmatprep.subr.mxu0 0.0
      %1208 = vmatpush1.xpose.msra.mxu0 0.0
      %1209 = vmatprep.subr.mxu0 0.0
      %1210 = vmatpush1.xpose.msra.mxu0 0.0
      %1211 = vmatprep.subr.mxu0 0.0
      %1212 = vmatpush1.xpose.msra.mxu0 0.0
      %1213 = vmatprep.subr.mxu0 0.0
      %1214 = vmatpush1.xpose.msra.mxu0 0.0
      %1215 = vmatprep.subr.mxu0 0.0
      %1216 = vmatpush1.xpose.msra.mxu0 0.0
      %1217 = vmatprep.subr.mxu0 0.0
      %1218 = vmatpush1.xpose.msra.mxu0 0.0
      %1219 = vmatprep.subr.mxu0 0.0
      %1220 = vmatpush1.xpose.msra.mxu0 0.0
      %1221 = vmatprep.subr.mxu0 0.0
      %1222 = vmatpush1.xpose.msra.mxu0 0.0
      %1223 = vmatprep.subr.mxu0 0.0
      %1224 = vmatpush1.xpose.msra.mxu0 %v1191
      %1225 = vmatprep.subr.mxu0 0.0
      %1226 = vmatpush2.xpose.msra.mxu0 0.0
      %1227 = vmatprep.subr.mxu0 0.0
      %1228 = vmatpush2.xpose.msra.mxu0 0.0
      %1229 = vmatprep.subr.mxu0 0.0
      %1230 = vmatpush2.xpose.msra.mxu0 0.0
      %1231 = vmatprep.subr.mxu0 0.0
      %1232 = vmatpush2.xpose.msra.mxu0 0.0
      %1233 = vmatprep.subr.mxu0 0.0
      %1234 = vmatpush2.xpose.msra.mxu0 0.0
      %1235 = vmatprep.subr.mxu0 0.0
      %1236 = vmatpush2.xpose.msra.mxu0 0.0
      %1237 = vmatprep.subr.mxu0 0.0
      %1238 = vmatpush2.xpose.msra.mxu0 0.0
      %1239 = vmatprep.subr.mxu0 0.0
      %1240 = vmatpush2.xpose.msra.mxu0 0.0
      %1241 = vmatprep.subr.mxu0 0.0
      %1242 = vmatpush2.xpose.msra.mxu0 0.0
      %1243 = vmatprep.subr.mxu0 0.0
      %1244 = vmatpush2.xpose.msra.mxu0 0.0
      %1245 = vmatprep.subr.mxu0 0.0
      %1246 = vmatpush2.xpose.msra.mxu0 0.0
      %1247 = vmatprep.subr.mxu0 0.0
      %1248 = vmatpush2.xpose.msra.mxu0 0.0
      %1249 = vmatprep.subr.mxu0 0.0
      %1250 = vmatpush2.xpose.msra.mxu0 0.0
      %1251 = vmatprep.subr.mxu0 0.0
      %1252 = vmatpush2.xpose.msra.mxu0 0.0
      %1253 = vmatprep.subr.mxu0 0.0
      %1254 = vmatpush2.xpose.msra.mxu0 0.0
      %1255 = vmatprep.subr.mxu0 0.0
      %1256 = vmatpush2.xpose.msra.mxu0 0.0
      %1257 = vmatprep.mubr.f32.mxu0 0.0
      %1258 = vmatmul.mubr.f32.gmra.mxu0 %v1189
      %v1259 = vpop.f32.mrf.mxu0
      %v1260 = vadd.f32 %v787, %v1259
      %v1261 = vpop.f32.mrf.mxu0
      %1262 = vdwg.mxu0
      %v1263 = vsel %vm1024, %v1260, -inf
      %1264 = vmax.xlane.f32.xlu0 %v1263
      %v1265 = vpop.xlane.xlu0 %1264
      %v1266 = vsub.f32 %v1260, %v1265
      %v1267 = vmul.f32 %v1266, 1.442695
      %v1268 = vpow.pop %v1267
      %v1269 = vsel %vm1024, %v1268, 0.0
      %1270 = vadd.xlane.f32.xlu0 %v1269
      %v1271 = vpop.xlane.xlu0 %1270
      %v1272 = vrcp.pop %v1271
      %v1273 = vmul.f32 %v1268, %v1272
      %1275 = vrot.lane.b32.xlu0 %v1021, 120
      %v1276 = vpop.permute.xlu0 %1275
      %v1279 = vsel %vm1024, %v1273, 0
      %1281 = vmatprep.subr.mxu0 0.0
      %1282 = vmatpush1.msra.mxu0 0.0
      %1283 = vmatprep.subr.mxu0 0.0
      %1284 = vmatpush1.msra.mxu0 0.0
      %1285 = vmatprep.subr.mxu0 0.0
      %1286 = vmatpush1.msra.mxu0 0.0
      %1287 = vmatprep.subr.mxu0 0.0
      %1288 = vmatpush1.msra.mxu0 0.0
      %1289 = vmatprep.subr.mxu0 0.0
      %1290 = vmatpush1.msra.mxu0 0.0
      %1291 = vmatprep.subr.mxu0 0.0
      %1292 = vmatpush1.msra.mxu0 0.0
      %1293 = vmatprep.subr.mxu0 0.0
      %1294 = vmatpush1.msra.mxu0 0.0
      %1295 = vmatprep.subr.mxu0 0.0
      %1296 = vmatpush1.msra.mxu0 0.0
      %1297 = vmatprep.subr.mxu0 0.0
      %1298 = vmatpush1.msra.mxu0 0.0
      %1299 = vmatprep.subr.mxu0 0.0
      %1300 = vmatpush1.msra.mxu0 0.0
      %1301 = vmatprep.subr.mxu0 0.0
      %1302 = vmatpush1.msra.mxu0 0.0
      %1303 = vmatprep.subr.mxu0 0.0
      %1304 = vmatpush1.msra.mxu0 0.0
      %1305 = vmatprep.subr.mxu0 0.0
      %1306 = vmatpush1.msra.mxu0 0.0
      %1307 = vmatprep.subr.mxu0 0.0
      %1308 = vmatpush1.msra.mxu0 0.0
      %1309 = vmatprep.subr.mxu0 0.0
      %1310 = vmatpush1.msra.mxu0 0.0
      %1311 = vmatprep.subr.mxu0 0.0
      %1312 = vmatpush1.msra.mxu0 %v1276
      %1313 = vmatprep.subr.mxu0 0.0
      %1314 = vmatpush2.msra.mxu0 0.0
      %1315 = vmatprep.subr.mxu0 0.0
      %1316 = vmatpush2.msra.mxu0 0.0
      %1317 = vmatprep.subr.mxu0 0.0
      %1318 = vmatpush2.msra.mxu0 0.0
      %1319 = vmatprep.subr.mxu0 0.0
      %1320 = vmatpush2.msra.mxu0 0.0
      %1321 = vmatprep.subr.mxu0 0.0
      %1322 = vmatpush2.msra.mxu0 0.0
      %1323 = vmatprep.subr.mxu0 0.0
      %1324 = vmatpush2.msra.mxu0 0.0
      %1325 = vmatprep.subr.mxu0 0.0
      %1326 = vmatpush2.msra.mxu0 0.0
      %1327 = vmatprep.subr.mxu0 0.0
      %1328 = vmatpush2.msra.mxu0 0.0
      %1329 = vmatprep.subr.mxu0 0.0
      %1330 = vmatpush2.msra.mxu0 0.0
      %1331 = vmatprep.subr.mxu0 0.0
      %1332 = vmatpush2.msra.mxu0 0.0
      %1333 = vmatprep.subr.mxu0 0.0
      %1334 = vmatpush2.msra.mxu0 0.0
      %1335 = vmatprep.subr.mxu0 0.0
      %1336 = vmatpush2.msra.mxu0 0.0
      %1337 = vmatprep.subr.mxu0 0.0
      %1338 = vmatpush2.msra.mxu0 0.0
      %1339 = vmatprep.subr.mxu0 0.0
      %1340 = vmatpush2.msra.mxu0 0.0
      %1341 = vmatprep.subr.mxu0 0.0
      %1342 = vmatpush2.msra.mxu0 0.0
      %1343 = vmatprep.subr.mxu0 0.0
      %1344 = vmatpush2.msra.mxu0 0.0
      %1345 = vmatprep.mubr.f32.mxu0 0.0
      %1346 = vmatmul.mubr.f32.gmra.mxu0 %v1279
      %v1347 = vpop.f32.mrf.mxu0
      %v1348 = vadd.f32 0.0, %v1347
      %v1349 = vpop.f32.mrf.mxu0
      %1350 = vdwg.mxu0
      %1351 = vrot.lane.b32.xlu0 %v883, 112
      %v1352 = vpop.permute.xlu0 %1351
      %1353 = vrot.lane.b32.xlu0 %v951, 112
      %v1354 = vpop.permute.xlu0 %1353
      %v1355 = vsel %vm1024, %v1352, 0
      %v1357 = vsel %vm1024, %v1354, 0
      %1359 = vmatprep.subr.mxu0 0.0
      %1360 = vmatpush1.xpose.msra.mxu0 0.0
      %1361 = vmatprep.subr.mxu0 0.0
      %1362 = vmatpush1.xpose.msra.mxu0 0.0
      %1363 = vmatprep.subr.mxu0 0.0
      %1364 = vmatpush1.xpose.msra.mxu0 0.0
      %1365 = vmatprep.subr.mxu0 0.0
      %1366 = vmatpush1.xpose.msra.mxu0 0.0
      %1367 = vmatprep.subr.mxu0 0.0
      %1368 = vmatpush1.xpose.msra.mxu0 0.0
      %1369 = vmatprep.subr.mxu0 0.0
      %1370 = vmatpush1.xpose.msra.mxu0 0.0
      %1371 = vmatprep.subr.mxu0 0.0
      %1372 = vmatpush1.xpose.msra.mxu0 0.0
      %1373 = vmatprep.subr.mxu0 0.0
      %1374 = vmatpush1.xpose.msra.mxu0 0.0
      %1375 = vmatprep.subr.mxu0 0.0
      %1376 = vmatpush1.xpose.msra.mxu0 0.0
      %1377 = vmatprep.subr.mxu0 0.0
      %1378 = vmatpush1.xpose.msra.mxu0 0.0
      %1379 = vmatprep.subr.mxu0 0.0
      %1380 = vmatpush1.xpose.msra.mxu0 0.0
      %1381 = vmatprep.subr.mxu0 0.0
      %1382 = vmatpush1.xpose.msra.mxu0 0.0
      %1383 = vmatprep.subr.mxu0 0.0
      %1384 = vmatpush1.xpose.msra.mxu0 0.0
      %1385 = vmatprep.subr.mxu0 0.0
      %1386 = vmatpush1.xpose.msra.mxu0 0.0
      %1387 = vmatprep.subr.mxu0 0.0
      %1388 = vmatpush1.xpose.msra.mxu0 0.0
      %1389 = vmatprep.subr.mxu0 0.0
      %1390 = vmatpush1.xpose.msra.mxu0 %v1357
      %1391 = vmatprep.subr.mxu0 0.0
      %1392 = vmatpush2.xpose.msra.mxu0 0.0
      %1393 = vmatprep.subr.mxu0 0.0
      %1394 = vmatpush2.xpose.msra.mxu0 0.0
      %1395 = vmatprep.subr.mxu0 0.0
      %1396 = vmatpush2.xpose.msra.mxu0 0.0
      %1397 = vmatprep.subr.mxu0 0.0
      %1398 = vmatpush2.xpose.msra.mxu0 0.0
      %1399 = vmatprep.subr.mxu0 0.0
      %1400 = vmatpush2.xpose.msra.mxu0 0.0
      %1401 = vmatprep.subr.mxu0 0.0
      %1402 = vmatpush2.xpose.msra.mxu0 0.0
      %1403 = vmatprep.subr.mxu0 0.0
      %1404 = vmatpush2.xpose.msra.mxu0 0.0
      %1405 = vmatprep.subr.mxu0 0.0
      %1406 = vmatpush2.xpose.msra.mxu0 0.0
      %1407 = vmatprep.subr.mxu0 0.0
      %1408 = vmatpush2.xpose.msra.mxu0 0.0
      %1409 = vmatprep.subr.mxu0 0.0
      %1410 = vmatpush2.xpose.msra.mxu0 0.0
      %1411 = vmatprep.subr.mxu0 0.0
      %1412 = vmatpush2.xpose.msra.mxu0 0.0
      %1413 = vmatprep.subr.mxu0 0.0
      %1414 = vmatpush2.xpose.msra.mxu0 0.0
      %1415 = vmatprep.subr.mxu0 0.0
      %1416 = vmatpush2.xpose.msra.mxu0 0.0
      %1417 = vmatprep.subr.mxu0 0.0
      %1418 = vmatpush2.xpose.msra.mxu0 0.0
      %1419 = vmatprep.subr.mxu0 0.0
      %1420 = vmatpush2.xpose.msra.mxu0 0.0
      %1421 = vmatprep.subr.mxu0 0.0
      %1422 = vmatpush2.xpose.msra.mxu0 0.0
      %1423 = vmatprep.mubr.f32.mxu0 0.0
      %1424 = vmatmul.mubr.f32.gmra.mxu0 %v1355
      %v1425 = vpop.f32.mrf.mxu0
      %v1426 = vadd.f32 %v787, %v1425
      %v1427 = vpop.f32.mrf.mxu0
      %1428 = vdwg.mxu0
      %v1429 = vsel %vm1024, %v1426, -inf
      %1430 = vmax.xlane.f32.xlu0 %v1429
      %v1431 = vpop.xlane.xlu0 %1430
      %v1432 = vsub.f32 %v1426, %v1431
      %v1433 = vmul.f32 %v1432, 1.442695
      %v1434 = vpow.pop %v1433
      %v1435 = vsel %vm1024, %v1434, 0.0
      %1436 = vadd.xlane.f32.xlu0 %v1435
      %v1437 = vpop.xlane.xlu0 %1436
      %v1438 = vrcp.pop %v1437
      %v1439 = vmul.f32 %v1434, %v1438
      %1440 = vrot.lane.b32.xlu0 %v1021, 112
      %v1441 = vpop.permute.xlu0 %1440
      %v1444 = vsel %vm1024, %v1439, 0
      %1446 = vmatprep.subr.mxu0 0.0
      %1447 = vmatpush1.msra.mxu0 0.0
      %1448 = vmatprep.subr.mxu0 0.0
      %1449 = vmatpush1.msra.mxu0 0.0
      %1450 = vmatprep.subr.mxu0 0.0
      %1451 = vmatpush1.msra.mxu0 0.0
      %1452 = vmatprep.subr.mxu0 0.0
      %1453 = vmatpush1.msra.mxu0 0.0
      %1454 = vmatprep.subr.mxu0 0.0
      %1455 = vmatpush1.msra.mxu0 0.0
      %1456 = vmatprep.subr.mxu0 0.0
      %1457 = vmatpush1.msra.mxu0 0.0
      %1458 = vmatprep.subr.mxu0 0.0
      %1459 = vmatpush1.msra.mxu0 0.0
      %1460 = vmatprep.subr.mxu0 0.0
      %1461 = vmatpush1.msra.mxu0 0.0
      %1462 = vmatprep.subr.mxu0 0.0
      %1463 = vmatpush1.msra.mxu0 0.0
      %1464 = vmatprep.subr.mxu0 0.0
      %1465 = vmatpush1.msra.mxu0 0.0
      %1466 = vmatprep.subr.mxu0 0.0
      %1467 = vmatpush1.msra.mxu0 0.0
      %1468 = vmatprep.subr.mxu0 0.0
      %1469 = vmatpush1.msra.mxu0 0.0
      %1470 = vmatprep.subr.mxu0 0.0
      %1471 = vmatpush1.msra.mxu0 0.0
      %1472 = vmatprep.subr.mxu0 0.0
      %1473 = vmatpush1.msra.mxu0 0.0
      %1474 = vmatprep.subr.mxu0 0.0
      %1475 = vmatpush1.msra.mxu0 0.0
      %1476 = vmatprep.subr.mxu0 0.0
      %1477 = vmatpush1.msra.mxu0 %v1441
      %1478 = vmatprep.subr.mxu0 0.0
      %1479 = vmatpush2.msra.mxu0 0.0
      %1480 = vmatprep.subr.mxu0 0.0
      %1481 = vmatpush2.msra.mxu0 0.0
      %1482 = vmatprep.subr.mxu0 0.0
      %1483 = vmatpush2.msra.mxu0 0.0
      %1484 = vmatprep.subr.mxu0 0.0
      %1485 = vmatpush2.msra.mxu0 0.0
      %1486 = vmatprep.subr.mxu0 0.0
      %1487 = vmatpush2.msra.mxu0 0.0
      %1488 = vmatprep.subr.mxu0 0.0
      %1489 = vmatpush2.msra.mxu0 0.0
      %1490 = vmatprep.subr.mxu0 0.0
      %1491 = vmatpush2.msra.mxu0 0.0
      %1492 = vmatprep.subr.mxu0 0.0
      %1493 = vmatpush2.msra.mxu0 0.0
      %1494 = vmatprep.subr.mxu0 0.0
      %1495 = vmatpush2.msra.mxu0 0.0
      %1496 = vmatprep.subr.mxu0 0.0
      %1497 = vmatpush2.msra.mxu0 0.0
      %1498 = vmatprep.subr.mxu0 0.0
      %1499 = vmatpush2.msra.mxu0 0.0
      %1500 = vmatprep.subr.mxu0 0.0
      %1501 = vmatpush2.msra.mxu0 0.0
      %1502 = vmatprep.subr.mxu0 0.0
      %1503 = vmatpush2.msra.mxu0 0.0
      %1504 = vmatprep.subr.mxu0 0.0
      %1505 = vmatpush2.msra.mxu0 0.0
      %1506 = vmatprep.subr.mxu0 0.0
      %1507 = vmatpush2.msra.mxu0 0.0
      %1508 = vmatprep.subr.mxu0 0.0
      %1509 = vmatpush2.msra.mxu0 0.0
      %1510 = vmatprep.mubr.f32.mxu0 0.0
      %1511 = vmatmul.mubr.f32.gmra.mxu0 %v1444
      %v1512 = vpop.f32.mrf.mxu0
      %v1513 = vadd.f32 0.0, %v1512
      %v1514 = vpop.f32.mrf.mxu0
      %1515 = vdwg.mxu0
      %1516 = vrot.lane.b32.xlu0 %v883, 104
      %v1517 = vpop.permute.xlu0 %1516
      %1518 = vrot.lane.b32.xlu0 %v951, 104
      %v1519 = vpop.permute.xlu0 %1518
      %v1520 = vsel %vm1024, %v1517, 0
      %v1522 = vsel %vm1024, %v1519, 0
      %1524 = vmatprep.subr.mxu0 0.0
      %1525 = vmatpush1.xpose.msra.mxu0 0.0
      %1526 = vmatprep.subr.mxu0 0.0
      %1527 = vmatpush1.xpose.msra.mxu0 0.0
      %1528 = vmatprep.subr.mxu0 0.0
      %1529 = vmatpush1.xpose.msra.mxu0 0.0
      %1530 = vmatprep.subr.mxu0 0.0
      %1531 = vmatpush1.xpose.msra.mxu0 0.0
      %1532 = vmatprep.subr.mxu0 0.0
      %1533 = vmatpush1.xpose.msra.mxu0 0.0
      %1534 = vmatprep.subr.mxu0 0.0
      %1535 = vmatpush1.xpose.msra.mxu0 0.0
      %1536 = vmatprep.subr.mxu0 0.0
      %1537 = vmatpush1.xpose.msra.mxu0 0.0
      %1538 = vmatprep.subr.mxu0 0.0
      %1539 = vmatpush1.xpose.msra.mxu0 0.0
      %1540 = vmatprep.subr.mxu0 0.0
      %1541 = vmatpush1.xpose.msra.mxu0 0.0
      %1542 = vmatprep.subr.mxu0 0.0
      %1543 = vmatpush1.xpose.msra.mxu0 0.0
      %1544 = vmatprep.subr.mxu0 0.0
      %1545 = vmatpush1.xpose.msra.mxu0 0.0
      %1546 = vmatprep.subr.mxu0 0.0
      %1547 = vmatpush1.xpose.msra.mxu0 0.0
      %1548 = vmatprep.subr.mxu0 0.0
      %1549 = vmatpush1.xpose.msra.mxu0 0.0
      %1550 = vmatprep.subr.mxu0 0.0
      %1551 = vmatpush1.xpose.msra.mxu0 0.0
      %1552 = vmatprep.subr.mxu0 0.0
      %1553 = vmatpush1.xpose.msra.mxu0 0.0
      %1554 = vmatprep.subr.mxu0 0.0
      %1555 = vmatpush1.xpose.msra.mxu0 %v1522
      %1556 = vmatprep.subr.mxu0 0.0
      %1557 = vmatpush2.xpose.msra.mxu0 0.0
      %1558 = vmatprep.subr.mxu0 0.0
      %1559 = vmatpush2.xpose.msra.mxu0 0.0
      %1560 = vmatprep.subr.mxu0 0.0
      %1561 = vmatpush2.xpose.msra.mxu0 0.0
      %1562 = vmatprep.subr.mxu0 0.0
      %1563 = vmatpush2.xpose.msra.mxu0 0.0
      %1564 = vmatprep.subr.mxu0 0.0
      %1565 = vmatpush2.xpose.msra.mxu0 0.0
      %1566 = vmatprep.subr.mxu0 0.0
      %1567 = vmatpush2.xpose.msra.mxu0 0.0
      %1568 = vmatprep.subr.mxu0 0.0
      %1569 = vmatpush2.xpose.msra.mxu0 0.0
      %1570 = vmatprep.subr.mxu0 0.0
      %1571 = vmatpush2.xpose.msra.mxu0 0.0
      %1572 = vmatprep.subr.mxu0 0.0
      %1573 = vmatpush2.xpose.msra.mxu0 0.0
      %1574 = vmatprep.subr.mxu0 0.0
      %1575 = vmatpush2.xpose.msra.mxu0 0.0
      %1576 = vmatprep.subr.mxu0 0.0
      %1577 = vmatpush2.xpose.msra.mxu0 0.0
      %1578 = vmatprep.subr.mxu0 0.0
      %1579 = vmatpush2.xpose.msra.mxu0 0.0
      %1580 = vmatprep.subr.mxu0 0.0
      %1581 = vmatpush2.xpose.msra.mxu0 0.0
      %1582 = vmatprep.subr.mxu0 0.0
      %1583 = vmatpush2.xpose.msra.mxu0 0.0
      %1584 = vmatprep.subr.mxu0 0.0
      %1585 = vmatpush2.xpose.msra.mxu0 0.0
      %1586 = vmatprep.subr.mxu0 0.0
      %1587 = vmatpush2.xpose.msra.mxu0 0.0
      %1588 = vmatprep.mubr.f32.mxu0 0.0
      %1589 = vmatmul.mubr.f32.gmra.mxu0 %v1520
      %v1590 = vpop.f32.mrf.mxu0
      %v1591 = vadd.f32 %v787, %v1590
      %v1592 = vpop.f32.mrf.mxu0
      %1593 = vdwg.mxu0
      %v1594 = vsel %vm1024, %v1591, -inf
      %1595 = vmax.xlane.f32.xlu0 %v1594
      %v1596 = vpop.xlane.xlu0 %1595
      %v1597 = vsub.f32 %v1591, %v1596
      %v1598 = vmul.f32 %v1597, 1.442695
      %v1599 = vpow.pop %v1598
      %v1600 = vsel %vm1024, %v1599, 0.0
      %1601 = vadd.xlane.f32.xlu0 %v1600
      %v1602 = vpop.xlane.xlu0 %1601
      %v1603 = vrcp.pop %v1602
      %v1604 = vmul.f32 %v1599, %v1603
      %1605 = vrot.lane.b32.xlu0 %v1021, 104
      %v1606 = vpop.permute.xlu0 %1605
      %v1609 = vsel %vm1024, %v1604, 0
      %1611 = vmatprep.subr.mxu0 0.0
      %1612 = vmatpush1.msra.mxu0 0.0
      %1613 = vmatprep.subr.mxu0 0.0
      %1614 = vmatpush1.msra.mxu0 0.0
      %1615 = vmatprep.subr.mxu0 0.0
      %1616 = vmatpush1.msra.mxu0 0.0
      %1617 = vmatprep.subr.mxu0 0.0
      %1618 = vmatpush1.msra.mxu0 0.0
      %1619 = vmatprep.subr.mxu0 0.0
      %1620 = vmatpush1.msra.mxu0 0.0
      %1621 = vmatprep.subr.mxu0 0.0
      %1622 = vmatpush1.msra.mxu0 0.0
      %1623 = vmatprep.subr.mxu0 0.0
      %1624 = vmatpush1.msra.mxu0 0.0
      %1625 = vmatprep.subr.mxu0 0.0
      %1626 = vmatpush1.msra.mxu0 0.0
      %1627 = vmatprep.subr.mxu0 0.0
      %1628 = vmatpush1.msra.mxu0 0.0
      %1629 = vmatprep.subr.mxu0 0.0
      %1630 = vmatpush1.msra.mxu0 0.0
      %1631 = vmatprep.subr.mxu0 0.0
      %1632 = vmatpush1.msra.mxu0 0.0
      %1633 = vmatprep.subr.mxu0 0.0
      %1634 = vmatpush1.msra.mxu0 0.0
      %1635 = vmatprep.subr.mxu0 0.0
      %1636 = vmatpush1.msra.mxu0 0.0
      %1637 = vmatprep.subr.mxu0 0.0
      %1638 = vmatpush1.msra.mxu0 0.0
      %1639 = vmatprep.subr.mxu0 0.0
      %1640 = vmatpush1.msra.mxu0 0.0
      %1641 = vmatprep.subr.mxu0 0.0
      %1642 = vmatpush1.msra.mxu0 %v1606
      %1643 = vmatprep.subr.mxu0 0.0
      %1644 = vmatpush2.msra.mxu0 0.0
      %1645 = vmatprep.subr.mxu0 0.0
      %1646 = vmatpush2.msra.mxu0 0.0
      %1647 = vmatprep.subr.mxu0 0.0
      %1648 = vmatpush2.msra.mxu0 0.0
      %1649 = vmatprep.subr.mxu0 0.0
      %1650 = vmatpush2.msra.mxu0 0.0
      %1651 = vmatprep.subr.mxu0 0.0
      %1652 = vmatpush2.msra.mxu0 0.0
      %1653 = vmatprep.subr.mxu0 0.0
      %1654 = vmatpush2.msra.mxu0 0.0
      %1655 = vmatprep.subr.mxu0 0.0
      %1656 = vmatpush2.msra.mxu0 0.0
      %1657 = vmatprep.subr.mxu0 0.0
      %1658 = vmatpush2.msra.mxu0 0.0
      %1659 = vmatprep.subr.mxu0 0.0
      %1660 = vmatpush2.msra.mxu0 0.0
      %1661 = vmatprep.subr.mxu0 0.0
      %1662 = vmatpush2.msra.mxu0 0.0
      %1663 = vmatprep.subr.mxu0 0.0
      %1664 = vmatpush2.msra.mxu0 0.0
      %1665 = vmatprep.subr.mxu0 0.0
      %1666 = vmatpush2.msra.mxu0 0.0
      %1667 = vmatprep.subr.mxu0 0.0
      %1668 = vmatpush2.msra.mxu0 0.0
      %1669 = vmatprep.subr.mxu0 0.0
      %1670 = vmatpush2.msra.mxu0 0.0
      %1671 = vmatprep.subr.mxu0 0.0
      %1672 = vmatpush2.msra.mxu0 0.0
      %1673 = vmatprep.subr.mxu0 0.0
      %1674 = vmatpush2.msra.mxu0 0.0
      %1675 = vmatprep.mubr.f32.mxu0 0.0
      %1676 = vmatmul.mubr.f32.gmra.mxu0 %v1609
      %v1677 = vpop.f32.mrf.mxu0
      %v1678 = vadd.f32 0.0, %v1677
      %v1679 = vpop.f32.mrf.mxu0
      %1680 = vdwg.mxu0
      %1682 = vrot.lane.b32.xlu0 %v1348, 8
      %v1683 = vpop.permute.xlu0 %1682
      %1686 = vrot.lane.b32.xlu0 %v1513, 16
      %v1687 = vpop.permute.xlu0 %1686
      %1690 = vrot.lane.b32.xlu0 %v1678, 24
      %v1691 = vpop.permute.xlu0 %1690
      %v1693 = vsel %vm1024, %v1182, %v1683
      %vm1694 = vcmask 130048
      %v1695 = vsel %vm1694, %v1693, %v1687
      %vm1696 = vcmask 195584
      %v1697 = vsel %vm1696, %v1695, %v1691
      %v1699 = vlaneseq
      %v1700 = vshrl.u32 %v1699, 7
      %v1701 = vsub.s32 0, %v1700
      %v1702 = vrot.slane %v806, %v1701
      %v1705 = vsel %vm809, %v1697, 0
      %1707 = vmatprep.subr.mxu0 0.0
      %1708 = vmatpush1.msra.mxu0 0.0
      %1709 = vmatprep.subr.mxu0 0.0
      %1710 = vmatpush1.msra.mxu0 0.0
      %1711 = vmatprep.subr.mxu0 0.0
      %1712 = vmatpush1.msra.mxu0 0.0
      %1713 = vmatprep.subr.mxu0 0.0
      %1714 = vmatpush1.msra.mxu0 0.0
      %1715 = vmatprep.subr.mxu0 0.0
      %1716 = vmatpush1.msra.mxu0 0.0
      %1717 = vmatprep.subr.mxu0 0.0
      %1718 = vmatpush1.msra.mxu0 0.0
      %1719 = vmatprep.subr.mxu0 0.0
      %1720 = vmatpush1.msra.mxu0 0.0
      %1721 = vmatprep.subr.mxu0 0.0
      %1722 = vmatpush1.msra.mxu0 0.0
      %1723 = vmatprep.subr.mxu0 0.0
      %1724 = vmatpush1.msra.mxu0 0.0
      %1725 = vmatprep.subr.mxu0 0.0
      %1726 = vmatpush1.msra.mxu0 0.0
      %1727 = vmatprep.subr.mxu0 0.0
      %1728 = vmatpush1.msra.mxu0 0.0
      %1729 = vmatprep.subr.mxu0 0.0
      %1730 = vmatpush1.msra.mxu0 0.0
      %1731 = vmatprep.subr.mxu0 0.0
      %1732 = vmatpush1.msra.mxu0 %v805
      %1733 = vmatprep.subr.mxu0 0.0
      %1734 = vmatpush1.msra.mxu0 %v804
      %1735 = vmatprep.subr.mxu0 0.0
      %1736 = vmatpush1.msra.mxu0 %v803
      %1737 = vmatprep.subr.mxu0 0.0
      %1738 = vmatpush1.msra.mxu0 %v802
      %1739 = vmatprep.subr.mxu0 0.0
      %1740 = vmatpush2.msra.mxu0 0.0
      %1741 = vmatprep.subr.mxu0 0.0
      %1742 = vmatpush2.msra.mxu0 0.0
      %1743 = vmatprep.subr.mxu0 0.0
      %1744 = vmatpush2.msra.mxu0 0.0
      %1745 = vmatprep.subr.mxu0 0.0
      %1746 = vmatpush2.msra.mxu0 0.0
      %1747 = vmatprep.subr.mxu0 0.0
      %1748 = vmatpush2.msra.mxu0 0.0
      %1749 = vmatprep.subr.mxu0 0.0
      %1750 = vmatpush2.msra.mxu0 0.0
      %1751 = vmatprep.subr.mxu0 0.0
      %1752 = vmatpush2.msra.mxu0 0.0
      %1753 = vmatprep.subr.mxu0 0.0
      %1754 = vmatpush2.msra.mxu0 0.0
      %1755 = vmatprep.subr.mxu0 0.0
      %1756 = vmatpush2.msra.mxu0 0.0
      %1757 = vmatprep.subr.mxu0 0.0
      %1758 = vmatpush2.msra.mxu0 0.0
      %1759 = vmatprep.subr.mxu0 0.0
      %1760 = vmatpush2.msra.mxu0 0.0
      %1761 = vmatprep.subr.mxu0 0.0
      %1762 = vmatpush2.msra.mxu0 0.0
      %1763 = vmatprep.subr.mxu0 0.0
      %1764 = vmatpush2.msra.mxu0 0.0
      %1765 = vmatprep.subr.mxu0 0.0
      %1766 = vmatpush2.msra.mxu0 0.0
      %1767 = vmatprep.subr.mxu0 0.0
      %1768 = vmatpush2.msra.mxu0 0.0
      %1769 = vmatprep.subr.mxu0 0.0
      %1770 = vmatpush2.msra.mxu0 0.0
      %1771 = vmatprep.mubr.f32.mxu0 0.0
      %1772 = vmatmul.mubr.f32.gmra.mxu0 %v1705
      %v1773 = vpop.f32.mrf.mxu0
      %v1774 = vadd.f32 %v1702, %v1773
      %v1775 = vpop.f32.mrf.mxu0
      %1776 = vdwg.mxu0
      %v1777 = vadd.f32 %v1774, %v784
      %v1778 = vsel %vm809, %v1777, 0.0
      %1779 = vadd.xlane.f32.xlu0 %v1778
      %v1780 = vpop.xlane.xlu0 %1779
      %v1781 = vrcp.pop 32.0
      %v1782 = vmul.f32 %v1780, %v1781
      %v1783 = vsub.f32 %v1777, %v1782
      %v1784 = vmul.f32 %v1783, %v1783
      %v1785 = vsel %vm809, %v1784, 0.0
      %1786 = vadd.xlane.f32.xlu0 %v1785
      %v1787 = vpop.xlane.xlu0 %1786
      %v1788 = vrcp.pop 31.0
      %v1789 = vmul.f32 %v1787, %v1788
      %v1790 = vrsqrt.pop %v1789
      %v1791 = vmul.f32 %v1789, %v1790
      %vm1792 = vcmp.eq.f32.partialorder %v1789, inf
      %v1793 = vsel %vm1792, %v1789, %v1791
      %vm1794 = vcmp.eq.f32.partialorder %v1789, 0.0
      %v1795 = vand.u32 %v1789, 2147483648
      %v1796 = vsel %vm1794, %v1795, %v1793
      %v1797 = vadd.f32 %v1796, 0.001
      %v1798 = vrcp.pop %v1797
      %v1799 = vmul.f32 %v1783, %v1798
      %v1801 = vlaneseq
      %v1802 = vshrl.u32 %v1801, 7
      %v1803 = vsub.s32 0, %v1802
      %v1804 = vrot.slane %v807, %v1803
      %v1806 = vmul.f32 %v1799, %v1804
      %v1808 = vlaneseq
      %v1809 = vshrl.u32 %v1808, 7
      %v1810 = vsub.s32 0, %v1809
      %v1811 = vrot.slane %v808, %v1810
      %v1813 = vadd.f32 %v1806, %v1811
      %v1814 = vld [vmem:[%s11] sm:$0xff]
      %v1815 = vld [vmem:[%s11 + $0x8] sm:$0xff]
      %v1816 = vld [vmem:[%s11 + $0x10] sm:$0xff]
      %v1817 = vld [vmem:[%s11 + $0x18] sm:$0xff]
      %v1818 = vld [vmem:[%s12] sm:$0xff]
      %v1819 = vld [vmem:[%s12 + $0x8] sm:$0xff]
      %v1820 = vld [vmem:[%s12 + $0x10] sm:$0xff]
      %v1821 = vld [vmem:[%s12 + $0x18] sm:$0xff]
      %v1822 = vld [vmem:[%s13] sm:$0xff]
      %v1823 = vld [vmem:[%s13 + $0x8] sm:$0xff]
      %v1824 = vld [vmem:[%s13 + $0x10] sm:$0xff]
      %v1825 = vld [vmem:[%s13 + $0x18] sm:$0xff]
      %v1826 = vld [vmem:[%s14] sm:$0xff]
      %v1827 = vld [vmem:[%s14 + $0x8] sm:$0xff]
      %v1828 = vld [vmem:[%s14 + $0x10] sm:$0xff]
      %v1829 = vld [vmem:[%s14 + $0x18] sm:$0xff]
      %v1830 = vld [vmem:[%s15] sm:$0x1]
      %v1831 = vld [vmem:[%s16] sm:$0x1]
      %v1832 = vld [vmem:[%s17] sm:$0x1]
      %v1834 = vsel %vm809, %v1813, 0
      %1836 = vmatprep.subr.mxu0 0.0
      %1837 = vmatpush1.msra.mxu0 0.0
      %1838 = vmatprep.subr.mxu0 0.0
      %1839 = vmatpush1.msra.mxu0 0.0
      %1840 = vmatprep.subr.mxu0 0.0
      %1841 = vmatpush1.msra.mxu0 0.0
      %1842 = vmatprep.subr.mxu0 0.0
      %1843 = vmatpush1.msra.mxu0 0.0
      %1844 = vmatprep.subr.mxu0 0.0
      %1845 = vmatpush1.msra.mxu0 0.0
      %1846 = vmatprep.subr.mxu0 0.0
      %1847 = vmatpush1.msra.mxu0 0.0
      %1848 = vmatprep.subr.mxu0 0.0
      %1849 = vmatpush1.msra.mxu0 0.0
      %1850 = vmatprep.subr.mxu0 0.0
      %1851 = vmatpush1.msra.mxu0 0.0
      %1852 = vmatprep.subr.mxu0 0.0
      %1853 = vmatpush1.msra.mxu0 0.0
      %1854 = vmatprep.subr.mxu0 0.0
      %1855 = vmatpush1.msra.mxu0 0.0
      %1856 = vmatprep.subr.mxu0 0.0
      %1857 = vmatpush1.msra.mxu0 0.0
      %1858 = vmatprep.subr.mxu0 0.0
      %1859 = vmatpush1.msra.mxu0 0.0
      %1860 = vmatprep.subr.mxu0 0.0
      %1861 = vmatpush1.msra.mxu0 %v1817
      %1862 = vmatprep.subr.mxu0 0.0
      %1863 = vmatpush1.msra.mxu0 %v1816
      %1864 = vmatprep.subr.mxu0 0.0
      %1865 = vmatpush1.msra.mxu0 %v1815
      %1866 = vmatprep.subr.mxu0 0.0
      %1867 = vmatpush1.msra.mxu0 %v1814
      %1868 = vmatprep.subr.mxu0 0.0
      %1869 = vmatpush2.msra.mxu0 0.0
      %1870 = vmatprep.subr.mxu0 0.0
      %1871 = vmatpush2.msra.mxu0 0.0
      %1872 = vmatprep.subr.mxu0 0.0
      %1873 = vmatpush2.msra.mxu0 0.0
      %1874 = vmatprep.subr.mxu0 0.0
      %1875 = vmatpush2.msra.mxu0 0.0
      %1876 = vmatprep.subr.mxu0 0.0
      %1877 = vmatpush2.msra.mxu0 0.0
      %1878 = vmatprep.subr.mxu0 0.0
      %1879 = vmatpush2.msra.mxu0 0.0
      %1880 = vmatprep.subr.mxu0 0.0
      %1881 = vmatpush2.msra.mxu0 0.0
      %1882 = vmatprep.subr.mxu0 0.0
      %1883 = vmatpush2.msra.mxu0 0.0
      %1884 = vmatprep.subr.mxu0 0.0
      %1885 = vmatpush2.msra.mxu0 0.0
      %1886 = vmatprep.subr.mxu0 0.0
      %1887 = vmatpush2.msra.mxu0 0.0
      %1888 = vmatprep.subr.mxu0 0.0
      %1889 = vmatpush2.msra.mxu0 0.0
      %1890 = vmatprep.subr.mxu0 0.0
      %1891 = vmatpush2.msra.mxu0 0.0
      %1892 = vmatprep.subr.mxu0 0.0
      %1893 = vmatpush2.msra.mxu0 0.0
      %1894 = vmatprep.subr.mxu0 0.0
      %1895 = vmatpush2.msra.mxu0 0.0
      %1896 = vmatprep.subr.mxu0 0.0
      %1897 = vmatpush2.msra.mxu0 0.0
      %1898 = vmatprep.subr.mxu0 0.0
      %1899 = vmatpush2.msra.mxu0 0.0
      %1900 = vmatprep.mubr.f32.mxu0 0.0
      %1901 = vmatmul.mubr.f32.gmra.mxu0 %v1834
      %v1902 = vpop.f32.mrf.mxu0
      %v1903 = vadd.f32 0.0, %v1902
      %v1904 = vpop.f32.mrf.mxu0
      %1905 = vdwg.mxu0
      %v1906 = vmul.f32 %v1903, 0.17677669
      %v1908 = vsel %vm809, %v785, 0
      %1910 = vmatprep.subr.mxu0 0.0
      %1911 = vmatpush1.msra.mxu0 0.0
      %1912 = vmatprep.subr.mxu0 0.0
      %1913 = vmatpush1.msra.mxu0 0.0
      %1914 = vmatprep.subr.mxu0 0.0
      %1915 = vmatpush1.msra.mxu0 0.0
      %1916 = vmatprep.subr.mxu0 0.0
      %1917 = vmatpush1.msra.mxu0 0.0
      %1918 = vmatprep.subr.mxu0 0.0
      %1919 = vmatpush1.msra.mxu0 0.0
      %1920 = vmatprep.subr.mxu0 0.0
      %1921 = vmatpush1.msra.mxu0 0.0
      %1922 = vmatprep.subr.mxu0 0.0
      %1923 = vmatpush1.msra.mxu0 0.0
      %1924 = vmatprep.subr.mxu0 0.0
      %1925 = vmatpush1.msra.mxu0 0.0
      %1926 = vmatprep.subr.mxu0 0.0
      %1927 = vmatpush1.msra.mxu0 0.0
      %1928 = vmatprep.subr.mxu0 0.0
      %1929 = vmatpush1.msra.mxu0 0.0
      %1930 = vmatprep.subr.mxu0 0.0
      %1931 = vmatpush1.msra.mxu0 0.0
      %1932 = vmatprep.subr.mxu0 0.0
      %1933 = vmatpush1.msra.mxu0 0.0
      %1934 = vmatprep.subr.mxu0 0.0
      %1935 = vmatpush1.msra.mxu0 %v1821
      %1936 = vmatprep.subr.mxu0 0.0
      %1937 = vmatpush1.msra.mxu0 %v1820
      %1938 = vmatprep.subr.mxu0 0.0
      %1939 = vmatpush1.msra.mxu0 %v1819
      %1940 = vmatprep.subr.mxu0 0.0
      %1941 = vmatpush1.msra.mxu0 %v1818
      %1942 = vmatprep.subr.mxu0 0.0
      %1943 = vmatpush2.msra.mxu0 0.0
      %1944 = vmatprep.subr.mxu0 0.0
      %1945 = vmatpush2.msra.mxu0 0.0
      %1946 = vmatprep.subr.mxu0 0.0
      %1947 = vmatpush2.msra.mxu0 0.0
      %1948 = vmatprep.subr.mxu0 0.0
      %1949 = vmatpush2.msra.mxu0 0.0
      %1950 = vmatprep.subr.mxu0 0.0
      %1951 = vmatpush2.msra.mxu0 0.0
      %1952 = vmatprep.subr.mxu0 0.0
      %1953 = vmatpush2.msra.mxu0 0.0
      %1954 = vmatprep.subr.mxu0 0.0
      %1955 = vmatpush2.msra.mxu0 0.0
      %1956 = vmatprep.subr.mxu0 0.0
      %1957 = vmatpush2.msra.mxu0 0.0
      %1958 = vmatprep.subr.mxu0 0.0
      %1959 = vmatpush2.msra.mxu0 0.0
      %1960 = vmatprep.subr.mxu0 0.0
      %1961 = vmatpush2.msra.mxu0 0.0
      %1962 = vmatprep.subr.mxu0 0.0
      %1963 = vmatpush2.msra.mxu0 0.0
      %1964 = vmatprep.subr.mxu0 0.0
      %1965 = vmatpush2.msra.mxu0 0.0
      %1966 = vmatprep.subr.mxu0 0.0
      %1967 = vmatpush2.msra.mxu0 0.0
      %1968 = vmatprep.subr.mxu0 0.0
      %1969 = vmatpush2.msra.mxu0 0.0
      %1970 = vmatprep.subr.mxu0 0.0
      %1971 = vmatpush2.msra.mxu0 0.0
      %1972 = vmatprep.subr.mxu0 0.0
      %1973 = vmatpush2.msra.mxu0 0.0
      %1974 = vmatprep.mubr.f32.mxu0 0.0
      %1975 = vmatmul.mubr.f32.gmra.mxu0 %v1908
      %v1976 = vpop.f32.mrf.mxu0
      %v1977 = vadd.f32 0.0, %v1976
      %v1978 = vpop.f32.mrf.mxu0
      %1979 = vdwg.mxu0
      %1980 = vmatprep.subr.mxu0 0.0
      %1981 = vmatpush1.msra.mxu0 0.0
      %1982 = vmatprep.subr.mxu0 0.0
      %1983 = vmatpush1.msra.mxu0 0.0
      %1984 = vmatprep.subr.mxu0 0.0
      %1985 = vmatpush1.msra.mxu0 0.0
      %1986 = vmatprep.subr.mxu0 0.0
      %1987 = vmatpush1.msra.mxu0 0.0
      %1988 = vmatprep.subr.mxu0 0.0
      %1989 = vmatpush1.msra.mxu0 0.0
      %1990 = vmatprep.subr.mxu0 0.0
      %1991 = vmatpush1.msra.mxu0 0.0
      %1992 = vmatprep.subr.mxu0 0.0
      %1993 = vmatpush1.msra.mxu0 0.0
      %1994 = vmatprep.subr.mxu0 0.0
      %1995 = vmatpush1.msra.mxu0 0.0
      %1996 = vmatprep.subr.mxu0 0.0
      %1997 = vmatpush1.msra.mxu0 0.0
      %1998 = vmatprep.subr.mxu0 0.0
      %1999 = vmatpush1.msra.mxu0 0.0
      %2000 = vmatprep.subr.mxu0 0.0
      %2001 = vmatpush1.msra.mxu0 0.0
      %2002 = vmatprep.subr.mxu0 0.0
      %2003 = vmatpush1.msra.mxu0 0.0
      %2004 = vmatprep.subr.mxu0 0.0
      %2005 = vmatpush1.msra.mxu0 %v1825
      %2006 = vmatprep.subr.mxu0 0.0
      %2007 = vmatpush1.msra.mxu0 %v1824
      %2008 = vmatprep.subr.mxu0 0.0
      %2009 = vmatpush1.msra.mxu0 %v1823
      %2010 = vmatprep.subr.mxu0 0.0
      %2011 = vmatpush1.msra.mxu0 %v1822
      %2012 = vmatprep.subr.mxu0 0.0
      %2013 = vmatpush2.msra.mxu0 0.0
      %2014 = vmatprep.subr.mxu0 0.0
      %2015 = vmatpush2.msra.mxu0 0.0
      %2016 = vmatprep.subr.mxu0 0.0
      %2017 = vmatpush2.msra.mxu0 0.0
      %2018 = vmatprep.subr.mxu0 0.0
      %2019 = vmatpush2.msra.mxu0 0.0
      %2020 = vmatprep.subr.mxu0 0.0
      %2021 = vmatpush2.msra.mxu0 0.0
      %2022 = vmatprep.subr.mxu0 0.0
      %2023 = vmatpush2.msra.mxu0 0.0
      %2024 = vmatprep.subr.mxu0 0.0
      %2025 = vmatpush2.msra.mxu0 0.0
      %2026 = vmatprep.subr.mxu0 0.0
      %2027 = vmatpush2.msra.mxu0 0.0
      %2028 = vmatprep.subr.mxu0 0.0
      %2029 = vmatpush2.msra.mxu0 0.0
      %2030 = vmatprep.subr.mxu0 0.0
      %2031 = vmatpush2.msra.mxu0 0.0
      %2032 = vmatprep.subr.mxu0 0.0
      %2033 = vmatpush2.msra.mxu0 0.0
      %2034 = vmatprep.subr.mxu0 0.0
      %2035 = vmatpush2.msra.mxu0 0.0
      %2036 = vmatprep.subr.mxu0 0.0
      %2037 = vmatpush2.msra.mxu0 0.0
      %2038 = vmatprep.subr.mxu0 0.0
      %2039 = vmatpush2.msra.mxu0 0.0
      %2040 = vmatprep.subr.mxu0 0.0
      %2041 = vmatpush2.msra.mxu0 0.0
      %2042 = vmatprep.subr.mxu0 0.0
      %2043 = vmatpush2.msra.mxu0 0.0
      %2044 = vmatprep.mubr.f32.mxu0 0.0
      %2045 = vmatmul.mubr.f32.gmra.mxu0 %v1908
      %v2046 = vpop.f32.mrf.mxu0
      %v2047 = vadd.f32 0.0, %v2046
      %v2048 = vpop.f32.mrf.mxu0
      %2049 = vdwg.mxu0
      %v2051 = vsel %vm1024, %v1906, 0
      %v2054 = vsel %vm1024, %v1977, 0
      %2056 = vmatprep.subr.mxu0 0.0
      %2057 = vmatpush1.xpose.msra.mxu0 0.0
      %2058 = vmatprep.subr.mxu0 0.0
      %2059 = vmatpush1.xpose.msra.mxu0 0.0
      %2060 = vmatprep.subr.mxu0 0.0
      %2061 = vmatpush1.xpose.msra.mxu0 0.0
      %2062 = vmatprep.subr.mxu0 0.0
      %2063 = vmatpush1.xpose.msra.mxu0 0.0
      %2064 = vmatprep.subr.mxu0 0.0
      %2065 = vmatpush1.xpose.msra.mxu0 0.0
      %2066 = vmatprep.subr.mxu0 0.0
      %2067 = vmatpush1.xpose.msra.mxu0 0.0
      %2068 = vmatprep.subr.mxu0 0.0
      %2069 = vmatpush1.xpose.msra.mxu0 0.0
      %2070 = vmatprep.subr.mxu0 0.0
      %2071 = vmatpush1.xpose.msra.mxu0 0.0
      %2072 = vmatprep.subr.mxu0 0.0
      %2073 = vmatpush1.xpose.msra.mxu0 0.0
      %2074 = vmatprep.subr.mxu0 0.0
      %2075 = vmatpush1.xpose.msra.mxu0 0.0
      %2076 = vmatprep.subr.mxu0 0.0
      %2077 = vmatpush1.xpose.msra.mxu0 0.0
      %2078 = vmatprep.subr.mxu0 0.0
      %2079 = vmatpush1.xpose.msra.mxu0 0.0
      %2080 = vmatprep.subr.mxu0 0.0
      %2081 = vmatpush1.xpose.msra.mxu0 0.0
      %2082 = vmatprep.subr.mxu0 0.0
      %2083 = vmatpush1.xpose.msra.mxu0 0.0
      %2084 = vmatprep.subr.mxu0 0.0
      %2085 = vmatpush1.xpose.msra.mxu0 0.0
      %2086 = vmatprep.subr.mxu0 0.0
      %2087 = vmatpush1.xpose.msra.mxu0 %v2054
      %2088 = vmatprep.subr.mxu0 0.0
      %2089 = vmatpush2.xpose.msra.mxu0 0.0
      %2090 = vmatprep.subr.mxu0 0.0
      %2091 = vmatpush2.xpose.msra.mxu0 0.0
      %2092 = vmatprep.subr.mxu0 0.0
      %2093 = vmatpush2.xpose.msra.mxu0 0.0
      %2094 = vmatprep.subr.mxu0 0.0
      %2095 = vmatpush2.xpose.msra.mxu0 0.0
      %2096 = vmatprep.subr.mxu0 0.0
      %2097 = vmatpush2.xpose.msra.mxu0 0.0
      %2098 = vmatprep.subr.mxu0 0.0
      %2099 = vmatpush2.xpose.msra.mxu0 0.0
      %2100 = vmatprep.subr.mxu0 0.0
      %2101 = vmatpush2.xpose.msra.mxu0 0.0
      %2102 = vmatprep.subr.mxu0 0.0
      %2103 = vmatpush2.xpose.msra.mxu0 0.0
      %2104 = vmatprep.subr.mxu0 0.0
      %2105 = vmatpush2.xpose.msra.mxu0 0.0
      %2106 = vmatprep.subr.mxu0 0.0
      %2107 = vmatpush2.xpose.msra.mxu0 0.0
      %2108 = vmatprep.subr.mxu0 0.0
      %2109 = vmatpush2.xpose.msra.mxu0 0.0
      %2110 = vmatprep.subr.mxu0 0.0
      %2111 = vmatpush2.xpose.msra.mxu0 0.0
      %2112 = vmatprep.subr.mxu0 0.0
      %2113 = vmatpush2.xpose.msra.mxu0 0.0
      %2114 = vmatprep.subr.mxu0 0.0
      %2115 = vmatpush2.xpose.msra.mxu0 0.0
      %2116 = vmatprep.subr.mxu0 0.0
      %2117 = vmatpush2.xpose.msra.mxu0 0.0
      %2118 = vmatprep.subr.mxu0 0.0
      %2119 = vmatpush2.xpose.msra.mxu0 0.0
      %2120 = vmatprep.mubr.f32.mxu0 0.0
      %2121 = vmatmul.mubr.f32.gmra.mxu0 %v2051
      %v2122 = vpop.f32.mrf.mxu0
      %v2123 = vadd.f32 %v789, %v2122
      %v2124 = vpop.f32.mrf.mxu0
      %2125 = vdwg.mxu0
      %v2126 = vsel %vm1024, %v2123, -inf
      %2127 = vmax.xlane.f32.xlu0 %v2126
      %v2128 = vpop.xlane.xlu0 %2127
      %v2129 = vsub.f32 %v2123, %v2128
      %v2130 = vmul.f32 %v2129, 1.442695
      %v2131 = vpow.pop %v2130
      %v2132 = vsel %vm1024, %v2131, 0.0
      %2133 = vadd.xlane.f32.xlu0 %v2132
      %v2134 = vpop.xlane.xlu0 %2133
      %v2135 = vrcp.pop %v2134
      %v2136 = vmul.f32 %v2131, %v2135
      %v2138 = vsel %vm1024, %v2136, 0
      %2140 = vmatprep.subr.mxu0 0.0
      %2141 = vmatpush1.msra.mxu0 0.0
      %2142 = vmatprep.subr.mxu0 0.0
      %2143 = vmatpush1.msra.mxu0 0.0
      %2144 = vmatprep.subr.mxu0 0.0
      %2145 = vmatpush1.msra.mxu0 0.0
      %2146 = vmatprep.subr.mxu0 0.0
      %2147 = vmatpush1.msra.mxu0 0.0
      %2148 = vmatprep.subr.mxu0 0.0
      %2149 = vmatpush1.msra.mxu0 0.0
      %2150 = vmatprep.subr.mxu0 0.0
      %2151 = vmatpush1.msra.mxu0 0.0
      %2152 = vmatprep.subr.mxu0 0.0
      %2153 = vmatpush1.msra.mxu0 0.0
      %2154 = vmatprep.subr.mxu0 0.0
      %2155 = vmatpush1.msra.mxu0 0.0
      %2156 = vmatprep.subr.mxu0 0.0
      %2157 = vmatpush1.msra.mxu0 0.0
      %2158 = vmatprep.subr.mxu0 0.0
      %2159 = vmatpush1.msra.mxu0 0.0
      %2160 = vmatprep.subr.mxu0 0.0
      %2161 = vmatpush1.msra.mxu0 0.0
      %2162 = vmatprep.subr.mxu0 0.0
      %2163 = vmatpush1.msra.mxu0 0.0
      %2164 = vmatprep.subr.mxu0 0.0
      %2165 = vmatpush1.msra.mxu0 0.0
      %2166 = vmatprep.subr.mxu0 0.0
      %2167 = vmatpush1.msra.mxu0 0.0
      %2168 = vmatprep.subr.mxu0 0.0
      %2169 = vmatpush1.msra.mxu0 0.0
      %2170 = vmatprep.subr.mxu0 0.0
      %2171 = vmatpush1.msra.mxu0 %v2047
      %2172 = vmatprep.subr.mxu0 0.0
      %2173 = vmatpush2.msra.mxu0 0.0
      %2174 = vmatprep.subr.mxu0 0.0
      %2175 = vmatpush2.msra.mxu0 0.0
      %2176 = vmatprep.subr.mxu0 0.0
      %2177 = vmatpush2.msra.mxu0 0.0
      %2178 = vmatprep.subr.mxu0 0.0
      %2179 = vmatpush2.msra.mxu0 0.0
      %2180 = vmatprep.subr.mxu0 0.0
      %2181 = vmatpush2.msra.mxu0 0.0
      %2182 = vmatprep.subr.mxu0 0.0
      %2183 = vmatpush2.msra.mxu0 0.0
      %2184 = vmatprep.subr.mxu0 0.0
      %2185 = vmatpush2.msra.mxu0 0.0
      %2186 = vmatprep.subr.mxu0 0.0
      %2187 = vmatpush2.msra.mxu0 0.0
      %2188 = vmatprep.subr.mxu0 0.0
      %2189 = vmatpush2.msra.mxu0 0.0
      %2190 = vmatprep.subr.mxu0 0.0
      %2191 = vmatpush2.msra.mxu0 0.0
      %2192 = vmatprep.subr.mxu0 0.0
      %2193 = vmatpush2.msra.mxu0 0.0
      %2194 = vmatprep.subr.mxu0 0.0
      %2195 = vmatpush2.msra.mxu0 0.0
      %2196 = vmatprep.subr.mxu0 0.0
      %2197 = vmatpush2.msra.mxu0 0.0
      %2198 = vmatprep.subr.mxu0 0.0
      %2199 = vmatpush2.msra.mxu0 0.0
      %2200 = vmatprep.subr.mxu0 0.0
      %2201 = vmatpush2.msra.mxu0 0.0
      %2202 = vmatprep.subr.mxu0 0.0
      %2203 = vmatpush2.msra.mxu0 0.0
      %2204 = vmatprep.mubr.f32.mxu0 0.0
      %2205 = vmatmul.mubr.f32.gmra.mxu0 %v2138
      %v2206 = vpop.f32.mrf.mxu0
      %v2207 = vadd.f32 0.0, %v2206
      %v2208 = vpop.f32.mrf.mxu0
      %2209 = vdwg.mxu0
      %2210 = vrot.lane.b32.xlu0 %v1906, 120
      %v2211 = vpop.permute.xlu0 %2210
      %2212 = vrot.lane.b32.xlu0 %v1977, 120
      %v2213 = vpop.permute.xlu0 %2212
      %v2214 = vsel %vm1024, %v2211, 0
      %v2216 = vsel %vm1024, %v2213, 0
      %2218 = vmatprep.subr.mxu0 0.0
      %2219 = vmatpush1.xpose.msra.mxu0 0.0
      %2220 = vmatprep.subr.mxu0 0.0
      %2221 = vmatpush1.xpose.msra.mxu0 0.0
      %2222 = vmatprep.subr.mxu0 0.0
      %2223 = vmatpush1.xpose.msra.mxu0 0.0
      %2224 = vmatprep.subr.mxu0 0.0
      %2225 = vmatpush1.xpose.msra.mxu0 0.0
      %2226 = vmatprep.subr.mxu0 0.0
      %2227 = vmatpush1.xpose.msra.mxu0 0.0
      %2228 = vmatprep.subr.mxu0 0.0
      %2229 = vmatpush1.xpose.msra.mxu0 0.0
      %2230 = vmatprep.subr.mxu0 0.0
      %2231 = vmatpush1.xpose.msra.mxu0 0.0
      %2232 = vmatprep.subr.mxu0 0.0
      %2233 = vmatpush1.xpose.msra.mxu0 0.0
      %2234 = vmatprep.subr.mxu0 0.0
      %2235 = vmatpush1.xpose.msra.mxu0 0.0
      %2236 = vmatprep.subr.mxu0 0.0
      %2237 = vmatpush1.xpose.msra.mxu0 0.0
      %2238 = vmatprep.subr.mxu0 0.0
      %2239 = vmatpush1.xpose.msra.mxu0 0.0
      %2240 = vmatprep.subr.mxu0 0.0
      %2241 = vmatpush1.xpose.msra.mxu0 0.0
      %2242 = vmatprep.subr.mxu0 0.0
      %2243 = vmatpush1.xpose.msra.mxu0 0.0
      %2244 = vmatprep.subr.mxu0 0.0
      %2245 = vmatpush1.xpose.msra.mxu0 0.0
      %2246 = vmatprep.subr.mxu0 0.0
      %2247 = vmatpush1.xpose.msra.mxu0 0.0
      %2248 = vmatprep.subr.mxu0 0.0
      %2249 = vmatpush1.xpose.msra.mxu0 %v2216
      %2250 = vmatprep.subr.mxu0 0.0
      %2251 = vmatpush2.xpose.msra.mxu0 0.0
      %2252 = vmatprep.subr.mxu0 0.0
      %2253 = vmatpush2.xpose.msra.mxu0 0.0
      %2254 = vmatprep.subr.mxu0 0.0
      %2255 = vmatpush2.xpose.msra.mxu0 0.0
      %2256 = vmatprep.subr.mxu0 0.0
      %2257 = vmatpush2.xpose.msra.mxu0 0.0
      %2258 = vmatprep.subr.mxu0 0.0
      %2259 = vmatpush2.xpose.msra.mxu0 0.0
      %2260 = vmatprep.subr.mxu0 0.0
      %2261 = vmatpush2.xpose.msra.mxu0 0.0
      %2262 = vmatprep.subr.mxu0 0.0
      %2263 = vmatpush2.xpose.msra.mxu0 0.0
      %2264 = vmatprep.subr.mxu0 0.0
      %2265 = vmatpush2.xpose.msra.mxu0 0.0
      %2266 = vmatprep.subr.mxu0 0.0
      %2267 = vmatpush2.xpose.msra.mxu0 0.0
      %2268 = vmatprep.subr.mxu0 0.0
      %2269 = vmatpush2.xpose.msra.mxu0 0.0
      %2270 = vmatprep.subr.mxu0 0.0
      %2271 = vmatpush2.xpose.msra.mxu0 0.0
      %2272 = vmatprep.subr.mxu0 0.0
      %2273 = vmatpush2.xpose.msra.mxu0 0.0
      %2274 = vmatprep.subr.mxu0 0.0
      %2275 = vmatpush2.xpose.msra.mxu0 0.0
      %2276 = vmatprep.subr.mxu0 0.0
      %2277 = vmatpush2.xpose.msra.mxu0 0.0
      %2278 = vmatprep.subr.mxu0 0.0
      %2279 = vmatpush2.xpose.msra.mxu0 0.0
      %2280 = vmatprep.subr.mxu0 0.0
      %2281 = vmatpush2.xpose.msra.mxu0 0.0
      %2282 = vmatprep.mubr.f32.mxu0 0.0
      %2283 = vmatmul.mubr.f32.gmra.mxu0 %v2214
      %v2284 = vpop.f32.mrf.mxu0
      %v2285 = vadd.f32 %v789, %v2284
      %v2286 = vpop.f32.mrf.mxu0
      %2287 = vdwg.mxu0
      %v2288 = vsel %vm1024, %v2285, -inf
      %2289 = vmax.xlane.f32.xlu0 %v2288
      %v2290 = vpop.xlane.xlu0 %2289
      %v2291 = vsub.f32 %v2285, %v2290
      %v2292 = vmul.f32 %v2291, 1.442695
      %v2293 = vpow.pop %v2292
      %v2294 = vsel %vm1024, %v2293, 0.0
      %2295 = vadd.xlane.f32.xlu0 %v2294
      %v2296 = vpop.xlane.xlu0 %2295
      %v2297 = vrcp.pop %v2296
      %v2298 = vmul.f32 %v2293, %v2297
      %2300 = vrot.lane.b32.xlu0 %v2047, 120
      %v2301 = vpop.permute.xlu0 %2300
      %v2304 = vsel %vm1024, %v2298, 0
      %2306 = vmatprep.subr.mxu0 0.0
      %2307 = vmatpush1.msra.mxu0 0.0
      %2308 = vmatprep.subr.mxu0 0.0
      %2309 = vmatpush1.msra.mxu0 0.0
      %2310 = vmatprep.subr.mxu0 0.0
      %2311 = vmatpush1.msra.mxu0 0.0
      %2312 = vmatprep.subr.mxu0 0.0
      %2313 = vmatpush1.msra.mxu0 0.0
      %2314 = vmatprep.subr.mxu0 0.0
      %2315 = vmatpush1.msra.mxu0 0.0
      %2316 = vmatprep.subr.mxu0 0.0
      %2317 = vmatpush1.msra.mxu0 0.0
      %2318 = vmatprep.subr.mxu0 0.0
      %2319 = vmatpush1.msra.mxu0 0.0
      %2320 = vmatprep.subr.mxu0 0.0
      %2321 = vmatpush1.msra.mxu0 0.0
      %2322 = vmatprep.subr.mxu0 0.0
      %2323 = vmatpush1.msra.mxu0 0.0
      %2324 = vmatprep.subr.mxu0 0.0
      %2325 = vmatpush1.msra.mxu0 0.0
      %2326 = vmatprep.subr.mxu0 0.0
      %2327 = vmatpush1.msra.mxu0 0.0
      %2328 = vmatprep.subr.mxu0 0.0
      %2329 = vmatpush1.msra.mxu0 0.0
      %2330 = vmatprep.subr.mxu0 0.0
      %2331 = vmatpush1.msra.mxu0 0.0
      %2332 = vmatprep.subr.mxu0 0.0
      %2333 = vmatpush1.msra.mxu0 0.0
      %2334 = vmatprep.subr.mxu0 0.0
      %2335 = vmatpush1.msra.mxu0 0.0
      %2336 = vmatprep.subr.mxu0 0.0
      %2337 = vmatpush1.msra.mxu0 %v2301
      %2338 = vmatprep.subr.mxu0 0.0
      %2339 = vmatpush2.msra.mxu0 0.0
      %2340 = vmatprep.subr.mxu0 0.0
      %2341 = vmatpush2.msra.mxu0 0.0
      %2342 = vmatprep.subr.mxu0 0.0
      %2343 = vmatpush2.msra.mxu0 0.0
      %2344 = vmatprep.subr.mxu0 0.0
      %2345 = vmatpush2.msra.mxu0 0.0
      %2346 = vmatprep.subr.mxu0 0.0
      %2347 = vmatpush2.msra.mxu0 0.0
      %2348 = vmatprep.subr.mxu0 0.0
      %2349 = vmatpush2.msra.mxu0 0.0
      %2350 = vmatprep.subr.mxu0 0.0
      %2351 = vmatpush2.msra.mxu0 0.0
      %2352 = vmatprep.subr.mxu0 0.0
      %2353 = vmatpush2.msra.mxu0 0.0
      %2354 = vmatprep.subr.mxu0 0.0
      %2355 = vmatpush2.msra.mxu0 0.0
      %2356 = vmatprep.subr.mxu0 0.0
      %2357 = vmatpush2.msra.mxu0 0.0
      %2358 = vmatprep.subr.mxu0 0.0
      %2359 = vmatpush2.msra.mxu0 0.0
      %2360 = vmatprep.subr.mxu0 0.0
      %2361 = vmatpush2.msra.mxu0 0.0
      %2362 = vmatprep.subr.mxu0 0.0
      %2363 = vmatpush2.msra.mxu0 0.0
      %2364 = vmatprep.subr.mxu0 0.0
      %2365 = vmatpush2.msra.mxu0 0.0
      %2366 = vmatprep.subr.mxu0 0.0
      %2367 = vmatpush2.msra.mxu0 0.0
      %2368 = vmatprep.subr.mxu0 0.0
      %2369 = vmatpush2.msra.mxu0 0.0
      %2370 = vmatprep.mubr.f32.mxu0 0.0
      %2371 = vmatmul.mubr.f32.gmra.mxu0 %v2304
      %v2372 = vpop.f32.mrf.mxu0
      %v2373 = vadd.f32 0.0, %v2372
      %v2374 = vpop.f32.mrf.mxu0
      %2375 = vdwg.mxu0
      %2376 = vrot.lane.b32.xlu0 %v1906, 112
      %v2377 = vpop.permute.xlu0 %2376
      %2378 = vrot.lane.b32.xlu0 %v1977, 112
      %v2379 = vpop.permute.xlu0 %2378
      %v2380 = vsel %vm1024, %v2377, 0
      %v2382 = vsel %vm1024, %v2379, 0
      %2384 = vmatprep.subr.mxu0 0.0
      %2385 = vmatpush1.xpose.msra.mxu0 0.0
      %2386 = vmatprep.subr.mxu0 0.0
      %2387 = vmatpush1.xpose.msra.mxu0 0.0
      %2388 = vmatprep.subr.mxu0 0.0
      %2389 = vmatpush1.xpose.msra.mxu0 0.0
      %2390 = vmatprep.subr.mxu0 0.0
      %2391 = vmatpush1.xpose.msra.mxu0 0.0
      %2392 = vmatprep.subr.mxu0 0.0
      %2393 = vmatpush1.xpose.msra.mxu0 0.0
      %2394 = vmatprep.subr.mxu0 0.0
      %2395 = vmatpush1.xpose.msra.mxu0 0.0
      %2396 = vmatprep.subr.mxu0 0.0
      %2397 = vmatpush1.xpose.msra.mxu0 0.0
      %2398 = vmatprep.subr.mxu0 0.0
      %2399 = vmatpush1.xpose.msra.mxu0 0.0
      %2400 = vmatprep.subr.mxu0 0.0
      %2401 = vmatpush1.xpose.msra.mxu0 0.0
      %2402 = vmatprep.subr.mxu0 0.0
      %2403 = vmatpush1.xpose.msra.mxu0 0.0
      %2404 = vmatprep.subr.mxu0 0.0
      %2405 = vmatpush1.xpose.msra.mxu0 0.0
      %2406 = vmatprep.subr.mxu0 0.0
      %2407 = vmatpush1.xpose.msra.mxu0 0.0
      %2408 = vmatprep.subr.mxu0 0.0
      %2409 = vmatpush1.xpose.msra.mxu0 0.0
      %2410 = vmatprep.subr.mxu0 0.0
      %2411 = vmatpush1.xpose.msra.mxu0 0.0
      %2412 = vmatprep.subr.mxu0 0.0
      %2413 = vmatpush1.xpose.msra.mxu0 0.0
      %2414 = vmatprep.subr.mxu0 0.0
      %2415 = vmatpush1.xpose.msra.mxu0 %v2382
      %2416 = vmatprep.subr.mxu0 0.0
      %2417 = vmatpush2.xpose.msra.mxu0 0.0
      %2418 = vmatprep.subr.mxu0 0.0
      %2419 = vmatpush2.xpose.msra.mxu0 0.0
      %2420 = vmatprep.subr.mxu0 0.0
      %2421 = vmatpush2.xpose.msra.mxu0 0.0
      %2422 = vmatprep.subr.mxu0 0.0
      %2423 = vmatpush2.xpose.msra.mxu0 0.0
      %2424 = vmatprep.subr.mxu0 0.0
      %2425 = vmatpush2.xpose.msra.mxu0 0.0
      %2426 = vmatprep.subr.mxu0 0.0
      %2427 = vmatpush2.xpose.msra.mxu0 0.0
      %2428 = vmatprep.subr.mxu0 0.0
      %2429 = vmatpush2.xpose.msra.mxu0 0.0
      %2430 = vmatprep.subr.mxu0 0.0
      %2431 = vmatpush2.xpose.msra.mxu0 0.0
      %2432 = vmatprep.subr.mxu0 0.0
      %2433 = vmatpush2.xpose.msra.mxu0 0.0
      %2434 = vmatprep.subr.mxu0 0.0
      %2435 = vmatpush2.xpose.msra.mxu0 0.0
      %2436 = vmatprep.subr.mxu0 0.0
      %2437 = vmatpush2.xpose.msra.mxu0 0.0
      %2438 = vmatprep.subr.mxu0 0.0
      %2439 = vmatpush2.xpose.msra.mxu0 0.0
      %2440 = vmatprep.subr.mxu0 0.0
      %2441 = vmatpush2.xpose.msra.mxu0 0.0
      %2442 = vmatprep.subr.mxu0 0.0
      %2443 = vmatpush2.xpose.msra.mxu0 0.0
      %2444 = vmatprep.subr.mxu0 0.0
      %2445 = vmatpush2.xpose.msra.mxu0 0.0
      %2446 = vmatprep.subr.mxu0 0.0
      %2447 = vmatpush2.xpose.msra.mxu0 0.0
      %2448 = vmatprep.mubr.f32.mxu0 0.0
      %2449 = vmatmul.mubr.f32.gmra.mxu0 %v2380
      %v2450 = vpop.f32.mrf.mxu0
      %v2451 = vadd.f32 %v789, %v2450
      %v2452 = vpop.f32.mrf.mxu0
      %2453 = vdwg.mxu0
      %v2454 = vsel %vm1024, %v2451, -inf
      %2455 = vmax.xlane.f32.xlu0 %v2454
      %v2456 = vpop.xlane.xlu0 %2455
      %v2457 = vsub.f32 %v2451, %v2456
      %v2458 = vmul.f32 %v2457, 1.442695
      %v2459 = vpow.pop %v2458
      %v2460 = vsel %vm1024, %v2459, 0.0
      %2461 = vadd.xlane.f32.xlu0 %v2460
      %v2462 = vpop.xlane.xlu0 %2461
      %v2463 = vrcp.pop %v2462
      %v2464 = vmul.f32 %v2459, %v2463
      %2465 = vrot.lane.b32.xlu0 %v2047, 112
      %v2466 = vpop.permute.xlu0 %2465
      %v2469 = vsel %vm1024, %v2464, 0
      %2471 = vmatprep.subr.mxu0 0.0
      %2472 = vmatpush1.msra.mxu0 0.0
      %2473 = vmatprep.subr.mxu0 0.0
      %2474 = vmatpush1.msra.mxu0 0.0
      %2475 = vmatprep.subr.mxu0 0.0
      %2476 = vmatpush1.msra.mxu0 0.0
      %2477 = vmatprep.subr.mxu0 0.0
      %2478 = vmatpush1.msra.mxu0 0.0
      %2479 = vmatprep.subr.mxu0 0.0
      %2480 = vmatpush1.msra.mxu0 0.0
      %2481 = vmatprep.subr.mxu0 0.0
      %2482 = vmatpush1.msra.mxu0 0.0
      %2483 = vmatprep.subr.mxu0 0.0
      %2484 = vmatpush1.msra.mxu0 0.0
      %2485 = vmatprep.subr.mxu0 0.0
      %2486 = vmatpush1.msra.mxu0 0.0
      %2487 = vmatprep.subr.mxu0 0.0
      %2488 = vmatpush1.msra.mxu0 0.0
      %2489 = vmatprep.subr.mxu0 0.0
      %2490 = vmatpush1.msra.mxu0 0.0
      %2491 = vmatprep.subr.mxu0 0.0
      %2492 = vmatpush1.msra.mxu0 0.0
      %2493 = vmatprep.subr.mxu0 0.0
      %2494 = vmatpush1.msra.mxu0 0.0
      %2495 = vmatprep.subr.mxu0 0.0
      %2496 = vmatpush1.msra.mxu0 0.0
      %2497 = vmatprep.subr.mxu0 0.0
      %2498 = vmatpush1.msra.mxu0 0.0
      %2499 = vmatprep.subr.mxu0 0.0
      %2500 = vmatpush1.msra.mxu0 0.0
      %2501 = vmatprep.subr.mxu0 0.0
      %2502 = vmatpush1.msra.mxu0 %v2466
      %2503 = vmatprep.subr.mxu0 0.0
      %2504 = vmatpush2.msra.mxu0 0.0
      %2505 = vmatprep.subr.mxu0 0.0
      %2506 = vmatpush2.msra.mxu0 0.0
      %2507 = vmatprep.subr.mxu0 0.0
      %2508 = vmatpush2.msra.mxu0 0.0
      %2509 = vmatprep.subr.mxu0 0.0
      %2510 = vmatpush2.msra.mxu0 0.0
      %2511 = vmatprep.subr.mxu0 0.0
      %2512 = vmatpush2.msra.mxu0 0.0
      %2513 = vmatprep.subr.mxu0 0.0
      %2514 = vmatpush2.msra.mxu0 0.0
      %2515 = vmatprep.subr.mxu0 0.0
      %2516 = vmatpush2.msra.mxu0 0.0
      %2517 = vmatprep.subr.mxu0 0.0
      %2518 = vmatpush2.msra.mxu0 0.0
      %2519 = vmatprep.subr.mxu0 0.0
      %2520 = vmatpush2.msra.mxu0 0.0
      %2521 = vmatprep.subr.mxu0 0.0
      %2522 = vmatpush2.msra.mxu0 0.0
      %2523 = vmatprep.subr.mxu0 0.0
      %2524 = vmatpush2.msra.mxu0 0.0
      %2525 = vmatprep.subr.mxu0 0.0
      %2526 = vmatpush2.msra.mxu0 0.0
      %2527 = vmatprep.subr.mxu0 0.0
      %2528 = vmatpush2.msra.mxu0 0.0
      %2529 = vmatprep.subr.mxu0 0.0
      %2530 = vmatpush2.msra.mxu0 0.0
      %2531 = vmatprep.subr.mxu0 0.0
      %2532 = vmatpush2.msra.mxu0 0.0
      %2533 = vmatprep.subr.mxu0 0.0
      %2534 = vmatpush2.msra.mxu0 0.0
      %2535 = vmatprep.mubr.f32.mxu0 0.0
      %2536 = vmatmul.mubr.f32.gmra.mxu0 %v2469
      %v2537 = vpop.f32.mrf.mxu0
      %v2538 = vadd.f32 0.0, %v2537
      %v2539 = vpop.f32.mrf.mxu0
      %2540 = vdwg.mxu0
      %2541 = vrot.lane.b32.xlu0 %v1906, 104
      %v2542 = vpop.permute.xlu0 %2541
      %2543 = vrot.lane.b32.xlu0 %v1977, 104
      %v2544 = vpop.permute.xlu0 %2543
      %v2545 = vsel %vm1024, %v2542, 0
      %v2547 = vsel %vm1024, %v2544, 0
      %2549 = vmatprep.subr.mxu0 0.0
      %2550 = vmatpush1.xpose.msra.mxu0 0.0
      %2551 = vmatprep.subr.mxu0 0.0
      %2552 = vmatpush1.xpose.msra.mxu0 0.0
      %2553 = vmatprep.subr.mxu0 0.0
      %2554 = vmatpush1.xpose.msra.mxu0 0.0
      %2555 = vmatprep.subr.mxu0 0.0
      %2556 = vmatpush1.xpose.msra.mxu0 0.0
      %2557 = vmatprep.subr.mxu0 0.0
      %2558 = vmatpush1.xpose.msra.mxu0 0.0
      %2559 = vmatprep.subr.mxu0 0.0
      %2560 = vmatpush1.xpose.msra.mxu0 0.0
      %2561 = vmatprep.subr.mxu0 0.0
      %2562 = vmatpush1.xpose.msra.mxu0 0.0
      %2563 = vmatprep.subr.mxu0 0.0
      %2564 = vmatpush1.xpose.msra.mxu0 0.0
      %2565 = vmatprep.subr.mxu0 0.0
      %2566 = vmatpush1.xpose.msra.mxu0 0.0
      %2567 = vmatprep.subr.mxu0 0.0
      %2568 = vmatpush1.xpose.msra.mxu0 0.0
      %2569 = vmatprep.subr.mxu0 0.0
      %2570 = vmatpush1.xpose.msra.mxu0 0.0
      %2571 = vmatprep.subr.mxu0 0.0
      %2572 = vmatpush1.xpose.msra.mxu0 0.0
      %2573 = vmatprep.subr.mxu0 0.0
      %2574 = vmatpush1.xpose.msra.mxu0 0.0
      %2575 = vmatprep.subr.mxu0 0.0
      %2576 = vmatpush1.xpose.msra.mxu0 0.0
      %2577 = vmatprep.subr.mxu0 0.0
      %2578 = vmatpush1.xpose.msra.mxu0 0.0
      %2579 = vmatprep.subr.mxu0 0.0
      %2580 = vmatpush1.xpose.msra.mxu0 %v2547
      %2581 = vmatprep.subr.mxu0 0.0
      %2582 = vmatpush2.xpose.msra.mxu0 0.0
      %2583 = vmatprep.subr.mxu0 0.0
      %2584 = vmatpush2.xpose.msra.mxu0 0.0
      %2585 = vmatprep.subr.mxu0 0.0
      %2586 = vmatpush2.xpose.msra.mxu0 0.0
      %2587 = vmatprep.subr.mxu0 0.0
      %2588 = vmatpush2.xpose.msra.mxu0 0.0
      %2589 = vmatprep.subr.mxu0 0.0
      %2590 = vmatpush2.xpose.msra.mxu0 0.0
      %2591 = vmatprep.subr.mxu0 0.0
      %2592 = vmatpush2.xpose.msra.mxu0 0.0
      %2593 = vmatprep.subr.mxu0 0.0
      %2594 = vmatpush2.xpose.msra.mxu0 0.0
      %2595 = vmatprep.subr.mxu0 0.0
      %2596 = vmatpush2.xpose.msra.mxu0 0.0
      %2597 = vmatprep.subr.mxu0 0.0
      %2598 = vmatpush2.xpose.msra.mxu0 0.0
      %2599 = vmatprep.subr.mxu0 0.0
      %2600 = vmatpush2.xpose.msra.mxu0 0.0
      %2601 = vmatprep.subr.mxu0 0.0
      %2602 = vmatpush2.xpose.msra.mxu0 0.0
      %2603 = vmatprep.subr.mxu0 0.0
      %2604 = vmatpush2.xpose.msra.mxu0 0.0
      %2605 = vmatprep.subr.mxu0 0.0
      %2606 = vmatpush2.xpose.msra.mxu0 0.0
      %2607 = vmatprep.subr.mxu0 0.0
      %2608 = vmatpush2.xpose.msra.mxu0 0.0
      %2609 = vmatprep.subr.mxu0 0.0
      %2610 = vmatpush2.xpose.msra.mxu0 0.0
      %2611 = vmatprep.subr.mxu0 0.0
      %2612 = vmatpush2.xpose.msra.mxu0 0.0
      %2613 = vmatprep.mubr.f32.mxu0 0.0
      %2614 = vmatmul.mubr.f32.gmra.mxu0 %v2545
      %v2615 = vpop.f32.mrf.mxu0
      %v2616 = vadd.f32 %v789, %v2615
      %v2617 = vpop.f32.mrf.mxu0
      %2618 = vdwg.mxu0
      %v2619 = vsel %vm1024, %v2616, -inf
      %2620 = vmax.xlane.f32.xlu0 %v2619
      %v2621 = vpop.xlane.xlu0 %2620
      %v2622 = vsub.f32 %v2616, %v2621
      %v2623 = vmul.f32 %v2622, 1.442695
      %v2624 = vpow.pop %v2623
      %v2625 = vsel %vm1024, %v2624, 0.0
      %2626 = vadd.xlane.f32.xlu0 %v2625
      %v2627 = vpop.xlane.xlu0 %2626
      %v2628 = vrcp.pop %v2627
      %v2629 = vmul.f32 %v2624, %v2628
      %2630 = vrot.lane.b32.xlu0 %v2047, 104
      %v2631 = vpop.permute.xlu0 %2630
      %v2634 = vsel %vm1024, %v2629, 0
      %2636 = vmatprep.subr.mxu0 0.0
      %2637 = vmatpush1.msra.mxu0 0.0
      %2638 = vmatprep.subr.mxu0 0.0
      %2639 = vmatpush1.msra.mxu0 0.0
      %2640 = vmatprep.subr.mxu0 0.0
      %2641 = vmatpush1.msra.mxu0 0.0
      %2642 = vmatprep.subr.mxu0 0.0
      %2643 = vmatpush1.msra.mxu0 0.0
      %2644 = vmatprep.subr.mxu0 0.0
      %2645 = vmatpush1.msra.mxu0 0.0
      %2646 = vmatprep.subr.mxu0 0.0
      %2647 = vmatpush1.msra.mxu0 0.0
      %2648 = vmatprep.subr.mxu0 0.0
      %2649 = vmatpush1.msra.mxu0 0.0
      %2650 = vmatprep.subr.mxu0 0.0
      %2651 = vmatpush1.msra.mxu0 0.0
      %2652 = vmatprep.subr.mxu0 0.0
      %2653 = vmatpush1.msra.mxu0 0.0
      %2654 = vmatprep.subr.mxu0 0.0
      %2655 = vmatpush1.msra.mxu0 0.0
      %2656 = vmatprep.subr.mxu0 0.0
      %2657 = vmatpush1.msra.mxu0 0.0
      %2658 = vmatprep.subr.mxu0 0.0
      %2659 = vmatpush1.msra.mxu0 0.0
      %2660 = vmatprep.subr.mxu0 0.0
      %2661 = vmatpush1.msra.mxu0 0.0
      %2662 = vmatprep.subr.mxu0 0.0
      %2663 = vmatpush1.msra.mxu0 0.0
      %2664 = vmatprep.subr.mxu0 0.0
      %2665 = vmatpush1.msra.mxu0 0.0
      %2666 = vmatprep.subr.mxu0 0.0
      %2667 = vmatpush1.msra.mxu0 %v2631
      %2668 = vmatprep.subr.mxu0 0.0
      %2669 = vmatpush2.msra.mxu0 0.0
      %2670 = vmatprep.subr.mxu0 0.0
      %2671 = vmatpush2.msra.mxu0 0.0
      %2672 = vmatprep.subr.mxu0 0.0
      %2673 = vmatpush2.msra.mxu0 0.0
      %2674 = vmatprep.subr.mxu0 0.0
      %2675 = vmatpush2.msra.mxu0 0.0
      %2676 = vmatprep.subr.mxu0 0.0
      %2677 = vmatpush2.msra.mxu0 0.0
      %2678 = vmatprep.subr.mxu0 0.0
      %2679 = vmatpush2.msra.mxu0 0.0
      %2680 = vmatprep.subr.mxu0 0.0
      %2681 = vmatpush2.msra.mxu0 0.0
      %2682 = vmatprep.subr.mxu0 0.0
      %2683 = vmatpush2.msra.mxu0 0.0
      %2684 = vmatprep.subr.mxu0 0.0
      %2685 = vmatpush2.msra.mxu0 0.0
      %2686 = vmatprep.subr.mxu0 0.0
      %2687 = vmatpush2.msra.mxu0 0.0
      %2688 = vmatprep.subr.mxu0 0.0
      %2689 = vmatpush2.msra.mxu0 0.0
      %2690 = vmatprep.subr.mxu0 0.0
      %2691 = vmatpush2.msra.mxu0 0.0
      %2692 = vmatprep.subr.mxu0 0.0
      %2693 = vmatpush2.msra.mxu0 0.0
      %2694 = vmatprep.subr.mxu0 0.0
      %2695 = vmatpush2.msra.mxu0 0.0
      %2696 = vmatprep.subr.mxu0 0.0
      %2697 = vmatpush2.msra.mxu0 0.0
      %2698 = vmatprep.subr.mxu0 0.0
      %2699 = vmatpush2.msra.mxu0 0.0
      %2700 = vmatprep.mubr.f32.mxu0 0.0
      %2701 = vmatmul.mubr.f32.gmra.mxu0 %v2634
      %v2702 = vpop.f32.mrf.mxu0
      %v2703 = vadd.f32 0.0, %v2702
      %v2704 = vpop.f32.mrf.mxu0
      %2705 = vdwg.mxu0
      %2707 = vrot.lane.b32.xlu0 %v2373, 8
      %v2708 = vpop.permute.xlu0 %2707
      %2711 = vrot.lane.b32.xlu0 %v2538, 16
      %v2712 = vpop.permute.xlu0 %2711
      %2715 = vrot.lane.b32.xlu0 %v2703, 24
      %v2716 = vpop.permute.xlu0 %2715
      %v2718 = vsel %vm1024, %v2207, %v2708
      %v2719 = vsel %vm1694, %v2718, %v2712
      %v2720 = vsel %vm1696, %v2719, %v2716
      %v2722 = vlaneseq
      %v2723 = vshrl.u32 %v2722, 7
      %v2724 = vsub.s32 0, %v2723
      %v2725 = vrot.slane %v1830, %v2724
      %v2728 = vsel %vm809, %v2720, 0
      %2730 = vmatprep.subr.mxu0 0.0
      %2731 = vmatpush1.msra.mxu0 0.0
      %2732 = vmatprep.subr.mxu0 0.0
      %2733 = vmatpush1.msra.mxu0 0.0
      %2734 = vmatprep.subr.mxu0 0.0
      %2735 = vmatpush1.msra.mxu0 0.0
      %2736 = vmatprep.subr.mxu0 0.0
      %2737 = vmatpush1.msra.mxu0 0.0
      %2738 = vmatprep.subr.mxu0 0.0
      %2739 = vmatpush1.msra.mxu0 0.0
      %2740 = vmatprep.subr.mxu0 0.0
      %2741 = vmatpush1.msra.mxu0 0.0
      %2742 = vmatprep.subr.mxu0 0.0
      %2743 = vmatpush1.msra.mxu0 0.0
      %2744 = vmatprep.subr.mxu0 0.0
      %2745 = vmatpush1.msra.mxu0 0.0
      %2746 = vmatprep.subr.mxu0 0.0
      %2747 = vmatpush1.msra.mxu0 0.0
      %2748 = vmatprep.subr.mxu0 0.0
      %2749 = vmatpush1.msra.mxu0 0.0
      %2750 = vmatprep.subr.mxu0 0.0
      %2751 = vmatpush1.msra.mxu0 0.0
      %2752 = vmatprep.subr.mxu0 0.0
      %2753 = vmatpush1.msra.mxu0 0.0
      %2754 = vmatprep.subr.mxu0 0.0
      %2755 = vmatpush1.msra.mxu0 %v1829
      %2756 = vmatprep.subr.mxu0 0.0
      %2757 = vmatpush1.msra.mxu0 %v1828
      %2758 = vmatprep.subr.mxu0 0.0
      %2759 = vmatpush1.msra.mxu0 %v1827
      %2760 = vmatprep.subr.mxu0 0.0
      %2761 = vmatpush1.msra.mxu0 %v1826
      %2762 = vmatprep.subr.mxu0 0.0
      %2763 = vmatpush2.msra.mxu0 0.0
      %2764 = vmatprep.subr.mxu0 0.0
      %2765 = vmatpush2.msra.mxu0 0.0
      %2766 = vmatprep.subr.mxu0 0.0
      %2767 = vmatpush2.msra.mxu0 0.0
      %2768 = vmatprep.subr.mxu0 0.0
      %2769 = vmatpush2.msra.mxu0 0.0
      %2770 = vmatprep.subr.mxu0 0.0
      %2771 = vmatpush2.msra.mxu0 0.0
      %2772 = vmatprep.subr.mxu0 0.0
      %2773 = vmatpush2.msra.mxu0 0.0
      %2774 = vmatprep.subr.mxu0 0.0
      %2775 = vmatpush2.msra.mxu0 0.0
      %2776 = vmatprep.subr.mxu0 0.0
      %2777 = vmatpush2.msra.mxu0 0.0
      %2778 = vmatprep.subr.mxu0 0.0
      %2779 = vmatpush2.msra.mxu0 0.0
      %2780 = vmatprep.subr.mxu0 0.0
      %2781 = vmatpush2.msra.mxu0 0.0
      %2782 = vmatprep.subr.mxu0 0.0
      %2783 = vmatpush2.msra.mxu0 0.0
      %2784 = vmatprep.subr.mxu0 0.0
      %2785 = vmatpush2.msra.mxu0 0.0
      %2786 = vmatprep.subr.mxu0 0.0
      %2787 = vmatpush2.msra.mxu0 0.0
      %2788 = vmatprep.subr.mxu0 0.0
      %2789 = vmatpush2.msra.mxu0 0.0
      %2790 = vmatprep.subr.mxu0 0.0
      %2791 = vmatpush2.msra.mxu0 0.0
      %2792 = vmatprep.subr.mxu0 0.0
      %2793 = vmatpush2.msra.mxu0 0.0
      %2794 = vmatprep.mubr.f32.mxu0 0.0
      %2795 = vmatmul.mubr.f32.gmra.mxu0 %v2728
      %v2796 = vpop.f32.mrf.mxu0
      %v2797 = vadd.f32 %v2725, %v2796
      %v2798 = vpop.f32.mrf.mxu0
      %2799 = vdwg.mxu0
      %v2800 = vadd.f32 %v2797, %v1813
      %v2801 = vsel %vm809, %v2800, 0.0
      %2802 = vadd.xlane.f32.xlu0 %v2801
      %v2803 = vpop.xlane.xlu0 %2802
      %v2804 = vmul.f32 %v2803, %v1781
      %v2805 = vsub.f32 %v2800, %v2804
      %v2806 = vmul.f32 %v2805, %v2805
      %v2807 = vsel %vm809, %v2806, 0.0
      %2808 = vadd.xlane.f32.xlu0 %v2807
      %v2809 = vpop.xlane.xlu0 %2808
      %v2810 = vmul.f32 %v2809, %v1788
      %v2811 = vrsqrt.pop %v2810
      %v2812 = vmul.f32 %v2810, %v2811
      %vm2813 = vcmp.eq.f32.partialorder %v2810, inf
      %v2814 = vsel %vm2813, %v2810, %v2812
      %vm2815 = vcmp.eq.f32.partialorder %v2810, 0.0
      %v2816 = vand.u32 %v2810, 2147483648
      %v2817 = vsel %vm2815, %v2816, %v2814
      %v2818 = vadd.f32 %v2817, 0.001
      %v2819 = vrcp.pop %v2818
      %v2820 = vmul.f32 %v2805, %v2819
      %v2822 = vlaneseq
      %v2823 = vshrl.u32 %v2822, 7
      %v2824 = vsub.s32 0, %v2823
      %v2825 = vrot.slane %v1831, %v2824
      %v2827 = vmul.f32 %v2820, %v2825
      %v2829 = vlaneseq
      %v2830 = vshrl.u32 %v2829, 7
      %v2831 = vsub.s32 0, %v2830
      %v2832 = vrot.slane %v1832, %v2831
      %v2834 = vadd.f32 %v2827, %v2832
      %v2835 = vld [vmem:[%s18] sm:$0xff]
      %v2836 = vld [vmem:[%s18 + $0x8] sm:$0xff]
      %v2837 = vld [vmem:[%s18 + $0x10] sm:$0xff]
      %v2838 = vld [vmem:[%s18 + $0x18] sm:$0xff]
      %v2839 = vld [vmem:[%s19] sm:$0x1]
      %v2841 = vlaneseq
      %v2842 = vshrl.u32 %v2841, 7
      %v2843 = vsub.s32 0, %v2842
      %v2844 = vrot.slane %v2839, %v2843
      %v2847 = vsel %vm809, %v2834, 0
      %2849 = vmatprep.subr.mxu0 0.0
      %2850 = vmatpush1.msra.mxu0 0.0
      %2851 = vmatprep.subr.mxu0 0.0
      %2852 = vmatpush1.msra.mxu0 0.0
      %2853 = vmatprep.subr.mxu0 0.0
      %2854 = vmatpush1.msra.mxu0 0.0
      %2855 = vmatprep.subr.mxu0 0.0
      %2856 = vmatpush1.msra.mxu0 0.0
      %2857 = vmatprep.subr.mxu0 0.0
      %2858 = vmatpush1.msra.mxu0 0.0
      %2859 = vmatprep.subr.mxu0 0.0
      %2860 = vmatpush1.msra.mxu0 0.0
      %2861 = vmatprep.subr.mxu0 0.0
      %2862 = vmatpush1.msra.mxu0 0.0
      %2863 = vmatprep.subr.mxu0 0.0
      %2864 = vmatpush1.msra.mxu0 0.0
      %2865 = vmatprep.subr.mxu0 0.0
      %2866 = vmatpush1.msra.mxu0 0.0
      %2867 = vmatprep.subr.mxu0 0.0
      %2868 = vmatpush1.msra.mxu0 0.0
      %2869 = vmatprep.subr.mxu0 0.0
      %2870 = vmatpush1.msra.mxu0 0.0
      %2871 = vmatprep.subr.mxu0 0.0
      %2872 = vmatpush1.msra.mxu0 0.0
      %2873 = vmatprep.subr.mxu0 0.0
      %2874 = vmatpush1.msra.mxu0 %v2838
      %2875 = vmatprep.subr.mxu0 0.0
      %2876 = vmatpush1.msra.mxu0 %v2837
      %2877 = vmatprep.subr.mxu0 0.0
      %2878 = vmatpush1.msra.mxu0 %v2836
      %2879 = vmatprep.subr.mxu0 0.0
      %2880 = vmatpush1.msra.mxu0 %v2835
      %2881 = vmatprep.subr.mxu0 0.0
      %2882 = vmatpush2.msra.mxu0 0.0
      %2883 = vmatprep.subr.mxu0 0.0
      %2884 = vmatpush2.msra.mxu0 0.0
      %2885 = vmatprep.subr.mxu0 0.0
      %2886 = vmatpush2.msra.mxu0 0.0
      %2887 = vmatprep.subr.mxu0 0.0
      %2888 = vmatpush2.msra.mxu0 0.0
      %2889 = vmatprep.subr.mxu0 0.0
      %2890 = vmatpush2.msra.mxu0 0.0
      %2891 = vmatprep.subr.mxu0 0.0
      %2892 = vmatpush2.msra.mxu0 0.0
      %2893 = vmatprep.subr.mxu0 0.0
      %2894 = vmatpush2.msra.mxu0 0.0
      %2895 = vmatprep.subr.mxu0 0.0
      %2896 = vmatpush2.msra.mxu0 0.0
      %2897 = vmatprep.subr.mxu0 0.0
      %2898 = vmatpush2.msra.mxu0 0.0
      %2899 = vmatprep.subr.mxu0 0.0
      %2900 = vmatpush2.msra.mxu0 0.0
      %2901 = vmatprep.subr.mxu0 0.0
      %2902 = vmatpush2.msra.mxu0 0.0
      %2903 = vmatprep.subr.mxu0 0.0
      %2904 = vmatpush2.msra.mxu0 0.0
      %2905 = vmatprep.subr.mxu0 0.0
      %2906 = vmatpush2.msra.mxu0 0.0
      %2907 = vmatprep.subr.mxu0 0.0
      %2908 = vmatpush2.msra.mxu0 0.0
      %2909 = vmatprep.subr.mxu0 0.0
      %2910 = vmatpush2.msra.mxu0 0.0
      %2911 = vmatprep.subr.mxu0 0.0
      %2912 = vmatpush2.msra.mxu0 0.0
      %2913 = vmatprep.mubr.f32.mxu0 0.0
      %2914 = vmatmul.mubr.f32.gmra.mxu0 %v2847
      %v2915 = vpop.f32.mrf.mxu0
      %v2916 = vadd.f32 %v2844, %v2915
      %v2917 = vpop.f32.mrf.mxu0
      %2918 = vdwg.mxu0
      %v2919 = vmax.f32 %v2916, 0.0
      %v2920 = vld [vmem:[%s20] sm:$0xff]
      %v2921 = vld [vmem:[%s20 + $0x8] sm:$0xff]
      %v2922 = vld [vmem:[%s20 + $0x10] sm:$0xff]
      %v2923 = vld [vmem:[%s20 + $0x18] sm:$0xff]
      %v2924 = vld [vmem:[%s20 + $0x20] sm:$0xff]
      %v2925 = vld [vmem:[%s20 + $0x28] sm:$0xff]
      %v2926 = vld [vmem:[%s20 + $0x30] sm:$0xff]
      %v2927 = vld [vmem:[%s20 + $0x38] sm:$0xff]
      %v2928 = vld [vmem:[%s21] sm:$0x1]
      %v2930 = vlaneseq
      %v2931 = vshrl.u32 %v2930, 7
      %v2932 = vsub.s32 0, %v2931
      %v2933 = vrot.slane %v2928, %v2932
      %vm2935 = vcmask 523264
      %v2937 = vsel %vm2935, %v2919, 0
      %2939 = vmatprep.subr.mxu0 0.0
      %2940 = vmatpush1.msra.mxu0 0.0
      %2941 = vmatprep.subr.mxu0 0.0
      %2942 = vmatpush1.msra.mxu0 0.0
      %2943 = vmatprep.subr.mxu0 0.0
      %2944 = vmatpush1.msra.mxu0 0.0
      %2945 = vmatprep.subr.mxu0 0.0
      %2946 = vmatpush1.msra.mxu0 0.0
      %2947 = vmatprep.subr.mxu0 0.0
      %2948 = vmatpush1.msra.mxu0 0.0
      %2949 = vmatprep.subr.mxu0 0.0
      %2950 = vmatpush1.msra.mxu0 0.0
      %2951 = vmatprep.subr.mxu0 0.0
      %2952 = vmatpush1.msra.mxu0 0.0
      %2953 = vmatprep.subr.mxu0 0.0
      %2954 = vmatpush1.msra.mxu0 0.0
      %2955 = vmatprep.subr.mxu0 0.0
      %2956 = vmatpush1.msra.mxu0 %v2927
      %2957 = vmatprep.subr.mxu0 0.0
      %2958 = vmatpush1.msra.mxu0 %v2926
      %2959 = vmatprep.subr.mxu0 0.0
      %2960 = vmatpush1.msra.mxu0 %v2925
      %2961 = vmatprep.subr.mxu0 0.0
      %2962 = vmatpush1.msra.mxu0 %v2924
      %2963 = vmatprep.subr.mxu0 0.0
      %2964 = vmatpush1.msra.mxu0 %v2923
      %2965 = vmatprep.subr.mxu0 0.0
      %2966 = vmatpush1.msra.mxu0 %v2922
      %2967 = vmatprep.subr.mxu0 0.0
      %2968 = vmatpush1.msra.mxu0 %v2921
      %2969 = vmatprep.subr.mxu0 0.0
      %2970 = vmatpush1.msra.mxu0 %v2920
      %2971 = vmatprep.subr.mxu0 0.0
      %2972 = vmatpush2.msra.mxu0 0.0
      %2973 = vmatprep.subr.mxu0 0.0
      %2974 = vmatpush2.msra.mxu0 0.0
      %2975 = vmatprep.subr.mxu0 0.0
      %2976 = vmatpush2.msra.mxu0 0.0
      %2977 = vmatprep.subr.mxu0 0.0
      %2978 = vmatpush2.msra.mxu0 0.0
      %2979 = vmatprep.subr.mxu0 0.0
      %2980 = vmatpush2.msra.mxu0 0.0
      %2981 = vmatprep.subr.mxu0 0.0
      %2982 = vmatpush2.msra.mxu0 0.0
      %2983 = vmatprep.subr.mxu0 0.0
      %2984 = vmatpush2.msra.mxu0 0.0
      %2985 = vmatprep.subr.mxu0 0.0
      %2986 = vmatpush2.msra.mxu0 0.0
      %2987 = vmatprep.subr.mxu0 0.0
      %2988 = vmatpush2.msra.mxu0 0.0
      %2989 = vmatprep.subr.mxu0 0.0
      %2990 = vmatpush2.msra.mxu0 0.0
      %2991 = vmatprep.subr.mxu0 0.0
      %2992 = vmatpush2.msra.mxu0 0.0
      %2993 = vmatprep.subr.mxu0 0.0
      %2994 = vmatpush2.msra.mxu0 0.0
      %2995 = vmatprep.subr.mxu0 0.0
      %2996 = vmatpush2.msra.mxu0 0.0
      %2997 = vmatprep.subr.mxu0 0.0
      %2998 = vmatpush2.msra.mxu0 0.0
      %2999 = vmatprep.subr.mxu0 0.0
      %3000 = vmatpush2.msra.mxu0 0.0
      %3001 = vmatprep.subr.mxu0 0.0
      %3002 = vmatpush2.msra.mxu0 0.0
      %3003 = vmatprep.mubr.f32.mxu0 0.0
      %3004 = vmatmul.mubr.f32.gmra.mxu0 %v2937
      %v3005 = vpop.f32.mrf.mxu0
      %v3006 = vadd.f32 %v2933, %v3005
      %v3007 = vpop.f32.mrf.mxu0
      %3008 = vdwg.mxu0
      %v3009 = vadd.f32 %v3006, %v2834
      %v3010 = vld [vmem:[%s22] sm:$0x1]
      %v3011 = vld [vmem:[%s23] sm:$0x1]
      %v3012 = vsel %vm809, %v3009, 0.0
      %3013 = vadd.xlane.f32.xlu0 %v3012
      %v3014 = vpop.xlane.xlu0 %3013
      %v3015 = vmul.f32 %v3014, %v1781
      %v3016 = vsub.f32 %v3009, %v3015
      %v3017 = vmul.f32 %v3016, %v3016
      %v3018 = vsel %vm809, %v3017, 0.0
      %3019 = vadd.xlane.f32.xlu0 %v3018
      %v3020 = vpop.xlane.xlu0 %3019
      %v3021 = vmul.f32 %v3020, %v1788
      %v3022 = vrsqrt.pop %v3021
      %v3023 = vmul.f32 %v3021, %v3022
      %vm3024 = vcmp.eq.f32.partialorder %v3021, inf
      %v3025 = vsel %vm3024, %v3021, %v3023
      %vm3026 = vcmp.eq.f32.partialorder %v3021, 0.0
      %v3027 = vand.u32 %v3021, 2147483648
      %v3028 = vsel %vm3026, %v3027, %v3025
      %v3029 = vadd.f32 %v3028, 0.001
      %v3030 = vrcp.pop %v3029
      %v3031 = vmul.f32 %v3016, %v3030
      %v3033 = vlaneseq
      %v3034 = vshrl.u32 %v3033, 7
      %v3035 = vsub.s32 0, %v3034
      %v3036 = vrot.slane %v3010, %v3035
      %v3038 = vmul.f32 %v3031, %v3036
      %v3040 = vlaneseq
      %v3041 = vshrl.u32 %v3040, 7
      %v3042 = vsub.s32 0, %v3041
      %v3043 = vrot.slane %v3011, %v3042
      %v3045 = vadd.f32 %v3038, %v3043
      %3046 = vst.msk [vmem:[%s783] sm:$0xff] %vm809, %v3045
      %p3047 = scmp.lt.s32.totalorder %s35, 1
      %s3048 = scalar_select %p3047, %s35, 1
      %s3049 = smul.addr %s3048, 8
      %s3050 = scalar_lea.vmem %s24, %s3049
      // Predicated region
      $region117: #{transformer_decoder.2} parent=115 // pred_check
        %p3051 = pneg %p577
      $region118: #{transformer_decoder.2} parent=115 // pred_check_branch
        %3053 = sbr.rel (%p3051) target = $region120
      $region119: #{transformer_decoder.2} parent=115 // pred_region
        _
      $region120: #{transformer_decoder.2} parent=115 // pred_fallthru
        _
    $region116: #{transformer_decoder.2} parent=5 // pred_fallthru
      _
    %p3054 = scmp.le.s32.totalorder 2, %s30
    // Predicated region
    $region121: #{transformer_decoder.2} parent=5 // pred_check
      %p3055 = pneg %p3054
    $region122: #{transformer_decoder.2} parent=5 // pred_check_branch
      %3057 = sbr.rel (%p3055) target = $region124
    $region123: #{transformer_decoder.2} parent=5 // pred_region
      %s3058 = ssub.s32 %s30, 2
      // Predicated region
      $region125: #{transformer_decoder.2} parent=123 // pred_check
        %p3059 = pneg %p583
      $region126: #{transformer_decoder.2} parent=123 // pred_check_branch
        %3061 = sbr.rel (%p3059) target = $region128
      $region127: #{transformer_decoder.2} parent=123 // pred_region
        %p3062 = scmp.lt.s32.totalorder %s36, 1
        %s3063 = scalar_select %p3062, %s36, 1
        %s3064 = smul.addr %s3063, 8
        %s3065 = scalar_lea.vmem %s24, %s3064
      $region128: #{transformer_decoder.2} parent=123 // pred_fallthru
        _
    $region124: #{transformer_decoder.2} parent=5 // pred_fallthru
      _
  $region6: #{transformer_decoder.2} parent=0 // loop_footer
    %s34 = sadd.s32 1, %s30
  $region7: #{transformer_decoder.2} parent=0 // loop_footer_branch
    %29 = sbr.rel target = $region3
  $region8: #{transformer_decoder.2} parent=0 // loop_exit
    _

// kernel: transformer_decoder.3
$region0: #{transformer_decoder.3}
  #allocation0 [shape = 'u32[]', space=smem, size = 0x4, offset = 0x4, fixed_abs, tag = 'smem constant byte address 0x4 - core index']
  #allocation1 [shape = 'u32[144,128]{1,0:T(1,128)}', space=vmem, size = 0x12000, scoped, tag = 'internal scratch']
  %s0 = inlined_call_operand.vmem [shape: f32[2,8,32], index: 0, kind: input, shape index: {}]
  %s1 = inlined_call_operand.vmem [shape: f32[2,8,32], index: 1, kind: input, shape index: {}]
  %s2 = inlined_call_operand.vmem [shape: f32[2,8,8], index: 2, kind: input, shape index: {}]
  %s3 = inlined_call_operand.vmem [shape: f32[2,8,8], index: 3, kind: input, shape index: {}]
  %s4 = inlined_call_operand.vmem [shape: f32[32,32], index: 4, kind: input, shape index: {}]
  %s5 = inlined_call_operand.vmem [shape: f32[32,32], index: 5, kind: input, shape index: {}]
  %s6 = inlined_call_operand.vmem [shape: f32[32,32], index: 6, kind: input, shape index: {}]
  %s7 = inlined_call_operand.vmem [shape: f32[32,32], index: 7, kind: input, shape index: {}]
  %s8 = inlined_call_operand.vmem [shape: f32[1,32], index: 8, kind: input, shape index: {}]
  %s9 = inlined_call_operand.vmem [shape: f32[1,32], index: 9, kind: input, shape index: {}]
  %s10 = inlined_call_operand.vmem [shape: f32[1,32], index: 10, kind: input, shape index: {}]
  %s11 = inlined_call_operand.vmem [shape: f32[32,32], index: 11, kind: input, shape index: {}]
  %s12 = inlined_call_operand.vmem [shape: f32[32,32], index: 12, kind: input, shape index: {}]
  %s13 = inlined_call_operand.vmem [shape: f32[32,32], index: 13, kind: input, shape index: {}]
  %s14 = inlined_call_operand.vmem [shape: f32[32,32], index: 14, kind: input, shape index: {}]
  %s15 = inlined_call_operand.vmem [shape: f32[1,32], index: 15, kind: input, shape index: {}]
  %s16 = inlined_call_operand.vmem [shape: f32[1,32], index: 16, kind: input, shape index: {}]
  %s17 = inlined_call_operand.vmem [shape: f32[1,32], index: 17, kind: input, shape index: {}]
  %s18 = inlined_call_operand.vmem [shape: f32[32,64], index: 18, kind: input, shape index: {}]
  %s19 = inlined_call_operand.vmem [shape: f32[1,64], index: 19, kind: input, shape index: {}]
  %s20 = inlined_call_operand.vmem [shape: f32[64,32], index: 20, kind: input, shape index: {}]
  %s21 = inlined_call_operand.vmem [shape: f32[1,32], index: 21, kind: input, shape index: {}]
  %s22 = inlined_call_operand.vmem [shape: f32[1,32], index: 22, kind: input, shape index: {}]
  %s23 = inlined_call_operand.hbm [shape: f32[1,32], index: 23, kind: input, shape index: {}]
  %s24 = inlined_call_operand.hbm [shape: f32[2,8,32], index: 24, kind: output, shape index: {}]
  %s25 = sld [smem:[#allocation0]]
  $region133: #{transformer_decoder.3} parent=0
    _
  %s27 = ssub.s32 1, %s25
  %s28 = scalar_select 0, %s27, %s25
  $region1: #{transformer_decoder.3} parent=0
    #allocation2 [shape = 'u8[512]{0}', space=vmem, size = 0x400, scoped, tag = 'input window, operand 23, single buffered']
    #allocation3 [shape = 's32[2]{0}', space=sflag, size = 0x8, scoped, tag = 'scoped memory for transformer_decoder.3']
    #allocation4 [shape = 's32[2]{0}', space=sflag, size = 0x8, scoped, tag = 'scoped memory for transformer_decoder.3']
    #allocation5 [shape = 'u8[8192]{0}', space=vmem, size = 0x2000, scoped, tag = 'output window, operand 0']
    %29 = vsyncpa [#allocation3], 0
    %30 = vsyncpa [#allocation4], 0
    %s31 = scalar_lea.sflag [#allocation4], 1
    %32 = vsyncpa %s31, 0
    loop: start=0, step=1, limit=4
    $region2: #{transformer_decoder.3} parent=1 // loop_pre_header
      _
    $region3: #{transformer_decoder.3} parent=1 // loop_header
      %s34 = sphi 0, %s38
      %p35 = scmp.ge.s32.totalorder %s34, 4
      %s44 = sphi 0, %s46
      %s47 = sphi 0, %s44
      %s48 = sphi 0, %s47
      %s64 = sphi 0, %s48
      %s70 = sphi 0, %s72
      %s73 = sphi 0, %s70
      %s74 = sphi 0, %s73
      %s90 = sphi 0, %s74
      %s96 = sphi 0, %s98
      %s99 = sphi 0, %s96
      %s100 = sphi 0, %s99
      %s116 = sphi 0, %s100
      %s122 = sphi 0, %s124
      %s125 = sphi 0, %s122
      %s126 = sphi 0, %s125
      %s142 = sphi 0, %s126
      %s146 = sphi 0, %s146
      %s148 = sphi 0, %s146
      %s149 = sphi 0, %s148
      %s163 = sphi 0, %s149
      %s167 = sphi 0, %s167
      %s169 = sphi 0, %s167
      %s170 = sphi 0, %s169
      %s184 = sphi 0, %s170
      %s188 = sphi 0, %s188
      %s190 = sphi 0, %s188
      %s191 = sphi 0, %s190
      %s205 = sphi 0, %s191
      %s209 = sphi 0, %s209
      %s211 = sphi 0, %s209
      %s212 = sphi 0, %s211
      %s226 = sphi 0, %s212
      %s230 = sphi 0, %s230
      %s232 = sphi 0, %s230
      %s233 = sphi 0, %s232
      %s247 = sphi 0, %s233
      %s251 = sphi 0, %s251
      %s253 = sphi 0, %s251
      %s254 = sphi 0, %s253
      %s268 = sphi 0, %s254
      %s272 = sphi 0, %s272
      %s274 = sphi 0, %s272
      %s275 = sphi 0, %s274
      %s289 = sphi 0, %s275
      %s293 = sphi 0, %s293
      %s295 = sphi 0, %s293
      %s296 = sphi 0, %s295
      %s310 = sphi 0, %s296
      %s314 = sphi 0, %s314
      %s316 = sphi 0, %s314
      %s317 = sphi 0, %s316
      %s331 = sphi 0, %s317
      %s335 = sphi 0, %s335
      %s337 = sphi 0, %s335
      %s338 = sphi 0, %s337
      %s352 = sphi 0, %s338
      %s356 = sphi 0, %s356
      %s358 = sphi 0, %s356
      %s359 = sphi 0, %s358
      %s373 = sphi 0, %s359
      %s377 = sphi 0, %s377
      %s379 = sphi 0, %s377
      %s380 = sphi 0, %s379
      %s394 = sphi 0, %s380
      %s398 = sphi 0, %s398
      %s400 = sphi 0, %s398
      %s401 = sphi 0, %s400
      %s415 = sphi 0, %s401
      %s419 = sphi 0, %s419
      %s421 = sphi 0, %s419
      %s422 = sphi 0, %s421
      %s436 = sphi 0, %s422
      %s440 = sphi 0, %s440
      %s442 = sphi 0, %s440
      %s443 = sphi 0, %s442
      %s457 = sphi 0, %s443
      %s461 = sphi 0, %s461
      %s463 = sphi 0, %s461
      %s464 = sphi 0, %s463
      %s478 = sphi 0, %s464
      %s482 = sphi 0, %s482
      %s484 = sphi 0, %s482
      %s485 = sphi 0, %s484
      %s499 = sphi 0, %s485
      %s503 = sphi 0, %s503
      %s505 = sphi 0, %s503
      %s506 = sphi 0, %s505
      %s520 = sphi 0, %s506
      %s524 = sphi 0, %s524
      %s526 = sphi 0, %s524
      %s527 = sphi 0, %s526
      %s541 = sphi 0, %s527
      %s545 = sphi 0, %s545
      %s547 = sphi 0, %s545
      %s548 = sphi 0, %s547
      %s562 = sphi 0, %s548
      %s568 = sphi 0, %s570
      %s571 = sphi 0, %s568
      %s572 = sphi 0, %s571
      %s588 = sphi 0, %s572
    $region4: #{transformer_decoder.3} parent=1 // loop_header_branch
      %37 = sbr.rel (%p35) target = $region8
    $region5: #{transformer_decoder.3} parent=1 // loop_body
      %s39 = ssub.s32 %s34, 1
      %s40 = ssub.s32 %s34, 2
      %s41 = sadd.s32 %s34, 1
      %s42 = ssub.s32 %s34, %s41
      %p43 = scmp.eq.s32.totalorder %s42, 0
      %s45 = sadd.s32 %s44, 1
      %s46 = scalar_select %p43, %s44, %s45
      %p49 = pneg %p43
      %p50 = scmp.eq.s32.totalorder %s34, 1
      %p51 = por %p49, %p50
      %p52 = scmp.ne.s32.totalorder %s44, %s47
      %p53 = scmp.eq.s32.totalorder %s34, 0
      %p54 = por %p52, %p53
      %p55 = scmp.ne.s32.totalorder %s44, %s47
      %p56 = scmp.eq.s32.totalorder %s39, 1
      %p57 = por %p55, %p56
      %p58 = scmp.ne.s32.totalorder %s47, %s48
      %p59 = scmp.eq.s32.totalorder %s39, 0
      %p60 = por %p58, %p59
      %p61 = scmp.ne.s32.totalorder %s47, %s48
      %p62 = scmp.eq.s32.totalorder %s40, 1
      %p63 = por %p61, %p62
      %p65 = scmp.ne.s32.totalorder %s48, %s64
      %p66 = scmp.eq.s32.totalorder %s40, 0
      %p67 = por %p65, %p66
      %s68 = ssub.s32 %s34, %s41
      %p69 = scmp.eq.s32.totalorder %s68, 0
      %s71 = sadd.s32 %s70, 1
      %s72 = scalar_select %p69, %s70, %s71
      %p75 = pneg %p69
      %p76 = scmp.eq.s32.totalorder %s34, 1
      %p77 = por %p75, %p76
      %p78 = scmp.ne.s32.totalorder %s70, %s73
      %p79 = scmp.eq.s32.totalorder %s34, 0
      %p80 = por %p78, %p79
      %p81 = scmp.ne.s32.totalorder %s70, %s73
      %p82 = scmp.eq.s32.totalorder %s39, 1
      %p83 = por %p81, %p82
      %p84 = scmp.ne.s32.totalorder %s73, %s74
      %p85 = scmp.eq.s32.totalorder %s39, 0
      %p86 = por %p84, %p85
      %p87 = scmp.ne.s32.totalorder %s73, %s74
      %p88 = scmp.eq.s32.totalorder %s40, 1
      %p89 = por %p87, %p88
      %p91 = scmp.ne.s32.totalorder %s74, %s90
      %p92 = scmp.eq.s32.totalorder %s40, 0
      %p93 = por %p91, %p92
      %s94 = ssub.s32 %s34, %s41
      %p95 = scmp.eq.s32.totalorder %s94, 0
      %s97 = sadd.s32 %s96, 1
      %s98 = scalar_select %p95, %s96, %s97
      %p101 = pneg %p95
      %p102 = scmp.eq.s32.totalorder %s34, 1
      %p103 = por %p101, %p102
      %p104 = scmp.ne.s32.totalorder %s96, %s99
      %p105 = scmp.eq.s32.totalorder %s34, 0
      %p106 = por %p104, %p105
      %p107 = scmp.ne.s32.totalorder %s96, %s99
      %p108 = scmp.eq.s32.totalorder %s39, 1
      %p109 = por %p107, %p108
      %p110 = scmp.ne.s32.totalorder %s99, %s100
      %p111 = scmp.eq.s32.totalorder %s39, 0
      %p112 = por %p110, %p111
      %p113 = scmp.ne.s32.totalorder %s99, %s100
      %p114 = scmp.eq.s32.totalorder %s40, 1
      %p115 = por %p113, %p114
      %p117 = scmp.ne.s32.totalorder %s100, %s116
      %p118 = scmp.eq.s32.totalorder %s40, 0
      %p119 = por %p117, %p118
      %s120 = ssub.s32 %s34, %s41
      %p121 = scmp.eq.s32.totalorder %s120, 0
      %s123 = sadd.s32 %s122, 1
      %s124 = scalar_select %p121, %s122, %s123
      %p127 = pneg %p121
      %p128 = scmp.eq.s32.totalorder %s34, 1
      %p129 = por %p127, %p128
      %p130 = scmp.ne.s32.totalorder %s122, %s125
      %p131 = scmp.eq.s32.totalorder %s34, 0
      %p132 = por %p130, %p131
      %p133 = scmp.ne.s32.totalorder %s122, %s125
      %p134 = scmp.eq.s32.totalorder %s39, 1
      %p135 = por %p133, %p134
      %p136 = scmp.ne.s32.totalorder %s125, %s126
      %p137 = scmp.eq.s32.totalorder %s39, 0
      %p138 = por %p136, %p137
      %p139 = scmp.ne.s32.totalorder %s125, %s126
      %p140 = scmp.eq.s32.totalorder %s40, 1
      %p141 = por %p139, %p140
      %p143 = scmp.ne.s32.totalorder %s126, %s142
      %p144 = scmp.eq.s32.totalorder %s40, 0
      %p145 = por %p143, %p144
      %s147 = sadd.s32 %s146, 1
      %p150 = scmp.eq.s32.totalorder %s34, 1
      %p151 = scmp.ne.s32.totalorder %s146, %s148
      %p152 = scmp.eq.s32.totalorder %s34, 0
      %p153 = por %p151, %p152
      %p154 = scmp.ne.s32.totalorder %s146, %s148
      %p155 = scmp.eq.s32.totalorder %s39, 1
      %p156 = por %p154, %p155
      %p157 = scmp.ne.s32.totalorder %s148, %s149
      %p158 = scmp.eq.s32.totalorder %s39, 0
      %p159 = por %p157, %p158
      %p160 = scmp.ne.s32.totalorder %s148, %s149
      %p161 = scmp.eq.s32.totalorder %s40, 1
      %p162 = por %p160, %p161
      %p164 = scmp.ne.s32.totalorder %s149, %s163
      %p165 = scmp.eq.s32.totalorder %s40, 0
      %p166 = por %p164, %p165
      %s168 = sadd.s32 %s167, 1
      %p171 = scmp.eq.s32.totalorder %s34, 1
      %p172 = scmp.ne.s32.totalorder %s167, %s169
      %p173 = scmp.eq.s32.totalorder %s34, 0
      %p174 = por %p172, %p173
      %p175 = scmp.ne.s32.totalorder %s167, %s169
      %p176 = scmp.eq.s32.totalorder %s39, 1
      %p177 = por %p175, %p176
      %p178 = scmp.ne.s32.totalorder %s169, %s170
      %p179 = scmp.eq.s32.totalorder %s39, 0
      %p180 = por %p178, %p179
      %p181 = scmp.ne.s32.totalorder %s169, %s170
      %p182 = scmp.eq.s32.totalorder %s40, 1
      %p183 = por %p181, %p182
      %p185 = scmp.ne.s32.totalorder %s170, %s184
      %p186 = scmp.eq.s32.totalorder %s40, 0
      %p187 = por %p185, %p186
      %s189 = sadd.s32 %s188, 1
      %p192 = scmp.eq.s32.totalorder %s34, 1
      %p193 = scmp.ne.s32.totalorder %s188, %s190
      %p194 = scmp.eq.s32.totalorder %s34, 0
      %p195 = por %p193, %p194
      %p196 = scmp.ne.s32.totalorder %s188, %s190
      %p197 = scmp.eq.s32.totalorder %s39, 1
      %p198 = por %p196, %p197
      %p199 = scmp.ne.s32.totalorder %s190, %s191
      %p200 = scmp.eq.s32.totalorder %s39, 0
      %p201 = por %p199, %p200
      %p202 = scmp.ne.s32.totalorder %s190, %s191
      %p203 = scmp.eq.s32.totalorder %s40, 1
      %p204 = por %p202, %p203
      %p206 = scmp.ne.s32.totalorder %s191, %s205
      %p207 = scmp.eq.s32.totalorder %s40, 0
      %p208 = por %p206, %p207
      %s210 = sadd.s32 %s209, 1
      %p213 = scmp.eq.s32.totalorder %s34, 1
      %p214 = scmp.ne.s32.totalorder %s209, %s211
      %p215 = scmp.eq.s32.totalorder %s34, 0
      %p216 = por %p214, %p215
      %p217 = scmp.ne.s32.totalorder %s209, %s211
      %p218 = scmp.eq.s32.totalorder %s39, 1
      %p219 = por %p217, %p218
      %p220 = scmp.ne.s32.totalorder %s211, %s212
      %p221 = scmp.eq.s32.totalorder %s39, 0
      %p222 = por %p220, %p221
      %p223 = scmp.ne.s32.totalorder %s211, %s212
      %p224 = scmp.eq.s32.totalorder %s40, 1
      %p225 = por %p223, %p224
      %p227 = scmp.ne.s32.totalorder %s212, %s226
      %p228 = scmp.eq.s32.totalorder %s40, 0
      %p229 = por %p227, %p228
      %s231 = sadd.s32 %s230, 1
      %p234 = scmp.eq.s32.totalorder %s34, 1
      %p235 = scmp.ne.s32.totalorder %s230, %s232
      %p236 = scmp.eq.s32.totalorder %s34, 0
      %p237 = por %p235, %p236
      %p238 = scmp.ne.s32.totalorder %s230, %s232
      %p239 = scmp.eq.s32.totalorder %s39, 1
      %p240 = por %p238, %p239
      %p241 = scmp.ne.s32.totalorder %s232, %s233
      %p242 = scmp.eq.s32.totalorder %s39, 0
      %p243 = por %p241, %p242
      %p244 = scmp.ne.s32.totalorder %s232, %s233
      %p245 = scmp.eq.s32.totalorder %s40, 1
      %p246 = por %p244, %p245
      %p248 = scmp.ne.s32.totalorder %s233, %s247
      %p249 = scmp.eq.s32.totalorder %s40, 0
      %p250 = por %p248, %p249
      %s252 = sadd.s32 %s251, 1
      %p255 = scmp.eq.s32.totalorder %s34, 1
      %p256 = scmp.ne.s32.totalorder %s251, %s253
      %p257 = scmp.eq.s32.totalorder %s34, 0
      %p258 = por %p256, %p257
      %p259 = scmp.ne.s32.totalorder %s251, %s253
      %p260 = scmp.eq.s32.totalorder %s39, 1
      %p261 = por %p259, %p260
      %p262 = scmp.ne.s32.totalorder %s253, %s254
      %p263 = scmp.eq.s32.totalorder %s39, 0
      %p264 = por %p262, %p263
      %p265 = scmp.ne.s32.totalorder %s253, %s254
      %p266 = scmp.eq.s32.totalorder %s40, 1
      %p267 = por %p265, %p266
      %p269 = scmp.ne.s32.totalorder %s254, %s268
      %p270 = scmp.eq.s32.totalorder %s40, 0
      %p271 = por %p269, %p270
      %s273 = sadd.s32 %s272, 1
      %p276 = scmp.eq.s32.totalorder %s34, 1
      %p277 = scmp.ne.s32.totalorder %s272, %s274
      %p278 = scmp.eq.s32.totalorder %s34, 0
      %p279 = por %p277, %p278
      %p280 = scmp.ne.s32.totalorder %s272, %s274
      %p281 = scmp.eq.s32.totalorder %s39, 1
      %p282 = por %p280, %p281
      %p283 = scmp.ne.s32.totalorder %s274, %s275
      %p284 = scmp.eq.s32.totalorder %s39, 0
      %p285 = por %p283, %p284
      %p286 = scmp.ne.s32.totalorder %s274, %s275
      %p287 = scmp.eq.s32.totalorder %s40, 1
      %p288 = por %p286, %p287
      %p290 = scmp.ne.s32.totalorder %s275, %s289
      %p291 = scmp.eq.s32.totalorder %s40, 0
      %p292 = por %p290, %p291
      %s294 = sadd.s32 %s293, 1
      %p297 = scmp.eq.s32.totalorder %s34, 1
      %p298 = scmp.ne.s32.totalorder %s293, %s295
      %p299 = scmp.eq.s32.totalorder %s34, 0
      %p300 = por %p298, %p299
      %p301 = scmp.ne.s32.totalorder %s293, %s295
      %p302 = scmp.eq.s32.totalorder %s39, 1
      %p303 = por %p301, %p302
      %p304 = scmp.ne.s32.totalorder %s295, %s296
      %p305 = scmp.eq.s32.totalorder %s39, 0
      %p306 = por %p304, %p305
      %p307 = scmp.ne.s32.totalorder %s295, %s296
      %p308 = scmp.eq.s32.totalorder %s40, 1
      %p309 = por %p307, %p308
      %p311 = scmp.ne.s32.totalorder %s296, %s310
      %p312 = scmp.eq.s32.totalorder %s40, 0
      %p313 = por %p311, %p312
      %s315 = sadd.s32 %s314, 1
      %p318 = scmp.eq.s32.totalorder %s34, 1
      %p319 = scmp.ne.s32.totalorder %s314, %s316
      %p320 = scmp.eq.s32.totalorder %s34, 0
      %p321 = por %p319, %p320
      %p322 = scmp.ne.s32.totalorder %s314, %s316
      %p323 = scmp.eq.s32.totalorder %s39, 1
      %p324 = por %p322, %p323
      %p325 = scmp.ne.s32.totalorder %s316, %s317
      %p326 = scmp.eq.s32.totalorder %s39, 0
      %p327 = por %p325, %p326
      %p328 = scmp.ne.s32.totalorder %s316, %s317
      %p329 = scmp.eq.s32.totalorder %s40, 1
      %p330 = por %p328, %p329
      %p332 = scmp.ne.s32.totalorder %s317, %s331
      %p333 = scmp.eq.s32.totalorder %s40, 0
      %p334 = por %p332, %p333
      %s336 = sadd.s32 %s335, 1
      %p339 = scmp.eq.s32.totalorder %s34, 1
      %p340 = scmp.ne.s32.totalorder %s335, %s337
      %p341 = scmp.eq.s32.totalorder %s34, 0
      %p342 = por %p340, %p341
      %p343 = scmp.ne.s32.totalorder %s335, %s337
      %p344 = scmp.eq.s32.totalorder %s39, 1
      %p345 = por %p343, %p344
      %p346 = scmp.ne.s32.totalorder %s337, %s338
      %p347 = scmp.eq.s32.totalorder %s39, 0
      %p348 = por %p346, %p347
      %p349 = scmp.ne.s32.totalorder %s337, %s338
      %p350 = scmp.eq.s32.totalorder %s40, 1
      %p351 = por %p349, %p350
      %p353 = scmp.ne.s32.totalorder %s338, %s352
      %p354 = scmp.eq.s32.totalorder %s40, 0
      %p355 = por %p353, %p354
      %s357 = sadd.s32 %s356, 1
      %p360 = scmp.eq.s32.totalorder %s34, 1
      %p361 = scmp.ne.s32.totalorder %s356, %s358
      %p362 = scmp.eq.s32.totalorder %s34, 0
      %p363 = por %p361, %p362
      %p364 = scmp.ne.s32.totalorder %s356, %s358
      %p365 = scmp.eq.s32.totalorder %s39, 1
      %p366 = por %p364, %p365
      %p367 = scmp.ne.s32.totalorder %s358, %s359
      %p368 = scmp.eq.s32.totalorder %s39, 0
      %p369 = por %p367, %p368
      %p370 = scmp.ne.s32.totalorder %s358, %s359
      %p371 = scmp.eq.s32.totalorder %s40, 1
      %p372 = por %p370, %p371
      %p374 = scmp.ne.s32.totalorder %s359, %s373
      %p375 = scmp.eq.s32.totalorder %s40, 0
      %p376 = por %p374, %p375
      %s378 = sadd.s32 %s377, 1
      %p381 = scmp.eq.s32.totalorder %s34, 1
      %p382 = scmp.ne.s32.totalorder %s377, %s379
      %p383 = scmp.eq.s32.totalorder %s34, 0
      %p384 = por %p382, %p383
      %p385 = scmp.ne.s32.totalorder %s377, %s379
      %p386 = scmp.eq.s32.totalorder %s39, 1
      %p387 = por %p385, %p386
      %p388 = scmp.ne.s32.totalorder %s379, %s380
      %p389 = scmp.eq.s32.totalorder %s39, 0
      %p390 = por %p388, %p389
      %p391 = scmp.ne.s32.totalorder %s379, %s380
      %p392 = scmp.eq.s32.totalorder %s40, 1
      %p393 = por %p391, %p392
      %p395 = scmp.ne.s32.totalorder %s380, %s394
      %p396 = scmp.eq.s32.totalorder %s40, 0
      %p397 = por %p395, %p396
      %s399 = sadd.s32 %s398, 1
      %p402 = scmp.eq.s32.totalorder %s34, 1
      %p403 = scmp.ne.s32.totalorder %s398, %s400
      %p404 = scmp.eq.s32.totalorder %s34, 0
      %p405 = por %p403, %p404
      %p406 = scmp.ne.s32.totalorder %s398, %s400
      %p407 = scmp.eq.s32.totalorder %s39, 1
      %p408 = por %p406, %p407
      %p409 = scmp.ne.s32.totalorder %s400, %s401
      %p410 = scmp.eq.s32.totalorder %s39, 0
      %p411 = por %p409, %p410
      %p412 = scmp.ne.s32.totalorder %s400, %s401
      %p413 = scmp.eq.s32.totalorder %s40, 1
      %p414 = por %p412, %p413
      %p416 = scmp.ne.s32.totalorder %s401, %s415
      %p417 = scmp.eq.s32.totalorder %s40, 0
      %p418 = por %p416, %p417
      %s420 = sadd.s32 %s419, 1
      %p423 = scmp.eq.s32.totalorder %s34, 1
      %p424 = scmp.ne.s32.totalorder %s419, %s421
      %p425 = scmp.eq.s32.totalorder %s34, 0
      %p426 = por %p424, %p425
      %p427 = scmp.ne.s32.totalorder %s419, %s421
      %p428 = scmp.eq.s32.totalorder %s39, 1
      %p429 = por %p427, %p428
      %p430 = scmp.ne.s32.totalorder %s421, %s422
      %p431 = scmp.eq.s32.totalorder %s39, 0
      %p432 = por %p430, %p431
      %p433 = scmp.ne.s32.totalorder %s421, %s422
      %p434 = scmp.eq.s32.totalorder %s40, 1
      %p435 = por %p433, %p434
      %p437 = scmp.ne.s32.totalorder %s422, %s436
      %p438 = scmp.eq.s32.totalorder %s40, 0
      %p439 = por %p437, %p438
      %s441 = sadd.s32 %s440, 1
      %p444 = scmp.eq.s32.totalorder %s34, 1
      %p445 = scmp.ne.s32.totalorder %s440, %s442
      %p446 = scmp.eq.s32.totalorder %s34, 0
      %p447 = por %p445, %p446
      %p448 = scmp.ne.s32.totalorder %s440, %s442
      %p449 = scmp.eq.s32.totalorder %s39, 1
      %p450 = por %p448, %p449
      %p451 = scmp.ne.s32.totalorder %s442, %s443
      %p452 = scmp.eq.s32.totalorder %s39, 0
      %p453 = por %p451, %p452
      %p454 = scmp.ne.s32.totalorder %s442, %s443
      %p455 = scmp.eq.s32.totalorder %s40, 1
      %p456 = por %p454, %p455
      %p458 = scmp.ne.s32.totalorder %s443, %s457
      %p459 = scmp.eq.s32.totalorder %s40, 0
      %p460 = por %p458, %p459
      %s462 = sadd.s32 %s461, 1
      %p465 = scmp.eq.s32.totalorder %s34, 1
      %p466 = scmp.ne.s32.totalorder %s461, %s463
      %p467 = scmp.eq.s32.totalorder %s34, 0
      %p468 = por %p466, %p467
      %p469 = scmp.ne.s32.totalorder %s461, %s463
      %p470 = scmp.eq.s32.totalorder %s39, 1
      %p471 = por %p469, %p470
      %p472 = scmp.ne.s32.totalorder %s463, %s464
      %p473 = scmp.eq.s32.totalorder %s39, 0
      %p474 = por %p472, %p473
      %p475 = scmp.ne.s32.totalorder %s463, %s464
      %p476 = scmp.eq.s32.totalorder %s40, 1
      %p477 = por %p475, %p476
      %p479 = scmp.ne.s32.totalorder %s464, %s478
      %p480 = scmp.eq.s32.totalorder %s40, 0
      %p481 = por %p479, %p480
      %s483 = sadd.s32 %s482, 1
      %p486 = scmp.eq.s32.totalorder %s34, 1
      %p487 = scmp.ne.s32.totalorder %s482, %s484
      %p488 = scmp.eq.s32.totalorder %s34, 0
      %p489 = por %p487, %p488
      %p490 = scmp.ne.s32.totalorder %s482, %s484
      %p491 = scmp.eq.s32.totalorder %s39, 1
      %p492 = por %p490, %p491
      %p493 = scmp.ne.s32.totalorder %s484, %s485
      %p494 = scmp.eq.s32.totalorder %s39, 0
      %p495 = por %p493, %p494
      %p496 = scmp.ne.s32.totalorder %s484, %s485
      %p497 = scmp.eq.s32.totalorder %s40, 1
      %p498 = por %p496, %p497
      %p500 = scmp.ne.s32.totalorder %s485, %s499
      %p501 = scmp.eq.s32.totalorder %s40, 0
      %p502 = por %p500, %p501
      %s504 = sadd.s32 %s503, 1
      %p507 = scmp.eq.s32.totalorder %s34, 1
      %p508 = scmp.ne.s32.totalorder %s503, %s505
      %p509 = scmp.eq.s32.totalorder %s34, 0
      %p510 = por %p508, %p509
      %p511 = scmp.ne.s32.totalorder %s503, %s505
      %p512 = scmp.eq.s32.totalorder %s39, 1
      %p513 = por %p511, %p512
      %p514 = scmp.ne.s32.totalorder %s505, %s506
      %p515 = scmp.eq.s32.totalorder %s39, 0
      %p516 = por %p514, %p515
      %p517 = scmp.ne.s32.totalorder %s505, %s506
      %p518 = scmp.eq.s32.totalorder %s40, 1
      %p519 = por %p517, %p518
      %p521 = scmp.ne.s32.totalorder %s506, %s520
      %p522 = scmp.eq.s32.totalorder %s40, 0
      %p523 = por %p521, %p522
      %s525 = sadd.s32 %s524, 1
      %p528 = scmp.eq.s32.totalorder %s34, 1
      %p529 = scmp.ne.s32.totalorder %s524, %s526
      %p530 = scmp.eq.s32.totalorder %s34, 0
      %p531 = por %p529, %p530
      %p532 = scmp.ne.s32.totalorder %s524, %s526
      %p533 = scmp.eq.s32.totalorder %s39, 1
      %p534 = por %p532, %p533
      %p535 = scmp.ne.s32.totalorder %s526, %s527
      %p536 = scmp.eq.s32.totalorder %s39, 0
      %p537 = por %p535, %p536
      %p538 = scmp.ne.s32.totalorder %s526, %s527
      %p539 = scmp.eq.s32.totalorder %s40, 1
      %p540 = por %p538, %p539
      %p542 = scmp.ne.s32.totalorder %s527, %s541
      %p543 = scmp.eq.s32.totalorder %s40, 0
      %p544 = por %p542, %p543
      %s546 = sadd.s32 %s545, 1
      %p549 = scmp.eq.s32.totalorder %s34, 1
      %p550 = scmp.ne.s32.totalorder %s545, %s547
      %p551 = scmp.eq.s32.totalorder %s34, 0
      %p552 = por %p550, %p551
      %p553 = scmp.ne.s32.totalorder %s545, %s547
      %p554 = scmp.eq.s32.totalorder %s39, 1
      %p555 = por %p553, %p554
      %p556 = scmp.ne.s32.totalorder %s547, %s548
      %p557 = scmp.eq.s32.totalorder %s39, 0
      %p558 = por %p556, %p557
      %p559 = scmp.ne.s32.totalorder %s547, %s548
      %p560 = scmp.eq.s32.totalorder %s40, 1
      %p561 = por %p559, %p560
      %p563 = scmp.ne.s32.totalorder %s548, %s562
      %p564 = scmp.eq.s32.totalorder %s40, 0
      %p565 = por %p563, %p564
      %s566 = ssub.s32 %s34, %s41
      %p567 = scmp.eq.s32.totalorder %s566, 0
      %s569 = sadd.s32 %s568, 1
      %s570 = scalar_select %p567, %s568, %s569
      %p573 = pneg %p567
      %p574 = scmp.eq.s32.totalorder %s34, 1
      %p575 = por %p573, %p574
      %p576 = scmp.ne.s32.totalorder %s568, %s571
      %p577 = scmp.eq.s32.totalorder %s34, 0
      %p578 = por %p576, %p577
      %p579 = scmp.ne.s32.totalorder %s568, %s571
      %p580 = scmp.eq.s32.totalorder %s39, 1
      %p581 = por %p579, %p580
      %p582 = scmp.ne.s32.totalorder %s571, %s572
      %p583 = scmp.eq.s32.totalorder %s39, 0
      %p584 = por %p582, %p583
      %p585 = scmp.ne.s32.totalorder %s571, %s572
      %p586 = scmp.eq.s32.totalorder %s40, 1
      %p587 = por %p585, %p586
      %p589 = scmp.ne.s32.totalorder %s572, %s588
      %p590 = scmp.eq.s32.totalorder %s40, 0
      %p591 = por %p589, %p590
      %p592 = scmp.le.s32.totalorder 1, %s34
      %p593 = scmp.lt.s32.totalorder %s34, 3
      %p594 = pnand %p592, %p593
      %p595 = pneg %p594
      // Predicated region
      $region9: #{transformer_decoder.3} parent=5 // pred_check
        _
      $region10: #{transformer_decoder.3} parent=5 // pred_check_branch
        %597 = sbr.rel (%p594) target = $region12
      $region11: #{transformer_decoder.3} parent=5 // pred_region
        %s598 = ssub.s32 %s34, 1
        // Predicated region
        $region13: #{transformer_decoder.3} parent=11 // pred_check
          %p599 = pneg %p159
        $region14: #{transformer_decoder.3} parent=11 // pred_check_branch
          %601 = sbr.rel (%p599) target = $region16
        $region15: #{transformer_decoder.3} parent=11 // pred_region
          _
        $region16: #{transformer_decoder.3} parent=11 // pred_fallthru
          _
        // Predicated region
        $region17: #{transformer_decoder.3} parent=11 // pred_check
          %p602 = pneg %p180
        $region18: #{transformer_decoder.3} parent=11 // pred_check_branch
          %604 = sbr.rel (%p602) target = $region20
        $region19: #{transformer_decoder.3} parent=11 // pred_region
          _
        $region20: #{transformer_decoder.3} parent=11 // pred_fallthru
          _
        // Predicated region
        $region21: #{transformer_decoder.3} parent=11 // pred_check
          %p605 = pneg %p201
        $region22: #{transformer_decoder.3} parent=11 // pred_check_branch
          %607 = sbr.rel (%p605) target = $region24
        $region23: #{transformer_decoder.3} parent=11 // pred_region
          _
        $region24: #{transformer_decoder.3} parent=11 // pred_fallthru
          _
        // Predicated region
        $region25: #{transformer_decoder.3} parent=11 // pred_check
          %p608 = pneg %p222
        $region26: #{transformer_decoder.3} parent=11 // pred_check_branch
          %610 = sbr.rel (%p608) target = $region28
        $region27: #{transformer_decoder.3} parent=11 // pred_region
          _
        $region28: #{transformer_decoder.3} parent=11 // pred_fallthru
          _
        // Predicated region
        $region29: #{transformer_decoder.3} parent=11 // pred_check
          %p611 = pneg %p243
        $region30: #{transformer_decoder.3} parent=11 // pred_check_branch
          %613 = sbr.rel (%p611) target = $region32
        $region31: #{transformer_decoder.3} parent=11 // pred_region
          _
        $region32: #{transformer_decoder.3} parent=11 // pred_fallthru
          _
        // Predicated region
        $region33: #{transformer_decoder.3} parent=11 // pred_check
          %p614 = pneg %p264
        $region34: #{transformer_decoder.3} parent=11 // pred_check_branch
          %616 = sbr.rel (%p614) target = $region36
        $region35: #{transformer_decoder.3} parent=11 // pred_region
          _
        $region36: #{transformer_decoder.3} parent=11 // pred_fallthru
          _
        // Predicated region
        $region37: #{transformer_decoder.3} parent=11 // pred_check
          %p617 = pneg %p285
        $region38: #{transformer_decoder.3} parent=11 // pred_check_branch
          %619 = sbr.rel (%p617) target = $region40
        $region39: #{transformer_decoder.3} parent=11 // pred_region
          _
        $region40: #{transformer_decoder.3} parent=11 // pred_fallthru
          _
        // Predicated region
        $region41: #{transformer_decoder.3} parent=11 // pred_check
          %p620 = pneg %p306
        $region42: #{transformer_decoder.3} parent=11 // pred_check_branch
          %622 = sbr.rel (%p620) target = $region44
        $region43: #{transformer_decoder.3} parent=11 // pred_region
          _
        $region44: #{transformer_decoder.3} parent=11 // pred_fallthru
          _
        // Predicated region
        $region45: #{transformer_decoder.3} parent=11 // pred_check
          %p623 = pneg %p327
        $region46: #{transformer_decoder.3} parent=11 // pred_check_branch
          %625 = sbr.rel (%p623) target = $region48
        $region47: #{transformer_decoder.3} parent=11 // pred_region
          _
        $region48: #{transformer_decoder.3} parent=11 // pred_fallthru
          _
        // Predicated region
        $region49: #{transformer_decoder.3} parent=11 // pred_check
          %p626 = pneg %p348
        $region50: #{transformer_decoder.3} parent=11 // pred_check_branch
          %628 = sbr.rel (%p626) target = $region52
        $region51: #{transformer_decoder.3} parent=11 // pred_region
          _
        $region52: #{transformer_decoder.3} parent=11 // pred_fallthru
          _
        // Predicated region
        $region53: #{transformer_decoder.3} parent=11 // pred_check
          %p629 = pneg %p369
        $region54: #{transformer_decoder.3} parent=11 // pred_check_branch
          %631 = sbr.rel (%p629) target = $region56
        $region55: #{transformer_decoder.3} parent=11 // pred_region
          _
        $region56: #{transformer_decoder.3} parent=11 // pred_fallthru
          _
        // Predicated region
        $region57: #{transformer_decoder.3} parent=11 // pred_check
          %p632 = pneg %p390
        $region58: #{transformer_decoder.3} parent=11 // pred_check_branch
          %634 = sbr.rel (%p632) target = $region60
        $region59: #{transformer_decoder.3} parent=11 // pred_region
          _
        $region60: #{transformer_decoder.3} parent=11 // pred_fallthru
          _
        // Predicated region
        $region61: #{transformer_decoder.3} parent=11 // pred_check
          %p635 = pneg %p411
        $region62: #{transformer_decoder.3} parent=11 // pred_check_branch
          %637 = sbr.rel (%p635) target = $region64
        $region63: #{transformer_decoder.3} parent=11 // pred_region
          _
        $region64: #{transformer_decoder.3} parent=11 // pred_fallthru
          _
        // Predicated region
        $region65: #{transformer_decoder.3} parent=11 // pred_check
          %p638 = pneg %p432
        $region66: #{transformer_decoder.3} parent=11 // pred_check_branch
          %640 = sbr.rel (%p638) target = $region68
        $region67: #{transformer_decoder.3} parent=11 // pred_region
          _
        $region68: #{transformer_decoder.3} parent=11 // pred_fallthru
          _
        // Predicated region
        $region69: #{transformer_decoder.3} parent=11 // pred_check
          %p641 = pneg %p453
        $region70: #{transformer_decoder.3} parent=11 // pred_check_branch
          %643 = sbr.rel (%p641) target = $region72
        $region71: #{transformer_decoder.3} parent=11 // pred_region
          _
        $region72: #{transformer_decoder.3} parent=11 // pred_fallthru
          _
        // Predicated region
        $region73: #{transformer_decoder.3} parent=11 // pred_check
          %p644 = pneg %p474
        $region74: #{transformer_decoder.3} parent=11 // pred_check_branch
          %646 = sbr.rel (%p644) target = $region76
        $region75: #{transformer_decoder.3} parent=11 // pred_region
          _
        $region76: #{transformer_decoder.3} parent=11 // pred_fallthru
          _
        // Predicated region
        $region77: #{transformer_decoder.3} parent=11 // pred_check
          %p647 = pneg %p495
        $region78: #{transformer_decoder.3} parent=11 // pred_check_branch
          %649 = sbr.rel (%p647) target = $region80
        $region79: #{transformer_decoder.3} parent=11 // pred_region
          _
        $region80: #{transformer_decoder.3} parent=11 // pred_fallthru
          _
        // Predicated region
        $region81: #{transformer_decoder.3} parent=11 // pred_check
          %p650 = pneg %p516
        $region82: #{transformer_decoder.3} parent=11 // pred_check_branch
          %652 = sbr.rel (%p650) target = $region84
        $region83: #{transformer_decoder.3} parent=11 // pred_region
          _
        $region84: #{transformer_decoder.3} parent=11 // pred_fallthru
          _
        // Predicated region
        $region85: #{transformer_decoder.3} parent=11 // pred_check
          %p653 = pneg %p537
        $region86: #{transformer_decoder.3} parent=11 // pred_check_branch
          %655 = sbr.rel (%p653) target = $region88
        $region87: #{transformer_decoder.3} parent=11 // pred_region
          _
        $region88: #{transformer_decoder.3} parent=11 // pred_fallthru
          _
        // Predicated region
        $region89: #{transformer_decoder.3} parent=11 // pred_check
          %p656 = pneg %p558
        $region90: #{transformer_decoder.3} parent=11 // pred_check_branch
          %658 = sbr.rel (%p656) target = $region92
        $region91: #{transformer_decoder.3} parent=11 // pred_region
          %s660 = ssub.s32 16, 16
          %661 = vsyncadd [#allocation3], %s660
          %s663 = sshll.u32 [#allocation2], 4
          %s664 = int_to_ptr.vmem [resolvable:$true] %s663
          %666 = dma.hbm_to_vmem [thread:$0]  %s23, 16, %s664, [#allocation3]
        $region92: #{transformer_decoder.3} parent=11 // pred_fallthru
          _
      $region12: #{transformer_decoder.3} parent=5 // pred_fallthru
        _
      %p667 = scmp.lt.s32.totalorder %s34, 2
      // Predicated region
      $region93: #{transformer_decoder.3} parent=5 // pred_check
        %p668 = pneg %p667
      $region94: #{transformer_decoder.3} parent=5 // pred_check_branch
        %670 = sbr.rel (%p668) target = $region96
      $region95: #{transformer_decoder.3} parent=5 // pred_region
        // Predicated region
        $region97: #{transformer_decoder.3} parent=95 // pred_check
          %p671 = pneg %p54
        $region98: #{transformer_decoder.3} parent=95 // pred_check_branch
          %673 = sbr.rel (%p671) target = $region100
        $region99: #{transformer_decoder.3} parent=95 // pred_region
          %p674 = scmp.lt.s32.totalorder %s34, 1
          %s675 = scalar_select %p674, %s34, 1
          %s676 = smul.addr %s675, 8
          %s677 = scalar_lea.vmem %s0, %s676
        $region100: #{transformer_decoder.3} parent=95 // pred_fallthru
          _
        // Predicated region
        $region101: #{transformer_decoder.3} parent=95 // pred_check
          %p678 = pneg %p80
        $region102: #{transformer_decoder.3} parent=95 // pred_check_branch
          %680 = sbr.rel (%p678) target = $region104
        $region103: #{transformer_decoder.3} parent=95 // pred_region
          %p681 = scmp.lt.s32.totalorder %s34, 1
          %s682 = scalar_select %p681, %s34, 1
          %s683 = smul.addr %s682, 8
          %s684 = scalar_lea.vmem %s1, %s683
        $region104: #{transformer_decoder.3} parent=95 // pred_fallthru
          _
        // Predicated region
        $region105: #{transformer_decoder.3} parent=95 // pred_check
          %p685 = pneg %p106
        $region106: #{transformer_decoder.3} parent=95 // pred_check_branch
          %687 = sbr.rel (%p685) target = $region108
        $region107: #{transformer_decoder.3} parent=95 // pred_region
          %p688 = scmp.lt.s32.totalorder %s34, 1
          %s689 = scalar_select %p688, %s34, 1
          %s690 = smul.addr %s689, 8
          %s691 = scalar_lea.vmem %s2, %s690
        $region108: #{transformer_decoder.3} parent=95 // pred_fallthru
          _
        // Predicated region
        $region109: #{transformer_decoder.3} parent=95 // pred_check
          %p692 = pneg %p132
        $region110: #{transformer_decoder.3} parent=95 // pred_check_branch
          %694 = sbr.rel (%p692) target = $region112
        $region111: #{transformer_decoder.3} parent=95 // pred_region
          %p695 = scmp.lt.s32.totalorder %s34, 1
          %s696 = scalar_select %p695, %s34, 1
          %s697 = smul.addr %s696, 8
          %s698 = scalar_lea.vmem %s3, %s697
        $region112: #{transformer_decoder.3} parent=95 // pred_fallthru
          _
      $region96: #{transformer_decoder.3} parent=5 // pred_fallthru
        _
      %p699 = scmp.le.s32.totalorder 1, %s34
      %p700 = scmp.lt.s32.totalorder %s34, 3
      %p701 = pnand %p699, %p700
      %p702 = pneg %p701
      // Predicated region
      $region113: #{transformer_decoder.3} parent=5 // pred_check
        _
      $region114: #{transformer_decoder.3} parent=5 // pred_check_branch
        %704 = sbr.rel (%p701) target = $region116
      $region115: #{transformer_decoder.3} parent=5 // pred_region
        %s705 = ssub.s32 %s34, 1
        // Predicated region
        $region117: #{transformer_decoder.3} parent=115 // pred_check
          %p706 = pneg %p558
        $region118: #{transformer_decoder.3} parent=115 // pred_check_branch
          %708 = sbr.rel (%p706) target = $region120
        $region119: #{transformer_decoder.3} parent=115 // pred_region
          %709 = dma.done [#allocation3], 16
        $region120: #{transformer_decoder.3} parent=115 // pred_fallthru
          _
        %p710 = scmp.lt.s32.totalorder %s39, 1
        %s711 = scalar_select %p710, %s39, 1
        %s712 = smul.addr %s711, 8
        %s713 = scalar_lea.vmem %s0, %s712
        %p714 = pneg %p60
        %p715 = pneg %p57
        %p716 = scmp.lt.s32.totalorder %s39, 1
        %s717 = scalar_select %p716, %s39, 1
        %s718 = smul.addr %s717, 8
        %s719 = scalar_lea.vmem %s1, %s718
        %p720 = pneg %p86
        %p721 = pneg %p83
        %p722 = scmp.lt.s32.totalorder %s39, 1
        %s723 = scalar_select %p722, %s39, 1
        %s724 = smul.addr %s723, 8
        %s725 = scalar_lea.vmem %s2, %s724
        %p726 = pneg %p112
        %p727 = pneg %p109
        %p728 = scmp.lt.s32.totalorder %s39, 1
        %s729 = scalar_select %p728, %s39, 1
        %s730 = smul.addr %s729, 8
        %s731 = scalar_lea.vmem %s3, %s730
        %p732 = pneg %p138
        %p733 = pneg %p135
        %p734 = pneg %p159
        %p735 = pneg %p156
        %p736 = pneg %p180
        %p737 = pneg %p177
        %p738 = pneg %p201
        %p739 = pneg %p198
        %p740 = pneg %p222
        %p741 = pneg %p219
        %p742 = pneg %p243
        %p743 = pneg %p240
        %p744 = pneg %p264
        %p745 = pneg %p261
        %p746 = pneg %p285
        %p747 = pneg %p282
        %p748 = pneg %p306
        %p749 = pneg %p303
        %p750 = pneg %p327
        %p751 = pneg %p324
        %p752 = pneg %p348
        %p753 = pneg %p345
        %p754 = pneg %p369
        %p755 = pneg %p366
        %p756 = pneg %p390
        %p757 = pneg %p387
        %p758 = pneg %p411
        %p759 = pneg %p408
        %p760 = pneg %p432
        %p761 = pneg %p429
        %p762 = pneg %p453
        %p763 = pneg %p450
        %p764 = pneg %p474
        %p765 = pneg %p471
        %p766 = pneg %p495
        %p767 = pneg %p492
        %p768 = pneg %p516
        %p769 = pneg %p513
        %p770 = pneg %p537
        %p771 = pneg %p534
        %p772 = pneg %p558
        %p773 = pneg %p555
        %p774 = pneg %p584
        %p775 = pneg %p581
        %s776 = sand.u32 %s571, 1
        %s777 = scalar_lea.sflag [#allocation4], %s776
        %s778 = sand.u32 %s571, 1
        %s779 = smul.addr %s778, 8
        %s780 = scalar_lea.vmem [#allocation5], %s779
        %p781 = scmp.lt.s32.totalorder %s39, 1
        %s782 = scalar_select %p781, %s39, 1
        %s783 = smul.addr %s782, 8
        %s784 = scalar_lea.vmem %s0, %s783
        %p785 = scmp.lt.s32.totalorder %s39, 1
        %s786 = scalar_select %p785, %s39, 1
        %s787 = smul.addr %s786, 8
        %s788 = scalar_lea.vmem %s1, %s787
        %p789 = scmp.lt.s32.totalorder %s39, 1
        %s790 = scalar_select %p789, %s39, 1
        %s791 = smul.addr %s790, 8
        %s792 = scalar_lea.vmem %s2, %s791
        %p793 = scmp.lt.s32.totalorder %s39, 1
        %s794 = scalar_select %p793, %s39, 1
        %s795 = smul.addr %s794, 8
        %s796 = scalar_lea.vmem %s3, %s795
        %v797 = vld [vmem:[%s784] sm:$0xff]
        %v798 = vld [vmem:[%s788] sm:$0xff]
        %v799 = vld [vmem:[%s792] sm:$0xff]
        %v800 = vmul.f32 %v799, -1e+09
        %v801 = vld [vmem:[%s796] sm:$0xff]
        %v802 = vmul.f32 %v801, -1e+09
        %v803 = vld [vmem:[%s4] sm:$0xff]
        %v804 = vld [vmem:[%s4 + $0x8] sm:$0xff]
        %v805 = vld [vmem:[%s4 + $0x10] sm:$0xff]
        %v806 = vld [vmem:[%s4 + $0x18] sm:$0xff]
        %v807 = vld [vmem:[%s5] sm:$0xff]
        %v808 = vld [vmem:[%s5 + $0x8] sm:$0xff]
        %v809 = vld [vmem:[%s5 + $0x10] sm:$0xff]
        %v810 = vld [vmem:[%s5 + $0x18] sm:$0xff]
        %v811 = vld [vmem:[%s6] sm:$0xff]
        %v812 = vld [vmem:[%s6 + $0x8] sm:$0xff]
        %v813 = vld [vmem:[%s6 + $0x10] sm:$0xff]
        %v814 = vld [vmem:[%s6 + $0x18] sm:$0xff]
        %v815 = vld [vmem:[%s7] sm:$0xff]
        %v816 = vld [vmem:[%s7 + $0x8] sm:$0xff]
        %v817 = vld [vmem:[%s7 + $0x10] sm:$0xff]
        %v818 = vld [vmem:[%s7 + $0x18] sm:$0xff]
        %v819 = vld [vmem:[%s8] sm:$0x1]
        %v820 = vld [vmem:[%s9] sm:$0x1]
        %v821 = vld [vmem:[%s10] sm:$0x1]
        %vm822 = vcmask 261120
        %v824 = vsel %vm822, %v797, 0
        %826 = vmatprep.subr.mxu0 0.0
        %827 = vmatpush1.msra.mxu0 0.0
        %828 = vmatprep.subr.mxu0 0.0
        %829 = vmatpush1.msra.mxu0 0.0
        %830 = vmatprep.subr.mxu0 0.0
        %831 = vmatpush1.msra.mxu0 0.0
        %832 = vmatprep.subr.mxu0 0.0
        %833 = vmatpush1.msra.mxu0 0.0
        %834 = vmatprep.subr.mxu0 0.0
        %835 = vmatpush1.msra.mxu0 0.0
        %836 = vmatprep.subr.mxu0 0.0
        %837 = vmatpush1.msra.mxu0 0.0
        %838 = vmatprep.subr.mxu0 0.0
        %839 = vmatpush1.msra.mxu0 0.0
        %840 = vmatprep.subr.mxu0 0.0
        %841 = vmatpush1.msra.mxu0 0.0
        %842 = vmatprep.subr.mxu0 0.0
        %843 = vmatpush1.msra.mxu0 0.0
        %844 = vmatprep.subr.mxu0 0.0
        %845 = vmatpush1.msra.mxu0 0.0
        %846 = vmatprep.subr.mxu0 0.0
        %847 = vmatpush1.msra.mxu0 0.0
        %848 = vmatprep.subr.mxu0 0.0
        %849 = vmatpush1.msra.mxu0 0.0
        %850 = vmatprep.subr.mxu0 0.0
        %851 = vmatpush1.msra.mxu0 %v806
        %852 = vmatprep.subr.mxu0 0.0
        %853 = vmatpush1.msra.mxu0 %v805
        %854 = vmatprep.subr.mxu0 0.0
        %855 = vmatpush1.msra.mxu0 %v804
        %856 = vmatprep.subr.mxu0 0.0
        %857 = vmatpush1.msra.mxu0 %v803
        %858 = vmatprep.subr.mxu0 0.0
        %859 = vmatpush2.msra.mxu0 0.0
        %860 = vmatprep.subr.mxu0 0.0
        %861 = vmatpush2.msra.mxu0 0.0
        %862 = vmatprep.subr.mxu0 0.0
        %863 = vmatpush2.msra.mxu0 0.0
        %864 = vmatprep.subr.mxu0 0.0
        %865 = vmatpush2.msra.mxu0 0.0
        %866 = vmatprep.subr.mxu0 0.0
        %867 = vmatpush2.msra.mxu0 0.0
        %868 = vmatprep.subr.mxu0 0.0
        %869 = vmatpush2.msra.mxu0 0.0
        %870 = vmatprep.subr.mxu0 0.0
        %871 = vmatpush2.msra.mxu0 0.0
        %872 = vmatprep.subr.mxu0 0.0
        %873 = vmatpush2.msra.mxu0 0.0
        %874 = vmatprep.subr.mxu0 0.0
        %875 = vmatpush2.msra.mxu0 0.0
        %876 = vmatprep.subr.mxu0 0.0
        %877 = vmatpush2.msra.mxu0 0.0
        %878 = vmatprep.subr.mxu0 0.0
        %879 = vmatpush2.msra.mxu0 0.0
        %880 = vmatprep.subr.mxu0 0.0
        %881 = vmatpush2.msra.mxu0 0.0
        %882 = vmatprep.subr.mxu0 0.0
        %883 = vmatpush2.msra.mxu0 0.0
        %884 = vmatprep.subr.mxu0 0.0
        %885 = vmatpush2.msra.mxu0 0.0
        %886 = vmatprep.subr.mxu0 0.0
        %887 = vmatpush2.msra.mxu0 0.0
        %888 = vmatprep.subr.mxu0 0.0
        %889 = vmatpush2.msra.mxu0 0.0
        %890 = vmatprep.mubr.f32.mxu0 0.0
        %891 = vmatmul.mubr.f32.gmra.mxu0 %v824
        %v892 = vpop.f32.mrf.mxu0
        %v893 = vadd.f32 0.0, %v892
        %v894 = vpop.f32.mrf.mxu0
        %895 = vdwg.mxu0
        %v896 = vmul.f32 %v893, 0.17677669
        %897 = vmatprep.subr.mxu0 0.0
        %898 = vmatpush1.msra.mxu0 0.0
        %899 = vmatprep.subr.mxu0 0.0
        %900 = vmatpush1.msra.mxu0 0.0
        %901 = vmatprep.subr.mxu0 0.0
        %902 = vmatpush1.msra.mxu0 0.0
        %903 = vmatprep.subr.mxu0 0.0
        %904 = vmatpush1.msra.mxu0 0.0
        %905 = vmatprep.subr.mxu0 0.0
        %906 = vmatpush1.msra.mxu0 0.0
        %907 = vmatprep.subr.mxu0 0.0
        %908 = vmatpush1.msra.mxu0 0.0
        %909 = vmatprep.subr.mxu0 0.0
        %910 = vmatpush1.msra.mxu0 0.0
        %911 = vmatprep.subr.mxu0 0.0
        %912 = vmatpush1.msra.mxu0 0.0
        %913 = vmatprep.subr.mxu0 0.0
        %914 = vmatpush1.msra.mxu0 0.0
        %915 = vmatprep.subr.mxu0 0.0
        %916 = vmatpush1.msra.mxu0 0.0
        %917 = vmatprep.subr.mxu0 0.0
        %918 = vmatpush1.msra.mxu0 0.0
        %919 = vmatprep.subr.mxu0 0.0
        %920 = vmatpush1.msra.mxu0 0.0
        %921 = vmatprep.subr.mxu0 0.0
        %922 = vmatpush1.msra.mxu0 %v810
        %923 = vmatprep.subr.mxu0 0.0
        %924 = vmatpush1.msra.mxu0 %v809
        %925 = vmatprep.subr.mxu0 0.0
        %926 = vmatpush1.msra.mxu0 %v808
        %927 = vmatprep.subr.mxu0 0.0
        %928 = vmatpush1.msra.mxu0 %v807
        %929 = vmatprep.subr.mxu0 0.0
        %930 = vmatpush2.msra.mxu0 0.0
        %931 = vmatprep.subr.mxu0 0.0
        %932 = vmatpush2.msra.mxu0 0.0
        %933 = vmatprep.subr.mxu0 0.0
        %934 = vmatpush2.msra.mxu0 0.0
        %935 = vmatprep.subr.mxu0 0.0
        %936 = vmatpush2.msra.mxu0 0.0
        %937 = vmatprep.subr.mxu0 0.0
        %938 = vmatpush2.msra.mxu0 0.0
        %939 = vmatprep.subr.mxu0 0.0
        %940 = vmatpush2.msra.mxu0 0.0
        %941 = vmatprep.subr.mxu0 0.0
        %942 = vmatpush2.msra.mxu0 0.0
        %943 = vmatprep.subr.mxu0 0.0
        %944 = vmatpush2.msra.mxu0 0.0
        %945 = vmatprep.subr.mxu0 0.0
        %946 = vmatpush2.msra.mxu0 0.0
        %947 = vmatprep.subr.mxu0 0.0
        %948 = vmatpush2.msra.mxu0 0.0
        %949 = vmatprep.subr.mxu0 0.0
        %950 = vmatpush2.msra.mxu0 0.0
        %951 = vmatprep.subr.mxu0 0.0
        %952 = vmatpush2.msra.mxu0 0.0
        %953 = vmatprep.subr.mxu0 0.0
        %954 = vmatpush2.msra.mxu0 0.0
        %955 = vmatprep.subr.mxu0 0.0
        %956 = vmatpush2.msra.mxu0 0.0
        %957 = vmatprep.subr.mxu0 0.0
        %958 = vmatpush2.msra.mxu0 0.0
        %959 = vmatprep.subr.mxu0 0.0
        %960 = vmatpush2.msra.mxu0 0.0
        %961 = vmatprep.mubr.f32.mxu0 0.0
        %962 = vmatmul.mubr.f32.gmra.mxu0 %v824
        %v963 = vpop.f32.mrf.mxu0
        %v964 = vadd.f32 0.0, %v963
        %v965 = vpop.f32.mrf.mxu0
        %966 = vdwg.mxu0
        %967 = vmatprep.subr.mxu0 0.0
        %968 = vmatpush1.msra.mxu0 0.0
        %969 = vmatprep.subr.mxu0 0.0
        %970 = vmatpush1.msra.mxu0 0.0
        %971 = vmatprep.subr.mxu0 0.0
        %972 = vmatpush1.msra.mxu0 0.0
        %973 = vmatprep.subr.mxu0 0.0
        %974 = vmatpush1.msra.mxu0 0.0
        %975 = vmatprep.subr.mxu0 0.0
        %976 = vmatpush1.msra.mxu0 0.0
        %977 = vmatprep.subr.mxu0 0.0
        %978 = vmatpush1.msra.mxu0 0.0
        %979 = vmatprep.subr.mxu0 0.0
        %980 = vmatpush1.msra.mxu0 0.0
        %981 = vmatprep.subr.mxu0 0.0
        %982 = vmatpush1.msra.mxu0 0.0
        %983 = vmatprep.subr.mxu0 0.0
        %984 = vmatpush1.msra.mxu0 0.0
        %985 = vmatprep.subr.mxu0 0.0
        %986 = vmatpush1.msra.mxu0 0.0
        %987 = vmatprep.subr.mxu0 0.0
        %988 = vmatpush1.msra.mxu0 0.0
        %989 = vmatprep.subr.mxu0 0.0
        %990 = vmatpush1.msra.mxu0 0.0
        %991 = vmatprep.subr.mxu0 0.0
        %992 = vmatpush1.msra.mxu0 %v814
        %993 = vmatprep.subr.mxu0 0.0
        %994 = vmatpush1.msra.mxu0 %v813
        %995 = vmatprep.subr.mxu0 0.0
        %996 = vmatpush1.msra.mxu0 %v812
        %997 = vmatprep.subr.mxu0 0.0
        %998 = vmatpush1.msra.mxu0 %v811
        %999 = vmatprep.subr.mxu0 0.0
        %1000 = vmatpush2.msra.mxu0 0.0
        %1001 = vmatprep.subr.mxu0 0.0
        %1002 = vmatpush2.msra.mxu0 0.0
        %1003 = vmatprep.subr.mxu0 0.0
        %1004 = vmatpush2.msra.mxu0 0.0
        %1005 = vmatprep.subr.mxu0 0.0
        %1006 = vmatpush2.msra.mxu0 0.0
        %1007 = vmatprep.subr.mxu0 0.0
        %1008 = vmatpush2.msra.mxu0 0.0
        %1009 = vmatprep.subr.mxu0 0.0
        %1010 = vmatpush2.msra.mxu0 0.0
        %1011 = vmatprep.subr.mxu0 0.0
        %1012 = vmatpush2.msra.mxu0 0.0
        %1013 = vmatprep.subr.mxu0 0.0
        %1014 = vmatpush2.msra.mxu0 0.0
        %1015 = vmatprep.subr.mxu0 0.0
        %1016 = vmatpush2.msra.mxu0 0.0
        %1017 = vmatprep.subr.mxu0 0.0
        %1018 = vmatpush2.msra.mxu0 0.0
        %1019 = vmatprep.subr.mxu0 0.0
        %1020 = vmatpush2.msra.mxu0 0.0
        %1021 = vmatprep.subr.mxu0 0.0
        %1022 = vmatpush2.msra.mxu0 0.0
        %1023 = vmatprep.subr.mxu0 0.0
        %1024 = vmatpush2.msra.mxu0 0.0
        %1025 = vmatprep.subr.mxu0 0.0
        %1026 = vmatpush2.msra.mxu0 0.0
        %1027 = vmatprep.subr.mxu0 0.0
        %1028 = vmatpush2.msra.mxu0 0.0
        %1029 = vmatprep.subr.mxu0 0.0
        %1030 = vmatpush2.msra.mxu0 0.0
        %1031 = vmatprep.mubr.f32.mxu0 0.0
        %1032 = vmatmul.mubr.f32.gmra.mxu0 %v824
        %v1033 = vpop.f32.mrf.mxu0
        %v1034 = vadd.f32 0.0, %v1033
        %v1035 = vpop.f32.mrf.mxu0
        %1036 = vdwg.mxu0
        %vm1037 = vcmask 64512
        %v1039 = vsel %vm1037, %v896, 0
        %v1042 = vsel %vm1037, %v964, 0
        %1044 = vmatprep.subr.mxu0 0.0
        %1045 = vmatpush1.xpose.msra.mxu0 0.0
        %1046 = vmatprep.subr.mxu0 0.0
        %1047 = vmatpush1.xpose.msra.mxu0 0.0
        %1048 = vmatprep.subr.mxu0 0.0
        %1049 = vmatpush1.xpose.msra.mxu0 0.0
        %1050 = vmatprep.subr.mxu0 0.0
        %1051 = vmatpush1.xpose.msra.mxu0 0.0
        %1052 = vmatprep.subr.mxu0 0.0
        %1053 = vmatpush1.xpose.msra.mxu0 0.0
        %1054 = vmatprep.subr.mxu0 0.0
        %1055 = vmatpush1.xpose.msra.mxu0 0.0
        %1056 = vmatprep.subr.mxu0 0.0
        %1057 = vmatpush1.xpose.msra.mxu0 0.0
        %1058 = vmatprep.subr.mxu0 0.0
        %1059 = vmatpush1.xpose.msra.mxu0 0.0
        %1060 = vmatprep.subr.mxu0 0.0
        %1061 = vmatpush1.xpose.msra.mxu0 0.0
        %1062 = vmatprep.subr.mxu0 0.0
        %1063 = vmatpush1.xpose.msra.mxu0 0.0
        %1064 = vmatprep.subr.mxu0 0.0
        %1065 = vmatpush1.xpose.msra.mxu0 0.0
        %1066 = vmatprep.subr.mxu0 0.0
        %1067 = vmatpush1.xpose.msra.mxu0 0.0
        %1068 = vmatprep.subr.mxu0 0.0
        %1069 = vmatpush1.xpose.msra.mxu0 0.0
        %1070 = vmatprep.subr.mxu0 0.0
        %1071 = vmatpush1.xpose.msra.mxu0 0.0
        %1072 = vmatprep.subr.mxu0 0.0
        %1073 = vmatpush1.xpose.msra.mxu0 0.0
        %1074 = vmatprep.subr.mxu0 0.0
        %1075 = vmatpush1.xpose.msra.mxu0 %v1042
        %1076 = vmatprep.subr.mxu0 0.0
        %1077 = vmatpush2.xpose.msra.mxu0 0.0
        %1078 = vmatprep.subr.mxu0 0.0
        %1079 = vmatpush2.xpose.msra.mxu0 0.0
        %1080 = vmatprep.subr.mxu0 0.0
        %1081 = vmatpush2.xpose.msra.mxu0 0.0
        %1082 = vmatprep.subr.mxu0 0.0
        %1083 = vmatpush2.xpose.msra.mxu0 0.0
        %1084 = vmatprep.subr.mxu0 0.0
        %1085 = vmatpush2.xpose.msra.mxu0 0.0
        %1086 = vmatprep.subr.mxu0 0.0
        %1087 = vmatpush2.xpose.msra.mxu0 0.0
        %1088 = vmatprep.subr.mxu0 0.0
        %1089 = vmatpush2.xpose.msra.mxu0 0.0
        %1090 = vmatprep.subr.mxu0 0.0
        %1091 = vmatpush2.xpose.msra.mxu0 0.0
        %1092 = vmatprep.subr.mxu0 0.0
        %1093 = vmatpush2.xpose.msra.mxu0 0.0
        %1094 = vmatprep.subr.mxu0 0.0
        %1095 = vmatpush2.xpose.msra.mxu0 0.0
        %1096 = vmatprep.subr.mxu0 0.0
        %1097 = vmatpush2.xpose.msra.mxu0 0.0
        %1098 = vmatprep.subr.mxu0 0.0
        %1099 = vmatpush2.xpose.msra.mxu0 0.0
        %1100 = vmatprep.subr.mxu0 0.0
        %1101 = vmatpush2.xpose.msra.mxu0 0.0
        %1102 = vmatprep.subr.mxu0 0.0
        %1103 = vmatpush2.xpose.msra.mxu0 0.0
        %1104 = vmatprep.subr.mxu0 0.0
        %1105 = vmatpush2.xpose.msra.mxu0 0.0
        %1106 = vmatprep.subr.mxu0 0.0
        %1107 = vmatpush2.xpose.msra.mxu0 0.0
        %1108 = vmatprep.mubr.f32.mxu0 0.0
        %1109 = vmatmul.mubr.f32.gmra.mxu0 %v1039
        %v1110 = vpop.f32.mrf.mxu0
        %v1111 = vadd.f32 %v800, %v1110
        %v1112 = vpop.f32.mrf.mxu0
        %1113 = vdwg.mxu0
        %v1114 = vsel %vm1037, %v1111, -inf
        %1115 = vmax.xlane.f32.xlu0 %v1114
        %v1116 = vpop.xlane.xlu0 %1115
        %v1117 = vsub.f32 %v1111, %v1116
        %v1118 = vmul.f32 %v1117, 1.442695
        %v1119 = vpow.pop %v1118
        %v1120 = vsel %vm1037, %v1119, 0.0
        %1121 = vadd.xlane.f32.xlu0 %v1120
        %v1122 = vpop.xlane.xlu0 %1121
        %v1123 = vrcp.pop %v1122
        %v1124 = vmul.f32 %v1119, %v1123
        %v1126 = vsel %vm1037, %v1124, 0
        %1128 = vmatprep.subr.mxu0 0.0
        %1129 = vmatpush1.msra.mxu0 0.0
        %1130 = vmatprep.subr.mxu0 0.0
        %1131 = vmatpush1.msra.mxu0 0.0
        %1132 = vmatprep.subr.mxu0 0.0
        %1133 = vmatpush1.msra.mxu0 0.0
        %1134 = vmatprep.subr.mxu0 0.0
        %1135 = vmatpush1.msra.mxu0 0.0
        %1136 = vmatprep.subr.mxu0 0.0
        %1137 = vmatpush1.msra.mxu0 0.0
        %1138 = vmatprep.subr.mxu0 0.0
        %1139 = vmatpush1.msra.mxu0 0.0
        %1140 = vmatprep.subr.mxu0 0.0
        %1141 = vmatpush1.msra.mxu0 0.0
        %1142 = vmatprep.subr.mxu0 0.0
        %1143 = vmatpush1.msra.mxu0 0.0
        %1144 = vmatprep.subr.mxu0 0.0
        %1145 = vmatpush1.msra.mxu0 0.0
        %1146 = vmatprep.subr.mxu0 0.0
        %1147 = vmatpush1.msra.mxu0 0.0
        %1148 = vmatprep.subr.mxu0 0.0
        %1149 = vmatpush1.msra.mxu0 0.0
        %1150 = vmatprep.subr.mxu0 0.0
        %1151 = vmatpush1.msra.mxu0 0.0
        %1152 = vmatprep.subr.mxu0 0.0
        %1153 = vmatpush1.msra.mxu0 0.0
        %1154 = vmatprep.subr.mxu0 0.0
        %1155 = vmatpush1.msra.mxu0 0.0
        %1156 = vmatprep.subr.mxu0 0.0
        %1157 = vmatpush1.msra.mxu0 0.0
        %1158 = vmatprep.subr.mxu0 0.0
        %1159 = vmatpush1.msra.mxu0 %v1034
        %1160 = vmatprep.subr.mxu0 0.0
        %1161 = vmatpush2.msra.mxu0 0.0
        %1162 = vmatprep.subr.mxu0 0.0
        %1163 = vmatpush2.msra.mxu0 0.0
        %1164 = vmatprep.subr.mxu0 0.0
        %1165 = vmatpush2.msra.mxu0 0.0
        %1166 = vmatprep.subr.mxu0 0.0
        %1167 = vmatpush2.msra.mxu0 0.0
        %1168 = vmatprep.subr.mxu0 0.0
        %1169 = vmatpush2.msra.mxu0 0.0
        %1170 = vmatprep.subr.mxu0 0.0
        %1171 = vmatpush2.msra.mxu0 0.0
        %1172 = vmatprep.subr.mxu0 0.0
        %1173 = vmatpush2.msra.mxu0 0.0
        %1174 = vmatprep.subr.mxu0 0.0
        %1175 = vmatpush2.msra.mxu0 0.0
        %1176 = vmatprep.subr.mxu0 0.0
        %1177 = vmatpush2.msra.mxu0 0.0
        %1178 = vmatprep.subr.mxu0 0.0
        %1179 = vmatpush2.msra.mxu0 0.0
        %1180 = vmatprep.subr.mxu0 0.0
        %1181 = vmatpush2.msra.mxu0 0.0
        %1182 = vmatprep.subr.mxu0 0.0
        %1183 = vmatpush2.msra.mxu0 0.0
        %1184 = vmatprep.subr.mxu0 0.0
        %1185 = vmatpush2.msra.mxu0 0.0
        %1186 = vmatprep.subr.mxu0 0.0
        %1187 = vmatpush2.msra.mxu0 0.0
        %1188 = vmatprep.subr.mxu0 0.0
        %1189 = vmatpush2.msra.mxu0 0.0
        %1190 = vmatprep.subr.mxu0 0.0
        %1191 = vmatpush2.msra.mxu0 0.0
        %1192 = vmatprep.mubr.f32.mxu0 0.0
        %1193 = vmatmul.mubr.f32.gmra.mxu0 %v1126
        %v1194 = vpop.f32.mrf.mxu0
        %v1195 = vadd.f32 0.0, %v1194
        %v1196 = vpop.f32.mrf.mxu0
        %1197 = vdwg.mxu0
        %1198 = vrot.lane.b32.xlu0 %v896, 120
        %v1199 = vpop.permute.xlu0 %1198
        %1200 = vrot.lane.b32.xlu0 %v964, 120
        %v1201 = vpop.permute.xlu0 %1200
        %v1202 = vsel %vm1037, %v1199, 0
        %v1204 = vsel %vm1037, %v1201, 0
        %1206 = vmatprep.subr.mxu0 0.0
        %1207 = vmatpush1.xpose.msra.mxu0 0.0
        %1208 = vmatprep.subr.mxu0 0.0
        %1209 = vmatpush1.xpose.msra.mxu0 0.0
        %1210 = vmatprep.subr.mxu0 0.0
        %1211 = vmatpush1.xpose.msra.mxu0 0.0
        %1212 = vmatprep.subr.mxu0 0.0
        %1213 = vmatpush1.xpose.msra.mxu0 0.0
        %1214 = vmatprep.subr.mxu0 0.0
        %1215 = vmatpush1.xpose.msra.mxu0 0.0
        %1216 = vmatprep.subr.mxu0 0.0
        %1217 = vmatpush1.xpose.msra.mxu0 0.0
        %1218 = vmatprep.subr.mxu0 0.0
        %1219 = vmatpush1.xpose.msra.mxu0 0.0
        %1220 = vmatprep.subr.mxu0 0.0
        %1221 = vmatpush1.xpose.msra.mxu0 0.0
        %1222 = vmatprep.subr.mxu0 0.0
        %1223 = vmatpush1.xpose.msra.mxu0 0.0
        %1224 = vmatprep.subr.mxu0 0.0
        %1225 = vmatpush1.xpose.msra.mxu0 0.0
        %1226 = vmatprep.subr.mxu0 0.0
        %1227 = vmatpush1.xpose.msra.mxu0 0.0
        %1228 = vmatprep.subr.mxu0 0.0
        %1229 = vmatpush1.xpose.msra.mxu0 0.0
        %1230 = vmatprep.subr.mxu0 0.0
        %1231 = vmatpush1.xpose.msra.mxu0 0.0
        %1232 = vmatprep.subr.mxu0 0.0
        %1233 = vmatpush1.xpose.msra.mxu0 0.0
        %1234 = vmatprep.subr.mxu0 0.0
        %1235 = vmatpush1.xpose.msra.mxu0 0.0
        %1236 = vmatprep.subr.mxu0 0.0
        %1237 = vmatpush1.xpose.msra.mxu0 %v1204
        %1238 = vmatprep.subr.mxu0 0.0
        %1239 = vmatpush2.xpose.msra.mxu0 0.0
        %1240 = vmatprep.subr.mxu0 0.0
        %1241 = vmatpush2.xpose.msra.mxu0 0.0
        %1242 = vmatprep.subr.mxu0 0.0
        %1243 = vmatpush2.xpose.msra.mxu0 0.0
        %1244 = vmatprep.subr.mxu0 0.0
        %1245 = vmatpush2.xpose.msra.mxu0 0.0
        %1246 = vmatprep.subr.mxu0 0.0
        %1247 = vmatpush2.xpose.msra.mxu0 0.0
        %1248 = vmatprep.subr.mxu0 0.0
        %1249 = vmatpush2.xpose.msra.mxu0 0.0
        %1250 = vmatprep.subr.mxu0 0.0
        %1251 = vmatpush2.xpose.msra.mxu0 0.0
        %1252 = vmatprep.subr.mxu0 0.0
        %1253 = vmatpush2.xpose.msra.mxu0 0.0
        %1254 = vmatprep.subr.mxu0 0.0
        %1255 = vmatpush2.xpose.msra.mxu0 0.0
        %1256 = vmatprep.subr.mxu0 0.0
        %1257 = vmatpush2.xpose.msra.mxu0 0.0
        %1258 = vmatprep.subr.mxu0 0.0
        %1259 = vmatpush2.xpose.msra.mxu0 0.0
        %1260 = vmatprep.subr.mxu0 0.0
        %1261 = vmatpush2.xpose.msra.mxu0 0.0
        %1262 = vmatprep.subr.mxu0 0.0
        %1263 = vmatpush2.xpose.msra.mxu0 0.0
        %1264 = vmatprep.subr.mxu0 0.0
        %1265 = vmatpush2.xpose.msra.mxu0 0.0
        %1266 = vmatprep.subr.mxu0 0.0
        %1267 = vmatpush2.xpose.msra.mxu0 0.0
        %1268 = vmatprep.subr.mxu0 0.0
        %1269 = vmatpush2.xpose.msra.mxu0 0.0
        %1270 = vmatprep.mubr.f32.mxu0 0.0
        %1271 = vmatmul.mubr.f32.gmra.mxu0 %v1202
        %v1272 = vpop.f32.mrf.mxu0
        %v1273 = vadd.f32 %v800, %v1272
        %v1274 = vpop.f32.mrf.mxu0
        %1275 = vdwg.mxu0
        %v1276 = vsel %vm1037, %v1273, -inf
        %1277 = vmax.xlane.f32.xlu0 %v1276
        %v1278 = vpop.xlane.xlu0 %1277
        %v1279 = vsub.f32 %v1273, %v1278
        %v1280 = vmul.f32 %v1279, 1.442695
        %v1281 = vpow.pop %v1280
        %v1282 = vsel %vm1037, %v1281, 0.0
        %1283 = vadd.xlane.f32.xlu0 %v1282
        %v1284 = vpop.xlane.xlu0 %1283
        %v1285 = vrcp.pop %v1284
        %v1286 = vmul.f32 %v1281, %v1285
        %1288 = vrot.lane.b32.xlu0 %v1034, 120
        %v1289 = vpop.permute.xlu0 %1288
        %v1292 = vsel %vm1037, %v1286, 0
        %1294 = vmatprep.subr.mxu0 0.0
        %1295 = vmatpush1.msra.mxu0 0.0
        %1296 = vmatprep.subr.mxu0 0.0
        %1297 = vmatpush1.msra.mxu0 0.0
        %1298 = vmatprep.subr.mxu0 0.0
        %1299 = vmatpush1.msra.mxu0 0.0
        %1300 = vmatprep.subr.mxu0 0.0
        %1301 = vmatpush1.msra.mxu0 0.0
        %1302 = vmatprep.subr.mxu0 0.0
        %1303 = vmatpush1.msra.mxu0 0.0
        %1304 = vmatprep.subr.mxu0 0.0
        %1305 = vmatpush1.msra.mxu0 0.0
        %1306 = vmatprep.subr.mxu0 0.0
        %1307 = vmatpush1.msra.mxu0 0.0
        %1308 = vmatprep.subr.mxu0 0.0
        %1309 = vmatpush1.msra.mxu0 0.0
        %1310 = vmatprep.subr.mxu0 0.0
        %1311 = vmatpush1.msra.mxu0 0.0
        %1312 = vmatprep.subr.mxu0 0.0
        %1313 = vmatpush1.msra.mxu0 0.0
        %1314 = vmatprep.subr.mxu0 0.0
        %1315 = vmatpush1.msra.mxu0 0.0
        %1316 = vmatprep.subr.mxu0 0.0
        %1317 = vmatpush1.msra.mxu0 0.0
        %1318 = vmatprep.subr.mxu0 0.0
        %1319 = vmatpush1.msra.mxu0 0.0
        %1320 = vmatprep.subr.mxu0 0.0
        %1321 = vmatpush1.msra.mxu0 0.0
        %1322 = vmatprep.subr.mxu0 0.0
        %1323 = vmatpush1.msra.mxu0 0.0
        %1324 = vmatprep.subr.mxu0 0.0
        %1325 = vmatpush1.msra.mxu0 %v1289
        %1326 = vmatprep.subr.mxu0 0.0
        %1327 = vmatpush2.msra.mxu0 0.0
        %1328 = vmatprep.subr.mxu0 0.0
        %1329 = vmatpush2.msra.mxu0 0.0
        %1330 = vmatprep.subr.mxu0 0.0
        %1331 = vmatpush2.msra.mxu0 0.0
        %1332 = vmatprep.subr.mxu0 0.0
        %1333 = vmatpush2.msra.mxu0 0.0
        %1334 = vmatprep.subr.mxu0 0.0
        %1335 = vmatpush2.msra.mxu0 0.0
        %1336 = vmatprep.subr.mxu0 0.0
        %1337 = vmatpush2.msra.mxu0 0.0
        %1338 = vmatprep.subr.mxu0 0.0
        %1339 = vmatpush2.msra.mxu0 0.0
        %1340 = vmatprep.subr.mxu0 0.0
        %1341 = vmatpush2.msra.mxu0 0.0
        %1342 = vmatprep.subr.mxu0 0.0
        %1343 = vmatpush2.msra.mxu0 0.0
        %1344 = vmatprep.subr.mxu0 0.0
        %1345 = vmatpush2.msra.mxu0 0.0
        %1346 = vmatprep.subr.mxu0 0.0
        %1347 = vmatpush2.msra.mxu0 0.0
        %1348 = vmatprep.subr.mxu0 0.0
        %1349 = vmatpush2.msra.mxu0 0.0
        %1350 = vmatprep.subr.mxu0 0.0
        %1351 = vmatpush2.msra.mxu0 0.0
        %1352 = vmatprep.subr.mxu0 0.0
        %1353 = vmatpush2.msra.mxu0 0.0
        %1354 = vmatprep.subr.mxu0 0.0
        %1355 = vmatpush2.msra.mxu0 0.0
        %1356 = vmatprep.subr.mxu0 0.0
        %1357 = vmatpush2.msra.mxu0 0.0
        %1358 = vmatprep.mubr.f32.mxu0 0.0
        %1359 = vmatmul.mubr.f32.gmra.mxu0 %v1292
        %v1360 = vpop.f32.mrf.mxu0
        %v1361 = vadd.f32 0.0, %v1360
        %v1362 = vpop.f32.mrf.mxu0
        %1363 = vdwg.mxu0
        %1364 = vrot.lane.b32.xlu0 %v896, 112
        %v1365 = vpop.permute.xlu0 %1364
        %1366 = vrot.lane.b32.xlu0 %v964, 112
        %v1367 = vpop.permute.xlu0 %1366
        %v1368 = vsel %vm1037, %v1365, 0
        %v1370 = vsel %vm1037, %v1367, 0
        %1372 = vmatprep.subr.mxu0 0.0
        %1373 = vmatpush1.xpose.msra.mxu0 0.0
        %1374 = vmatprep.subr.mxu0 0.0
        %1375 = vmatpush1.xpose.msra.mxu0 0.0
        %1376 = vmatprep.subr.mxu0 0.0
        %1377 = vmatpush1.xpose.msra.mxu0 0.0
        %1378 = vmatprep.subr.mxu0 0.0
        %1379 = vmatpush1.xpose.msra.mxu0 0.0
        %1380 = vmatprep.subr.mxu0 0.0
        %1381 = vmatpush1.xpose.msra.mxu0 0.0
        %1382 = vmatprep.subr.mxu0 0.0
        %1383 = vmatpush1.xpose.msra.mxu0 0.0
        %1384 = vmatprep.subr.mxu0 0.0
        %1385 = vmatpush1.xpose.msra.mxu0 0.0
        %1386 = vmatprep.subr.mxu0 0.0
        %1387 = vmatpush1.xpose.msra.mxu0 0.0
        %1388 = vmatprep.subr.mxu0 0.0
        %1389 = vmatpush1.xpose.msra.mxu0 0.0
        %1390 = vmatprep.subr.mxu0 0.0
        %1391 = vmatpush1.xpose.msra.mxu0 0.0
        %1392 = vmatprep.subr.mxu0 0.0
        %1393 = vmatpush1.xpose.msra.mxu0 0.0
        %1394 = vmatprep.subr.mxu0 0.0
        %1395 = vmatpush1.xpose.msra.mxu0 0.0
        %1396 = vmatprep.subr.mxu0 0.0
        %1397 = vmatpush1.xpose.msra.mxu0 0.0
        %1398 = vmatprep.subr.mxu0 0.0
        %1399 = vmatpush1.xpose.msra.mxu0 0.0
        %1400 = vmatprep.subr.mxu0 0.0
        %1401 = vmatpush1.xpose.msra.mxu0 0.0
        %1402 = vmatprep.subr.mxu0 0.0
        %1403 = vmatpush1.xpose.msra.mxu0 %v1370
        %1404 = vmatprep.subr.mxu0 0.0
        %1405 = vmatpush2.xpose.msra.mxu0 0.0
        %1406 = vmatprep.subr.mxu0 0.0
        %1407 = vmatpush2.xpose.msra.mxu0 0.0
        %1408 = vmatprep.subr.mxu0 0.0
        %1409 = vmatpush2.xpose.msra.mxu0 0.0
        %1410 = vmatprep.subr.mxu0 0.0
        %1411 = vmatpush2.xpose.msra.mxu0 0.0
        %1412 = vmatprep.subr.mxu0 0.0
        %1413 = vmatpush2.xpose.msra.mxu0 0.0
        %1414 = vmatprep.subr.mxu0 0.0
        %1415 = vmatpush2.xpose.msra.mxu0 0.0
        %1416 = vmatprep.subr.mxu0 0.0
        %1417 = vmatpush2.xpose.msra.mxu0 0.0
        %1418 = vmatprep.subr.mxu0 0.0
        %1419 = vmatpush2.xpose.msra.mxu0 0.0
        %1420 = vmatprep.subr.mxu0 0.0
        %1421 = vmatpush2.xpose.msra.mxu0 0.0
        %1422 = vmatprep.subr.mxu0 0.0
        %1423 = vmatpush2.xpose.msra.mxu0 0.0
        %1424 = vmatprep.subr.mxu0 0.0
        %1425 = vmatpush2.xpose.msra.mxu0 0.0
        %1426 = vmatprep.subr.mxu0 0.0
        %1427 = vmatpush2.xpose.msra.mxu0 0.0
        %1428 = vmatprep.subr.mxu0 0.0
        %1429 = vmatpush2.xpose.msra.mxu0 0.0
        %1430 = vmatprep.subr.mxu0 0.0
        %1431 = vmatpush2.xpose.msra.mxu0 0.0
        %1432 = vmatprep.subr.mxu0 0.0
        %1433 = vmatpush2.xpose.msra.mxu0 0.0
        %1434 = vmatprep.subr.mxu0 0.0
        %1435 = vmatpush2.xpose.msra.mxu0 0.0
        %1436 = vmatprep.mubr.f32.mxu0 0.0
        %1437 = vmatmul.mubr.f32.gmra.mxu0 %v1368
        %v1438 = vpop.f32.mrf.mxu0
        %v1439 = vadd.f32 %v800, %v1438
        %v1440 = vpop.f32.mrf.mxu0
        %1441 = vdwg.mxu0
        %v1442 = vsel %vm1037, %v1439, -inf
        %1443 = vmax.xlane.f32.xlu0 %v1442
        %v1444 = vpop.xlane.xlu0 %1443
        %v1445 = vsub.f32 %v1439, %v1444
        %v1446 = vmul.f32 %v1445, 1.442695
        %v1447 = vpow.pop %v1446
        %v1448 = vsel %vm1037, %v1447, 0.0
        %1449 = vadd.xlane.f32.xlu0 %v1448
        %v1450 = vpop.xlane.xlu0 %1449
        %v1451 = vrcp.pop %v1450
        %v1452 = vmul.f32 %v1447, %v1451
        %1453 = vrot.lane.b32.xlu0 %v1034, 112
        %v1454 = vpop.permute.xlu0 %1453
        %v1457 = vsel %vm1037, %v1452, 0
        %1459 = vmatprep.subr.mxu0 0.0
        %1460 = vmatpush1.msra.mxu0 0.0
        %1461 = vmatprep.subr.mxu0 0.0
        %1462 = vmatpush1.msra.mxu0 0.0
        %1463 = vmatprep.subr.mxu0 0.0
        %1464 = vmatpush1.msra.mxu0 0.0
        %1465 = vmatprep.subr.mxu0 0.0
        %1466 = vmatpush1.msra.mxu0 0.0
        %1467 = vmatprep.subr.mxu0 0.0
        %1468 = vmatpush1.msra.mxu0 0.0
        %1469 = vmatprep.subr.mxu0 0.0
        %1470 = vmatpush1.msra.mxu0 0.0
        %1471 = vmatprep.subr.mxu0 0.0
        %1472 = vmatpush1.msra.mxu0 0.0
        %1473 = vmatprep.subr.mxu0 0.0
        %1474 = vmatpush1.msra.mxu0 0.0
        %1475 = vmatprep.subr.mxu0 0.0
        %1476 = vmatpush1.msra.mxu0 0.0
        %1477 = vmatprep.subr.mxu0 0.0
        %1478 = vmatpush1.msra.mxu0 0.0
        %1479 = vmatprep.subr.mxu0 0.0
        %1480 = vmatpush1.msra.mxu0 0.0
        %1481 = vmatprep.subr.mxu0 0.0
        %1482 = vmatpush1.msra.mxu0 0.0
        %1483 = vmatprep.subr.mxu0 0.0
        %1484 = vmatpush1.msra.mxu0 0.0
        %1485 = vmatprep.subr.mxu0 0.0
        %1486 = vmatpush1.msra.mxu0 0.0
        %1487 = vmatprep.subr.mxu0 0.0
        %1488 = vmatpush1.msra.mxu0 0.0
        %1489 = vmatprep.subr.mxu0 0.0
        %1490 = vmatpush1.msra.mxu0 %v1454
        %1491 = vmatprep.subr.mxu0 0.0
        %1492 = vmatpush2.msra.mxu0 0.0
        %1493 = vmatprep.subr.mxu0 0.0
        %1494 = vmatpush2.msra.mxu0 0.0
        %1495 = vmatprep.subr.mxu0 0.0
        %1496 = vmatpush2.msra.mxu0 0.0
        %1497 = vmatprep.subr.mxu0 0.0
        %1498 = vmatpush2.msra.mxu0 0.0
        %1499 = vmatprep.subr.mxu0 0.0
        %1500 = vmatpush2.msra.mxu0 0.0
        %1501 = vmatprep.subr.mxu0 0.0
        %1502 = vmatpush2.msra.mxu0 0.0
        %1503 = vmatprep.subr.mxu0 0.0
        %1504 = vmatpush2.msra.mxu0 0.0
        %1505 = vmatprep.subr.mxu0 0.0
        %1506 = vmatpush2.msra.mxu0 0.0
        %1507 = vmatprep.subr.mxu0 0.0
        %1508 = vmatpush2.msra.mxu0 0.0
        %1509 = vmatprep.subr.mxu0 0.0
        %1510 = vmatpush2.msra.mxu0 0.0
        %1511 = vmatprep.subr.mxu0 0.0
        %1512 = vmatpush2.msra.mxu0 0.0
        %1513 = vmatprep.subr.mxu0 0.0
        %1514 = vmatpush2.msra.mxu0 0.0
        %1515 = vmatprep.subr.mxu0 0.0
        %1516 = vmatpush2.msra.mxu0 0.0
        %1517 = vmatprep.subr.mxu0 0.0
        %1518 = vmatpush2.msra.mxu0 0.0
        %1519 = vmatprep.subr.mxu0 0.0
        %1520 = vmatpush2.msra.mxu0 0.0
        %1521 = vmatprep.subr.mxu0 0.0
        %1522 = vmatpush2.msra.mxu0 0.0
        %1523 = vmatprep.mubr.f32.mxu0 0.0
        %1524 = vmatmul.mubr.f32.gmra.mxu0 %v1457
        %v1525 = vpop.f32.mrf.mxu0
        %v1526 = vadd.f32 0.0, %v1525
        %v1527 = vpop.f32.mrf.mxu0
        %1528 = vdwg.mxu0
        %1529 = vrot.lane.b32.xlu0 %v896, 104
        %v1530 = vpop.permute.xlu0 %1529
        %1531 = vrot.lane.b32.xlu0 %v964, 104
        %v1532 = vpop.permute.xlu0 %1531
        %v1533 = vsel %vm1037, %v1530, 0
        %v1535 = vsel %vm1037, %v1532, 0
        %1537 = vmatprep.subr.mxu0 0.0
        %1538 = vmatpush1.xpose.msra.mxu0 0.0
        %1539 = vmatprep.subr.mxu0 0.0
        %1540 = vmatpush1.xpose.msra.mxu0 0.0
        %1541 = vmatprep.subr.mxu0 0.0
        %1542 = vmatpush1.xpose.msra.mxu0 0.0
        %1543 = vmatprep.subr.mxu0 0.0
        %1544 = vmatpush1.xpose.msra.mxu0 0.0
        %1545 = vmatprep.subr.mxu0 0.0
        %1546 = vmatpush1.xpose.msra.mxu0 0.0
        %1547 = vmatprep.subr.mxu0 0.0
        %1548 = vmatpush1.xpose.msra.mxu0 0.0
        %1549 = vmatprep.subr.mxu0 0.0
        %1550 = vmatpush1.xpose.msra.mxu0 0.0
        %1551 = vmatprep.subr.mxu0 0.0
        %1552 = vmatpush1.xpose.msra.mxu0 0.0
        %1553 = vmatprep.subr.mxu0 0.0
        %1554 = vmatpush1.xpose.msra.mxu0 0.0
        %1555 = vmatprep.subr.mxu0 0.0
        %1556 = vmatpush1.xpose.msra.mxu0 0.0
        %1557 = vmatprep.subr.mxu0 0.0
        %1558 = vmatpush1.xpose.msra.mxu0 0.0
        %1559 = vmatprep.subr.mxu0 0.0
        %1560 = vmatpush1.xpose.msra.mxu0 0.0
        %1561 = vmatprep.subr.mxu0 0.0
        %1562 = vmatpush1.xpose.msra.mxu0 0.0
        %1563 = vmatprep.subr.mxu0 0.0
        %1564 = vmatpush1.xpose.msra.mxu0 0.0
        %1565 = vmatprep.subr.mxu0 0.0
        %1566 = vmatpush1.xpose.msra.mxu0 0.0
        %1567 = vmatprep.subr.mxu0 0.0
        %1568 = vmatpush1.xpose.msra.mxu0 %v1535
        %1569 = vmatprep.subr.mxu0 0.0
        %1570 = vmatpush2.xpose.msra.mxu0 0.0
        %1571 = vmatprep.subr.mxu0 0.0
        %1572 = vmatpush2.xpose.msra.mxu0 0.0
        %1573 = vmatprep.subr.mxu0 0.0
        %1574 = vmatpush2.xpose.msra.mxu0 0.0
        %1575 = vmatprep.subr.mxu0 0.0
        %1576 = vmatpush2.xpose.msra.mxu0 0.0
        %1577 = vmatprep.subr.mxu0 0.0
        %1578 = vmatpush2.xpose.msra.mxu0 0.0
        %1579 = vmatprep.subr.mxu0 0.0
        %1580 = vmatpush2.xpose.msra.mxu0 0.0
        %1581 = vmatprep.subr.mxu0 0.0
        %1582 = vmatpush2.xpose.msra.mxu0 0.0
        %1583 = vmatprep.subr.mxu0 0.0
        %1584 = vmatpush2.xpose.msra.mxu0 0.0
        %1585 = vmatprep.subr.mxu0 0.0
        %1586 = vmatpush2.xpose.msra.mxu0 0.0
        %1587 = vmatprep.subr.mxu0 0.0
        %1588 = vmatpush2.xpose.msra.mxu0 0.0
        %1589 = vmatprep.subr.mxu0 0.0
        %1590 = vmatpush2.xpose.msra.mxu0 0.0
        %1591 = vmatprep.subr.mxu0 0.0
        %1592 = vmatpush2.xpose.msra.mxu0 0.0
        %1593 = vmatprep.subr.mxu0 0.0
        %1594 = vmatpush2.xpose.msra.mxu0 0.0
        %1595 = vmatprep.subr.mxu0 0.0
        %1596 = vmatpush2.xpose.msra.mxu0 0.0
        %1597 = vmatprep.subr.mxu0 0.0
        %1598 = vmatpush2.xpose.msra.mxu0 0.0
        %1599 = vmatprep.subr.mxu0 0.0
        %1600 = vmatpush2.xpose.msra.mxu0 0.0
        %1601 = vmatprep.mubr.f32.mxu0 0.0
        %1602 = vmatmul.mubr.f32.gmra.mxu0 %v1533
        %v1603 = vpop.f32.mrf.mxu0
        %v1604 = vadd.f32 %v800, %v1603
        %v1605 = vpop.f32.mrf.mxu0
        %1606 = vdwg.mxu0
        %v1607 = vsel %vm1037, %v1604, -inf
        %1608 = vmax.xlane.f32.xlu0 %v1607
        %v1609 = vpop.xlane.xlu0 %1608
        %v1610 = vsub.f32 %v1604, %v1609
        %v1611 = vmul.f32 %v1610, 1.442695
        %v1612 = vpow.pop %v1611
        %v1613 = vsel %vm1037, %v1612, 0.0
        %1614 = vadd.xlane.f32.xlu0 %v1613
        %v1615 = vpop.xlane.xlu0 %1614
        %v1616 = vrcp.pop %v1615
        %v1617 = vmul.f32 %v1612, %v1616
        %1618 = vrot.lane.b32.xlu0 %v1034, 104
        %v1619 = vpop.permute.xlu0 %1618
        %v1622 = vsel %vm1037, %v1617, 0
        %1624 = vmatprep.subr.mxu0 0.0
        %1625 = vmatpush1.msra.mxu0 0.0
        %1626 = vmatprep.subr.mxu0 0.0
        %1627 = vmatpush1.msra.mxu0 0.0
        %1628 = vmatprep.subr.mxu0 0.0
        %1629 = vmatpush1.msra.mxu0 0.0
        %1630 = vmatprep.subr.mxu0 0.0
        %1631 = vmatpush1.msra.mxu0 0.0
        %1632 = vmatprep.subr.mxu0 0.0
        %1633 = vmatpush1.msra.mxu0 0.0
        %1634 = vmatprep.subr.mxu0 0.0
        %1635 = vmatpush1.msra.mxu0 0.0
        %1636 = vmatprep.subr.mxu0 0.0
        %1637 = vmatpush1.msra.mxu0 0.0
        %1638 = vmatprep.subr.mxu0 0.0
        %1639 = vmatpush1.msra.mxu0 0.0
        %1640 = vmatprep.subr.mxu0 0.0
        %1641 = vmatpush1.msra.mxu0 0.0
        %1642 = vmatprep.subr.mxu0 0.0
        %1643 = vmatpush1.msra.mxu0 0.0
        %1644 = vmatprep.subr.mxu0 0.0
        %1645 = vmatpush1.msra.mxu0 0.0
        %1646 = vmatprep.subr.mxu0 0.0
        %1647 = vmatpush1.msra.mxu0 0.0
        %1648 = vmatprep.subr.mxu0 0.0
        %1649 = vmatpush1.msra.mxu0 0.0
        %1650 = vmatprep.subr.mxu0 0.0
        %1651 = vmatpush1.msra.mxu0 0.0
        %1652 = vmatprep.subr.mxu0 0.0
        %1653 = vmatpush1.msra.mxu0 0.0
        %1654 = vmatprep.subr.mxu0 0.0
        %1655 = vmatpush1.msra.mxu0 %v1619
        %1656 = vmatprep.subr.mxu0 0.0
        %1657 = vmatpush2.msra.mxu0 0.0
        %1658 = vmatprep.subr.mxu0 0.0
        %1659 = vmatpush2.msra.mxu0 0.0
        %1660 = vmatprep.subr.mxu0 0.0
        %1661 = vmatpush2.msra.mxu0 0.0
        %1662 = vmatprep.subr.mxu0 0.0
        %1663 = vmatpush2.msra.mxu0 0.0
        %1664 = vmatprep.subr.mxu0 0.0
        %1665 = vmatpush2.msra.mxu0 0.0
        %1666 = vmatprep.subr.mxu0 0.0
        %1667 = vmatpush2.msra.mxu0 0.0
        %1668 = vmatprep.subr.mxu0 0.0
        %1669 = vmatpush2.msra.mxu0 0.0
        %1670 = vmatprep.subr.mxu0 0.0
        %1671 = vmatpush2.msra.mxu0 0.0
        %1672 = vmatprep.subr.mxu0 0.0
        %1673 = vmatpush2.msra.mxu0 0.0
        %1674 = vmatprep.subr.mxu0 0.0
        %1675 = vmatpush2.msra.mxu0 0.0
        %1676 = vmatprep.subr.mxu0 0.0
        %1677 = vmatpush2.msra.mxu0 0.0
        %1678 = vmatprep.subr.mxu0 0.0
        %1679 = vmatpush2.msra.mxu0 0.0
        %1680 = vmatprep.subr.mxu0 0.0
        %1681 = vmatpush2.msra.mxu0 0.0
        %1682 = vmatprep.subr.mxu0 0.0
        %1683 = vmatpush2.msra.mxu0 0.0
        %1684 = vmatprep.subr.mxu0 0.0
        %1685 = vmatpush2.msra.mxu0 0.0
        %1686 = vmatprep.subr.mxu0 0.0
        %1687 = vmatpush2.msra.mxu0 0.0
        %1688 = vmatprep.mubr.f32.mxu0 0.0
        %1689 = vmatmul.mubr.f32.gmra.mxu0 %v1622
        %v1690 = vpop.f32.mrf.mxu0
        %v1691 = vadd.f32 0.0, %v1690
        %v1692 = vpop.f32.mrf.mxu0
        %1693 = vdwg.mxu0
        %1695 = vrot.lane.b32.xlu0 %v1361, 8
        %v1696 = vpop.permute.xlu0 %1695
        %1699 = vrot.lane.b32.xlu0 %v1526, 16
        %v1700 = vpop.permute.xlu0 %1699
        %1703 = vrot.lane.b32.xlu0 %v1691, 24
        %v1704 = vpop.permute.xlu0 %1703
        %v1706 = vsel %vm1037, %v1195, %v1696
        %vm1707 = vcmask 130048
        %v1708 = vsel %vm1707, %v1706, %v1700
        %vm1709 = vcmask 195584
        %v1710 = vsel %vm1709, %v1708, %v1704
        %v1712 = vlaneseq
        %v1713 = vshrl.u32 %v1712, 7
        %v1714 = vsub.s32 0, %v1713
        %v1715 = vrot.slane %v819, %v1714
        %v1718 = vsel %vm822, %v1710, 0
        %1720 = vmatprep.subr.mxu0 0.0
        %1721 = vmatpush1.msra.mxu0 0.0
        %1722 = vmatprep.subr.mxu0 0.0
        %1723 = vmatpush1.msra.mxu0 0.0
        %1724 = vmatprep.subr.mxu0 0.0
        %1725 = vmatpush1.msra.mxu0 0.0
        %1726 = vmatprep.subr.mxu0 0.0
        %1727 = vmatpush1.msra.mxu0 0.0
        %1728 = vmatprep.subr.mxu0 0.0
        %1729 = vmatpush1.msra.mxu0 0.0
        %1730 = vmatprep.subr.mxu0 0.0
        %1731 = vmatpush1.msra.mxu0 0.0
        %1732 = vmatprep.subr.mxu0 0.0
        %1733 = vmatpush1.msra.mxu0 0.0
        %1734 = vmatprep.subr.mxu0 0.0
        %1735 = vmatpush1.msra.mxu0 0.0
        %1736 = vmatprep.subr.mxu0 0.0
        %1737 = vmatpush1.msra.mxu0 0.0
        %1738 = vmatprep.subr.mxu0 0.0
        %1739 = vmatpush1.msra.mxu0 0.0
        %1740 = vmatprep.subr.mxu0 0.0
        %1741 = vmatpush1.msra.mxu0 0.0
        %1742 = vmatprep.subr.mxu0 0.0
        %1743 = vmatpush1.msra.mxu0 0.0
        %1744 = vmatprep.subr.mxu0 0.0
        %1745 = vmatpush1.msra.mxu0 %v818
        %1746 = vmatprep.subr.mxu0 0.0
        %1747 = vmatpush1.msra.mxu0 %v817
        %1748 = vmatprep.subr.mxu0 0.0
        %1749 = vmatpush1.msra.mxu0 %v816
        %1750 = vmatprep.subr.mxu0 0.0
        %1751 = vmatpush1.msra.mxu0 %v815
        %1752 = vmatprep.subr.mxu0 0.0
        %1753 = vmatpush2.msra.mxu0 0.0
        %1754 = vmatprep.subr.mxu0 0.0
        %1755 = vmatpush2.msra.mxu0 0.0
        %1756 = vmatprep.subr.mxu0 0.0
        %1757 = vmatpush2.msra.mxu0 0.0
        %1758 = vmatprep.subr.mxu0 0.0
        %1759 = vmatpush2.msra.mxu0 0.0
        %1760 = vmatprep.subr.mxu0 0.0
        %1761 = vmatpush2.msra.mxu0 0.0
        %1762 = vmatprep.subr.mxu0 0.0
        %1763 = vmatpush2.msra.mxu0 0.0
        %1764 = vmatprep.subr.mxu0 0.0
        %1765 = vmatpush2.msra.mxu0 0.0
        %1766 = vmatprep.subr.mxu0 0.0
        %1767 = vmatpush2.msra.mxu0 0.0
        %1768 = vmatprep.subr.mxu0 0.0
        %1769 = vmatpush2.msra.mxu0 0.0
        %1770 = vmatprep.subr.mxu0 0.0
        %1771 = vmatpush2.msra.mxu0 0.0
        %1772 = vmatprep.subr.mxu0 0.0
        %1773 = vmatpush2.msra.mxu0 0.0
        %1774 = vmatprep.subr.mxu0 0.0
        %1775 = vmatpush2.msra.mxu0 0.0
        %1776 = vmatprep.subr.mxu0 0.0
        %1777 = vmatpush2.msra.mxu0 0.0
        %1778 = vmatprep.subr.mxu0 0.0
        %1779 = vmatpush2.msra.mxu0 0.0
        %1780 = vmatprep.subr.mxu0 0.0
        %1781 = vmatpush2.msra.mxu0 0.0
        %1782 = vmatprep.subr.mxu0 0.0
        %1783 = vmatpush2.msra.mxu0 0.0
        %1784 = vmatprep.mubr.f32.mxu0 0.0
        %1785 = vmatmul.mubr.f32.gmra.mxu0 %v1718
        %v1786 = vpop.f32.mrf.mxu0
        %v1787 = vadd.f32 %v1715, %v1786
        %v1788 = vpop.f32.mrf.mxu0
        %1789 = vdwg.mxu0
        %v1790 = vadd.f32 %v1787, %v797
        %v1791 = vsel %vm822, %v1790, 0.0
        %1792 = vadd.xlane.f32.xlu0 %v1791
        %v1793 = vpop.xlane.xlu0 %1792
        %v1794 = vrcp.pop 32.0
        %v1795 = vmul.f32 %v1793, %v1794
        %v1796 = vsub.f32 %v1790, %v1795
        %v1797 = vmul.f32 %v1796, %v1796
        %v1798 = vsel %vm822, %v1797, 0.0
        %1799 = vadd.xlane.f32.xlu0 %v1798
        %v1800 = vpop.xlane.xlu0 %1799
        %v1801 = vrcp.pop 31.0
        %v1802 = vmul.f32 %v1800, %v1801
        %v1803 = vrsqrt.pop %v1802
        %v1804 = vmul.f32 %v1802, %v1803
        %vm1805 = vcmp.eq.f32.partialorder %v1802, inf
        %v1806 = vsel %vm1805, %v1802, %v1804
        %vm1807 = vcmp.eq.f32.partialorder %v1802, 0.0
        %v1808 = vand.u32 %v1802, 2147483648
        %v1809 = vsel %vm1807, %v1808, %v1806
        %v1810 = vadd.f32 %v1809, 0.001
        %v1811 = vrcp.pop %v1810
        %v1812 = vmul.f32 %v1796, %v1811
        %v1814 = vlaneseq
        %v1815 = vshrl.u32 %v1814, 7
        %v1816 = vsub.s32 0, %v1815
        %v1817 = vrot.slane %v820, %v1816
        %v1819 = vmul.f32 %v1812, %v1817
        %v1821 = vlaneseq
        %v1822 = vshrl.u32 %v1821, 7
        %v1823 = vsub.s32 0, %v1822
        %v1824 = vrot.slane %v821, %v1823
        %v1826 = vadd.f32 %v1819, %v1824
        %v1827 = vld [vmem:[%s11] sm:$0xff]
        %v1828 = vld [vmem:[%s11 + $0x8] sm:$0xff]
        %v1829 = vld [vmem:[%s11 + $0x10] sm:$0xff]
        %v1830 = vld [vmem:[%s11 + $0x18] sm:$0xff]
        %v1831 = vld [vmem:[%s12] sm:$0xff]
        %v1832 = vld [vmem:[%s12 + $0x8] sm:$0xff]
        %v1833 = vld [vmem:[%s12 + $0x10] sm:$0xff]
        %v1834 = vld [vmem:[%s12 + $0x18] sm:$0xff]
        %v1835 = vld [vmem:[%s13] sm:$0xff]
        %v1836 = vld [vmem:[%s13 + $0x8] sm:$0xff]
        %v1837 = vld [vmem:[%s13 + $0x10] sm:$0xff]
        %v1838 = vld [vmem:[%s13 + $0x18] sm:$0xff]
        %v1839 = vld [vmem:[%s14] sm:$0xff]
        %v1840 = vld [vmem:[%s14 + $0x8] sm:$0xff]
        %v1841 = vld [vmem:[%s14 + $0x10] sm:$0xff]
        %v1842 = vld [vmem:[%s14 + $0x18] sm:$0xff]
        %v1843 = vld [vmem:[%s15] sm:$0x1]
        %v1844 = vld [vmem:[%s16] sm:$0x1]
        %v1845 = vld [vmem:[%s17] sm:$0x1]
        %v1847 = vsel %vm822, %v1826, 0
        %1849 = vmatprep.subr.mxu0 0.0
        %1850 = vmatpush1.msra.mxu0 0.0
        %1851 = vmatprep.subr.mxu0 0.0
        %1852 = vmatpush1.msra.mxu0 0.0
        %1853 = vmatprep.subr.mxu0 0.0
        %1854 = vmatpush1.msra.mxu0 0.0
        %1855 = vmatprep.subr.mxu0 0.0
        %1856 = vmatpush1.msra.mxu0 0.0
        %1857 = vmatprep.subr.mxu0 0.0
        %1858 = vmatpush1.msra.mxu0 0.0
        %1859 = vmatprep.subr.mxu0 0.0
        %1860 = vmatpush1.msra.mxu0 0.0
        %1861 = vmatprep.subr.mxu0 0.0
        %1862 = vmatpush1.msra.mxu0 0.0
        %1863 = vmatprep.subr.mxu0 0.0
        %1864 = vmatpush1.msra.mxu0 0.0
        %1865 = vmatprep.subr.mxu0 0.0
        %1866 = vmatpush1.msra.mxu0 0.0
        %1867 = vmatprep.subr.mxu0 0.0
        %1868 = vmatpush1.msra.mxu0 0.0
        %1869 = vmatprep.subr.mxu0 0.0
        %1870 = vmatpush1.msra.mxu0 0.0
        %1871 = vmatprep.subr.mxu0 0.0
        %1872 = vmatpush1.msra.mxu0 0.0
        %1873 = vmatprep.subr.mxu0 0.0
        %1874 = vmatpush1.msra.mxu0 %v1830
        %1875 = vmatprep.subr.mxu0 0.0
        %1876 = vmatpush1.msra.mxu0 %v1829
        %1877 = vmatprep.subr.mxu0 0.0
        %1878 = vmatpush1.msra.mxu0 %v1828
        %1879 = vmatprep.subr.mxu0 0.0
        %1880 = vmatpush1.msra.mxu0 %v1827
        %1881 = vmatprep.subr.mxu0 0.0
        %1882 = vmatpush2.msra.mxu0 0.0
        %1883 = vmatprep.subr.mxu0 0.0
        %1884 = vmatpush2.msra.mxu0 0.0
        %1885 = vmatprep.subr.mxu0 0.0
        %1886 = vmatpush2.msra.mxu0 0.0
        %1887 = vmatprep.subr.mxu0 0.0
        %1888 = vmatpush2.msra.mxu0 0.0
        %1889 = vmatprep.subr.mxu0 0.0
        %1890 = vmatpush2.msra.mxu0 0.0
        %1891 = vmatprep.subr.mxu0 0.0
        %1892 = vmatpush2.msra.mxu0 0.0
        %1893 = vmatprep.subr.mxu0 0.0
        %1894 = vmatpush2.msra.mxu0 0.0
        %1895 = vmatprep.subr.mxu0 0.0
        %1896 = vmatpush2.msra.mxu0 0.0
        %1897 = vmatprep.subr.mxu0 0.0
        %1898 = vmatpush2.msra.mxu0 0.0
        %1899 = vmatprep.subr.mxu0 0.0
        %1900 = vmatpush2.msra.mxu0 0.0
        %1901 = vmatprep.subr.mxu0 0.0
        %1902 = vmatpush2.msra.mxu0 0.0
        %1903 = vmatprep.subr.mxu0 0.0
        %1904 = vmatpush2.msra.mxu0 0.0
        %1905 = vmatprep.subr.mxu0 0.0
        %1906 = vmatpush2.msra.mxu0 0.0
        %1907 = vmatprep.subr.mxu0 0.0
        %1908 = vmatpush2.msra.mxu0 0.0
        %1909 = vmatprep.subr.mxu0 0.0
        %1910 = vmatpush2.msra.mxu0 0.0
        %1911 = vmatprep.subr.mxu0 0.0
        %1912 = vmatpush2.msra.mxu0 0.0
        %1913 = vmatprep.mubr.f32.mxu0 0.0
        %1914 = vmatmul.mubr.f32.gmra.mxu0 %v1847
        %v1915 = vpop.f32.mrf.mxu0
        %v1916 = vadd.f32 0.0, %v1915
        %v1917 = vpop.f32.mrf.mxu0
        %1918 = vdwg.mxu0
        %v1919 = vmul.f32 %v1916, 0.17677669
        %v1921 = vsel %vm822, %v798, 0
        %1923 = vmatprep.subr.mxu0 0.0
        %1924 = vmatpush1.msra.mxu0 0.0
        %1925 = vmatprep.subr.mxu0 0.0
        %1926 = vmatpush1.msra.mxu0 0.0
        %1927 = vmatprep.subr.mxu0 0.0
        %1928 = vmatpush1.msra.mxu0 0.0
        %1929 = vmatprep.subr.mxu0 0.0
        %1930 = vmatpush1.msra.mxu0 0.0
        %1931 = vmatprep.subr.mxu0 0.0
        %1932 = vmatpush1.msra.mxu0 0.0
        %1933 = vmatprep.subr.mxu0 0.0
        %1934 = vmatpush1.msra.mxu0 0.0
        %1935 = vmatprep.subr.mxu0 0.0
        %1936 = vmatpush1.msra.mxu0 0.0
        %1937 = vmatprep.subr.mxu0 0.0
        %1938 = vmatpush1.msra.mxu0 0.0
        %1939 = vmatprep.subr.mxu0 0.0
        %1940 = vmatpush1.msra.mxu0 0.0
        %1941 = vmatprep.subr.mxu0 0.0
        %1942 = vmatpush1.msra.mxu0 0.0
        %1943 = vmatprep.subr.mxu0 0.0
        %1944 = vmatpush1.msra.mxu0 0.0
        %1945 = vmatprep.subr.mxu0 0.0
        %1946 = vmatpush1.msra.mxu0 0.0
        %1947 = vmatprep.subr.mxu0 0.0
        %1948 = vmatpush1.msra.mxu0 %v1834
        %1949 = vmatprep.subr.mxu0 0.0
        %1950 = vmatpush1.msra.mxu0 %v1833
        %1951 = vmatprep.subr.mxu0 0.0
        %1952 = vmatpush1.msra.mxu0 %v1832
        %1953 = vmatprep.subr.mxu0 0.0
        %1954 = vmatpush1.msra.mxu0 %v1831
        %1955 = vmatprep.subr.mxu0 0.0
        %1956 = vmatpush2.msra.mxu0 0.0
        %1957 = vmatprep.subr.mxu0 0.0
        %1958 = vmatpush2.msra.mxu0 0.0
        %1959 = vmatprep.subr.mxu0 0.0
        %1960 = vmatpush2.msra.mxu0 0.0
        %1961 = vmatprep.subr.mxu0 0.0
        %1962 = vmatpush2.msra.mxu0 0.0
        %1963 = vmatprep.subr.mxu0 0.0
        %1964 = vmatpush2.msra.mxu0 0.0
        %1965 = vmatprep.subr.mxu0 0.0
        %1966 = vmatpush2.msra.mxu0 0.0
        %1967 = vmatprep.subr.mxu0 0.0
        %1968 = vmatpush2.msra.mxu0 0.0
        %1969 = vmatprep.subr.mxu0 0.0
        %1970 = vmatpush2.msra.mxu0 0.0
        %1971 = vmatprep.subr.mxu0 0.0
        %1972 = vmatpush2.msra.mxu0 0.0
        %1973 = vmatprep.subr.mxu0 0.0
        %1974 = vmatpush2.msra.mxu0 0.0
        %1975 = vmatprep.subr.mxu0 0.0
        %1976 = vmatpush2.msra.mxu0 0.0
        %1977 = vmatprep.subr.mxu0 0.0
        %1978 = vmatpush2.msra.mxu0 0.0
        %1979 = vmatprep.subr.mxu0 0.0
        %1980 = vmatpush2.msra.mxu0 0.0
        %1981 = vmatprep.subr.mxu0 0.0
        %1982 = vmatpush2.msra.mxu0 0.0
        %1983 = vmatprep.subr.mxu0 0.0
        %1984 = vmatpush2.msra.mxu0 0.0
        %1985 = vmatprep.subr.mxu0 0.0
        %1986 = vmatpush2.msra.mxu0 0.0
        %1987 = vmatprep.mubr.f32.mxu0 0.0
        %1988 = vmatmul.mubr.f32.gmra.mxu0 %v1921
        %v1989 = vpop.f32.mrf.mxu0
        %v1990 = vadd.f32 0.0, %v1989
        %v1991 = vpop.f32.mrf.mxu0
        %1992 = vdwg.mxu0
        %1993 = vmatprep.subr.mxu0 0.0
        %1994 = vmatpush1.msra.mxu0 0.0
        %1995 = vmatprep.subr.mxu0 0.0
        %1996 = vmatpush1.msra.mxu0 0.0
        %1997 = vmatprep.subr.mxu0 0.0
        %1998 = vmatpush1.msra.mxu0 0.0
        %1999 = vmatprep.subr.mxu0 0.0
        %2000 = vmatpush1.msra.mxu0 0.0
        %2001 = vmatprep.subr.mxu0 0.0
        %2002 = vmatpush1.msra.mxu0 0.0
        %2003 = vmatprep.subr.mxu0 0.0
        %2004 = vmatpush1.msra.mxu0 0.0
        %2005 = vmatprep.subr.mxu0 0.0
        %2006 = vmatpush1.msra.mxu0 0.0
        %2007 = vmatprep.subr.mxu0 0.0
        %2008 = vmatpush1.msra.mxu0 0.0
        %2009 = vmatprep.subr.mxu0 0.0
        %2010 = vmatpush1.msra.mxu0 0.0
        %2011 = vmatprep.subr.mxu0 0.0
        %2012 = vmatpush1.msra.mxu0 0.0
        %2013 = vmatprep.subr.mxu0 0.0
        %2014 = vmatpush1.msra.mxu0 0.0
        %2015 = vmatprep.subr.mxu0 0.0
        %2016 = vmatpush1.msra.mxu0 0.0
        %2017 = vmatprep.subr.mxu0 0.0
        %2018 = vmatpush1.msra.mxu0 %v1838
        %2019 = vmatprep.subr.mxu0 0.0
        %2020 = vmatpush1.msra.mxu0 %v1837
        %2021 = vmatprep.subr.mxu0 0.0
        %2022 = vmatpush1.msra.mxu0 %v1836
        %2023 = vmatprep.subr.mxu0 0.0
        %2024 = vmatpush1.msra.mxu0 %v1835
        %2025 = vmatprep.subr.mxu0 0.0
        %2026 = vmatpush2.msra.mxu0 0.0
        %2027 = vmatprep.subr.mxu0 0.0
        %2028 = vmatpush2.msra.mxu0 0.0
        %2029 = vmatprep.subr.mxu0 0.0
        %2030 = vmatpush2.msra.mxu0 0.0
        %2031 = vmatprep.subr.mxu0 0.0
        %2032 = vmatpush2.msra.mxu0 0.0
        %2033 = vmatprep.subr.mxu0 0.0
        %2034 = vmatpush2.msra.mxu0 0.0
        %2035 = vmatprep.subr.mxu0 0.0
        %2036 = vmatpush2.msra.mxu0 0.0
        %2037 = vmatprep.subr.mxu0 0.0
        %2038 = vmatpush2.msra.mxu0 0.0
        %2039 = vmatprep.subr.mxu0 0.0
        %2040 = vmatpush2.msra.mxu0 0.0
        %2041 = vmatprep.subr.mxu0 0.0
        %2042 = vmatpush2.msra.mxu0 0.0
        %2043 = vmatprep.subr.mxu0 0.0
        %2044 = vmatpush2.msra.mxu0 0.0
        %2045 = vmatprep.subr.mxu0 0.0
        %2046 = vmatpush2.msra.mxu0 0.0
        %2047 = vmatprep.subr.mxu0 0.0
        %2048 = vmatpush2.msra.mxu0 0.0
        %2049 = vmatprep.subr.mxu0 0.0
        %2050 = vmatpush2.msra.mxu0 0.0
        %2051 = vmatprep.subr.mxu0 0.0
        %2052 = vmatpush2.msra.mxu0 0.0
        %2053 = vmatprep.subr.mxu0 0.0
        %2054 = vmatpush2.msra.mxu0 0.0
        %2055 = vmatprep.subr.mxu0 0.0
        %2056 = vmatpush2.msra.mxu0 0.0
        %2057 = vmatprep.mubr.f32.mxu0 0.0
        %2058 = vmatmul.mubr.f32.gmra.mxu0 %v1921
        %v2059 = vpop.f32.mrf.mxu0
        %v2060 = vadd.f32 0.0, %v2059
        %v2061 = vpop.f32.mrf.mxu0
        %2062 = vdwg.mxu0
        %v2064 = vsel %vm1037, %v1919, 0
        %v2067 = vsel %vm1037, %v1990, 0
        %2069 = vmatprep.subr.mxu0 0.0
        %2070 = vmatpush1.xpose.msra.mxu0 0.0
        %2071 = vmatprep.subr.mxu0 0.0
        %2072 = vmatpush1.xpose.msra.mxu0 0.0
        %2073 = vmatprep.subr.mxu0 0.0
        %2074 = vmatpush1.xpose.msra.mxu0 0.0
        %2075 = vmatprep.subr.mxu0 0.0
        %2076 = vmatpush1.xpose.msra.mxu0 0.0
        %2077 = vmatprep.subr.mxu0 0.0
        %2078 = vmatpush1.xpose.msra.mxu0 0.0
        %2079 = vmatprep.subr.mxu0 0.0
        %2080 = vmatpush1.xpose.msra.mxu0 0.0
        %2081 = vmatprep.subr.mxu0 0.0
        %2082 = vmatpush1.xpose.msra.mxu0 0.0
        %2083 = vmatprep.subr.mxu0 0.0
        %2084 = vmatpush1.xpose.msra.mxu0 0.0
        %2085 = vmatprep.subr.mxu0 0.0
        %2086 = vmatpush1.xpose.msra.mxu0 0.0
        %2087 = vmatprep.subr.mxu0 0.0
        %2088 = vmatpush1.xpose.msra.mxu0 0.0
        %2089 = vmatprep.subr.mxu0 0.0
        %2090 = vmatpush1.xpose.msra.mxu0 0.0
        %2091 = vmatprep.subr.mxu0 0.0
        %2092 = vmatpush1.xpose.msra.mxu0 0.0
        %2093 = vmatprep.subr.mxu0 0.0
        %2094 = vmatpush1.xpose.msra.mxu0 0.0
        %2095 = vmatprep.subr.mxu0 0.0
        %2096 = vmatpush1.xpose.msra.mxu0 0.0
        %2097 = vmatprep.subr.mxu0 0.0
        %2098 = vmatpush1.xpose.msra.mxu0 0.0
        %2099 = vmatprep.subr.mxu0 0.0
        %2100 = vmatpush1.xpose.msra.mxu0 %v2067
        %2101 = vmatprep.subr.mxu0 0.0
        %2102 = vmatpush2.xpose.msra.mxu0 0.0
        %2103 = vmatprep.subr.mxu0 0.0
        %2104 = vmatpush2.xpose.msra.mxu0 0.0
        %2105 = vmatprep.subr.mxu0 0.0
        %2106 = vmatpush2.xpose.msra.mxu0 0.0
        %2107 = vmatprep.subr.mxu0 0.0
        %2108 = vmatpush2.xpose.msra.mxu0 0.0
        %2109 = vmatprep.subr.mxu0 0.0
        %2110 = vmatpush2.xpose.msra.mxu0 0.0
        %2111 = vmatprep.subr.mxu0 0.0
        %2112 = vmatpush2.xpose.msra.mxu0 0.0
        %2113 = vmatprep.subr.mxu0 0.0
        %2114 = vmatpush2.xpose.msra.mxu0 0.0
        %2115 = vmatprep.subr.mxu0 0.0
        %2116 = vmatpush2.xpose.msra.mxu0 0.0
        %2117 = vmatprep.subr.mxu0 0.0
        %2118 = vmatpush2.xpose.msra.mxu0 0.0
        %2119 = vmatprep.subr.mxu0 0.0
        %2120 = vmatpush2.xpose.msra.mxu0 0.0
        %2121 = vmatprep.subr.mxu0 0.0
        %2122 = vmatpush2.xpose.msra.mxu0 0.0
        %2123 = vmatprep.subr.mxu0 0.0
        %2124 = vmatpush2.xpose.msra.mxu0 0.0
        %2125 = vmatprep.subr.mxu0 0.0
        %2126 = vmatpush2.xpose.msra.mxu0 0.0
        %2127 = vmatprep.subr.mxu0 0.0
        %2128 = vmatpush2.xpose.msra.mxu0 0.0
        %2129 = vmatprep.subr.mxu0 0.0
        %2130 = vmatpush2.xpose.msra.mxu0 0.0
        %2131 = vmatprep.subr.mxu0 0.0
        %2132 = vmatpush2.xpose.msra.mxu0 0.0
        %2133 = vmatprep.mubr.f32.mxu0 0.0
        %2134 = vmatmul.mubr.f32.gmra.mxu0 %v2064
        %v2135 = vpop.f32.mrf.mxu0
        %v2136 = vadd.f32 %v802, %v2135
        %v2137 = vpop.f32.mrf.mxu0
        %2138 = vdwg.mxu0
        %v2139 = vsel %vm1037, %v2136, -inf
        %2140 = vmax.xlane.f32.xlu0 %v2139
        %v2141 = vpop.xlane.xlu0 %2140
        %v2142 = vsub.f32 %v2136, %v2141
        %v2143 = vmul.f32 %v2142, 1.442695
        %v2144 = vpow.pop %v2143
        %v2145 = vsel %vm1037, %v2144, 0.0
        %2146 = vadd.xlane.f32.xlu0 %v2145
        %v2147 = vpop.xlane.xlu0 %2146
        %v2148 = vrcp.pop %v2147
        %v2149 = vmul.f32 %v2144, %v2148
        %v2151 = vsel %vm1037, %v2149, 0
        %2153 = vmatprep.subr.mxu0 0.0
        %2154 = vmatpush1.msra.mxu0 0.0
        %2155 = vmatprep.subr.mxu0 0.0
        %2156 = vmatpush1.msra.mxu0 0.0
        %2157 = vmatprep.subr.mxu0 0.0
        %2158 = vmatpush1.msra.mxu0 0.0
        %2159 = vmatprep.subr.mxu0 0.0
        %2160 = vmatpush1.msra.mxu0 0.0
        %2161 = vmatprep.subr.mxu0 0.0
        %2162 = vmatpush1.msra.mxu0 0.0
        %2163 = vmatprep.subr.mxu0 0.0
        %2164 = vmatpush1.msra.mxu0 0.0
        %2165 = vmatprep.subr.mxu0 0.0
        %2166 = vmatpush1.msra.mxu0 0.0
        %2167 = vmatprep.subr.mxu0 0.0
        %2168 = vmatpush1.msra.mxu0 0.0
        %2169 = vmatprep.subr.mxu0 0.0
        %2170 = vmatpush1.msra.mxu0 0.0
        %2171 = vmatprep.subr.mxu0 0.0
        %2172 = vmatpush1.msra.mxu0 0.0
        %2173 = vmatprep.subr.mxu0 0.0
        %2174 = vmatpush1.msra.mxu0 0.0
        %2175 = vmatprep.subr.mxu0 0.0
        %2176 = vmatpush1.msra.mxu0 0.0
        %2177 = vmatprep.subr.mxu0 0.0
        %2178 = vmatpush1.msra.mxu0 0.0
        %2179 = vmatprep.subr.mxu0 0.0
        %2180 = vmatpush1.msra.mxu0 0.0
        %2181 = vmatprep.subr.mxu0 0.0
        %2182 = vmatpush1.msra.mxu0 0.0
        %2183 = vmatprep.subr.mxu0 0.0
        %2184 = vmatpush1.msra.mxu0 %v2060
        %2185 = vmatprep.subr.mxu0 0.0
        %2186 = vmatpush2.msra.mxu0 0.0
        %2187 = vmatprep.subr.mxu0 0.0
        %2188 = vmatpush2.msra.mxu0 0.0
        %2189 = vmatprep.subr.mxu0 0.0
        %2190 = vmatpush2.msra.mxu0 0.0
        %2191 = vmatprep.subr.mxu0 0.0
        %2192 = vmatpush2.msra.mxu0 0.0
        %2193 = vmatprep.subr.mxu0 0.0
        %2194 = vmatpush2.msra.mxu0 0.0
        %2195 = vmatprep.subr.mxu0 0.0
        %2196 = vmatpush2.msra.mxu0 0.0
        %2197 = vmatprep.subr.mxu0 0.0
        %2198 = vmatpush2.msra.mxu0 0.0
        %2199 = vmatprep.subr.mxu0 0.0
        %2200 = vmatpush2.msra.mxu0 0.0
        %2201 = vmatprep.subr.mxu0 0.0
        %2202 = vmatpush2.msra.mxu0 0.0
        %2203 = vmatprep.subr.mxu0 0.0
        %2204 = vmatpush2.msra.mxu0 0.0
        %2205 = vmatprep.subr.mxu0 0.0
        %2206 = vmatpush2.msra.mxu0 0.0
        %2207 = vmatprep.subr.mxu0 0.0
        %2208 = vmatpush2.msra.mxu0 0.0
        %2209 = vmatprep.subr.mxu0 0.0
        %2210 = vmatpush2.msra.mxu0 0.0
        %2211 = vmatprep.subr.mxu0 0.0
        %2212 = vmatpush2.msra.mxu0 0.0
        %2213 = vmatprep.subr.mxu0 0.0
        %2214 = vmatpush2.msra.mxu0 0.0
        %2215 = vmatprep.subr.mxu0 0.0
        %2216 = vmatpush2.msra.mxu0 0.0
        %2217 = vmatprep.mubr.f32.mxu0 0.0
        %2218 = vmatmul.mubr.f32.gmra.mxu0 %v2151
        %v2219 = vpop.f32.mrf.mxu0
        %v2220 = vadd.f32 0.0, %v2219
        %v2221 = vpop.f32.mrf.mxu0
        %2222 = vdwg.mxu0
        %2223 = vrot.lane.b32.xlu0 %v1919, 120
        %v2224 = vpop.permute.xlu0 %2223
        %2225 = vrot.lane.b32.xlu0 %v1990, 120
        %v2226 = vpop.permute.xlu0 %2225
        %v2227 = vsel %vm1037, %v2224, 0
        %v2229 = vsel %vm1037, %v2226, 0
        %2231 = vmatprep.subr.mxu0 0.0
        %2232 = vmatpush1.xpose.msra.mxu0 0.0
        %2233 = vmatprep.subr.mxu0 0.0
        %2234 = vmatpush1.xpose.msra.mxu0 0.0
        %2235 = vmatprep.subr.mxu0 0.0
        %2236 = vmatpush1.xpose.msra.mxu0 0.0
        %2237 = vmatprep.subr.mxu0 0.0
        %2238 = vmatpush1.xpose.msra.mxu0 0.0
        %2239 = vmatprep.subr.mxu0 0.0
        %2240 = vmatpush1.xpose.msra.mxu0 0.0
        %2241 = vmatprep.subr.mxu0 0.0
        %2242 = vmatpush1.xpose.msra.mxu0 0.0
        %2243 = vmatprep.subr.mxu0 0.0
        %2244 = vmatpush1.xpose.msra.mxu0 0.0
        %2245 = vmatprep.subr.mxu0 0.0
        %2246 = vmatpush1.xpose.msra.mxu0 0.0
        %2247 = vmatprep.subr.mxu0 0.0
        %2248 = vmatpush1.xpose.msra.mxu0 0.0
        %2249 = vmatprep.subr.mxu0 0.0
        %2250 = vmatpush1.xpose.msra.mxu0 0.0
        %2251 = vmatprep.subr.mxu0 0.0
        %2252 = vmatpush1.xpose.msra.mxu0 0.0
        %2253 = vmatprep.subr.mxu0 0.0
        %2254 = vmatpush1.xpose.msra.mxu0 0.0
        %2255 = vmatprep.subr.mxu0 0.0
        %2256 = vmatpush1.xpose.msra.mxu0 0.0
        %2257 = vmatprep.subr.mxu0 0.0
        %2258 = vmatpush1.xpose.msra.mxu0 0.0
        %2259 = vmatprep.subr.mxu0 0.0
        %2260 = vmatpush1.xpose.msra.mxu0 0.0
        %2261 = vmatprep.subr.mxu0 0.0
        %2262 = vmatpush1.xpose.msra.mxu0 %v2229
        %2263 = vmatprep.subr.mxu0 0.0
        %2264 = vmatpush2.xpose.msra.mxu0 0.0
        %2265 = vmatprep.subr.mxu0 0.0
        %2266 = vmatpush2.xpose.msra.mxu0 0.0
        %2267 = vmatprep.subr.mxu0 0.0
        %2268 = vmatpush2.xpose.msra.mxu0 0.0
        %2269 = vmatprep.subr.mxu0 0.0
        %2270 = vmatpush2.xpose.msra.mxu0 0.0
        %2271 = vmatprep.subr.mxu0 0.0
        %2272 = vmatpush2.xpose.msra.mxu0 0.0
        %2273 = vmatprep.subr.mxu0 0.0
        %2274 = vmatpush2.xpose.msra.mxu0 0.0
        %2275 = vmatprep.subr.mxu0 0.0
        %2276 = vmatpush2.xpose.msra.mxu0 0.0
        %2277 = vmatprep.subr.mxu0 0.0
        %2278 = vmatpush2.xpose.msra.mxu0 0.0
        %2279 = vmatprep.subr.mxu0 0.0
        %2280 = vmatpush2.xpose.msra.mxu0 0.0
        %2281 = vmatprep.subr.mxu0 0.0
        %2282 = vmatpush2.xpose.msra.mxu0 0.0
        %2283 = vmatprep.subr.mxu0 0.0
        %2284 = vmatpush2.xpose.msra.mxu0 0.0
        %2285 = vmatprep.subr.mxu0 0.0
        %2286 = vmatpush2.xpose.msra.mxu0 0.0
        %2287 = vmatprep.subr.mxu0 0.0
        %2288 = vmatpush2.xpose.msra.mxu0 0.0
        %2289 = vmatprep.subr.mxu0 0.0
        %2290 = vmatpush2.xpose.msra.mxu0 0.0
        %2291 = vmatprep.subr.mxu0 0.0
        %2292 = vmatpush2.xpose.msra.mxu0 0.0
        %2293 = vmatprep.subr.mxu0 0.0
        %2294 = vmatpush2.xpose.msra.mxu0 0.0
        %2295 = vmatprep.mubr.f32.mxu0 0.0
        %2296 = vmatmul.mubr.f32.gmra.mxu0 %v2227
        %v2297 = vpop.f32.mrf.mxu0
        %v2298 = vadd.f32 %v802, %v2297
        %v2299 = vpop.f32.mrf.mxu0
        %2300 = vdwg.mxu0
        %v2301 = vsel %vm1037, %v2298, -inf
        %2302 = vmax.xlane.f32.xlu0 %v2301
        %v2303 = vpop.xlane.xlu0 %2302
        %v2304 = vsub.f32 %v2298, %v2303
        %v2305 = vmul.f32 %v2304, 1.442695
        %v2306 = vpow.pop %v2305
        %v2307 = vsel %vm1037, %v2306, 0.0
        %2308 = vadd.xlane.f32.xlu0 %v2307
        %v2309 = vpop.xlane.xlu0 %2308
        %v2310 = vrcp.pop %v2309
        %v2311 = vmul.f32 %v2306, %v2310
        %2313 = vrot.lane.b32.xlu0 %v2060, 120
        %v2314 = vpop.permute.xlu0 %2313
        %v2317 = vsel %vm1037, %v2311, 0
        %2319 = vmatprep.subr.mxu0 0.0
        %2320 = vmatpush1.msra.mxu0 0.0
        %2321 = vmatprep.subr.mxu0 0.0
        %2322 = vmatpush1.msra.mxu0 0.0
        %2323 = vmatprep.subr.mxu0 0.0
        %2324 = vmatpush1.msra.mxu0 0.0
        %2325 = vmatprep.subr.mxu0 0.0
        %2326 = vmatpush1.msra.mxu0 0.0
        %2327 = vmatprep.subr.mxu0 0.0
        %2328 = vmatpush1.msra.mxu0 0.0
        %2329 = vmatprep.subr.mxu0 0.0
        %2330 = vmatpush1.msra.mxu0 0.0
        %2331 = vmatprep.subr.mxu0 0.0
        %2332 = vmatpush1.msra.mxu0 0.0
        %2333 = vmatprep.subr.mxu0 0.0
        %2334 = vmatpush1.msra.mxu0 0.0
        %2335 = vmatprep.subr.mxu0 0.0
        %2336 = vmatpush1.msra.mxu0 0.0
        %2337 = vmatprep.subr.mxu0 0.0
        %2338 = vmatpush1.msra.mxu0 0.0
        %2339 = vmatprep.subr.mxu0 0.0
        %2340 = vmatpush1.msra.mxu0 0.0
        %2341 = vmatprep.subr.mxu0 0.0
        %2342 = vmatpush1.msra.mxu0 0.0
        %2343 = vmatprep.subr.mxu0 0.0
        %2344 = vmatpush1.msra.mxu0 0.0
        %2345 = vmatprep.subr.mxu0 0.0
        %2346 = vmatpush1.msra.mxu0 0.0
        %2347 = vmatprep.subr.mxu0 0.0
        %2348 = vmatpush1.msra.mxu0 0.0
        %2349 = vmatprep.subr.mxu0 0.0
        %2350 = vmatpush1.msra.mxu0 %v2314
        %2351 = vmatprep.subr.mxu0 0.0
        %2352 = vmatpush2.msra.mxu0 0.0
        %2353 = vmatprep.subr.mxu0 0.0
        %2354 = vmatpush2.msra.mxu0 0.0
        %2355 = vmatprep.subr.mxu0 0.0
        %2356 = vmatpush2.msra.mxu0 0.0
        %2357 = vmatprep.subr.mxu0 0.0
        %2358 = vmatpush2.msra.mxu0 0.0
        %2359 = vmatprep.subr.mxu0 0.0
        %2360 = vmatpush2.msra.mxu0 0.0
        %2361 = vmatprep.subr.mxu0 0.0
        %2362 = vmatpush2.msra.mxu0 0.0
        %2363 = vmatprep.subr.mxu0 0.0
        %2364 = vmatpush2.msra.mxu0 0.0
        %2365 = vmatprep.subr.mxu0 0.0
        %2366 = vmatpush2.msra.mxu0 0.0
        %2367 = vmatprep.subr.mxu0 0.0
        %2368 = vmatpush2.msra.mxu0 0.0
        %2369 = vmatprep.subr.mxu0 0.0
        %2370 = vmatpush2.msra.mxu0 0.0
        %2371 = vmatprep.subr.mxu0 0.0
        %2372 = vmatpush2.msra.mxu0 0.0
        %2373 = vmatprep.subr.mxu0 0.0
        %2374 = vmatpush2.msra.mxu0 0.0
        %2375 = vmatprep.subr.mxu0 0.0
        %2376 = vmatpush2.msra.mxu0 0.0
        %2377 = vmatprep.subr.mxu0 0.0
        %2378 = vmatpush2.msra.mxu0 0.0
        %2379 = vmatprep.subr.mxu0 0.0
        %2380 = vmatpush2.msra.mxu0 0.0
        %2381 = vmatprep.subr.mxu0 0.0
        %2382 = vmatpush2.msra.mxu0 0.0
        %2383 = vmatprep.mubr.f32.mxu0 0.0
        %2384 = vmatmul.mubr.f32.gmra.mxu0 %v2317
        %v2385 = vpop.f32.mrf.mxu0
        %v2386 = vadd.f32 0.0, %v2385
        %v2387 = vpop.f32.mrf.mxu0
        %2388 = vdwg.mxu0
        %2389 = vrot.lane.b32.xlu0 %v1919, 112
        %v2390 = vpop.permute.xlu0 %2389
        %2391 = vrot.lane.b32.xlu0 %v1990, 112
        %v2392 = vpop.permute.xlu0 %2391
        %v2393 = vsel %vm1037, %v2390, 0
        %v2395 = vsel %vm1037, %v2392, 0
        %2397 = vmatprep.subr.mxu0 0.0
        %2398 = vmatpush1.xpose.msra.mxu0 0.0
        %2399 = vmatprep.subr.mxu0 0.0
        %2400 = vmatpush1.xpose.msra.mxu0 0.0
        %2401 = vmatprep.subr.mxu0 0.0
        %2402 = vmatpush1.xpose.msra.mxu0 0.0
        %2403 = vmatprep.subr.mxu0 0.0
        %2404 = vmatpush1.xpose.msra.mxu0 0.0
        %2405 = vmatprep.subr.mxu0 0.0
        %2406 = vmatpush1.xpose.msra.mxu0 0.0
        %2407 = vmatprep.subr.mxu0 0.0
        %2408 = vmatpush1.xpose.msra.mxu0 0.0
        %2409 = vmatprep.subr.mxu0 0.0
        %2410 = vmatpush1.xpose.msra.mxu0 0.0
        %2411 = vmatprep.subr.mxu0 0.0
        %2412 = vmatpush1.xpose.msra.mxu0 0.0
        %2413 = vmatprep.subr.mxu0 0.0
        %2414 = vmatpush1.xpose.msra.mxu0 0.0
        %2415 = vmatprep.subr.mxu0 0.0
        %2416 = vmatpush1.xpose.msra.mxu0 0.0
        %2417 = vmatprep.subr.mxu0 0.0
        %2418 = vmatpush1.xpose.msra.mxu0 0.0
        %2419 = vmatprep.subr.mxu0 0.0
        %2420 = vmatpush1.xpose.msra.mxu0 0.0
        %2421 = vmatprep.subr.mxu0 0.0
        %2422 = vmatpush1.xpose.msra.mxu0 0.0
        %2423 = vmatprep.subr.mxu0 0.0
        %2424 = vmatpush1.xpose.msra.mxu0 0.0
        %2425 = vmatprep.subr.mxu0 0.0
        %2426 = vmatpush1.xpose.msra.mxu0 0.0
        %2427 = vmatprep.subr.mxu0 0.0
        %2428 = vmatpush1.xpose.msra.mxu0 %v2395
        %2429 = vmatprep.subr.mxu0 0.0
        %2430 = vmatpush2.xpose.msra.mxu0 0.0
        %2431 = vmatprep.subr.mxu0 0.0
        %2432 = vmatpush2.xpose.msra.mxu0 0.0
        %2433 = vmatprep.subr.mxu0 0.0
        %2434 = vmatpush2.xpose.msra.mxu0 0.0
        %2435 = vmatprep.subr.mxu0 0.0
        %2436 = vmatpush2.xpose.msra.mxu0 0.0
        %2437 = vmatprep.subr.mxu0 0.0
        %2438 = vmatpush2.xpose.msra.mxu0 0.0
        %2439 = vmatprep.subr.mxu0 0.0
        %2440 = vmatpush2.xpose.msra.mxu0 0.0
        %2441 = vmatprep.subr.mxu0 0.0
        %2442 = vmatpush2.xpose.msra.mxu0 0.0
        %2443 = vmatprep.subr.mxu0 0.0
        %2444 = vmatpush2.xpose.msra.mxu0 0.0
        %2445 = vmatprep.subr.mxu0 0.0
        %2446 = vmatpush2.xpose.msra.mxu0 0.0
        %2447 = vmatprep.subr.mxu0 0.0
        %2448 = vmatpush2.xpose.msra.mxu0 0.0
        %2449 = vmatprep.subr.mxu0 0.0
        %2450 = vmatpush2.xpose.msra.mxu0 0.0
        %2451 = vmatprep.subr.mxu0 0.0
        %2452 = vmatpush2.xpose.msra.mxu0 0.0
        %2453 = vmatprep.subr.mxu0 0.0
        %2454 = vmatpush2.xpose.msra.mxu0 0.0
        %2455 = vmatprep.subr.mxu0 0.0
        %2456 = vmatpush2.xpose.msra.mxu0 0.0
        %2457 = vmatprep.subr.mxu0 0.0
        %2458 = vmatpush2.xpose.msra.mxu0 0.0
        %2459 = vmatprep.subr.mxu0 0.0
        %2460 = vmatpush2.xpose.msra.mxu0 0.0
        %2461 = vmatprep.mubr.f32.mxu0 0.0
        %2462 = vmatmul.mubr.f32.gmra.mxu0 %v2393
        %v2463 = vpop.f32.mrf.mxu0
        %v2464 = vadd.f32 %v802, %v2463
        %v2465 = vpop.f32.mrf.mxu0
        %2466 = vdwg.mxu0
        %v2467 = vsel %vm1037, %v2464, -inf
        %2468 = vmax.xlane.f32.xlu0 %v2467
        %v2469 = vpop.xlane.xlu0 %2468
        %v2470 = vsub.f32 %v2464, %v2469
        %v2471 = vmul.f32 %v2470, 1.442695
        %v2472 = vpow.pop %v2471
        %v2473 = vsel %vm1037, %v2472, 0.0
        %2474 = vadd.xlane.f32.xlu0 %v2473
        %v2475 = vpop.xlane.xlu0 %2474
        %v2476 = vrcp.pop %v2475
        %v2477 = vmul.f32 %v2472, %v2476
        %2478 = vrot.lane.b32.xlu0 %v2060, 112
        %v2479 = vpop.permute.xlu0 %2478
        %v2482 = vsel %vm1037, %v2477, 0
        %2484 = vmatprep.subr.mxu0 0.0
        %2485 = vmatpush1.msra.mxu0 0.0
        %2486 = vmatprep.subr.mxu0 0.0
        %2487 = vmatpush1.msra.mxu0 0.0
        %2488 = vmatprep.subr.mxu0 0.0
        %2489 = vmatpush1.msra.mxu0 0.0
        %2490 = vmatprep.subr.mxu0 0.0
        %2491 = vmatpush1.msra.mxu0 0.0
        %2492 = vmatprep.subr.mxu0 0.0
        %2493 = vmatpush1.msra.mxu0 0.0
        %2494 = vmatprep.subr.mxu0 0.0
        %2495 = vmatpush1.msra.mxu0 0.0
        %2496 = vmatprep.subr.mxu0 0.0
        %2497 = vmatpush1.msra.mxu0 0.0
        %2498 = vmatprep.subr.mxu0 0.0
        %2499 = vmatpush1.msra.mxu0 0.0
        %2500 = vmatprep.subr.mxu0 0.0
        %2501 = vmatpush1.msra.mxu0 0.0
        %2502 = vmatprep.subr.mxu0 0.0
        %2503 = vmatpush1.msra.mxu0 0.0
        %2504 = vmatprep.subr.mxu0 0.0
        %2505 = vmatpush1.msra.mxu0 0.0
        %2506 = vmatprep.subr.mxu0 0.0
        %2507 = vmatpush1.msra.mxu0 0.0
        %2508 = vmatprep.subr.mxu0 0.0
        %2509 = vmatpush1.msra.mxu0 0.0
        %2510 = vmatprep.subr.mxu0 0.0
        %2511 = vmatpush1.msra.mxu0 0.0
        %2512 = vmatprep.subr.mxu0 0.0
        %2513 = vmatpush1.msra.mxu0 0.0
        %2514 = vmatprep.subr.mxu0 0.0
        %2515 = vmatpush1.msra.mxu0 %v2479
        %2516 = vmatprep.subr.mxu0 0.0
        %2517 = vmatpush2.msra.mxu0 0.0
        %2518 = vmatprep.subr.mxu0 0.0
        %2519 = vmatpush2.msra.mxu0 0.0
        %2520 = vmatprep.subr.mxu0 0.0
        %2521 = vmatpush2.msra.mxu0 0.0
        %2522 = vmatprep.subr.mxu0 0.0
        %2523 = vmatpush2.msra.mxu0 0.0
        %2524 = vmatprep.subr.mxu0 0.0
        %2525 = vmatpush2.msra.mxu0 0.0
        %2526 = vmatprep.subr.mxu0 0.0
        %2527 = vmatpush2.msra.mxu0 0.0
        %2528 = vmatprep.subr.mxu0 0.0
        %2529 = vmatpush2.msra.mxu0 0.0
        %2530 = vmatprep.subr.mxu0 0.0
        %2531 = vmatpush2.msra.mxu0 0.0
        %2532 = vmatprep.subr.mxu0 0.0
        %2533 = vmatpush2.msra.mxu0 0.0
        %2534 = vmatprep.subr.mxu0 0.0
        %2535 = vmatpush2.msra.mxu0 0.0
        %2536 = vmatprep.subr.mxu0 0.0
        %2537 = vmatpush2.msra.mxu0 0.0
        %2538 = vmatprep.subr.mxu0 0.0
        %2539 = vmatpush2.msra.mxu0 0.0
        %2540 = vmatprep.subr.mxu0 0.0
        %2541 = vmatpush2.msra.mxu0 0.0
        %2542 = vmatprep.subr.mxu0 0.0
        %2543 = vmatpush2.msra.mxu0 0.0
        %2544 = vmatprep.subr.mxu0 0.0
        %2545 = vmatpush2.msra.mxu0 0.0
        %2546 = vmatprep.subr.mxu0 0.0
        %2547 = vmatpush2.msra.mxu0 0.0
        %2548 = vmatprep.mubr.f32.mxu0 0.0
        %2549 = vmatmul.mubr.f32.gmra.mxu0 %v2482
        %v2550 = vpop.f32.mrf.mxu0
        %v2551 = vadd.f32 0.0, %v2550
        %v2552 = vpop.f32.mrf.mxu0
        %2553 = vdwg.mxu0
        %2554 = vrot.lane.b32.xlu0 %v1919, 104
        %v2555 = vpop.permute.xlu0 %2554
        %2556 = vrot.lane.b32.xlu0 %v1990, 104
        %v2557 = vpop.permute.xlu0 %2556
        %v2558 = vsel %vm1037, %v2555, 0
        %v2560 = vsel %vm1037, %v2557, 0
        %2562 = vmatprep.subr.mxu0 0.0
        %2563 = vmatpush1.xpose.msra.mxu0 0.0
        %2564 = vmatprep.subr.mxu0 0.0
        %2565 = vmatpush1.xpose.msra.mxu0 0.0
        %2566 = vmatprep.subr.mxu0 0.0
        %2567 = vmatpush1.xpose.msra.mxu0 0.0
        %2568 = vmatprep.subr.mxu0 0.0
        %2569 = vmatpush1.xpose.msra.mxu0 0.0
        %2570 = vmatprep.subr.mxu0 0.0
        %2571 = vmatpush1.xpose.msra.mxu0 0.0
        %2572 = vmatprep.subr.mxu0 0.0
        %2573 = vmatpush1.xpose.msra.mxu0 0.0
        %2574 = vmatprep.subr.mxu0 0.0
        %2575 = vmatpush1.xpose.msra.mxu0 0.0
        %2576 = vmatprep.subr.mxu0 0.0
        %2577 = vmatpush1.xpose.msra.mxu0 0.0
        %2578 = vmatprep.subr.mxu0 0.0
        %2579 = vmatpush1.xpose.msra.mxu0 0.0
        %2580 = vmatprep.subr.mxu0 0.0
        %2581 = vmatpush1.xpose.msra.mxu0 0.0
        %2582 = vmatprep.subr.mxu0 0.0
        %2583 = vmatpush1.xpose.msra.mxu0 0.0
        %2584 = vmatprep.subr.mxu0 0.0
        %2585 = vmatpush1.xpose.msra.mxu0 0.0
        %2586 = vmatprep.subr.mxu0 0.0
        %2587 = vmatpush1.xpose.msra.mxu0 0.0
        %2588 = vmatprep.subr.mxu0 0.0
        %2589 = vmatpush1.xpose.msra.mxu0 0.0
        %2590 = vmatprep.subr.mxu0 0.0
        %2591 = vmatpush1.xpose.msra.mxu0 0.0
        %2592 = vmatprep.subr.mxu0 0.0
        %2593 = vmatpush1.xpose.msra.mxu0 %v2560
        %2594 = vmatprep.subr.mxu0 0.0
        %2595 = vmatpush2.xpose.msra.mxu0 0.0
        %2596 = vmatprep.subr.mxu0 0.0
        %2597 = vmatpush2.xpose.msra.mxu0 0.0
        %2598 = vmatprep.subr.mxu0 0.0
        %2599 = vmatpush2.xpose.msra.mxu0 0.0
        %2600 = vmatprep.subr.mxu0 0.0
        %2601 = vmatpush2.xpose.msra.mxu0 0.0
        %2602 = vmatprep.subr.mxu0 0.0
        %2603 = vmatpush2.xpose.msra.mxu0 0.0
        %2604 = vmatprep.subr.mxu0 0.0
        %2605 = vmatpush2.xpose.msra.mxu0 0.0
        %2606 = vmatprep.subr.mxu0 0.0
        %2607 = vmatpush2.xpose.msra.mxu0 0.0
        %2608 = vmatprep.subr.mxu0 0.0
        %2609 = vmatpush2.xpose.msra.mxu0 0.0
        %2610 = vmatprep.subr.mxu0 0.0
        %2611 = vmatpush2.xpose.msra.mxu0 0.0
        %2612 = vmatprep.subr.mxu0 0.0
        %2613 = vmatpush2.xpose.msra.mxu0 0.0
        %2614 = vmatprep.subr.mxu0 0.0
        %2615 = vmatpush2.xpose.msra.mxu0 0.0
        %2616 = vmatprep.subr.mxu0 0.0
        %2617 = vmatpush2.xpose.msra.mxu0 0.0
        %2618 = vmatprep.subr.mxu0 0.0
        %2619 = vmatpush2.xpose.msra.mxu0 0.0
        %2620 = vmatprep.subr.mxu0 0.0
        %2621 = vmatpush2.xpose.msra.mxu0 0.0
        %2622 = vmatprep.subr.mxu0 0.0
        %2623 = vmatpush2.xpose.msra.mxu0 0.0
        %2624 = vmatprep.subr.mxu0 0.0
        %2625 = vmatpush2.xpose.msra.mxu0 0.0
        %2626 = vmatprep.mubr.f32.mxu0 0.0
        %2627 = vmatmul.mubr.f32.gmra.mxu0 %v2558
        %v2628 = vpop.f32.mrf.mxu0
        %v2629 = vadd.f32 %v802, %v2628
        %v2630 = vpop.f32.mrf.mxu0
        %2631 = vdwg.mxu0
        %v2632 = vsel %vm1037, %v2629, -inf
        %2633 = vmax.xlane.f32.xlu0 %v2632
        %v2634 = vpop.xlane.xlu0 %2633
        %v2635 = vsub.f32 %v2629, %v2634
        %v2636 = vmul.f32 %v2635, 1.442695
        %v2637 = vpow.pop %v2636
        %v2638 = vsel %vm1037, %v2637, 0.0
        %2639 = vadd.xlane.f32.xlu0 %v2638
        %v2640 = vpop.xlane.xlu0 %2639
        %v2641 = vrcp.pop %v2640
        %v2642 = vmul.f32 %v2637, %v2641
        %2643 = vrot.lane.b32.xlu0 %v2060, 104
        %v2644 = vpop.permute.xlu0 %2643
        %v2647 = vsel %vm1037, %v2642, 0
        %2649 = vmatprep.subr.mxu0 0.0
        %2650 = vmatpush1.msra.mxu0 0.0
        %2651 = vmatprep.subr.mxu0 0.0
        %2652 = vmatpush1.msra.mxu0 0.0
        %2653 = vmatprep.subr.mxu0 0.0
        %2654 = vmatpush1.msra.mxu0 0.0
        %2655 = vmatprep.subr.mxu0 0.0
        %2656 = vmatpush1.msra.mxu0 0.0
        %2657 = vmatprep.subr.mxu0 0.0
        %2658 = vmatpush1.msra.mxu0 0.0
        %2659 = vmatprep.subr.mxu0 0.0
        %2660 = vmatpush1.msra.mxu0 0.0
        %2661 = vmatprep.subr.mxu0 0.0
        %2662 = vmatpush1.msra.mxu0 0.0
        %2663 = vmatprep.subr.mxu0 0.0
        %2664 = vmatpush1.msra.mxu0 0.0
        %2665 = vmatprep.subr.mxu0 0.0
        %2666 = vmatpush1.msra.mxu0 0.0
        %2667 = vmatprep.subr.mxu0 0.0
        %2668 = vmatpush1.msra.mxu0 0.0
        %2669 = vmatprep.subr.mxu0 0.0
        %2670 = vmatpush1.msra.mxu0 0.0
        %2671 = vmatprep.subr.mxu0 0.0
        %2672 = vmatpush1.msra.mxu0 0.0
        %2673 = vmatprep.subr.mxu0 0.0
        %2674 = vmatpush1.msra.mxu0 0.0
        %2675 = vmatprep.subr.mxu0 0.0
        %2676 = vmatpush1.msra.mxu0 0.0
        %2677 = vmatprep.subr.mxu0 0.0
        %2678 = vmatpush1.msra.mxu0 0.0
        %2679 = vmatprep.subr.mxu0 0.0
        %2680 = vmatpush1.msra.mxu0 %v2644
        %2681 = vmatprep.subr.mxu0 0.0
        %2682 = vmatpush2.msra.mxu0 0.0
        %2683 = vmatprep.subr.mxu0 0.0
        %2684 = vmatpush2.msra.mxu0 0.0
        %2685 = vmatprep.subr.mxu0 0.0
        %2686 = vmatpush2.msra.mxu0 0.0
        %2687 = vmatprep.subr.mxu0 0.0
        %2688 = vmatpush2.msra.mxu0 0.0
        %2689 = vmatprep.subr.mxu0 0.0
        %2690 = vmatpush2.msra.mxu0 0.0
        %2691 = vmatprep.subr.mxu0 0.0
        %2692 = vmatpush2.msra.mxu0 0.0
        %2693 = vmatprep.subr.mxu0 0.0
        %2694 = vmatpush2.msra.mxu0 0.0
        %2695 = vmatprep.subr.mxu0 0.0
        %2696 = vmatpush2.msra.mxu0 0.0
        %2697 = vmatprep.subr.mxu0 0.0
        %2698 = vmatpush2.msra.mxu0 0.0
        %2699 = vmatprep.subr.mxu0 0.0
        %2700 = vmatpush2.msra.mxu0 0.0
        %2701 = vmatprep.subr.mxu0 0.0
        %2702 = vmatpush2.msra.mxu0 0.0
        %2703 = vmatprep.subr.mxu0 0.0
        %2704 = vmatpush2.msra.mxu0 0.0
        %2705 = vmatprep.subr.mxu0 0.0
        %2706 = vmatpush2.msra.mxu0 0.0
        %2707 = vmatprep.subr.mxu0 0.0
        %2708 = vmatpush2.msra.mxu0 0.0
        %2709 = vmatprep.subr.mxu0 0.0
        %2710 = vmatpush2.msra.mxu0 0.0
        %2711 = vmatprep.subr.mxu0 0.0
        %2712 = vmatpush2.msra.mxu0 0.0
        %2713 = vmatprep.mubr.f32.mxu0 0.0
        %2714 = vmatmul.mubr.f32.gmra.mxu0 %v2647
        %v2715 = vpop.f32.mrf.mxu0
        %v2716 = vadd.f32 0.0, %v2715
        %v2717 = vpop.f32.mrf.mxu0
        %2718 = vdwg.mxu0
        %2720 = vrot.lane.b32.xlu0 %v2386, 8
        %v2721 = vpop.permute.xlu0 %2720
        %2724 = vrot.lane.b32.xlu0 %v2551, 16
        %v2725 = vpop.permute.xlu0 %2724
        %2728 = vrot.lane.b32.xlu0 %v2716, 24
        %v2729 = vpop.permute.xlu0 %2728
        %v2731 = vsel %vm1037, %v2220, %v2721
        %v2732 = vsel %vm1707, %v2731, %v2725
        %v2733 = vsel %vm1709, %v2732, %v2729
        %v2735 = vlaneseq
        %v2736 = vshrl.u32 %v2735, 7
        %v2737 = vsub.s32 0, %v2736
        %v2738 = vrot.slane %v1843, %v2737
        %v2741 = vsel %vm822, %v2733, 0
        %2743 = vmatprep.subr.mxu0 0.0
        %2744 = vmatpush1.msra.mxu0 0.0
        %2745 = vmatprep.subr.mxu0 0.0
        %2746 = vmatpush1.msra.mxu0 0.0
        %2747 = vmatprep.subr.mxu0 0.0
        %2748 = vmatpush1.msra.mxu0 0.0
        %2749 = vmatprep.subr.mxu0 0.0
        %2750 = vmatpush1.msra.mxu0 0.0
        %2751 = vmatprep.subr.mxu0 0.0
        %2752 = vmatpush1.msra.mxu0 0.0
        %2753 = vmatprep.subr.mxu0 0.0
        %2754 = vmatpush1.msra.mxu0 0.0
        %2755 = vmatprep.subr.mxu0 0.0
        %2756 = vmatpush1.msra.mxu0 0.0
        %2757 = vmatprep.subr.mxu0 0.0
        %2758 = vmatpush1.msra.mxu0 0.0
        %2759 = vmatprep.subr.mxu0 0.0
        %2760 = vmatpush1.msra.mxu0 0.0
        %2761 = vmatprep.subr.mxu0 0.0
        %2762 = vmatpush1.msra.mxu0 0.0
        %2763 = vmatprep.subr.mxu0 0.0
        %2764 = vmatpush1.msra.mxu0 0.0
        %2765 = vmatprep.subr.mxu0 0.0
        %2766 = vmatpush1.msra.mxu0 0.0
        %2767 = vmatprep.subr.mxu0 0.0
        %2768 = vmatpush1.msra.mxu0 %v1842
        %2769 = vmatprep.subr.mxu0 0.0
        %2770 = vmatpush1.msra.mxu0 %v1841
        %2771 = vmatprep.subr.mxu0 0.0
        %2772 = vmatpush1.msra.mxu0 %v1840
        %2773 = vmatprep.subr.mxu0 0.0
        %2774 = vmatpush1.msra.mxu0 %v1839
        %2775 = vmatprep.subr.mxu0 0.0
        %2776 = vmatpush2.msra.mxu0 0.0
        %2777 = vmatprep.subr.mxu0 0.0
        %2778 = vmatpush2.msra.mxu0 0.0
        %2779 = vmatprep.subr.mxu0 0.0
        %2780 = vmatpush2.msra.mxu0 0.0
        %2781 = vmatprep.subr.mxu0 0.0
        %2782 = vmatpush2.msra.mxu0 0.0
        %2783 = vmatprep.subr.mxu0 0.0
        %2784 = vmatpush2.msra.mxu0 0.0
        %2785 = vmatprep.subr.mxu0 0.0
        %2786 = vmatpush2.msra.mxu0 0.0
        %2787 = vmatprep.subr.mxu0 0.0
        %2788 = vmatpush2.msra.mxu0 0.0
        %2789 = vmatprep.subr.mxu0 0.0
        %2790 = vmatpush2.msra.mxu0 0.0
        %2791 = vmatprep.subr.mxu0 0.0
        %2792 = vmatpush2.msra.mxu0 0.0
        %2793 = vmatprep.subr.mxu0 0.0
        %2794 = vmatpush2.msra.mxu0 0.0
        %2795 = vmatprep.subr.mxu0 0.0
        %2796 = vmatpush2.msra.mxu0 0.0
        %2797 = vmatprep.subr.mxu0 0.0
        %2798 = vmatpush2.msra.mxu0 0.0
        %2799 = vmatprep.subr.mxu0 0.0
        %2800 = vmatpush2.msra.mxu0 0.0
        %2801 = vmatprep.subr.mxu0 0.0
        %2802 = vmatpush2.msra.mxu0 0.0
        %2803 = vmatprep.subr.mxu0 0.0
        %2804 = vmatpush2.msra.mxu0 0.0
        %2805 = vmatprep.subr.mxu0 0.0
        %2806 = vmatpush2.msra.mxu0 0.0
        %2807 = vmatprep.mubr.f32.mxu0 0.0
        %2808 = vmatmul.mubr.f32.gmra.mxu0 %v2741
        %v2809 = vpop.f32.mrf.mxu0
        %v2810 = vadd.f32 %v2738, %v2809
        %v2811 = vpop.f32.mrf.mxu0
        %2812 = vdwg.mxu0
        %v2813 = vadd.f32 %v2810, %v1826
        %v2814 = vsel %vm822, %v2813, 0.0
        %2815 = vadd.xlane.f32.xlu0 %v2814
        %v2816 = vpop.xlane.xlu0 %2815
        %v2817 = vmul.f32 %v2816, %v1794
        %v2818 = vsub.f32 %v2813, %v2817
        %v2819 = vmul.f32 %v2818, %v2818
        %v2820 = vsel %vm822, %v2819, 0.0
        %2821 = vadd.xlane.f32.xlu0 %v2820
        %v2822 = vpop.xlane.xlu0 %2821
        %v2823 = vmul.f32 %v2822, %v1801
        %v2824 = vrsqrt.pop %v2823
        %v2825 = vmul.f32 %v2823, %v2824
        %vm2826 = vcmp.eq.f32.partialorder %v2823, inf
        %v2827 = vsel %vm2826, %v2823, %v2825
        %vm2828 = vcmp.eq.f32.partialorder %v2823, 0.0
        %v2829 = vand.u32 %v2823, 2147483648
        %v2830 = vsel %vm2828, %v2829, %v2827
        %v2831 = vadd.f32 %v2830, 0.001
        %v2832 = vrcp.pop %v2831
        %v2833 = vmul.f32 %v2818, %v2832
        %v2835 = vlaneseq
        %v2836 = vshrl.u32 %v2835, 7
        %v2837 = vsub.s32 0, %v2836
        %v2838 = vrot.slane %v1844, %v2837
        %v2840 = vmul.f32 %v2833, %v2838
        %v2842 = vlaneseq
        %v2843 = vshrl.u32 %v2842, 7
        %v2844 = vsub.s32 0, %v2843
        %v2845 = vrot.slane %v1845, %v2844
        %v2847 = vadd.f32 %v2840, %v2845
        %v2848 = vld [vmem:[%s18] sm:$0xff]
        %v2849 = vld [vmem:[%s18 + $0x8] sm:$0xff]
        %v2850 = vld [vmem:[%s18 + $0x10] sm:$0xff]
        %v2851 = vld [vmem:[%s18 + $0x18] sm:$0xff]
        %v2852 = vld [vmem:[%s19] sm:$0x1]
        %v2854 = vlaneseq
        %v2855 = vshrl.u32 %v2854, 7
        %v2856 = vsub.s32 0, %v2855
        %v2857 = vrot.slane %v2852, %v2856
        %v2860 = vsel %vm822, %v2847, 0
        %2862 = vmatprep.subr.mxu0 0.0
        %2863 = vmatpush1.msra.mxu0 0.0
        %2864 = vmatprep.subr.mxu0 0.0
        %2865 = vmatpush1.msra.mxu0 0.0
        %2866 = vmatprep.subr.mxu0 0.0
        %2867 = vmatpush1.msra.mxu0 0.0
        %2868 = vmatprep.subr.mxu0 0.0
        %2869 = vmatpush1.msra.mxu0 0.0
        %2870 = vmatprep.subr.mxu0 0.0
        %2871 = vmatpush1.msra.mxu0 0.0
        %2872 = vmatprep.subr.mxu0 0.0
        %2873 = vmatpush1.msra.mxu0 0.0
        %2874 = vmatprep.subr.mxu0 0.0
        %2875 = vmatpush1.msra.mxu0 0.0
        %2876 = vmatprep.subr.mxu0 0.0
        %2877 = vmatpush1.msra.mxu0 0.0
        %2878 = vmatprep.subr.mxu0 0.0
        %2879 = vmatpush1.msra.mxu0 0.0
        %2880 = vmatprep.subr.mxu0 0.0
        %2881 = vmatpush1.msra.mxu0 0.0
        %2882 = vmatprep.subr.mxu0 0.0
        %2883 = vmatpush1.msra.mxu0 0.0
        %2884 = vmatprep.subr.mxu0 0.0
        %2885 = vmatpush1.msra.mxu0 0.0
        %2886 = vmatprep.subr.mxu0 0.0
        %2887 = vmatpush1.msra.mxu0 %v2851
        %2888 = vmatprep.subr.mxu0 0.0
        %2889 = vmatpush1.msra.mxu0 %v2850
        %2890 = vmatprep.subr.mxu0 0.0
        %2891 = vmatpush1.msra.mxu0 %v2849
        %2892 = vmatprep.subr.mxu0 0.0
        %2893 = vmatpush1.msra.mxu0 %v2848
        %2894 = vmatprep.subr.mxu0 0.0
        %2895 = vmatpush2.msra.mxu0 0.0
        %2896 = vmatprep.subr.mxu0 0.0
        %2897 = vmatpush2.msra.mxu0 0.0
        %2898 = vmatprep.subr.mxu0 0.0
        %2899 = vmatpush2.msra.mxu0 0.0
        %2900 = vmatprep.subr.mxu0 0.0
        %2901 = vmatpush2.msra.mxu0 0.0
        %2902 = vmatprep.subr.mxu0 0.0
        %2903 = vmatpush2.msra.mxu0 0.0
        %2904 = vmatprep.subr.mxu0 0.0
        %2905 = vmatpush2.msra.mxu0 0.0
        %2906 = vmatprep.subr.mxu0 0.0
        %2907 = vmatpush2.msra.mxu0 0.0
        %2908 = vmatprep.subr.mxu0 0.0
        %2909 = vmatpush2.msra.mxu0 0.0
        %2910 = vmatprep.subr.mxu0 0.0
        %2911 = vmatpush2.msra.mxu0 0.0
        %2912 = vmatprep.subr.mxu0 0.0
        %2913 = vmatpush2.msra.mxu0 0.0
        %2914 = vmatprep.subr.mxu0 0.0
        %2915 = vmatpush2.msra.mxu0 0.0
        %2916 = vmatprep.subr.mxu0 0.0
        %2917 = vmatpush2.msra.mxu0 0.0
        %2918 = vmatprep.subr.mxu0 0.0
        %2919 = vmatpush2.msra.mxu0 0.0
        %2920 = vmatprep.subr.mxu0 0.0
        %2921 = vmatpush2.msra.mxu0 0.0
        %2922 = vmatprep.subr.mxu0 0.0
        %2923 = vmatpush2.msra.mxu0 0.0
        %2924 = vmatprep.subr.mxu0 0.0
        %2925 = vmatpush2.msra.mxu0 0.0
        %2926 = vmatprep.mubr.f32.mxu0 0.0
        %2927 = vmatmul.mubr.f32.gmra.mxu0 %v2860
        %v2928 = vpop.f32.mrf.mxu0
        %v2929 = vadd.f32 %v2857, %v2928
        %v2930 = vpop.f32.mrf.mxu0
        %2931 = vdwg.mxu0
        %v2932 = vmax.f32 %v2929, 0.0
        %v2933 = vld [vmem:[%s20] sm:$0xff]
        %v2934 = vld [vmem:[%s20 + $0x8] sm:$0xff]
        %v2935 = vld [vmem:[%s20 + $0x10] sm:$0xff]
        %v2936 = vld [vmem:[%s20 + $0x18] sm:$0xff]
        %v2937 = vld [vmem:[%s20 + $0x20] sm:$0xff]
        %v2938 = vld [vmem:[%s20 + $0x28] sm:$0xff]
        %v2939 = vld [vmem:[%s20 + $0x30] sm:$0xff]
        %v2940 = vld [vmem:[%s20 + $0x38] sm:$0xff]
        %v2941 = vld [vmem:[%s21] sm:$0x1]
        %v2943 = vlaneseq
        %v2944 = vshrl.u32 %v2943, 7
        %v2945 = vsub.s32 0, %v2944
        %v2946 = vrot.slane %v2941, %v2945
        %vm2948 = vcmask 523264
        %v2950 = vsel %vm2948, %v2932, 0
        %2952 = vmatprep.subr.mxu0 0.0
        %2953 = vmatpush1.msra.mxu0 0.0
        %2954 = vmatprep.subr.mxu0 0.0
        %2955 = vmatpush1.msra.mxu0 0.0
        %2956 = vmatprep.subr.mxu0 0.0
        %2957 = vmatpush1.msra.mxu0 0.0
        %2958 = vmatprep.subr.mxu0 0.0
        %2959 = vmatpush1.msra.mxu0 0.0
        %2960 = vmatprep.subr.mxu0 0.0
        %2961 = vmatpush1.msra.mxu0 0.0
        %2962 = vmatprep.subr.mxu0 0.0
        %2963 = vmatpush1.msra.mxu0 0.0
        %2964 = vmatprep.subr.mxu0 0.0
        %2965 = vmatpush1.msra.mxu0 0.0
        %2966 = vmatprep.subr.mxu0 0.0
        %2967 = vmatpush1.msra.mxu0 0.0
        %2968 = vmatprep.subr.mxu0 0.0
        %2969 = vmatpush1.msra.mxu0 %v2940
        %2970 = vmatprep.subr.mxu0 0.0
        %2971 = vmatpush1.msra.mxu0 %v2939
        %2972 = vmatprep.subr.mxu0 0.0
        %2973 = vmatpush1.msra.mxu0 %v2938
        %2974 = vmatprep.subr.mxu0 0.0
        %2975 = vmatpush1.msra.mxu0 %v2937
        %2976 = vmatprep.subr.mxu0 0.0
        %2977 = vmatpush1.msra.mxu0 %v2936
        %2978 = vmatprep.subr.mxu0 0.0
        %2979 = vmatpush1.msra.mxu0 %v2935
        %2980 = vmatprep.subr.mxu0 0.0
        %2981 = vmatpush1.msra.mxu0 %v2934
        %2982 = vmatprep.subr.mxu0 0.0
        %2983 = vmatpush1.msra.mxu0 %v2933
        %2984 = vmatprep.subr.mxu0 0.0
        %2985 = vmatpush2.msra.mxu0 0.0
        %2986 = vmatprep.subr.mxu0 0.0
        %2987 = vmatpush2.msra.mxu0 0.0
        %2988 = vmatprep.subr.mxu0 0.0
        %2989 = vmatpush2.msra.mxu0 0.0
        %2990 = vmatprep.subr.mxu0 0.0
        %2991 = vmatpush2.msra.mxu0 0.0
        %2992 = vmatprep.subr.mxu0 0.0
        %2993 = vmatpush2.msra.mxu0 0.0
        %2994 = vmatprep.subr.mxu0 0.0
        %2995 = vmatpush2.msra.mxu0 0.0
        %2996 = vmatprep.subr.mxu0 0.0
        %2997 = vmatpush2.msra.mxu0 0.0
        %2998 = vmatprep.subr.mxu0 0.0
        %2999 = vmatpush2.msra.mxu0 0.0
        %3000 = vmatprep.subr.mxu0 0.0
        %3001 = vmatpush2.msra.mxu0 0.0
        %3002 = vmatprep.subr.mxu0 0.0
        %3003 = vmatpush2.msra.mxu0 0.0
        %3004 = vmatprep.subr.mxu0 0.0
        %3005 = vmatpush2.msra.mxu0 0.0
        %3006 = vmatprep.subr.mxu0 0.0
        %3007 = vmatpush2.msra.mxu0 0.0
        %3008 = vmatprep.subr.mxu0 0.0
        %3009 = vmatpush2.msra.mxu0 0.0
        %3010 = vmatprep.subr.mxu0 0.0
        %3011 = vmatpush2.msra.mxu0 0.0
        %3012 = vmatprep.subr.mxu0 0.0
        %3013 = vmatpush2.msra.mxu0 0.0
        %3014 = vmatprep.subr.mxu0 0.0
        %3015 = vmatpush2.msra.mxu0 0.0
        %3016 = vmatprep.mubr.f32.mxu0 0.0
        %3017 = vmatmul.mubr.f32.gmra.mxu0 %v2950
        %v3018 = vpop.f32.mrf.mxu0
        %v3019 = vadd.f32 %v2946, %v3018
        %v3020 = vpop.f32.mrf.mxu0
        %3021 = vdwg.mxu0
        %v3022 = vadd.f32 %v3019, %v2847
        %v3023 = vld [vmem:[%s22] sm:$0x1]
        %v3024 = vld [vmem:[#allocation2] sm:$0x1]
        %v3025 = vsel %vm822, %v3022, 0.0
        %3026 = vadd.xlane.f32.xlu0 %v3025
        %v3027 = vpop.xlane.xlu0 %3026
        %v3028 = vmul.f32 %v3027, %v1794
        %v3029 = vsub.f32 %v3022, %v3028
        %v3030 = vmul.f32 %v3029, %v3029
        %v3031 = vsel %vm822, %v3030, 0.0
        %3032 = vadd.xlane.f32.xlu0 %v3031
        %v3033 = vpop.xlane.xlu0 %3032
        %v3034 = vmul.f32 %v3033, %v1801
        %v3035 = vrsqrt.pop %v3034
        %v3036 = vmul.f32 %v3034, %v3035
        %vm3037 = vcmp.eq.f32.partialorder %v3034, inf
        %v3038 = vsel %vm3037, %v3034, %v3036
        %vm3039 = vcmp.eq.f32.partialorder %v3034, 0.0
        %v3040 = vand.u32 %v3034, 2147483648
        %v3041 = vsel %vm3039, %v3040, %v3038
        %v3042 = vadd.f32 %v3041, 0.001
        %v3043 = vrcp.pop %v3042
        %v3044 = vmul.f32 %v3029, %v3043
        %v3046 = vlaneseq
        %v3047 = vshrl.u32 %v3046, 7
        %v3048 = vsub.s32 0, %v3047
        %v3049 = vrot.slane %v3023, %v3048
        %v3051 = vmul.f32 %v3044, %v3049
        %v3053 = vlaneseq
        %v3054 = vshrl.u32 %v3053, 7
        %v3055 = vsub.s32 0, %v3054
        %v3056 = vrot.slane %v3024, %v3055
        %v3058 = vadd.f32 %v3051, %v3056
        %3059 = vst.msk [vmem:[%s780] sm:$0xff] %vm822, %v3058
        %s3060 = sand.u32 %s571, 1
        %s3061 = scalar_lea.sflag [#allocation4], %s3060
        %s3062 = sand.u32 %s571, 1
        %s3063 = smul.addr %s3062, 8
        %s3064 = scalar_lea.vmem [#allocation5], %s3063
        // Predicated region
        $region121: #{transformer_decoder.3} parent=115 // pred_check
          %p3065 = pneg %p581
        $region122: #{transformer_decoder.3} parent=115 // pred_check_branch
          %3067 = sbr.rel (%p3065) target = $region124
        $region123: #{transformer_decoder.3} parent=115 // pred_region
          %s3069 = ssub.s32 128, 128
          %3070 = vsyncadd %s3061, %s3069
          %s3071 = smul.addr %s39, 128
          %s3072 = scalar_lea.hbm %s24, %s3071
          %s3074 = sshll.u32 %s3064, 4
          %s3075 = int_to_ptr.vmem [resolvable:$true] %s3074
          %3077 = dma.vmem_to_hbm [thread:$0]  %s3075, 128, %s3072, %s3061
        $region124: #{transformer_decoder.3} parent=115 // pred_fallthru
          _
      $region116: #{transformer_decoder.3} parent=5 // pred_fallthru
        _
      %p3078 = scmp.le.s32.totalorder 2, %s34
      // Predicated region
      $region125: #{transformer_decoder.3} parent=5 // pred_check
        %p3079 = pneg %p3078
      $region126: #{transformer_decoder.3} parent=5 // pred_check_branch
        %3081 = sbr.rel (%p3079) target = $region128
      $region127: #{transformer_decoder.3} parent=5 // pred_region
        %s3082 = ssub.s32 %s34, 2
        // Predicated region
        $region129: #{transformer_decoder.3} parent=127 // pred_check
          %p3083 = pneg %p587
        $region130: #{transformer_decoder.3} parent=127 // pred_check_branch
          %3085 = sbr.rel (%p3083) target = $region132
        $region131: #{transformer_decoder.3} parent=127 // pred_region
          %s3086 = sand.u32 %s572, 1
          %s3087 = scalar_lea.sflag [#allocation4], %s3086
          %s3088 = sand.u32 %s572, 1
          %s3089 = smul.addr %s3088, 8
          %s3090 = scalar_lea.vmem [#allocation5], %s3089
          %3091 = dma.done %s3087, 128
        $region132: #{transformer_decoder.3} parent=127 // pred_fallthru
          _
      $region128: #{transformer_decoder.3} parent=5 // pred_fallthru
        _
    $region6: #{transformer_decoder.3} parent=1 // loop_footer
      %s38 = sadd.s32 1, %s34
    $region7: #{transformer_decoder.3} parent=1 // loop_footer_branch
      %33 = sbr.rel target = $region3
    $region8: #{transformer_decoder.3} parent=1 // loop_exit
      _
    %3092 = vsyncpa [#allocation3], 1
    %s3093 = scalar_lea.sflag [#allocation3], 1
    %3094 = vsyncpa %s3093, 1
    %3095 = vsyncpa [#allocation4], 1
    %s3096 = scalar_lea.sflag [#allocation4], 1
    %3097 = vsyncpa %s3096, 1

</llo_original>
